<compile_context>
chip_gen: v7x
topology: tpu7x:2x2x1
jax: 0.10.0
libtpu: 0.0.40
codegen_flags: <defaults>
</compile_context>

<pallas_src>
import functools

import jax
import jax.numpy as jnp
from jax.experimental import pallas as pl
from jax.experimental.pallas import tpu as pltpu

LANE = 128                    # TPU lane width
COMPUTE_DTYPE = jnp.bfloat16  # MXU input dtype (accumulation is f32)


def _round_up(x, m):
    return ((x + m - 1) // m) * m


def _bn_fold(gamma, beta, mean, var, eps=1e-5):
    scale = gamma * jax.lax.rsqrt(var + eps)
    bias = beta - mean * scale
    return scale, bias


# ---------------------------------------------------------------------------
# Fused kernel: one NHWC image per grid step.
# ---------------------------------------------------------------------------

def _bottleneck_kernel(x_ref, w1_ref, b1_ref, w2_ref, b2_ref, w3_ref, b3_ref,
                       o_ref, hpad_ref, acc_ref, *, H, W):
    """Fused v1 bottleneck (stride=1, groups=1, no downsample).

    x_ref   : (1, H, W, Cp)     bf16  input image (channel-padded)
    w1_ref  : (Cp, Cn)          bf16  conv1 1x1 weight * bn1 scale
    b1_ref  : (1, Cn)           f32   bn1 bias
    w2_ref  : (3, 3, Cn, Cn)    bf16  conv2 3x3 weight * bn2 scale
    b2_ref  : (1, Cn)           f32   bn2 bias
    w3_ref  : (Cn, Cp)          bf16  conv3 1x1 weight * bn3 scale
    b3_ref  : (1, Cp)           f32   bn3 bias
    o_ref   : (1, H, W, Cp)     f32   output
    hpad_ref: (H+2, W+2, Cn)    bf16  VMEM scratch: conv1 output with halo
    acc_ref : (H*W, Cn)         f32   VMEM scratch: 3x3 accumulator
    """
    Cp = x_ref.shape[-1]
    Cn = w1_ref.shape[-1]

    # ---- conv1 (1x1) + bn1 + relu ------------------------------------------
    x = x_ref[0].reshape(H * W, Cp)                              # bf16
    h1 = jnp.dot(x, w1_ref[...], preferred_element_type=jnp.float32)
    h1 = jnp.maximum(h1 + b1_ref[...], 0.0)

    # Stage conv1 output in a zero-bordered VMEM scratch: the 1-pixel halo of
    # the 3x3 'same' conv lives here, so no padded activation copy in HBM.
    hpad_ref[...] = jnp.zeros_like(hpad_ref)
    hpad_ref[1:H + 1, 1:W + 1, :] = h1.reshape(H, W, Cn).astype(hpad_ref.dtype)

    # ---- conv2 (3x3, pad=1, stride=1) + bn2 + relu ---------------------------
    # 9 shifted matmuls on VMEM-resident data, accumulated into a f32 scratch.
    for dy in range(3):
        for dx in range(3):
            patch = hpad_ref[dy:dy + H, dx:dx + W, :].reshape(H * W, Cn)
            contrib = jnp.dot(patch, w2_ref[dy, dx],
                              preferred_element_type=jnp.float32)
            if dy == 0 and dx == 0:
                acc_ref[...] = contrib
            else:
                acc_ref[...] += contrib
    h2 = jnp.maximum(acc_ref[...] + b2_ref[...], 0.0).astype(w3_ref.dtype)

    # ---- conv3 (1x1) + bn3 + residual add + relu -----------------------------
    y = jnp.dot(h2, w3_ref[...], preferred_element_type=jnp.float32)
    y = y + b3_ref[...] + x.astype(jnp.float32)     # reuse the loaded identity
    o_ref[...] = jnp.maximum(y, 0.0).reshape(1, H, W, Cp).astype(o_ref.dtype)


# ---------------------------------------------------------------------------
# Wrapper
# ---------------------------------------------------------------------------

def bottleneck_v1(x_nchw, params, *, eps=1e-5):
    """Bottleneck._forward_v1 (stride=1, groups=1, dilation=1, no downsample).

    BatchNorm runs in inference mode (folded running statistics).
    """
    x = jnp.transpose(x_nchw, (0, 2, 3, 1)).astype(jnp.float32)  # NCHW -> NHWC
    N, H, W, Cin = x.shape
    w1, w2, w3 = params["w1"], params["w2"], params["w3"]
    Cneck, Cout = w1.shape[1], w3.shape[1]
    assert Cin == Cout, "no-downsample residual requires in_planes == out_planes"

    s1, b1 = _bn_fold(*params["bn1"], eps)
    s2, b2 = _bn_fold(*params["bn2"], eps)
    s3, b3 = _bn_fold(*params["bn3"], eps)

    # Fold BN scale into conv weights -> kernel epilogue is "+ bias" only.
    w1f = w1 * s1[None, :]
    w2f = w2 * s2[None, None, None, :]
    w3f = w3 * s3[None, :]

    # Zero-pad channel dims to multiples of the 128-lane width so all matmul
    # operands / output stores are full-lane.  Zero channels are inert.
    Cp = _round_up(Cout, LANE)
    Cn = _round_up(Cneck, LANE)

    xp = jnp.pad(x, ((0, 0), (0, 0), (0, 0), (0, Cp - Cin))).astype(COMPUTE_DTYPE)
    w1p = jnp.pad(w1f, ((0, Cp - Cin), (0, Cn - Cneck))).astype(COMPUTE_DTYPE)
    w2p = jnp.pad(w2f, ((0, 0), (0, 0), (0, Cn - Cneck),
                        (0, Cn - Cneck))).astype(COMPUTE_DTYPE)
    w3p = jnp.pad(w3f, ((0, Cn - Cneck), (0, Cp - Cout))).astype(COMPUTE_DTYPE)
    b1p = jnp.pad(b1, (0, Cn - Cneck)).reshape(1, Cn).astype(jnp.float32)
    b2p = jnp.pad(b2, (0, Cn - Cneck)).reshape(1, Cn).astype(jnp.float32)
    b3p = jnp.pad(b3, (0, Cp - Cout)).reshape(1, Cp).astype(jnp.float32)

    kernel = functools.partial(_bottleneck_kernel, H=H, W=W)
    # TODO(synk): for very large spatial sizes add an H row-strip grid axis
    #             with a 1-row halo; per-image tiles are ample at ResNet sizes
    #             (<= a few MiB per grid step, well under all VMEM budgets).
    out = pl.pallas_call(
        kernel,
        out_shape=jax.ShapeDtypeStruct((N, H, W, Cp), jnp.float32),
        grid_spec=pltpu.PrefetchScalarGridSpec(
            num_scalar_prefetch=0,
            grid=(N,),
            in_specs=[
                pl.BlockSpec((1, H, W, Cp), lambda n: (n, 0, 0, 0)),   # x
                pl.BlockSpec((Cp, Cn), lambda n: (0, 0)),              # w1
                pl.BlockSpec((1, Cn), lambda n: (0, 0)),               # b1
                pl.BlockSpec((3, 3, Cn, Cn), lambda n: (0, 0, 0, 0)),  # w2
                pl.BlockSpec((1, Cn), lambda n: (0, 0)),               # b2
                pl.BlockSpec((Cn, Cp), lambda n: (0, 0)),              # w3
                pl.BlockSpec((1, Cp), lambda n: (0, 0)),               # b3
            ],
            out_specs=pl.BlockSpec((1, H, W, Cp), lambda n: (n, 0, 0, 0)),
            scratch_shapes=[
                pltpu.VMEM((H + 2, W + 2, Cn), COMPUTE_DTYPE),  # conv1 + halo
                pltpu.VMEM((H * W, Cn), jnp.float32),           # 3x3 accumulator
            ],
        ),
        compiler_params=pltpu.CompilerParams(
            dimension_semantics=("parallel",),
            vmem_limit_bytes=48 * 1024 * 1024,
        ),
    )(xp, w1p, b1p, w2p, b2p, w3p, b3p)

    out = out[..., :Cout]                                  # drop channel padding
    return jnp.transpose(out, (0, 3, 1, 2))                # NHWC -> NCHW


# ---------------------------------------------------------------------------
# Pure-JAX reference (f32 end-to-end) for a sanity check
# ---------------------------------------------------------------------------

def bottleneck_v1_reference(x_nchw, params, eps=1e-5):
    x = jnp.transpose(x_nchw, (0, 2, 3, 1)).astype(jnp.float32)

    def bn(y, g, b, m, v):
        return (y - m) * jax.lax.rsqrt(v + eps) * g + b

    h = jnp.einsum("nhwc,cd->nhwd", x, params["w1"])
    h = jax.nn.relu(bn(h, *params["bn1"]))
    h = jax.lax.conv_general_dilated(
        h, params["w2"], window_strides=(1, 1), padding="SAME",
        dimension_numbers=("NHWC", "HWIO", "NHWC"))
    h = jax.nn.relu(bn(h, *params["bn2"]))
    h = jnp.einsum("nhwc,cd->nhwd", h, params["w3"])
    h = bn(h, *params["bn3"])
    out = jax.nn.relu(h + x)
    return jnp.transpose(out, (0, 3, 1, 2))


# ---------------------------------------------------------------------------
# Deterministic parameter construction (matches Bottleneck.__init__ shapes)
# ---------------------------------------------------------------------------

def make_params(key, in_planes, out_planes, groups=1, planes_per_group=64):
    neck = int(out_planes / 4 * (planes_per_group / 64.0)) * groups
    ks = jax.random.split(key, 12)

    def bn_params(k0, k1, k2, k3, c):
        gamma = 1.0 + 0.1 * jax.random.normal(k0, (c,), jnp.float32)
        beta = 0.1 * jax.random.normal(k1, (c,), jnp.float32)
        mean = 0.1 * jax.random.normal(k2, (c,), jnp.float32)
        var = jnp.abs(jax.random.normal(k3, (c,), jnp.float32)) + 0.5
        return (gamma, beta, mean, var)

    params = {
        # conv weights stored matmul-ready: (Cin, Cout) for 1x1, HWIO for 3x3
        "w1": 0.3 * jax.random.normal(ks[0], (in_planes, neck), jnp.float32),
        "w2": 0.3 * jax.random.normal(ks[1], (3, 3, neck, neck), jnp.float32),
        "w3": 0.3 * jax.random.normal(ks[2], (neck, out_planes), jnp.float32),
        "bn1": bn_params(ks[3], ks[4], ks[5], ks[6], neck),
        "bn2": bn_params(ks[7], ks[8], ks[9], ks[10], neck),
        "bn3": bn_params(*jax.random.split(ks[11], 4), out_planes),
    }
    return params


if __name__ == "__main__":
    key = jax.random.PRNGKey(0)
    k_x, k_p = jax.random.split(key)

    # Bottleneck(in_planes=16, out_planes=16) -> neck_planes=4, no downsample.
    N, C, H, W = 2, 16, 16, 16
    x = jax.random.normal(k_x, (N, C, H, W), jnp.float32)
    params = make_params(k_p, in_planes=C, out_planes=C)

    out = jax.block_until_ready(bottleneck_v1(x, params))
    ref = jax.block_until_ready(bottleneck_v1_reference(x, params))

    assert out.shape == (N, C, H, W), out.shape
    # bf16 MXU path vs f32 reference -> slightly relaxed tolerance.
    assert jnp.allclose(out, ref, rtol=5e-2, atol=5e-2), (
        float(jnp.max(jnp.abs(out - ref))))

    print("KERNEL_OK")
</pallas_src>

<mosaic_0001>
module attributes {stable_mosaic.version = 11 : i64} {
  func.func @_bottleneck_kernel(%arg0: i32, %arg1: memref<1x16x16x128xbf16, #tpu.memory_space<vmem>>, %arg2: memref<128x128xbf16, #tpu.memory_space<vmem>>, %arg3: memref<1x128xf32, #tpu.memory_space<vmem>>, %arg4: memref<3x3x128x128xbf16, #tpu.memory_space<vmem>>, %arg5: memref<1x128xf32, #tpu.memory_space<vmem>>, %arg6: memref<128x128xbf16, #tpu.memory_space<vmem>>, %arg7: memref<1x128xf32, #tpu.memory_space<vmem>>, %arg8: memref<1x16x16x128xf32, #tpu.memory_space<vmem>>, %arg9: memref<18x18x128xbf16, #tpu.memory_space<vmem>>, %arg10: memref<256x128xf32, #tpu.memory_space<vmem>>) attributes {dimension_semantics = [#tpu.dimension_semantics<parallel>], iteration_bounds = array<i64: 2>, scalar_prefetch = 0 : i64, scratch_operands = 2 : i64, tpu.core_type = #tpu.core_type<tc>, window_params = [{transform_indices = @transform_0, window_bounds = array<i64: 1, 16, 16, 128>}, {pipeline_mode = #tpu.pipeline_mode<synchronous>, transform_indices = @transform_1, window_bounds = array<i64: 128, 128>}, {pipeline_mode = #tpu.pipeline_mode<synchronous>, transform_indices = @transform_2, window_bounds = array<i64: 1, 128>}, {pipeline_mode = #tpu.pipeline_mode<synchronous>, transform_indices = @transform_3, window_bounds = array<i64: 3, 3, 128, 128>}, {pipeline_mode = #tpu.pipeline_mode<synchronous>, transform_indices = @transform_4, window_bounds = array<i64: 1, 128>}, {pipeline_mode = #tpu.pipeline_mode<synchronous>, transform_indices = @transform_5, window_bounds = array<i64: 128, 128>}, {pipeline_mode = #tpu.pipeline_mode<synchronous>, transform_indices = @transform_6, window_bounds = array<i64: 1, 128>}, {transform_indices = @transform_7, window_bounds = array<i64: 1, 16, 16, 128>}]} {
    %c0 = arith.constant 0 : index
    %c0_0 = arith.constant 0 : index
    %c0_1 = arith.constant 0 : index
    %c0_2 = arith.constant 0 : index
    %0 = vector.load %arg1[%c0, %c0_0, %c0_1, %c0_2] : memref<1x16x16x128xbf16, #tpu.memory_space<vmem>>, vector<1x16x16x128xbf16>
    %1 = vector.shape_cast %0 : vector<1x16x16x128xbf16> to vector<16x16x128xbf16>
    %2 = vector.shape_cast %1 : vector<16x16x128xbf16> to vector<256x128xbf16>
    %c0_3 = arith.constant 0 : index
    %c0_4 = arith.constant 0 : index
    %3 = vector.load %arg2[%c0_3, %c0_4] : memref<128x128xbf16, #tpu.memory_space<vmem>>, vector<128x128xbf16>
    %cst = arith.constant dense<0.000000e+00> : vector<256x128xf32>
    %4 = tpu.matmul %2, %3, %cst {dimension_numbers = #tpu.dot_dimension_numbers<[1], [0], [0], [1], [0, 0, 1, 1], [], []>} : vector<256x128xbf16>, vector<128x128xbf16>, vector<256x128xf32> -> vector<256x128xf32>
    %c0_5 = arith.constant 0 : index
    %c0_6 = arith.constant 0 : index
    %5 = vector.load %arg3[%c0_5, %c0_6] : memref<1x128xf32, #tpu.memory_space<vmem>>, vector<1x128xf32>
    %6 = vector.broadcast %5 : vector<1x128xf32> to vector<256x128xf32>
    %7 = arith.addf %4, %6 : vector<256x128xf32>
    %cst_7 = arith.constant 0.000000e+00 : f32
    %8 = vector.broadcast %cst_7 : f32 to vector<256x128xf32>
    %9 = arith.maximumf %7, %8 : vector<256x128xf32>
    %cst_8 = arith.constant 0.000000e+00 : bf16
    %10 = vector.broadcast %cst_8 : bf16 to vector<18x18x128xbf16>
    %c0_9 = arith.constant 0 : index
    %c0_10 = arith.constant 0 : index
    %c0_11 = arith.constant 0 : index
    %11 = vector.load %arg9[%c0_9, %c0_10, %c0_11] : memref<18x18x128xbf16, #tpu.memory_space<vmem>>, vector<18x18x128xbf16>
    tpu.vector_store %arg9[%c0_9, %c0_10, %c0_11], %10 {strides = array<i32>} : memref<18x18x128xbf16, #tpu.memory_space<vmem>>, vector<18x18x128xbf16>,
    %12 = vector.shape_cast %9 : vector<256x128xf32> to vector<16x16x128xf32>
    %13 = arith.truncf %12 : vector<16x16x128xf32> to vector<16x16x128xbf16>
    %c1 = arith.constant 1 : index
    %c1_12 = arith.constant 1 : index
    %c0_13 = arith.constant 0 : index
    %14 = vector.load %arg9[%c1, %c1_12, %c0_13] : memref<18x18x128xbf16, #tpu.memory_space<vmem>>, vector<16x16x128xbf16>
    tpu.vector_store %arg9[%c1, %c1_12, %c0_13], %13 {strides = array<i32>} : memref<18x18x128xbf16, #tpu.memory_space<vmem>>, vector<16x16x128xbf16>,
    %c0_14 = arith.constant 0 : index
    %c0_15 = arith.constant 0 : index
    %c0_16 = arith.constant 0 : index
    %15 = vector.load %arg9[%c0_14, %c0_15, %c0_16] : memref<18x18x128xbf16, #tpu.memory_space<vmem>>, vector<16x16x128xbf16>
    %16 = vector.shape_cast %15 : vector<16x16x128xbf16> to vector<256x128xbf16>
    %c0_17 = arith.constant 0 : index
    %c0_18 = arith.constant 0 : index
    %c0_19 = arith.constant 0 : index
    %c0_20 = arith.constant 0 : index
    %17 = vector.load %arg4[%c0_17, %c0_18, %c0_19, %c0_20] : memref<3x3x128x128xbf16, #tpu.memory_space<vmem>>, vector<1x1x128x128xbf16>
    %18 = vector.shape_cast %17 : vector<1x1x128x128xbf16> to vector<128x128xbf16>
    %cst_21 = arith.constant dense<0.000000e+00> : vector<256x128xf32>
    %19 = tpu.matmul %16, %18, %cst_21 {dimension_numbers = #tpu.dot_dimension_numbers<[1], [0], [0], [1], [0, 0, 1, 1], [], []>} : vector<256x128xbf16>, vector<128x128xbf16>, vector<256x128xf32> -> vector<256x128xf32>
    %c0_22 = arith.constant 0 : index
    %c0_23 = arith.constant 0 : index
    %20 = vector.load %arg10[%c0_22, %c0_23] : memref<256x128xf32, #tpu.memory_space<vmem>>, vector<256x128xf32>
    tpu.vector_store %arg10[%c0_22, %c0_23], %19 {strides = array<i32>} : memref<256x128xf32, #tpu.memory_space<vmem>>, vector<256x128xf32>,
    %c0_24 = arith.constant 0 : index
    %c1_25 = arith.constant 1 : index
    %c0_26 = arith.constant 0 : index
    %21 = vector.load %arg9[%c0_24, %c1_25, %c0_26] : memref<18x18x128xbf16, #tpu.memory_space<vmem>>, vector<16x16x128xbf16>
    %22 = vector.shape_cast %21 : vector<16x16x128xbf16> to vector<256x128xbf16>
    %c0_27 = arith.constant 0 : index
    %c1_28 = arith.constant 1 : index
    %c0_29 = arith.constant 0 : index
    %c0_30 = arith.constant 0 : index
    %23 = vector.load %arg4[%c0_27, %c1_28, %c0_29, %c0_30] : memref<3x3x128x128xbf16, #tpu.memory_space<vmem>>, vector<1x1x128x128xbf16>
    %24 = vector.shape_cast %23 : vector<1x1x128x128xbf16> to vector<128x128xbf16>
    %cst_31 = arith.constant dense<0.000000e+00> : vector<256x128xf32>
    %25 = tpu.matmul %22, %24, %cst_31 {dimension_numbers = #tpu.dot_dimension_numbers<[1], [0], [0], [1], [0, 0, 1, 1], [], []>} : vector<256x128xbf16>, vector<128x128xbf16>, vector<256x128xf32> -> vector<256x128xf32>
    %c0_32 = arith.constant 0 : index
    %c0_33 = arith.constant 0 : index
    %26 = vector.load %arg10[%c0_32, %c0_33] : memref<256x128xf32, #tpu.memory_space<vmem>>, vector<256x128xf32>
    %27 = arith.addf %26, %25 : vector<256x128xf32>
    %c0_34 = arith.constant 0 : index
    %c0_35 = arith.constant 0 : index
    %28 = vector.load %arg10[%c0_34, %c0_35] : memref<256x128xf32, #tpu.memory_space<vmem>>, vector<256x128xf32>
    tpu.vector_store %arg10[%c0_34, %c0_35], %27 {strides = array<i32>} : memref<256x128xf32, #tpu.memory_space<vmem>>, vector<256x128xf32>,
    %c0_36 = arith.constant 0 : index
    %c2 = arith.constant 2 : index
    %c0_37 = arith.constant 0 : index
    %29 = vector.load %arg9[%c0_36, %c2, %c0_37] : memref<18x18x128xbf16, #tpu.memory_space<vmem>>, vector<16x16x128xbf16>
    %30 = vector.shape_cast %29 : vector<16x16x128xbf16> to vector<256x128xbf16>
    %c0_38 = arith.constant 0 : index
    %c2_39 = arith.constant 2 : index
    %c0_40 = arith.constant 0 : index
    %c0_41 = arith.constant 0 : index
    %31 = vector.load %arg4[%c0_38, %c2_39, %c0_40, %c0_41] : memref<3x3x128x128xbf16, #tpu.memory_space<vmem>>, vector<1x1x128x128xbf16>
    %32 = vector.shape_cast %31 : vector<1x1x128x128xbf16> to vector<128x128xbf16>
    %cst_42 = arith.constant dense<0.000000e+00> : vector<256x128xf32>
    %33 = tpu.matmul %30, %32, %cst_42 {dimension_numbers = #tpu.dot_dimension_numbers<[1], [0], [0], [1], [0, 0, 1, 1], [], []>} : vector<256x128xbf16>, vector<128x128xbf16>, vector<256x128xf32> -> vector<256x128xf32>
    %c0_43 = arith.constant 0 : index
    %c0_44 = arith.constant 0 : index
    %34 = vector.load %arg10[%c0_43, %c0_44] : memref<256x128xf32, #tpu.memory_space<vmem>>, vector<256x128xf32>
    %35 = arith.addf %34, %33 : vector<256x128xf32>
    %c0_45 = arith.constant 0 : index
    %c0_46 = arith.constant 0 : index
    %36 = vector.load %arg10[%c0_45, %c0_46] : memref<256x128xf32, #tpu.memory_space<vmem>>, vector<256x128xf32>
    tpu.vector_store %arg10[%c0_45, %c0_46], %35 {strides = array<i32>} : memref<256x128xf32, #tpu.memory_space<vmem>>, vector<256x128xf32>,
    %c1_47 = arith.constant 1 : index
    %c0_48 = arith.constant 0 : index
    %c0_49 = arith.constant 0 : index
    %37 = vector.load %arg9[%c1_47, %c0_48, %c0_49] : memref<18x18x128xbf16, #tpu.memory_space<vmem>>, vector<16x16x128xbf16>
    %38 = vector.shape_cast %37 : vector<16x16x128xbf16> to vector<256x128xbf16>
    %c1_50 = arith.constant 1 : index
    %c0_51 = arith.constant 0 : index
    %c0_52 = arith.constant 0 : index
    %c0_53 = arith.constant 0 : index
    %39 = vector.load %arg4[%c1_50, %c0_51, %c0_52, %c0_53] : memref<3x3x128x128xbf16, #tpu.memory_space<vmem>>, vector<1x1x128x128xbf16>
    %40 = vector.shape_cast %39 : vector<1x1x128x128xbf16> to vector<128x128xbf16>
    %cst_54 = arith.constant dense<0.000000e+00> : vector<256x128xf32>
    %41 = tpu.matmul %38, %40, %cst_54 {dimension_numbers = #tpu.dot_dimension_numbers<[1], [0], [0], [1], [0, 0, 1, 1], [], []>} : vector<256x128xbf16>, vector<128x128xbf16>, vector<256x128xf32> -> vector<256x128xf32>
    %c0_55 = arith.constant 0 : index
    %c0_56 = arith.constant 0 : index
    %42 = vector.load %arg10[%c0_55, %c0_56] : memref<256x128xf32, #tpu.memory_space<vmem>>, vector<256x128xf32>
    %43 = arith.addf %42, %41 : vector<256x128xf32>
    %c0_57 = arith.constant 0 : index
    %c0_58 = arith.constant 0 : index
    %44 = vector.load %arg10[%c0_57, %c0_58] : memref<256x128xf32, #tpu.memory_space<vmem>>, vector<256x128xf32>
    tpu.vector_store %arg10[%c0_57, %c0_58], %43 {strides = array<i32>} : memref<256x128xf32, #tpu.memory_space<vmem>>, vector<256x128xf32>,
    %c1_59 = arith.constant 1 : index
    %c1_60 = arith.constant 1 : index
    %c0_61 = arith.constant 0 : index
    %45 = vector.load %arg9[%c1_59, %c1_60, %c0_61] : memref<18x18x128xbf16, #tpu.memory_space<vmem>>, vector<16x16x128xbf16>
    %46 = vector.shape_cast %45 : vector<16x16x128xbf16> to vector<256x128xbf16>
    %c1_62 = arith.constant 1 : index
    %c1_63 = arith.constant 1 : index
    %c0_64 = arith.constant 0 : index
    %c0_65 = arith.constant 0 : index
    %47 = vector.load %arg4[%c1_62, %c1_63, %c0_64, %c0_65] : memref<3x3x128x128xbf16, #tpu.memory_space<vmem>>, vector<1x1x128x128xbf16>
    %48 = vector.shape_cast %47 : vector<1x1x128x128xbf16> to vector<128x128xbf16>
    %cst_66 = arith.constant dense<0.000000e+00> : vector<256x128xf32>
    %49 = tpu.matmul %46, %48, %cst_66 {dimension_numbers = #tpu.dot_dimension_numbers<[1], [0], [0], [1], [0, 0, 1, 1], [], []>} : vector<256x128xbf16>, vector<128x128xbf16>, vector<256x128xf32> -> vector<256x128xf32>
    %c0_67 = arith.constant 0 : index
    %c0_68 = arith.constant 0 : index
    %50 = vector.load %arg10[%c0_67, %c0_68] : memref<256x128xf32, #tpu.memory_space<vmem>>, vector<256x128xf32>
    %51 = arith.addf %50, %49 : vector<256x128xf32>
    %c0_69 = arith.constant 0 : index
    %c0_70 = arith.constant 0 : index
    %52 = vector.load %arg10[%c0_69, %c0_70] : memref<256x128xf32, #tpu.memory_space<vmem>>, vector<256x128xf32>
    tpu.vector_store %arg10[%c0_69, %c0_70], %51 {strides = array<i32>} : memref<256x128xf32, #tpu.memory_space<vmem>>, vector<256x128xf32>,
    %c1_71 = arith.constant 1 : index
    %c2_72 = arith.constant 2 : index
    %c0_73 = arith.constant 0 : index
    %53 = vector.load %arg9[%c1_71, %c2_72, %c0_73] : memref<18x18x128xbf16, #tpu.memory_space<vmem>>, vector<16x16x128xbf16>
    %54 = vector.shape_cast %53 : vector<16x16x128xbf16> to vector<256x128xbf16>
    %c1_74 = arith.constant 1 : index
    %c2_75 = arith.constant 2 : index
    %c0_76 = arith.constant 0 : index
    %c0_77 = arith.constant 0 : index
    %55 = vector.load %arg4[%c1_74, %c2_75, %c0_76, %c0_77] : memref<3x3x128x128xbf16, #tpu.memory_space<vmem>>, vector<1x1x128x128xbf16>
    %56 = vector.shape_cast %55 : vector<1x1x128x128xbf16> to vector<128x128xbf16>
    %cst_78 = arith.constant dense<0.000000e+00> : vector<256x128xf32>
    %57 = tpu.matmul %54, %56, %cst_78 {dimension_numbers = #tpu.dot_dimension_numbers<[1], [0], [0], [1], [0, 0, 1, 1], [], []>} : vector<256x128xbf16>, vector<128x128xbf16>, vector<256x128xf32> -> vector<256x128xf32>
    %c0_79 = arith.constant 0 : index
    %c0_80 = arith.constant 0 : index
    %58 = vector.load %arg10[%c0_79, %c0_80] : memref<256x128xf32, #tpu.memory_space<vmem>>, vector<256x128xf32>
    %59 = arith.addf %58, %57 : vector<256x128xf32>
    %c0_81 = arith.constant 0 : index
    %c0_82 = arith.constant 0 : index
    %60 = vector.load %arg10[%c0_81, %c0_82] : memref<256x128xf32, #tpu.memory_space<vmem>>, vector<256x128xf32>
    tpu.vector_store %arg10[%c0_81, %c0_82], %59 {strides = array<i32>} : memref<256x128xf32, #tpu.memory_space<vmem>>, vector<256x128xf32>,
    %c2_83 = arith.constant 2 : index
    %c0_84 = arith.constant 0 : index
    %c0_85 = arith.constant 0 : index
    %61 = vector.load %arg9[%c2_83, %c0_84, %c0_85] : memref<18x18x128xbf16, #tpu.memory_space<vmem>>, vector<16x16x128xbf16>
    %62 = vector.shape_cast %61 : vector<16x16x128xbf16> to vector<256x128xbf16>
    %c2_86 = arith.constant 2 : index
    %c0_87 = arith.constant 0 : index
    %c0_88 = arith.constant 0 : index
    %c0_89 = arith.constant 0 : index
    %63 = vector.load %arg4[%c2_86, %c0_87, %c0_88, %c0_89] : memref<3x3x128x128xbf16, #tpu.memory_space<vmem>>, vector<1x1x128x128xbf16>
    %64 = vector.shape_cast %63 : vector<1x1x128x128xbf16> to vector<128x128xbf16>
    %cst_90 = arith.constant dense<0.000000e+00> : vector<256x128xf32>
    %65 = tpu.matmul %62, %64, %cst_90 {dimension_numbers = #tpu.dot_dimension_numbers<[1], [0], [0], [1], [0, 0, 1, 1], [], []>} : vector<256x128xbf16>, vector<128x128xbf16>, vector<256x128xf32> -> vector<256x128xf32>
    %c0_91 = arith.constant 0 : index
    %c0_92 = arith.constant 0 : index
    %66 = vector.load %arg10[%c0_91, %c0_92] : memref<256x128xf32, #tpu.memory_space<vmem>>, vector<256x128xf32>
    %67 = arith.addf %66, %65 : vector<256x128xf32>
    %c0_93 = arith.constant 0 : index
    %c0_94 = arith.constant 0 : index
    %68 = vector.load %arg10[%c0_93, %c0_94] : memref<256x128xf32, #tpu.memory_space<vmem>>, vector<256x128xf32>
    tpu.vector_store %arg10[%c0_93, %c0_94], %67 {strides = array<i32>} : memref<256x128xf32, #tpu.memory_space<vmem>>, vector<256x128xf32>,
    %c2_95 = arith.constant 2 : index
    %c1_96 = arith.constant 1 : index
    %c0_97 = arith.constant 0 : index
    %69 = vector.load %arg9[%c2_95, %c1_96, %c0_97] : memref<18x18x128xbf16, #tpu.memory_space<vmem>>, vector<16x16x128xbf16>
    %70 = vector.shape_cast %69 : vector<16x16x128xbf16> to vector<256x128xbf16>
    %c2_98 = arith.constant 2 : index
    %c1_99 = arith.constant 1 : index
    %c0_100 = arith.constant 0 : index
    %c0_101 = arith.constant 0 : index
    %71 = vector.load %arg4[%c2_98, %c1_99, %c0_100, %c0_101] : memref<3x3x128x128xbf16, #tpu.memory_space<vmem>>, vector<1x1x128x128xbf16>
    %72 = vector.shape_cast %71 : vector<1x1x128x128xbf16> to vector<128x128xbf16>
    %cst_102 = arith.constant dense<0.000000e+00> : vector<256x128xf32>
    %73 = tpu.matmul %70, %72, %cst_102 {dimension_numbers = #tpu.dot_dimension_numbers<[1], [0], [0], [1], [0, 0, 1, 1], [], []>} : vector<256x128xbf16>, vector<128x128xbf16>, vector<256x128xf32> -> vector<256x128xf32>
    %c0_103 = arith.constant 0 : index
    %c0_104 = arith.constant 0 : index
    %74 = vector.load %arg10[%c0_103, %c0_104] : memref<256x128xf32, #tpu.memory_space<vmem>>, vector<256x128xf32>
    %75 = arith.addf %74, %73 : vector<256x128xf32>
    %c0_105 = arith.constant 0 : index
    %c0_106 = arith.constant 0 : index
    %76 = vector.load %arg10[%c0_105, %c0_106] : memref<256x128xf32, #tpu.memory_space<vmem>>, vector<256x128xf32>
    tpu.vector_store %arg10[%c0_105, %c0_106], %75 {strides = array<i32>} : memref<256x128xf32, #tpu.memory_space<vmem>>, vector<256x128xf32>,
    %c2_107 = arith.constant 2 : index
    %c2_108 = arith.constant 2 : index
    %c0_109 = arith.constant 0 : index
    %77 = vector.load %arg9[%c2_107, %c2_108, %c0_109] : memref<18x18x128xbf16, #tpu.memory_space<vmem>>, vector<16x16x128xbf16>
    %78 = vector.shape_cast %77 : vector<16x16x128xbf16> to vector<256x128xbf16>
    %c2_110 = arith.constant 2 : index
    %c2_111 = arith.constant 2 : index
    %c0_112 = arith.constant 0 : index
    %c0_113 = arith.constant 0 : index
    %79 = vector.load %arg4[%c2_110, %c2_111, %c0_112, %c0_113] : memref<3x3x128x128xbf16, #tpu.memory_space<vmem>>, vector<1x1x128x128xbf16>
    %80 = vector.shape_cast %79 : vector<1x1x128x128xbf16> to vector<128x128xbf16>
    %cst_114 = arith.constant dense<0.000000e+00> : vector<256x128xf32>
    %81 = tpu.matmul %78, %80, %cst_114 {dimension_numbers = #tpu.dot_dimension_numbers<[1], [0], [0], [1], [0, 0, 1, 1], [], []>} : vector<256x128xbf16>, vector<128x128xbf16>, vector<256x128xf32> -> vector<256x128xf32>
    %c0_115 = arith.constant 0 : index
    %c0_116 = arith.constant 0 : index
    %82 = vector.load %arg10[%c0_115, %c0_116] : memref<256x128xf32, #tpu.memory_space<vmem>>, vector<256x128xf32>
    %83 = arith.addf %82, %81 : vector<256x128xf32>
    %c0_117 = arith.constant 0 : index
    %c0_118 = arith.constant 0 : index
    %84 = vector.load %arg10[%c0_117, %c0_118] : memref<256x128xf32, #tpu.memory_space<vmem>>, vector<256x128xf32>
    tpu.vector_store %arg10[%c0_117, %c0_118], %83 {strides = array<i32>} : memref<256x128xf32, #tpu.memory_space<vmem>>, vector<256x128xf32>,
    %c0_119 = arith.constant 0 : index
    %c0_120 = arith.constant 0 : index
    %85 = vector.load %arg10[%c0_119, %c0_120] : memref<256x128xf32, #tpu.memory_space<vmem>>, vector<256x128xf32>
    %c0_121 = arith.constant 0 : index
    %c0_122 = arith.constant 0 : index
    %86 = vector.load %arg5[%c0_121, %c0_122] : memref<1x128xf32, #tpu.memory_space<vmem>>, vector<1x128xf32>
    %87 = vector.broadcast %86 : vector<1x128xf32> to vector<256x128xf32>
    %88 = arith.addf %85, %87 : vector<256x128xf32>
    %cst_123 = arith.constant 0.000000e+00 : f32
    %89 = vector.broadcast %cst_123 : f32 to vector<256x128xf32>
    %90 = arith.maximumf %88, %89 : vector<256x128xf32>
    %91 = arith.truncf %90 : vector<256x128xf32> to vector<256x128xbf16>
    %c0_124 = arith.constant 0 : index
    %c0_125 = arith.constant 0 : index
    %92 = vector.load %arg6[%c0_124, %c0_125] : memref<128x128xbf16, #tpu.memory_space<vmem>>, vector<128x128xbf16>
    %cst_126 = arith.constant dense<0.000000e+00> : vector<256x128xf32>
    %93 = tpu.matmul %91, %92, %cst_126 {dimension_numbers = #tpu.dot_dimension_numbers<[1], [0], [0], [1], [0, 0, 1, 1], [], []>} : vector<256x128xbf16>, vector<128x128xbf16>, vector<256x128xf32> -> vector<256x128xf32>
    %c0_127 = arith.constant 0 : index
    %c0_128 = arith.constant 0 : index
    %94 = vector.load %arg7[%c0_127, %c0_128] : memref<1x128xf32, #tpu.memory_space<vmem>>, vector<1x128xf32>
    %95 = vector.broadcast %94 : vector<1x128xf32> to vector<256x128xf32>
    %96 = arith.addf %93, %95 : vector<256x128xf32>
    %97 = arith.extf %2 : vector<256x128xbf16> to vector<256x128xf32>
    %98 = arith.addf %96, %97 : vector<256x128xf32>
    %cst_129 = arith.constant 0.000000e+00 : f32
    %99 = vector.broadcast %cst_129 : f32 to vector<256x128xf32>
    %100 = arith.maximumf %98, %99 : vector<256x128xf32>
    %101 = vector.shape_cast %100 : vector<256x128xf32> to vector<1x16x16x128xf32>
    %c0_130 = arith.constant 0 : index
    %c0_131 = arith.constant 0 : index
    %c0_132 = arith.constant 0 : index
    %c0_133 = arith.constant 0 : index
    %102 = vector.load %arg8[%c0_130, %c0_131, %c0_132, %c0_133] : memref<1x16x16x128xf32, #tpu.memory_space<vmem>>, vector<1x16x16x128xf32>
    tpu.vector_store %arg8[%c0_130, %c0_131, %c0_132, %c0_133], %101 {strides = array<i32>} : memref<1x16x16x128xf32, #tpu.memory_space<vmem>>, vector<1x16x16x128xf32>,
    return
  }
  func.func @transform_0(%arg0: i32) -> (i32, i32, i32, i32) {
    %c0_i32 = arith.constant 0 : i32
    %c0_i32_0 = arith.constant 0 : i32
    %c0_i32_1 = arith.constant 0 : i32
    %c0_i32_2 = arith.constant 0 : i32
    return %arg0, %c0_i32, %c0_i32_0, %c0_i32_1 : i32, i32, i32, i32
  }
  func.func @transform_1(%arg0: i32) -> (i32, i32) {
    %c0_i32 = arith.constant 0 : i32
    %c0_i32_0 = arith.constant 0 : i32
    %c0_i32_1 = arith.constant 0 : i32
    return %c0_i32, %c0_i32_0 : i32, i32
  }
  func.func @transform_2(%arg0: i32) -> (i32, i32) {
    %c0_i32 = arith.constant 0 : i32
    %c0_i32_0 = arith.constant 0 : i32
    %c0_i32_1 = arith.constant 0 : i32
    return %c0_i32, %c0_i32_0 : i32, i32
  }
  func.func @transform_3(%arg0: i32) -> (i32, i32, i32, i32) {
    %c0_i32 = arith.constant 0 : i32
    %c0_i32_0 = arith.constant 0 : i32
    %c0_i32_1 = arith.constant 0 : i32
    %c0_i32_2 = arith.constant 0 : i32
    %c0_i32_3 = arith.constant 0 : i32
    return %c0_i32, %c0_i32_0, %c0_i32_1, %c0_i32_2 : i32, i32, i32, i32
  }
  func.func @transform_4(%arg0: i32) -> (i32, i32) {
    %c0_i32 = arith.constant 0 : i32
    %c0_i32_0 = arith.constant 0 : i32
    %c0_i32_1 = arith.constant 0 : i32
    return %c0_i32, %c0_i32_0 : i32, i32
  }
  func.func @transform_5(%arg0: i32) -> (i32, i32) {
    %c0_i32 = arith.constant 0 : i32
    %c0_i32_0 = arith.constant 0 : i32
    %c0_i32_1 = arith.constant 0 : i32
    return %c0_i32, %c0_i32_0 : i32, i32
  }
  func.func @transform_6(%arg0: i32) -> (i32, i32) {
    %c0_i32 = arith.constant 0 : i32
    %c0_i32_0 = arith.constant 0 : i32
    %c0_i32_1 = arith.constant 0 : i32
    return %c0_i32, %c0_i32_0 : i32, i32
  }
  func.func @transform_7(%arg0: i32) -> (i32, i32, i32, i32) {
    %c0_i32 = arith.constant 0 : i32
    %c0_i32_0 = arith.constant 0 : i32
    %c0_i32_1 = arith.constant 0 : i32
    %c0_i32_2 = arith.constant 0 : i32
    return %arg0, %c0_i32, %c0_i32_0, %c0_i32_1 : i32, i32, i32, i32
  }
}

</mosaic_0001>

<llo_original>
// kernel: tpu_custom_call.1
$region0: #{tpu_custom_call.1}
  #allocation0 [shape = 'u32[]', space=smem, size = 0x4, offset = 0x4, fixed_abs, tag = 'smem constant byte address 0x4 - core index']
  #allocation1 [shape = 'u32[144,128]{1,0:T(1,128)}', space=vmem, size = 0x12000, scoped, tag = 'internal scratch']
  #allocation2 [shape = 'bf16[18,18,128]{2,1,0:T(8,128)(2,1)}', space=vmem, size = 0x1b000, scoped, tag = 'scratch operand']
  #allocation3 [shape = 'f32[256,128]{1,0:T(8,128)}', space=vmem, size = 0x20000, scoped, tag = 'scratch operand']
  %s0 = inlined_call_operand.hbm [shape: bf16[2,16,16,128], index: 0, kind: input, shape index: {}]
  %s1 = inlined_call_operand.hbm [shape: bf16[128,128], index: 1, kind: input, shape index: {}]
  %s2 = inlined_call_operand.vmem [shape: f32[1,128], index: 2, kind: input, shape index: {}]
  %s3 = inlined_call_operand.hbm [shape: bf16[3,3,128,128], index: 3, kind: input, shape index: {}]
  %s4 = inlined_call_operand.vmem [shape: f32[1,128], index: 4, kind: input, shape index: {}]
  %s5 = inlined_call_operand.hbm [shape: bf16[128,128], index: 5, kind: input, shape index: {}]
  %s6 = inlined_call_operand.vmem [shape: f32[1,128], index: 6, kind: input, shape index: {}]
  %s7 = inlined_call_operand.hbm [shape: f32[2,16,16,128], index: 7, kind: output, shape index: {}]
  %s8 = sld [smem:[#allocation0]]
  $region77: #{tpu_custom_call.1} parent=0
    _
  %s10 = ssub.s32 1, %s8
  %s11 = scalar_select 0, %s10, %s8
  $region1: #{tpu_custom_call.1} parent=0
    #allocation4 [shape = 'u8[131072]{0}', space=vmem, size = 0x20000, scoped, tag = 'input window, operand 0']
    #allocation5 [shape = 's32[2]{0}', space=sflag, size = 0x8, scoped, tag = 'scoped memory for tpu_custom_call.1']
    #allocation6 [shape = 's32[2]{0}', space=sflag, size = 0x8, scoped, tag = 'scoped memory for tpu_custom_call.1']
    #allocation7 [shape = 'u8[32768]{0}', space=vmem, size = 0x8000, scoped, tag = 'input window, operand 1, single buffered']
    #allocation8 [shape = 's32[1]{0}', space=sflag, size = 0x4, scoped, tag = 'scoped memory for tpu_custom_call.1']
    #allocation9 [shape = 'u8[294912]{0}', space=vmem, size = 0x48000, scoped, tag = 'input window, operand 3, single buffered']
    #allocation10 [shape = 'u8[32768]{0}', space=vmem, size = 0x8000, scoped, tag = 'input window, operand 5, single buffered']
    #allocation11 [shape = 's32[1]{0}', space=sflag, size = 0x4, scoped, tag = 'scoped memory for tpu_custom_call.1']
    #allocation12 [shape = 'u8[262144]{0}', space=vmem, size = 0x40000, scoped, tag = 'output window, operand 0']
    %12 = vsyncpa [#allocation5], 0
    %s13 = scalar_lea.sflag [#allocation5], 1
    %14 = vsyncpa %s13, 0
    %15 = vsyncpa [#allocation8], 0
    %16 = vsyncpa [#allocation11], 0
    %17 = vsyncpa [#allocation6], 0
    %s18 = scalar_lea.sflag [#allocation6], 1
    %19 = vsyncpa %s18, 0
    loop: start=0, step=1, limit=4
    $region2: #{tpu_custom_call.1} parent=1 // loop_pre_header
      _
    $region3: #{tpu_custom_call.1} parent=1 // loop_header
      %s21 = sphi 0, %s25
      %p22 = scmp.ge.s32.totalorder %s21, 4
      %s31 = sphi 0, %s33
      %s34 = sphi 0, %s31
      %s35 = sphi 0, %s34
      %s51 = sphi 0, %s35
      %s55 = sphi 0, %s55
      %s57 = sphi 0, %s55
      %s58 = sphi 0, %s57
      %s72 = sphi 0, %s58
      %s76 = sphi 0, %s76
      %s78 = sphi 0, %s76
      %s79 = sphi 0, %s78
      %s93 = sphi 0, %s79
      %s97 = sphi 0, %s97
      %s99 = sphi 0, %s97
      %s100 = sphi 0, %s99
      %s114 = sphi 0, %s100
      %s118 = sphi 0, %s118
      %s120 = sphi 0, %s118
      %s121 = sphi 0, %s120
      %s135 = sphi 0, %s121
      %s139 = sphi 0, %s139
      %s141 = sphi 0, %s139
      %s142 = sphi 0, %s141
      %s156 = sphi 0, %s142
      %s160 = sphi 0, %s160
      %s162 = sphi 0, %s160
      %s163 = sphi 0, %s162
      %s177 = sphi 0, %s163
      %s183 = sphi 0, %s185
      %s186 = sphi 0, %s183
      %s187 = sphi 0, %s186
      %s203 = sphi 0, %s187
    $region4: #{tpu_custom_call.1} parent=1 // loop_header_branch
      %24 = sbr.rel (%p22) target = $region8
    $region5: #{tpu_custom_call.1} parent=1 // loop_body
      %s26 = ssub.s32 %s21, 1
      %s27 = ssub.s32 %s21, 2
      %s28 = sadd.s32 %s21, 1
      %s29 = ssub.s32 %s21, %s28
      %p30 = scmp.eq.s32.totalorder %s29, 0
      %s32 = sadd.s32 %s31, 1
      %s33 = scalar_select %p30, %s31, %s32
      %p36 = pneg %p30
      %p37 = scmp.eq.s32.totalorder %s21, 1
      %p38 = por %p36, %p37
      %p39 = scmp.ne.s32.totalorder %s31, %s34
      %p40 = scmp.eq.s32.totalorder %s21, 0
      %p41 = por %p39, %p40
      %p42 = scmp.ne.s32.totalorder %s31, %s34
      %p43 = scmp.eq.s32.totalorder %s26, 1
      %p44 = por %p42, %p43
      %p45 = scmp.ne.s32.totalorder %s34, %s35
      %p46 = scmp.eq.s32.totalorder %s26, 0
      %p47 = por %p45, %p46
      %p48 = scmp.ne.s32.totalorder %s34, %s35
      %p49 = scmp.eq.s32.totalorder %s27, 1
      %p50 = por %p48, %p49
      %p52 = scmp.ne.s32.totalorder %s35, %s51
      %p53 = scmp.eq.s32.totalorder %s27, 0
      %p54 = por %p52, %p53
      %s56 = sadd.s32 %s55, 1
      %p59 = scmp.eq.s32.totalorder %s21, 1
      %p60 = scmp.ne.s32.totalorder %s55, %s57
      %p61 = scmp.eq.s32.totalorder %s21, 0
      %p62 = por %p60, %p61
      %p63 = scmp.ne.s32.totalorder %s55, %s57
      %p64 = scmp.eq.s32.totalorder %s26, 1
      %p65 = por %p63, %p64
      %p66 = scmp.ne.s32.totalorder %s57, %s58
      %p67 = scmp.eq.s32.totalorder %s26, 0
      %p68 = por %p66, %p67
      %p69 = scmp.ne.s32.totalorder %s57, %s58
      %p70 = scmp.eq.s32.totalorder %s27, 1
      %p71 = por %p69, %p70
      %p73 = scmp.ne.s32.totalorder %s58, %s72
      %p74 = scmp.eq.s32.totalorder %s27, 0
      %p75 = por %p73, %p74
      %s77 = sadd.s32 %s76, 1
      %p80 = scmp.eq.s32.totalorder %s21, 1
      %p81 = scmp.ne.s32.totalorder %s76, %s78
      %p82 = scmp.eq.s32.totalorder %s21, 0
      %p83 = por %p81, %p82
      %p84 = scmp.ne.s32.totalorder %s76, %s78
      %p85 = scmp.eq.s32.totalorder %s26, 1
      %p86 = por %p84, %p85
      %p87 = scmp.ne.s32.totalorder %s78, %s79
      %p88 = scmp.eq.s32.totalorder %s26, 0
      %p89 = por %p87, %p88
      %p90 = scmp.ne.s32.totalorder %s78, %s79
      %p91 = scmp.eq.s32.totalorder %s27, 1
      %p92 = por %p90, %p91
      %p94 = scmp.ne.s32.totalorder %s79, %s93
      %p95 = scmp.eq.s32.totalorder %s27, 0
      %p96 = por %p94, %p95
      %s98 = sadd.s32 %s97, 1
      %p101 = scmp.eq.s32.totalorder %s21, 1
      %p102 = scmp.ne.s32.totalorder %s97, %s99
      %p103 = scmp.eq.s32.totalorder %s21, 0
      %p104 = por %p102, %p103
      %p105 = scmp.ne.s32.totalorder %s97, %s99
      %p106 = scmp.eq.s32.totalorder %s26, 1
      %p107 = por %p105, %p106
      %p108 = scmp.ne.s32.totalorder %s99, %s100
      %p109 = scmp.eq.s32.totalorder %s26, 0
      %p110 = por %p108, %p109
      %p111 = scmp.ne.s32.totalorder %s99, %s100
      %p112 = scmp.eq.s32.totalorder %s27, 1
      %p113 = por %p111, %p112
      %p115 = scmp.ne.s32.totalorder %s100, %s114
      %p116 = scmp.eq.s32.totalorder %s27, 0
      %p117 = por %p115, %p116
      %s119 = sadd.s32 %s118, 1
      %p122 = scmp.eq.s32.totalorder %s21, 1
      %p123 = scmp.ne.s32.totalorder %s118, %s120
      %p124 = scmp.eq.s32.totalorder %s21, 0
      %p125 = por %p123, %p124
      %p126 = scmp.ne.s32.totalorder %s118, %s120
      %p127 = scmp.eq.s32.totalorder %s26, 1
      %p128 = por %p126, %p127
      %p129 = scmp.ne.s32.totalorder %s120, %s121
      %p130 = scmp.eq.s32.totalorder %s26, 0
      %p131 = por %p129, %p130
      %p132 = scmp.ne.s32.totalorder %s120, %s121
      %p133 = scmp.eq.s32.totalorder %s27, 1
      %p134 = por %p132, %p133
      %p136 = scmp.ne.s32.totalorder %s121, %s135
      %p137 = scmp.eq.s32.totalorder %s27, 0
      %p138 = por %p136, %p137
      %s140 = sadd.s32 %s139, 1
      %p143 = scmp.eq.s32.totalorder %s21, 1
      %p144 = scmp.ne.s32.totalorder %s139, %s141
      %p145 = scmp.eq.s32.totalorder %s21, 0
      %p146 = por %p144, %p145
      %p147 = scmp.ne.s32.totalorder %s139, %s141
      %p148 = scmp.eq.s32.totalorder %s26, 1
      %p149 = por %p147, %p148
      %p150 = scmp.ne.s32.totalorder %s141, %s142
      %p151 = scmp.eq.s32.totalorder %s26, 0
      %p152 = por %p150, %p151
      %p153 = scmp.ne.s32.totalorder %s141, %s142
      %p154 = scmp.eq.s32.totalorder %s27, 1
      %p155 = por %p153, %p154
      %p157 = scmp.ne.s32.totalorder %s142, %s156
      %p158 = scmp.eq.s32.totalorder %s27, 0
      %p159 = por %p157, %p158
      %s161 = sadd.s32 %s160, 1
      %p164 = scmp.eq.s32.totalorder %s21, 1
      %p165 = scmp.ne.s32.totalorder %s160, %s162
      %p166 = scmp.eq.s32.totalorder %s21, 0
      %p167 = por %p165, %p166
      %p168 = scmp.ne.s32.totalorder %s160, %s162
      %p169 = scmp.eq.s32.totalorder %s26, 1
      %p170 = por %p168, %p169
      %p171 = scmp.ne.s32.totalorder %s162, %s163
      %p172 = scmp.eq.s32.totalorder %s26, 0
      %p173 = por %p171, %p172
      %p174 = scmp.ne.s32.totalorder %s162, %s163
      %p175 = scmp.eq.s32.totalorder %s27, 1
      %p176 = por %p174, %p175
      %p178 = scmp.ne.s32.totalorder %s163, %s177
      %p179 = scmp.eq.s32.totalorder %s27, 0
      %p180 = por %p178, %p179
      %s181 = ssub.s32 %s21, %s28
      %p182 = scmp.eq.s32.totalorder %s181, 0
      %s184 = sadd.s32 %s183, 1
      %s185 = scalar_select %p182, %s183, %s184
      %p188 = pneg %p182
      %p189 = scmp.eq.s32.totalorder %s21, 1
      %p190 = por %p188, %p189
      %p191 = scmp.ne.s32.totalorder %s183, %s186
      %p192 = scmp.eq.s32.totalorder %s21, 0
      %p193 = por %p191, %p192
      %p194 = scmp.ne.s32.totalorder %s183, %s186
      %p195 = scmp.eq.s32.totalorder %s26, 1
      %p196 = por %p194, %p195
      %p197 = scmp.ne.s32.totalorder %s186, %s187
      %p198 = scmp.eq.s32.totalorder %s26, 0
      %p199 = por %p197, %p198
      %p200 = scmp.ne.s32.totalorder %s186, %s187
      %p201 = scmp.eq.s32.totalorder %s27, 1
      %p202 = por %p200, %p201
      %p204 = scmp.ne.s32.totalorder %s187, %s203
      %p205 = scmp.eq.s32.totalorder %s27, 0
      %p206 = por %p204, %p205
      %p207 = scmp.le.s32.totalorder 1, %s21
      %p208 = scmp.lt.s32.totalorder %s21, 3
      %p209 = pnand %p207, %p208
      %p210 = pneg %p209
      // Predicated region
      $region9: #{tpu_custom_call.1} parent=5 // pred_check
        _
      $region10: #{tpu_custom_call.1} parent=5 // pred_check_branch
        %212 = sbr.rel (%p209) target = $region12
      $region11: #{tpu_custom_call.1} parent=5 // pred_region
        %s213 = ssub.s32 %s21, 1
        // Predicated region
        $region13: #{tpu_custom_call.1} parent=11 // pred_check
          %p214 = pneg %p68
        $region14: #{tpu_custom_call.1} parent=11 // pred_check_branch
          %216 = sbr.rel (%p214) target = $region16
        $region15: #{tpu_custom_call.1} parent=11 // pred_region
          %s218 = ssub.s32 1024, 1024
          %219 = vsyncadd [#allocation8], %s218
          %s220 = sshll.u32 [#allocation7], 4
          %s221 = int_to_ptr.vmem [resolvable:$true] %s220
          %226 = dma.hbm_to_vmem [thread:$0]  %s1, 1024, %s221, [#allocation8], 64, 64, 4
        $region16: #{tpu_custom_call.1} parent=11 // pred_fallthru
          _
        // Predicated region
        $region17: #{tpu_custom_call.1} parent=11 // pred_check
          %p227 = pneg %p89
        $region18: #{tpu_custom_call.1} parent=11 // pred_check_branch
          %229 = sbr.rel (%p227) target = $region20
        $region19: #{tpu_custom_call.1} parent=11 // pred_region
          _
        $region20: #{tpu_custom_call.1} parent=11 // pred_fallthru
          _
        // Predicated region
        $region21: #{tpu_custom_call.1} parent=11 // pred_check
          %p230 = pneg %p110
        $region22: #{tpu_custom_call.1} parent=11 // pred_check_branch
          %232 = sbr.rel (%p230) target = $region24
        $region23: #{tpu_custom_call.1} parent=11 // pred_region
          %s234 = ssub.s32 9216, 9216
          %235 = vsyncadd [#allocation8], %s234
          %s236 = sshll.u32 [#allocation9], 4
          %s237 = int_to_ptr.vmem [resolvable:$true] %s236
          %242 = dma.hbm_to_vmem [thread:$0]  %s3, 9216, %s237, [#allocation8], 64, 64, 4
        $region24: #{tpu_custom_call.1} parent=11 // pred_fallthru
          _
        // Predicated region
        $region25: #{tpu_custom_call.1} parent=11 // pred_check
          %p243 = pneg %p131
        $region26: #{tpu_custom_call.1} parent=11 // pred_check_branch
          %245 = sbr.rel (%p243) target = $region28
        $region27: #{tpu_custom_call.1} parent=11 // pred_region
          _
        $region28: #{tpu_custom_call.1} parent=11 // pred_fallthru
          _
        // Predicated region
        $region29: #{tpu_custom_call.1} parent=11 // pred_check
          %p246 = pneg %p152
        $region30: #{tpu_custom_call.1} parent=11 // pred_check_branch
          %248 = sbr.rel (%p246) target = $region32
        $region31: #{tpu_custom_call.1} parent=11 // pred_region
          %s250 = ssub.s32 1024, 1024
          %251 = vsyncadd [#allocation11], %s250
          %s252 = sshll.u32 [#allocation10], 4
          %s253 = int_to_ptr.vmem [resolvable:$true] %s252
          %258 = dma.hbm_to_vmem [thread:$0]  %s5, 1024, %s253, [#allocation11], 64, 64, 4
        $region32: #{tpu_custom_call.1} parent=11 // pred_fallthru
          _
        // Predicated region
        $region33: #{tpu_custom_call.1} parent=11 // pred_check
          %p259 = pneg %p173
        $region34: #{tpu_custom_call.1} parent=11 // pred_check_branch
          %261 = sbr.rel (%p259) target = $region36
        $region35: #{tpu_custom_call.1} parent=11 // pred_region
          _
        $region36: #{tpu_custom_call.1} parent=11 // pred_fallthru
          _
      $region12: #{tpu_custom_call.1} parent=5 // pred_fallthru
        _
      %p262 = scmp.lt.s32.totalorder %s21, 2
      // Predicated region
      $region37: #{tpu_custom_call.1} parent=5 // pred_check
        %p263 = pneg %p262
      $region38: #{tpu_custom_call.1} parent=5 // pred_check_branch
        %265 = sbr.rel (%p263) target = $region40
      $region39: #{tpu_custom_call.1} parent=5 // pred_region
        // Predicated region
        $region41: #{tpu_custom_call.1} parent=39 // pred_check
          %p266 = pneg %p41
        $region42: #{tpu_custom_call.1} parent=39 // pred_check_branch
          %268 = sbr.rel (%p266) target = $region44
        $region43: #{tpu_custom_call.1} parent=39 // pred_region
          %s269 = sand.u32 %s31, 1
          %s270 = scalar_lea.sflag [#allocation5], %s269
          %s271 = sand.u32 %s31, 1
          %s272 = smul.addr %s271, 128
          %s273 = scalar_lea.vmem [#allocation4], %s272
          %s275 = ssub.s32 2048, 2048
          %276 = vsyncadd %s270, %s275
          %s277 = smul.addr %s21, 32
          %s278 = smul.addr %s277, 64
          %s279 = scalar_lea.hbm %s0, %s278
          %s280 = sshll.u32 %s273, 4
          %s281 = int_to_ptr.vmem [resolvable:$true] %s280
          %286 = dma.hbm_to_vmem [thread:$0]  %s279, 2048, %s281, %s270, 64, 64, 4
        $region44: #{tpu_custom_call.1} parent=39 // pred_fallthru
          _
      $region40: #{tpu_custom_call.1} parent=5 // pred_fallthru
        _
      %p287 = scmp.le.s32.totalorder 1, %s21
      %p288 = scmp.lt.s32.totalorder %s21, 3
      %p289 = pnand %p287, %p288
      %p290 = pneg %p289
      // Predicated region
      $region45: #{tpu_custom_call.1} parent=5 // pred_check
        _
      $region46: #{tpu_custom_call.1} parent=5 // pred_check_branch
        %292 = sbr.rel (%p289) target = $region48
      $region47: #{tpu_custom_call.1} parent=5 // pred_region
        %s293 = ssub.s32 %s21, 1
        %s294 = sand.u32 %s34, 1
        %s295 = scalar_lea.sflag [#allocation5], %s294
        %s296 = sand.u32 %s34, 1
        %s297 = smul.addr %s296, 128
        %s298 = scalar_lea.vmem [#allocation4], %s297
        // Predicated region
        $region49: #{tpu_custom_call.1} parent=47 // pred_check
          %p299 = pneg %p47
        $region50: #{tpu_custom_call.1} parent=47 // pred_check_branch
          %301 = sbr.rel (%p299) target = $region52
        $region51: #{tpu_custom_call.1} parent=47 // pred_region
          %302 = dma.done %s295, 2048
        $region52: #{tpu_custom_call.1} parent=47 // pred_fallthru
          _
        // Predicated region
        $region53: #{tpu_custom_call.1} parent=47 // pred_check
          %p303 = pneg %p68
        $region54: #{tpu_custom_call.1} parent=47 // pred_check_branch
          %305 = sbr.rel (%p303) target = $region56
        $region55: #{tpu_custom_call.1} parent=47 // pred_region
          %306 = dma.done [#allocation8], 1024
        $region56: #{tpu_custom_call.1} parent=47 // pred_fallthru
          _
        // Predicated region
        $region57: #{tpu_custom_call.1} parent=47 // pred_check
          %p307 = pneg %p110
        $region58: #{tpu_custom_call.1} parent=47 // pred_check_branch
          %309 = sbr.rel (%p307) target = $region60
        $region59: #{tpu_custom_call.1} parent=47 // pred_region
          %310 = dma.done [#allocation8], 9216
        $region60: #{tpu_custom_call.1} parent=47 // pred_fallthru
          _
        // Predicated region
        $region61: #{tpu_custom_call.1} parent=47 // pred_check
          %p311 = pneg %p152
        $region62: #{tpu_custom_call.1} parent=47 // pred_check_branch
          %313 = sbr.rel (%p311) target = $region64
        $region63: #{tpu_custom_call.1} parent=47 // pred_region
          %314 = dma.done [#allocation11], 1024
        $region64: #{tpu_custom_call.1} parent=47 // pred_fallthru
          _
        %s315 = sand.u32 %s34, 1
        %s316 = scalar_lea.sflag [#allocation5], %s315
        %s317 = sand.u32 %s34, 1
        %s318 = smul.addr %s317, 128
        %s319 = scalar_lea.vmem [#allocation4], %s318
        %p320 = pneg %p47
        %p321 = pneg %p44
        %p322 = pneg %p68
        %p323 = pneg %p65
        %p324 = pneg %p89
        %p325 = pneg %p86
        %p326 = pneg %p110
        %p327 = pneg %p107
        %p328 = pneg %p131
        %p329 = pneg %p128
        %p330 = pneg %p152
        %p331 = pneg %p149
        %p332 = pneg %p173
        %p333 = pneg %p170
        %p334 = pneg %p199
        %p335 = pneg %p196
        %s336 = sand.u32 %s186, 1
        %s337 = scalar_lea.sflag [#allocation6], %s336
        %s338 = sand.u32 %s186, 1
        %s339 = smul.addr %s338, 256
        %s340 = scalar_lea.vmem [#allocation12], %s339
        %v342 = vld [vmem:[%s298] sm:$0xf]
        %v343 = vld [vmem:[%s298 + $0x4] sm:$0xf]
        %v344 = vld [vmem:[%s298 + $0x8] sm:$0xf]
        %v345 = vld [vmem:[%s298 + $0xc] sm:$0xf]
        %v346 = vld [vmem:[%s298 + $0x10] sm:$0xf]
        %v347 = vld [vmem:[%s298 + $0x14] sm:$0xf]
        %v348 = vld [vmem:[%s298 + $0x18] sm:$0xf]
        %v349 = vld [vmem:[%s298 + $0x1c] sm:$0xf]
        %v350 = vld [vmem:[%s298 + $0x20] sm:$0xf]
        %v351 = vld [vmem:[%s298 + $0x24] sm:$0xf]
        %v352 = vld [vmem:[%s298 + $0x28] sm:$0xf]
        %v353 = vld [vmem:[%s298 + $0x2c] sm:$0xf]
        %v354 = vld [vmem:[%s298 + $0x30] sm:$0xf]
        %v355 = vld [vmem:[%s298 + $0x34] sm:$0xf]
        %v356 = vld [vmem:[%s298 + $0x38] sm:$0xf]
        %v357 = vld [vmem:[%s298 + $0x3c] sm:$0xf]
        %v358 = vld [vmem:[%s298 + $0x40] sm:$0xf]
        %v359 = vld [vmem:[%s298 + $0x44] sm:$0xf]
        %v360 = vld [vmem:[%s298 + $0x48] sm:$0xf]
        %v361 = vld [vmem:[%s298 + $0x4c] sm:$0xf]
        %v362 = vld [vmem:[%s298 + $0x50] sm:$0xf]
        %v363 = vld [vmem:[%s298 + $0x54] sm:$0xf]
        %v364 = vld [vmem:[%s298 + $0x58] sm:$0xf]
        %v365 = vld [vmem:[%s298 + $0x5c] sm:$0xf]
        %v366 = vld [vmem:[%s298 + $0x60] sm:$0xf]
        %v367 = vld [vmem:[%s298 + $0x64] sm:$0xf]
        %v368 = vld [vmem:[%s298 + $0x68] sm:$0xf]
        %v369 = vld [vmem:[%s298 + $0x6c] sm:$0xf]
        %v370 = vld [vmem:[%s298 + $0x70] sm:$0xf]
        %v371 = vld [vmem:[%s298 + $0x74] sm:$0xf]
        %v372 = vld [vmem:[%s298 + $0x78] sm:$0xf]
        %v373 = vld [vmem:[%s298 + $0x7c] sm:$0xf]
        %v374 = vld [vmem:[#allocation7] sm:$0xf]
        %v375 = vld [vmem:[#allocation7 + $0x4] sm:$0xf]
        %v376 = vld [vmem:[#allocation7 + $0x8] sm:$0xf]
        %v377 = vld [vmem:[#allocation7 + $0xc] sm:$0xf]
        %v378 = vld [vmem:[#allocation7 + $0x10] sm:$0xf]
        %v379 = vld [vmem:[#allocation7 + $0x14] sm:$0xf]
        %v380 = vld [vmem:[#allocation7 + $0x18] sm:$0xf]
        %v381 = vld [vmem:[#allocation7 + $0x1c] sm:$0xf]
        %v382 = vld [vmem:[#allocation7 + $0x20] sm:$0xf]
        %v383 = vld [vmem:[#allocation7 + $0x24] sm:$0xf]
        %v384 = vld [vmem:[#allocation7 + $0x28] sm:$0xf]
        %v385 = vld [vmem:[#allocation7 + $0x2c] sm:$0xf]
        %v386 = vld [vmem:[#allocation7 + $0x30] sm:$0xf]
        %v387 = vld [vmem:[#allocation7 + $0x34] sm:$0xf]
        %v388 = vld [vmem:[#allocation7 + $0x38] sm:$0xf]
        %v389 = vld [vmem:[#allocation7 + $0x3c] sm:$0xf]
        %v390 = vld [vmem:[%s2] sm:$0x1]
        %v392 = vlaneseq
        %v393 = vshrl.u32 %v392, 7
        %v394 = vsub.s32 0, %v393
        %v395 = vrot.slane %v390, %v394
        %v429 = vunpack.c.l.b16 %v342
        %v430 = vunpack.c.l.b16 %v343
        %v431 = vunpack.c.l.b16 %v344
        %v432 = vunpack.c.l.b16 %v345
        %v433 = vunpack.c.l.b16 %v346
        %v434 = vunpack.c.l.b16 %v347
        %v435 = vunpack.c.l.b16 %v348
        %v436 = vunpack.c.l.b16 %v349
        %v437 = vunpack.c.l.b16 %v350
        %v438 = vunpack.c.l.b16 %v351
        %v439 = vunpack.c.l.b16 %v352
        %v440 = vunpack.c.l.b16 %v353
        %v441 = vunpack.c.l.b16 %v354
        %v442 = vunpack.c.l.b16 %v355
        %v443 = vunpack.c.l.b16 %v356
        %v444 = vunpack.c.l.b16 %v357
        %v445 = vunpack.c.l.b16 %v358
        %v446 = vunpack.c.l.b16 %v359
        %v447 = vunpack.c.l.b16 %v360
        %v448 = vunpack.c.l.b16 %v361
        %v449 = vunpack.c.l.b16 %v362
        %v450 = vunpack.c.l.b16 %v363
        %v451 = vunpack.c.l.b16 %v364
        %v452 = vunpack.c.l.b16 %v365
        %v453 = vunpack.c.l.b16 %v366
        %v454 = vunpack.c.l.b16 %v367
        %v455 = vunpack.c.l.b16 %v368
        %v456 = vunpack.c.l.b16 %v369
        %v457 = vunpack.c.l.b16 %v370
        %v458 = vunpack.c.l.b16 %v371
        %v459 = vunpack.c.l.b16 %v372
        %v460 = vunpack.c.l.b16 %v373
        %v461 = vpack.c.b16 %v430, %v429
        %v462 = vpack.c.b16 %v432, %v431
        %v463 = vpack.c.b16 %v434, %v433
        %v464 = vpack.c.b16 %v436, %v435
        %v465 = vpack.c.b16 %v438, %v437
        %v466 = vpack.c.b16 %v440, %v439
        %v467 = vpack.c.b16 %v442, %v441
        %v468 = vpack.c.b16 %v444, %v443
        %v469 = vpack.c.b16 %v446, %v445
        %v470 = vpack.c.b16 %v448, %v447
        %v471 = vpack.c.b16 %v450, %v449
        %v472 = vpack.c.b16 %v452, %v451
        %v473 = vpack.c.b16 %v454, %v453
        %v474 = vpack.c.b16 %v456, %v455
        %v475 = vpack.c.b16 %v458, %v457
        %v476 = vpack.c.b16 %v460, %v459
        %v509 = vunpack.c.l.b16 %v374
        %v510 = vunpack.c.l.b16 %v375
        %v511 = vunpack.c.l.b16 %v376
        %v512 = vunpack.c.l.b16 %v377
        %v513 = vunpack.c.l.b16 %v378
        %v514 = vunpack.c.l.b16 %v379
        %v515 = vunpack.c.l.b16 %v380
        %v516 = vunpack.c.l.b16 %v381
        %v517 = vunpack.c.l.b16 %v382
        %v518 = vunpack.c.l.b16 %v383
        %v519 = vunpack.c.l.b16 %v384
        %v520 = vunpack.c.l.b16 %v385
        %v521 = vunpack.c.l.b16 %v386
        %v522 = vunpack.c.l.b16 %v387
        %v523 = vunpack.c.l.b16 %v388
        %v524 = vunpack.c.l.b16 %v389
        %v525 = vpack.c.b16 %v510, %v509
        %v526 = vpack.c.b16 %v512, %v511
        %v527 = vpack.c.b16 %v514, %v513
        %v528 = vpack.c.b16 %v516, %v515
        %v529 = vpack.c.b16 %v518, %v517
        %v530 = vpack.c.b16 %v520, %v519
        %v531 = vpack.c.b16 %v522, %v521
        %v532 = vpack.c.b16 %v524, %v523
        %541 = vmatprep.subr.bf16.mxu0 0
        %542 = vmatpush1.bf16.msra.mxu0 %v525
        %543 = vmatprep.subr.bf16.mxu0 0
        %544 = vmatpush1.bf16.msra.mxu0 %v526
        %545 = vmatprep.subr.bf16.mxu0 0
        %546 = vmatpush1.bf16.msra.mxu0 %v527
        %547 = vmatprep.subr.bf16.mxu0 0
        %548 = vmatpush1.bf16.msra.mxu0 %v528
        %549 = vmatprep.subr.bf16.mxu0 0
        %550 = vmatpush1.bf16.msra.mxu0 %v529
        %551 = vmatprep.subr.bf16.mxu0 0
        %552 = vmatpush1.bf16.msra.mxu0 %v530
        %553 = vmatprep.subr.bf16.mxu0 0
        %554 = vmatpush1.bf16.msra.mxu0 %v531
        %555 = vmatprep.subr.bf16.mxu0 0
        %556 = vmatpush1.bf16.msra.mxu0 %v532
        %557 = vmatprep.subr.bf16.mxu0 0
        %558 = vmatpush1.bf16.msra.mxu0 0
        %559 = vmatprep.subr.bf16.mxu0 0
        %560 = vmatpush1.bf16.msra.mxu0 0
        %561 = vmatprep.subr.bf16.mxu0 0
        %562 = vmatpush1.bf16.msra.mxu0 0
        %563 = vmatprep.subr.bf16.mxu0 0
        %564 = vmatpush1.bf16.msra.mxu0 0
        %565 = vmatprep.subr.bf16.mxu0 0
        %566 = vmatpush1.bf16.msra.mxu0 0
        %567 = vmatprep.subr.bf16.mxu0 0
        %568 = vmatpush1.bf16.msra.mxu0 0
        %569 = vmatprep.subr.bf16.mxu0 0
        %570 = vmatpush1.bf16.msra.mxu0 0
        %571 = vmatprep.subr.bf16.mxu0 0
        %572 = vmatpush1.bf16.msra.mxu0 0
        %573 = vmatprep.mubr.bf16.mxu0 0
        %574 = vmatmul.mubr.bf16.gmra.mrb[0].mxu0 %v461
        %v575 = vpop.f32.mrb[0].mxu0
        %v576 = vadd.f32 %v395, %v575
        %v577 = vpop.f32.mrb[0].mxu0
        %v578 = vpop.f32.mrb[0].mxu0
        %v579 = vadd.f32 %v395, %v578
        %v580 = vpop.f32.mrb[0].mxu0
        %581 = vmatprep.mubr.bf16.mxu0 0
        %582 = vmatmul.mubr.bf16.gmra.mrb[0].mxu0 %v462
        %v583 = vpop.f32.mrb[0].mxu0
        %v584 = vadd.f32 %v395, %v583
        %v585 = vpop.f32.mrb[0].mxu0
        %v586 = vpop.f32.mrb[0].mxu0
        %v587 = vadd.f32 %v395, %v586
        %v588 = vpop.f32.mrb[0].mxu0
        %589 = vmatprep.mubr.bf16.mxu0 0
        %590 = vmatmul.mubr.bf16.gmra.mrb[0].mxu0 %v463
        %v591 = vpop.f32.mrb[0].mxu0
        %v592 = vadd.f32 %v395, %v591
        %v593 = vpop.f32.mrb[0].mxu0
        %v594 = vpop.f32.mrb[0].mxu0
        %v595 = vadd.f32 %v395, %v594
        %v596 = vpop.f32.mrb[0].mxu0
        %597 = vmatprep.mubr.bf16.mxu0 0
        %598 = vmatmul.mubr.bf16.gmra.mrb[0].mxu0 %v464
        %v599 = vpop.f32.mrb[0].mxu0
        %v600 = vadd.f32 %v395, %v599
        %v601 = vpop.f32.mrb[0].mxu0
        %v602 = vpop.f32.mrb[0].mxu0
        %v603 = vadd.f32 %v395, %v602
        %v604 = vpop.f32.mrb[0].mxu0
        %605 = vmatprep.mubr.bf16.mxu0 0
        %606 = vmatmul.mubr.bf16.gmra.mrb[0].mxu0 %v465
        %v607 = vpop.f32.mrb[0].mxu0
        %v608 = vadd.f32 %v395, %v607
        %v609 = vpop.f32.mrb[0].mxu0
        %v610 = vpop.f32.mrb[0].mxu0
        %v611 = vadd.f32 %v395, %v610
        %v612 = vpop.f32.mrb[0].mxu0
        %613 = vmatprep.mubr.bf16.mxu0 0
        %614 = vmatmul.mubr.bf16.gmra.mrb[0].mxu0 %v466
        %v615 = vpop.f32.mrb[0].mxu0
        %v616 = vadd.f32 %v395, %v615
        %v617 = vpop.f32.mrb[0].mxu0
        %v618 = vpop.f32.mrb[0].mxu0
        %v619 = vadd.f32 %v395, %v618
        %v620 = vpop.f32.mrb[0].mxu0
        %621 = vmatprep.mubr.bf16.mxu0 0
        %622 = vmatmul.mubr.bf16.gmra.mrb[0].mxu0 %v467
        %v623 = vpop.f32.mrb[0].mxu0
        %v624 = vadd.f32 %v395, %v623
        %v625 = vpop.f32.mrb[0].mxu0
        %v626 = vpop.f32.mrb[0].mxu0
        %v627 = vadd.f32 %v395, %v626
        %v628 = vpop.f32.mrb[0].mxu0
        %629 = vmatprep.mubr.bf16.mxu0 0
        %630 = vmatmul.mubr.bf16.gmra.mrb[0].mxu0 %v468
        %v631 = vpop.f32.mrb[0].mxu0
        %v632 = vadd.f32 %v395, %v631
        %v633 = vpop.f32.mrb[0].mxu0
        %v634 = vpop.f32.mrb[0].mxu0
        %v635 = vadd.f32 %v395, %v634
        %v636 = vpop.f32.mrb[0].mxu0
        %637 = vmatprep.mubr.bf16.mxu0 0
        %638 = vmatmul.mubr.bf16.gmra.mrb[0].mxu0 %v469
        %v639 = vpop.f32.mrb[0].mxu0
        %v640 = vadd.f32 %v395, %v639
        %v641 = vpop.f32.mrb[0].mxu0
        %v642 = vpop.f32.mrb[0].mxu0
        %v643 = vadd.f32 %v395, %v642
        %v644 = vpop.f32.mrb[0].mxu0
        %645 = vmatprep.mubr.bf16.mxu0 0
        %646 = vmatmul.mubr.bf16.gmra.mrb[0].mxu0 %v470
        %v647 = vpop.f32.mrb[0].mxu0
        %v648 = vadd.f32 %v395, %v647
        %v649 = vpop.f32.mrb[0].mxu0
        %v650 = vpop.f32.mrb[0].mxu0
        %v651 = vadd.f32 %v395, %v650
        %v652 = vpop.f32.mrb[0].mxu0
        %653 = vmatprep.mubr.bf16.mxu0 0
        %654 = vmatmul.mubr.bf16.gmra.mrb[0].mxu0 %v471
        %v655 = vpop.f32.mrb[0].mxu0
        %v656 = vadd.f32 %v395, %v655
        %v657 = vpop.f32.mrb[0].mxu0
        %v658 = vpop.f32.mrb[0].mxu0
        %v659 = vadd.f32 %v395, %v658
        %v660 = vpop.f32.mrb[0].mxu0
        %661 = vmatprep.mubr.bf16.mxu0 0
        %662 = vmatmul.mubr.bf16.gmra.mrb[0].mxu0 %v472
        %v663 = vpop.f32.mrb[0].mxu0
        %v664 = vadd.f32 %v395, %v663
        %v665 = vpop.f32.mrb[0].mxu0
        %v666 = vpop.f32.mrb[0].mxu0
        %v667 = vadd.f32 %v395, %v666
        %v668 = vpop.f32.mrb[0].mxu0
        %669 = vmatprep.mubr.bf16.mxu0 0
        %670 = vmatmul.mubr.bf16.gmra.mrb[0].mxu0 %v473
        %v671 = vpop.f32.mrb[0].mxu0
        %v672 = vadd.f32 %v395, %v671
        %v673 = vpop.f32.mrb[0].mxu0
        %v674 = vpop.f32.mrb[0].mxu0
        %v675 = vadd.f32 %v395, %v674
        %v676 = vpop.f32.mrb[0].mxu0
        %677 = vmatprep.mubr.bf16.mxu0 0
        %678 = vmatmul.mubr.bf16.gmra.mrb[0].mxu0 %v474
        %v679 = vpop.f32.mrb[0].mxu0
        %v680 = vadd.f32 %v395, %v679
        %v681 = vpop.f32.mrb[0].mxu0
        %v682 = vpop.f32.mrb[0].mxu0
        %v683 = vadd.f32 %v395, %v682
        %v684 = vpop.f32.mrb[0].mxu0
        %685 = vmatprep.mubr.bf16.mxu0 0
        %686 = vmatmul.mubr.bf16.gmra.mrb[0].mxu0 %v475
        %v687 = vpop.f32.mrb[0].mxu0
        %v688 = vadd.f32 %v395, %v687
        %v689 = vpop.f32.mrb[0].mxu0
        %v690 = vpop.f32.mrb[0].mxu0
        %v691 = vadd.f32 %v395, %v690
        %v692 = vpop.f32.mrb[0].mxu0
        %693 = vmatprep.mubr.bf16.mxu0 0
        %694 = vmatmul.mubr.bf16.gmra.mrb[0].mxu0 %v476
        %v695 = vpop.f32.mrb[0].mxu0
        %v696 = vadd.f32 %v395, %v695
        %v697 = vpop.f32.mrb[0].mxu0
        %v698 = vpop.f32.mrb[0].mxu0
        %v699 = vadd.f32 %v395, %v698
        %v700 = vpop.f32.mrb[0].mxu0
        %701 = vdwg.mxu0
        %v702 = vmax.f32 %v576, 0.0
        %v703 = vmax.f32 %v579, 0.0
        %v704 = vmax.f32 %v584, 0.0
        %v705 = vmax.f32 %v587, 0.0
        %v706 = vmax.f32 %v592, 0.0
        %v707 = vmax.f32 %v595, 0.0
        %v708 = vmax.f32 %v600, 0.0
        %v709 = vmax.f32 %v603, 0.0
        %v710 = vmax.f32 %v608, 0.0
        %v711 = vmax.f32 %v611, 0.0
        %v712 = vmax.f32 %v616, 0.0
        %v713 = vmax.f32 %v619, 0.0
        %v714 = vmax.f32 %v624, 0.0
        %v715 = vmax.f32 %v627, 0.0
        %v716 = vmax.f32 %v632, 0.0
        %v717 = vmax.f32 %v635, 0.0
        %v718 = vmax.f32 %v640, 0.0
        %v719 = vmax.f32 %v643, 0.0
        %v720 = vmax.f32 %v648, 0.0
        %v721 = vmax.f32 %v651, 0.0
        %v722 = vmax.f32 %v656, 0.0
        %v723 = vmax.f32 %v659, 0.0
        %v724 = vmax.f32 %v664, 0.0
        %v725 = vmax.f32 %v667, 0.0
        %v726 = vmax.f32 %v672, 0.0
        %v727 = vmax.f32 %v675, 0.0
        %v728 = vmax.f32 %v680, 0.0
        %v729 = vmax.f32 %v683, 0.0
        %v730 = vmax.f32 %v688, 0.0
        %v731 = vmax.f32 %v691, 0.0
        %v732 = vmax.f32 %v696, 0.0
        %v733 = vmax.f32 %v699, 0.0
        %734 = vst [vmem:[#allocation2] sm:$0xf] 0
        %735 = vst [vmem:[#allocation2 + $0x4] sm:$0xf] 0
        %736 = vst [vmem:[#allocation2 + $0x8] sm:$0x1] 0
        %737 = vst [vmem:[#allocation2 + $0xc] sm:$0xf] 0
        %738 = vst [vmem:[#allocation2 + $0x10] sm:$0xf] 0
        %739 = vst [vmem:[#allocation2 + $0x14] sm:$0x1] 0
        %740 = vst [vmem:[#allocation2 + $0x18] sm:$0xf] 0
        %741 = vst [vmem:[#allocation2 + $0x1c] sm:$0xf] 0
        %742 = vst [vmem:[#allocation2 + $0x20] sm:$0x1] 0
        %743 = vst [vmem:[#allocation2 + $0x24] sm:$0xf] 0
        %744 = vst [vmem:[#allocation2 + $0x28] sm:$0xf] 0
        %745 = vst [vmem:[#allocation2 + $0x2c] sm:$0x1] 0
        %746 = vst [vmem:[#allocation2 + $0x30] sm:$0xf] 0
        %747 = vst [vmem:[#allocation2 + $0x34] sm:$0xf] 0
        %748 = vst [vmem:[#allocation2 + $0x38] sm:$0x1] 0
        %749 = vst [vmem:[#allocation2 + $0x3c] sm:$0xf] 0
        %750 = vst [vmem:[#allocation2 + $0x40] sm:$0xf] 0
        %751 = vst [vmem:[#allocation2 + $0x44] sm:$0x1] 0
        %752 = vst [vmem:[#allocation2 + $0x48] sm:$0xf] 0
        %753 = vst [vmem:[#allocation2 + $0x4c] sm:$0xf] 0
        %754 = vst [vmem:[#allocation2 + $0x50] sm:$0x1] 0
        %755 = vst [vmem:[#allocation2 + $0x54] sm:$0xf] 0
        %756 = vst [vmem:[#allocation2 + $0x58] sm:$0xf] 0
        %757 = vst [vmem:[#allocation2 + $0x5c] sm:$0x1] 0
        %758 = vst [vmem:[#allocation2 + $0x60] sm:$0xf] 0
        %759 = vst [vmem:[#allocation2 + $0x64] sm:$0xf] 0
        %760 = vst [vmem:[#allocation2 + $0x68] sm:$0x1] 0
        %761 = vst [vmem:[#allocation2 + $0x6c] sm:$0xf] 0
        %762 = vst [vmem:[#allocation2 + $0x70] sm:$0xf] 0
        %763 = vst [vmem:[#allocation2 + $0x74] sm:$0x1] 0
        %764 = vst [vmem:[#allocation2 + $0x78] sm:$0xf] 0
        %765 = vst [vmem:[#allocation2 + $0x7c] sm:$0xf] 0
        %766 = vst [vmem:[#allocation2 + $0x80] sm:$0x1] 0
        %767 = vst [vmem:[#allocation2 + $0x84] sm:$0xf] 0
        %768 = vst [vmem:[#allocation2 + $0x88] sm:$0xf] 0
        %769 = vst [vmem:[#allocation2 + $0x8c] sm:$0x1] 0
        %770 = vst [vmem:[#allocation2 + $0x90] sm:$0xf] 0
        %771 = vst [vmem:[#allocation2 + $0x94] sm:$0xf] 0
        %772 = vst [vmem:[#allocation2 + $0x98] sm:$0x1] 0
        %773 = vst [vmem:[#allocation2 + $0x9c] sm:$0xf] 0
        %774 = vst [vmem:[#allocation2 + $0xa0] sm:$0xf] 0
        %775 = vst [vmem:[#allocation2 + $0xa4] sm:$0x1] 0
        %776 = vst [vmem:[#allocation2 + $0xa8] sm:$0xf] 0
        %777 = vst [vmem:[#allocation2 + $0xac] sm:$0xf] 0
        %778 = vst [vmem:[#allocation2 + $0xb0] sm:$0x1] 0
        %779 = vst [vmem:[#allocation2 + $0xb4] sm:$0xf] 0
        %780 = vst [vmem:[#allocation2 + $0xb8] sm:$0xf] 0
        %781 = vst [vmem:[#allocation2 + $0xbc] sm:$0x1] 0
        %782 = vst [vmem:[#allocation2 + $0xc0] sm:$0xf] 0
        %783 = vst [vmem:[#allocation2 + $0xc4] sm:$0xf] 0
        %784 = vst [vmem:[#allocation2 + $0xc8] sm:$0x1] 0
        %785 = vst [vmem:[#allocation2 + $0xcc] sm:$0xf] 0
        %786 = vst [vmem:[#allocation2 + $0xd0] sm:$0xf] 0
        %787 = vst [vmem:[#allocation2 + $0xd4] sm:$0x1] 0
        %v788 = vpack.c.bf16 %v703, %v702
        %v789 = vpack.c.bf16 %v705, %v704
        %v790 = vpack.c.bf16 %v707, %v706
        %v791 = vpack.c.bf16 %v709, %v708
        %v792 = vpack.c.bf16 %v711, %v710
        %v793 = vpack.c.bf16 %v713, %v712
        %v794 = vpack.c.bf16 %v715, %v714
        %v795 = vpack.c.bf16 %v717, %v716
        %v796 = vpack.c.bf16 %v719, %v718
        %v797 = vpack.c.bf16 %v721, %v720
        %v798 = vpack.c.bf16 %v723, %v722
        %v799 = vpack.c.bf16 %v725, %v724
        %v800 = vpack.c.bf16 %v727, %v726
        %v801 = vpack.c.bf16 %v729, %v728
        %v802 = vpack.c.bf16 %v731, %v730
        %v803 = vpack.c.bf16 %v733, %v732
        %v820 = vunpack.c.l.b16 %v788
        %v821 = vunpack.c.h.b16 %v788
        %v822 = vunpack.c.l.b16 %v789
        %v823 = vunpack.c.h.b16 %v789
        %v824 = vunpack.c.l.b16 %v790
        %v825 = vunpack.c.h.b16 %v790
        %v826 = vunpack.c.l.b16 %v791
        %v827 = vunpack.c.h.b16 %v791
        %v828 = vunpack.c.l.b16 %v792
        %v829 = vunpack.c.h.b16 %v792
        %v830 = vunpack.c.l.b16 %v793
        %v831 = vunpack.c.h.b16 %v793
        %v832 = vunpack.c.l.b16 %v794
        %v833 = vunpack.c.h.b16 %v794
        %v834 = vunpack.c.l.b16 %v795
        %v835 = vunpack.c.h.b16 %v795
        %v836 = vunpack.c.l.b16 %v796
        %v837 = vunpack.c.h.b16 %v796
        %v838 = vunpack.c.l.b16 %v797
        %v839 = vunpack.c.h.b16 %v797
        %v840 = vunpack.c.l.b16 %v798
        %v841 = vunpack.c.h.b16 %v798
        %v842 = vunpack.c.l.b16 %v799
        %v843 = vunpack.c.h.b16 %v799
        %v844 = vunpack.c.l.b16 %v800
        %v845 = vunpack.c.h.b16 %v800
        %v846 = vunpack.c.l.b16 %v801
        %v847 = vunpack.c.h.b16 %v801
        %v848 = vunpack.c.l.b16 %v802
        %v849 = vunpack.c.h.b16 %v802
        %v850 = vunpack.c.l.b16 %v803
        %v851 = vunpack.c.h.b16 %v803
        %v852 = vpack.c.b16 %v820, %v820
        %v853 = vpack.c.b16 %v821, %v821
        %v854 = vpack.c.b16 %v822, %v822
        %v855 = vpack.c.b16 %v823, %v823
        %v856 = vpack.c.b16 %v824, %v824
        %v857 = vpack.c.b16 %v825, %v825
        %v858 = vpack.c.b16 %v826, %v826
        %v859 = vpack.c.b16 %v827, %v827
        %v860 = vpack.c.b16 %v828, %v828
        %v861 = vpack.c.b16 %v829, %v829
        %v862 = vpack.c.b16 %v830, %v830
        %v863 = vpack.c.b16 %v831, %v831
        %v864 = vpack.c.b16 %v832, %v832
        %v865 = vpack.c.b16 %v833, %v833
        %v866 = vpack.c.b16 %v834, %v834
        %v867 = vpack.c.b16 %v835, %v835
        %v868 = vpack.c.b16 %v836, %v836
        %v869 = vpack.c.b16 %v837, %v837
        %v870 = vpack.c.b16 %v838, %v838
        %v871 = vpack.c.b16 %v839, %v839
        %v872 = vpack.c.b16 %v840, %v840
        %v873 = vpack.c.b16 %v841, %v841
        %v874 = vpack.c.b16 %v842, %v842
        %v875 = vpack.c.b16 %v843, %v843
        %v876 = vpack.c.b16 %v844, %v844
        %v877 = vpack.c.b16 %v845, %v845
        %v878 = vpack.c.b16 %v846, %v846
        %v879 = vpack.c.b16 %v847, %v847
        %v880 = vpack.c.b16 %v848, %v848
        %v881 = vpack.c.b16 %v849, %v849
        %v882 = vpack.c.b16 %v850, %v850
        %v883 = vpack.c.b16 %v851, %v851
        %vm884 = vsmask.f32 256
        %vm885 = vsmask.f32 4368
        %vm886 = vmor %vm884, %vm885
        %v888 = vshrl.u32 %v852, 16
        %v890 = vrot.slane %v888, 7
        %v891 = vshll.u32 %v852, 16
        %v893 = vor.u32 %v890, %v891
        %v894 = vrot.slane %v890, 4
        %v896 = vshrl.u32 %v853, 16
        %v898 = vrot.slane %v896, 7
        %v899 = vshll.u32 %v853, 16
        %v901 = vor.u32 %v898, %v899
        %v902 = vsel %vm886, %v894, %v901
        %v903 = vrot.slane %v898, 4
        %v905 = vshrl.u32 %v854, 16
        %v907 = vrot.slane %v905, 7
        %v908 = vshll.u32 %v854, 16
        %v910 = vor.u32 %v907, %v908
        %v911 = vrot.slane %v907, 4
        %v913 = vshrl.u32 %v855, 16
        %v915 = vrot.slane %v913, 7
        %v916 = vshll.u32 %v855, 16
        %v918 = vor.u32 %v915, %v916
        %v919 = vsel %vm886, %v911, %v918
        %v920 = vrot.slane %v915, 4
        %v922 = vshrl.u32 %v856, 16
        %v924 = vrot.slane %v922, 7
        %v925 = vshll.u32 %v856, 16
        %v927 = vor.u32 %v924, %v925
        %v928 = vrot.slane %v924, 4
        %v930 = vshrl.u32 %v857, 16
        %v932 = vrot.slane %v930, 7
        %v933 = vshll.u32 %v857, 16
        %v935 = vor.u32 %v932, %v933
        %v936 = vsel %vm886, %v928, %v935
        %v937 = vrot.slane %v932, 4
        %v939 = vshrl.u32 %v858, 16
        %v941 = vrot.slane %v939, 7
        %v942 = vshll.u32 %v858, 16
        %v944 = vor.u32 %v941, %v942
        %v945 = vrot.slane %v941, 4
        %v947 = vshrl.u32 %v859, 16
        %v949 = vrot.slane %v947, 7
        %v950 = vshll.u32 %v859, 16
        %v952 = vor.u32 %v949, %v950
        %v953 = vsel %vm886, %v945, %v952
        %v954 = vrot.slane %v949, 4
        %v956 = vshrl.u32 %v860, 16
        %v958 = vrot.slane %v956, 7
        %v959 = vshll.u32 %v860, 16
        %v961 = vor.u32 %v958, %v959
        %v962 = vrot.slane %v958, 4
        %v964 = vshrl.u32 %v861, 16
        %v966 = vrot.slane %v964, 7
        %v967 = vshll.u32 %v861, 16
        %v969 = vor.u32 %v966, %v967
        %v970 = vsel %vm886, %v962, %v969
        %v971 = vrot.slane %v966, 4
        %v973 = vshrl.u32 %v862, 16
        %v975 = vrot.slane %v973, 7
        %v976 = vshll.u32 %v862, 16
        %v978 = vor.u32 %v975, %v976
        %v979 = vrot.slane %v975, 4
        %v981 = vshrl.u32 %v863, 16
        %v983 = vrot.slane %v981, 7
        %v984 = vshll.u32 %v863, 16
        %v986 = vor.u32 %v983, %v984
        %v987 = vsel %vm886, %v979, %v986
        %v988 = vrot.slane %v983, 4
        %v990 = vshrl.u32 %v864, 16
        %v992 = vrot.slane %v990, 7
        %v993 = vshll.u32 %v864, 16
        %v995 = vor.u32 %v992, %v993
        %v996 = vrot.slane %v992, 4
        %v998 = vshrl.u32 %v865, 16
        %v1000 = vrot.slane %v998, 7
        %v1001 = vshll.u32 %v865, 16
        %v1003 = vor.u32 %v1000, %v1001
        %v1004 = vsel %vm886, %v996, %v1003
        %v1005 = vrot.slane %v1000, 4
        %v1007 = vshrl.u32 %v866, 16
        %v1009 = vrot.slane %v1007, 7
        %v1010 = vshll.u32 %v866, 16
        %v1012 = vor.u32 %v1009, %v1010
        %v1013 = vrot.slane %v1009, 4
        %v1015 = vshrl.u32 %v867, 16
        %v1017 = vrot.slane %v1015, 7
        %v1018 = vshll.u32 %v867, 16
        %v1020 = vor.u32 %v1017, %v1018
        %v1021 = vsel %vm886, %v1013, %v1020
        %v1022 = vrot.slane %v1017, 4
        %v1024 = vshrl.u32 %v868, 16
        %v1026 = vrot.slane %v1024, 7
        %v1027 = vshll.u32 %v868, 16
        %v1029 = vor.u32 %v1026, %v1027
        %v1030 = vrot.slane %v1026, 4
        %v1032 = vshrl.u32 %v869, 16
        %v1034 = vrot.slane %v1032, 7
        %v1035 = vshll.u32 %v869, 16
        %v1037 = vor.u32 %v1034, %v1035
        %v1038 = vsel %vm886, %v1030, %v1037
        %v1039 = vrot.slane %v1034, 4
        %v1041 = vshrl.u32 %v870, 16
        %v1043 = vrot.slane %v1041, 7
        %v1044 = vshll.u32 %v870, 16
        %v1046 = vor.u32 %v1043, %v1044
        %v1047 = vrot.slane %v1043, 4
        %v1049 = vshrl.u32 %v871, 16
        %v1051 = vrot.slane %v1049, 7
        %v1052 = vshll.u32 %v871, 16
        %v1054 = vor.u32 %v1051, %v1052
        %v1055 = vsel %vm886, %v1047, %v1054
        %v1056 = vrot.slane %v1051, 4
        %v1058 = vshrl.u32 %v872, 16
        %v1060 = vrot.slane %v1058, 7
        %v1061 = vshll.u32 %v872, 16
        %v1063 = vor.u32 %v1060, %v1061
        %v1064 = vrot.slane %v1060, 4
        %v1066 = vshrl.u32 %v873, 16
        %v1068 = vrot.slane %v1066, 7
        %v1069 = vshll.u32 %v873, 16
        %v1071 = vor.u32 %v1068, %v1069
        %v1072 = vsel %vm886, %v1064, %v1071
        %v1073 = vrot.slane %v1068, 4
        %v1075 = vshrl.u32 %v874, 16
        %v1077 = vrot.slane %v1075, 7
        %v1078 = vshll.u32 %v874, 16
        %v1080 = vor.u32 %v1077, %v1078
        %v1081 = vrot.slane %v1077, 4
        %v1083 = vshrl.u32 %v875, 16
        %v1085 = vrot.slane %v1083, 7
        %v1086 = vshll.u32 %v875, 16
        %v1088 = vor.u32 %v1085, %v1086
        %v1089 = vsel %vm886, %v1081, %v1088
        %v1090 = vrot.slane %v1085, 4
        %v1092 = vshrl.u32 %v876, 16
        %v1094 = vrot.slane %v1092, 7
        %v1095 = vshll.u32 %v876, 16
        %v1097 = vor.u32 %v1094, %v1095
        %v1098 = vrot.slane %v1094, 4
        %v1100 = vshrl.u32 %v877, 16
        %v1102 = vrot.slane %v1100, 7
        %v1103 = vshll.u32 %v877, 16
        %v1105 = vor.u32 %v1102, %v1103
        %v1106 = vsel %vm886, %v1098, %v1105
        %v1107 = vrot.slane %v1102, 4
        %v1109 = vshrl.u32 %v878, 16
        %v1111 = vrot.slane %v1109, 7
        %v1112 = vshll.u32 %v878, 16
        %v1114 = vor.u32 %v1111, %v1112
        %v1115 = vrot.slane %v1111, 4
        %v1117 = vshrl.u32 %v879, 16
        %v1119 = vrot.slane %v1117, 7
        %v1120 = vshll.u32 %v879, 16
        %v1122 = vor.u32 %v1119, %v1120
        %v1123 = vsel %vm886, %v1115, %v1122
        %v1124 = vrot.slane %v1119, 4
        %v1126 = vshrl.u32 %v880, 16
        %v1128 = vrot.slane %v1126, 7
        %v1129 = vshll.u32 %v880, 16
        %v1131 = vor.u32 %v1128, %v1129
        %v1132 = vrot.slane %v1128, 4
        %v1134 = vshrl.u32 %v881, 16
        %v1136 = vrot.slane %v1134, 7
        %v1137 = vshll.u32 %v881, 16
        %v1139 = vor.u32 %v1136, %v1137
        %v1140 = vsel %vm886, %v1132, %v1139
        %v1141 = vrot.slane %v1136, 4
        %v1143 = vshrl.u32 %v882, 16
        %v1145 = vrot.slane %v1143, 7
        %v1146 = vshll.u32 %v882, 16
        %v1148 = vor.u32 %v1145, %v1146
        %v1149 = vrot.slane %v1145, 4
        %v1151 = vshrl.u32 %v883, 16
        %v1153 = vrot.slane %v1151, 7
        %v1154 = vshll.u32 %v883, 16
        %v1156 = vor.u32 %v1153, %v1154
        %v1157 = vsel %vm886, %v1149, %v1156
        %v1158 = vrot.slane %v1153, 4
        %s1207 = scalar_lea.vmem [#allocation2], 12
        %vm1208 = vcmask 1043456
        %vm1209 = vsmask.f32 7938
        %vm1210 = vmand %vm1208, %vm1209
        %v1211 = vld [vmem:[%s1207] sm:$0xf]
        %v1212 = vsel %vm1210, %v893, %v1211
        %1213 = vst [vmem:[%s1207] sm:$0xf] %v1212
        %1214 = vst [vmem:[%s1207 + $0x4] sm:$0xf] %v902
        %vm1215 = vcmask 1040384
        %vm1216 = vmand %vm1215, %vm884
        %v1217 = vld [vmem:[%s1207 + $0x8] sm:$0x1]
        %v1218 = vsel %vm1216, %v903, %v1217
        %1219 = vst [vmem:[%s1207 + $0x8] sm:$0x1] %v1218
        %v1220 = vld [vmem:[%s1207 + $0xc] sm:$0xf]
        %v1221 = vsel %vm1210, %v910, %v1220
        %1222 = vst [vmem:[%s1207 + $0xc] sm:$0xf] %v1221
        %1223 = vst [vmem:[%s1207 + $0x10] sm:$0xf] %v919
        %v1224 = vld [vmem:[%s1207 + $0x14] sm:$0x1]
        %v1225 = vsel %vm1216, %v920, %v1224
        %1226 = vst [vmem:[%s1207 + $0x14] sm:$0x1] %v1225
        %v1227 = vld [vmem:[%s1207 + $0x18] sm:$0xf]
        %v1228 = vsel %vm1210, %v927, %v1227
        %1229 = vst [vmem:[%s1207 + $0x18] sm:$0xf] %v1228
        %1230 = vst [vmem:[%s1207 + $0x1c] sm:$0xf] %v936
        %v1231 = vld [vmem:[%s1207 + $0x20] sm:$0x1]
        %v1232 = vsel %vm1216, %v937, %v1231
        %1233 = vst [vmem:[%s1207 + $0x20] sm:$0x1] %v1232
        %v1234 = vld [vmem:[%s1207 + $0x24] sm:$0xf]
        %v1235 = vsel %vm1210, %v944, %v1234
        %1236 = vst [vmem:[%s1207 + $0x24] sm:$0xf] %v1235
        %1237 = vst [vmem:[%s1207 + $0x28] sm:$0xf] %v953
        %v1238 = vld [vmem:[%s1207 + $0x2c] sm:$0x1]
        %v1239 = vsel %vm1216, %v954, %v1238
        %1240 = vst [vmem:[%s1207 + $0x2c] sm:$0x1] %v1239
        %v1241 = vld [vmem:[%s1207 + $0x30] sm:$0xf]
        %v1242 = vsel %vm1210, %v961, %v1241
        %1243 = vst [vmem:[%s1207 + $0x30] sm:$0xf] %v1242
        %1244 = vst [vmem:[%s1207 + $0x34] sm:$0xf] %v970
        %v1245 = vld [vmem:[%s1207 + $0x38] sm:$0x1]
        %v1246 = vsel %vm1216, %v971, %v1245
        %1247 = vst [vmem:[%s1207 + $0x38] sm:$0x1] %v1246
        %v1248 = vld [vmem:[%s1207 + $0x3c] sm:$0xf]
        %v1249 = vsel %vm1210, %v978, %v1248
        %1250 = vst [vmem:[%s1207 + $0x3c] sm:$0xf] %v1249
        %1251 = vst [vmem:[%s1207 + $0x40] sm:$0xf] %v987
        %v1252 = vld [vmem:[%s1207 + $0x44] sm:$0x1]
        %v1253 = vsel %vm1216, %v988, %v1252
        %1254 = vst [vmem:[%s1207 + $0x44] sm:$0x1] %v1253
        %v1255 = vld [vmem:[%s1207 + $0x48] sm:$0xf]
        %v1256 = vsel %vm1210, %v995, %v1255
        %1257 = vst [vmem:[%s1207 + $0x48] sm:$0xf] %v1256
        %1258 = vst [vmem:[%s1207 + $0x4c] sm:$0xf] %v1004
        %v1259 = vld [vmem:[%s1207 + $0x50] sm:$0x1]
        %v1260 = vsel %vm1216, %v1005, %v1259
        %1261 = vst [vmem:[%s1207 + $0x50] sm:$0x1] %v1260
        %v1262 = vld [vmem:[%s1207 + $0x54] sm:$0xf]
        %v1263 = vsel %vm1210, %v1012, %v1262
        %1264 = vst [vmem:[%s1207 + $0x54] sm:$0xf] %v1263
        %1265 = vst [vmem:[%s1207 + $0x58] sm:$0xf] %v1021
        %v1266 = vld [vmem:[%s1207 + $0x5c] sm:$0x1]
        %v1267 = vsel %vm1216, %v1022, %v1266
        %1268 = vst [vmem:[%s1207 + $0x5c] sm:$0x1] %v1267
        %v1269 = vld [vmem:[%s1207 + $0x60] sm:$0xf]
        %v1270 = vsel %vm1210, %v1029, %v1269
        %1271 = vst [vmem:[%s1207 + $0x60] sm:$0xf] %v1270
        %1272 = vst [vmem:[%s1207 + $0x64] sm:$0xf] %v1038
        %v1273 = vld [vmem:[%s1207 + $0x68] sm:$0x1]
        %v1274 = vsel %vm1216, %v1039, %v1273
        %1275 = vst [vmem:[%s1207 + $0x68] sm:$0x1] %v1274
        %v1276 = vld [vmem:[%s1207 + $0x6c] sm:$0xf]
        %v1277 = vsel %vm1210, %v1046, %v1276
        %1278 = vst [vmem:[%s1207 + $0x6c] sm:$0xf] %v1277
        %1279 = vst [vmem:[%s1207 + $0x70] sm:$0xf] %v1055
        %v1280 = vld [vmem:[%s1207 + $0x74] sm:$0x1]
        %v1281 = vsel %vm1216, %v1056, %v1280
        %1282 = vst [vmem:[%s1207 + $0x74] sm:$0x1] %v1281
        %v1283 = vld [vmem:[%s1207 + $0x78] sm:$0xf]
        %v1284 = vsel %vm1210, %v1063, %v1283
        %1285 = vst [vmem:[%s1207 + $0x78] sm:$0xf] %v1284
        %1286 = vst [vmem:[%s1207 + $0x7c] sm:$0xf] %v1072
        %v1287 = vld [vmem:[%s1207 + $0x80] sm:$0x1]
        %v1288 = vsel %vm1216, %v1073, %v1287
        %1289 = vst [vmem:[%s1207 + $0x80] sm:$0x1] %v1288
        %v1290 = vld [vmem:[%s1207 + $0x84] sm:$0xf]
        %v1291 = vsel %vm1210, %v1080, %v1290
        %1292 = vst [vmem:[%s1207 + $0x84] sm:$0xf] %v1291
        %1293 = vst [vmem:[%s1207 + $0x88] sm:$0xf] %v1089
        %v1294 = vld [vmem:[%s1207 + $0x8c] sm:$0x1]
        %v1295 = vsel %vm1216, %v1090, %v1294
        %1296 = vst [vmem:[%s1207 + $0x8c] sm:$0x1] %v1295
        %v1297 = vld [vmem:[%s1207 + $0x90] sm:$0xf]
        %v1298 = vsel %vm1210, %v1097, %v1297
        %1299 = vst [vmem:[%s1207 + $0x90] sm:$0xf] %v1298
        %1300 = vst [vmem:[%s1207 + $0x94] sm:$0xf] %v1106
        %v1301 = vld [vmem:[%s1207 + $0x98] sm:$0x1]
        %v1302 = vsel %vm1216, %v1107, %v1301
        %1303 = vst [vmem:[%s1207 + $0x98] sm:$0x1] %v1302
        %v1304 = vld [vmem:[%s1207 + $0x9c] sm:$0xf]
        %v1305 = vsel %vm1210, %v1114, %v1304
        %1306 = vst [vmem:[%s1207 + $0x9c] sm:$0xf] %v1305
        %1307 = vst [vmem:[%s1207 + $0xa0] sm:$0xf] %v1123
        %v1308 = vld [vmem:[%s1207 + $0xa4] sm:$0x1]
        %v1309 = vsel %vm1216, %v1124, %v1308
        %1310 = vst [vmem:[%s1207 + $0xa4] sm:$0x1] %v1309
        %v1311 = vld [vmem:[%s1207 + $0xa8] sm:$0xf]
        %v1312 = vsel %vm1210, %v1131, %v1311
        %1313 = vst [vmem:[%s1207 + $0xa8] sm:$0xf] %v1312
        %1314 = vst [vmem:[%s1207 + $0xac] sm:$0xf] %v1140
        %v1315 = vld [vmem:[%s1207 + $0xb0] sm:$0x1]
        %v1316 = vsel %vm1216, %v1141, %v1315
        %1317 = vst [vmem:[%s1207 + $0xb0] sm:$0x1] %v1316
        %v1318 = vld [vmem:[%s1207 + $0xb4] sm:$0xf]
        %v1319 = vsel %vm1210, %v1148, %v1318
        %1320 = vst [vmem:[%s1207 + $0xb4] sm:$0xf] %v1319
        %1321 = vst [vmem:[%s1207 + $0xb8] sm:$0xf] %v1157
        %v1322 = vld [vmem:[%s1207 + $0xbc] sm:$0x1]
        %v1323 = vsel %vm1216, %v1158, %v1322
        %1324 = vst [vmem:[%s1207 + $0xbc] sm:$0x1] %v1323
        %v1325 = vld [vmem:[#allocation2] sm:$0xf]
        %v1326 = vld [vmem:[#allocation2 + $0x4] sm:$0xf]
        %v1327 = vld [vmem:[#allocation2 + $0xc] sm:$0xf]
        %v1328 = vld [vmem:[#allocation2 + $0x10] sm:$0xf]
        %v1329 = vld [vmem:[#allocation2 + $0x18] sm:$0xf]
        %v1330 = vld [vmem:[#allocation2 + $0x1c] sm:$0xf]
        %v1331 = vld [vmem:[#allocation2 + $0x24] sm:$0xf]
        %v1332 = vld [vmem:[#allocation2 + $0x28] sm:$0xf]
        %v1333 = vld [vmem:[#allocation2 + $0x30] sm:$0xf]
        %v1334 = vld [vmem:[#allocation2 + $0x34] sm:$0xf]
        %v1335 = vld [vmem:[#allocation2 + $0x3c] sm:$0xf]
        %v1336 = vld [vmem:[#allocation2 + $0x40] sm:$0xf]
        %v1337 = vld [vmem:[#allocation2 + $0x48] sm:$0xf]
        %v1338 = vld [vmem:[#allocation2 + $0x4c] sm:$0xf]
        %v1339 = vld [vmem:[#allocation2 + $0x54] sm:$0xf]
        %v1340 = vld [vmem:[#allocation2 + $0x58] sm:$0xf]
        %v1341 = vld [vmem:[#allocation2 + $0x60] sm:$0xf]
        %v1342 = vld [vmem:[#allocation2 + $0x64] sm:$0xf]
        %v1343 = vld [vmem:[#allocation2 + $0x6c] sm:$0xf]
        %v1344 = vld [vmem:[#allocation2 + $0x70] sm:$0xf]
        %v1345 = vld [vmem:[#allocation2 + $0x78] sm:$0xf]
        %v1346 = vld [vmem:[#allocation2 + $0x7c] sm:$0xf]
        %v1347 = vld [vmem:[#allocation2 + $0x84] sm:$0xf]
        %v1348 = vld [vmem:[#allocation2 + $0x88] sm:$0xf]
        %v1349 = vld [vmem:[#allocation2 + $0x90] sm:$0xf]
        %v1350 = vld [vmem:[#allocation2 + $0x94] sm:$0xf]
        %v1351 = vld [vmem:[#allocation2 + $0x9c] sm:$0xf]
        %v1352 = vld [vmem:[#allocation2 + $0xa0] sm:$0xf]
        %v1353 = vld [vmem:[#allocation2 + $0xa8] sm:$0xf]
        %v1354 = vld [vmem:[#allocation2 + $0xac] sm:$0xf]
        %v1355 = vld [vmem:[#allocation2 + $0xb4] sm:$0xf]
        %v1356 = vld [vmem:[#allocation2 + $0xb8] sm:$0xf]
        %v1357 = vld [vmem:[#allocation9] sm:$0xf]
        %v1358 = vld [vmem:[#allocation9 + $0x4] sm:$0xf]
        %v1359 = vld [vmem:[#allocation9 + $0x8] sm:$0xf]
        %v1360 = vld [vmem:[#allocation9 + $0xc] sm:$0xf]
        %v1361 = vld [vmem:[#allocation9 + $0x10] sm:$0xf]
        %v1362 = vld [vmem:[#allocation9 + $0x14] sm:$0xf]
        %v1363 = vld [vmem:[#allocation9 + $0x18] sm:$0xf]
        %v1364 = vld [vmem:[#allocation9 + $0x1c] sm:$0xf]
        %v1365 = vld [vmem:[#allocation9 + $0x20] sm:$0xf]
        %v1366 = vld [vmem:[#allocation9 + $0x24] sm:$0xf]
        %v1367 = vld [vmem:[#allocation9 + $0x28] sm:$0xf]
        %v1368 = vld [vmem:[#allocation9 + $0x2c] sm:$0xf]
        %v1369 = vld [vmem:[#allocation9 + $0x30] sm:$0xf]
        %v1370 = vld [vmem:[#allocation9 + $0x34] sm:$0xf]
        %v1371 = vld [vmem:[#allocation9 + $0x38] sm:$0xf]
        %v1372 = vld [vmem:[#allocation9 + $0x3c] sm:$0xf]
        %v1405 = vunpack.c.l.b16 %v1325
        %v1406 = vunpack.c.l.b16 %v1326
        %v1407 = vunpack.c.l.b16 %v1327
        %v1408 = vunpack.c.l.b16 %v1328
        %v1409 = vunpack.c.l.b16 %v1329
        %v1410 = vunpack.c.l.b16 %v1330
        %v1411 = vunpack.c.l.b16 %v1331
        %v1412 = vunpack.c.l.b16 %v1332
        %v1413 = vunpack.c.l.b16 %v1333
        %v1414 = vunpack.c.l.b16 %v1334
        %v1415 = vunpack.c.l.b16 %v1335
        %v1416 = vunpack.c.l.b16 %v1336
        %v1417 = vunpack.c.l.b16 %v1337
        %v1418 = vunpack.c.l.b16 %v1338
        %v1419 = vunpack.c.l.b16 %v1339
        %v1420 = vunpack.c.l.b16 %v1340
        %v1421 = vunpack.c.l.b16 %v1341
        %v1422 = vunpack.c.l.b16 %v1342
        %v1423 = vunpack.c.l.b16 %v1343
        %v1424 = vunpack.c.l.b16 %v1344
        %v1425 = vunpack.c.l.b16 %v1345
        %v1426 = vunpack.c.l.b16 %v1346
        %v1427 = vunpack.c.l.b16 %v1347
        %v1428 = vunpack.c.l.b16 %v1348
        %v1429 = vunpack.c.l.b16 %v1349
        %v1430 = vunpack.c.l.b16 %v1350
        %v1431 = vunpack.c.l.b16 %v1351
        %v1432 = vunpack.c.l.b16 %v1352
        %v1433 = vunpack.c.l.b16 %v1353
        %v1434 = vunpack.c.l.b16 %v1354
        %v1435 = vunpack.c.l.b16 %v1355
        %v1436 = vunpack.c.l.b16 %v1356
        %v1437 = vpack.c.b16 %v1406, %v1405
        %v1438 = vpack.c.b16 %v1408, %v1407
        %v1439 = vpack.c.b16 %v1410, %v1409
        %v1440 = vpack.c.b16 %v1412, %v1411
        %v1441 = vpack.c.b16 %v1414, %v1413
        %v1442 = vpack.c.b16 %v1416, %v1415
        %v1443 = vpack.c.b16 %v1418, %v1417
        %v1444 = vpack.c.b16 %v1420, %v1419
        %v1445 = vpack.c.b16 %v1422, %v1421
        %v1446 = vpack.c.b16 %v1424, %v1423
        %v1447 = vpack.c.b16 %v1426, %v1425
        %v1448 = vpack.c.b16 %v1428, %v1427
        %v1449 = vpack.c.b16 %v1430, %v1429
        %v1450 = vpack.c.b16 %v1432, %v1431
        %v1451 = vpack.c.b16 %v1434, %v1433
        %v1452 = vpack.c.b16 %v1436, %v1435
        %v1485 = vunpack.c.l.b16 %v1357
        %v1486 = vunpack.c.l.b16 %v1358
        %v1487 = vunpack.c.l.b16 %v1359
        %v1488 = vunpack.c.l.b16 %v1360
        %v1489 = vunpack.c.l.b16 %v1361
        %v1490 = vunpack.c.l.b16 %v1362
        %v1491 = vunpack.c.l.b16 %v1363
        %v1492 = vunpack.c.l.b16 %v1364
        %v1493 = vunpack.c.l.b16 %v1365
        %v1494 = vunpack.c.l.b16 %v1366
        %v1495 = vunpack.c.l.b16 %v1367
        %v1496 = vunpack.c.l.b16 %v1368
        %v1497 = vunpack.c.l.b16 %v1369
        %v1498 = vunpack.c.l.b16 %v1370
        %v1499 = vunpack.c.l.b16 %v1371
        %v1500 = vunpack.c.l.b16 %v1372
        %v1501 = vpack.c.b16 %v1486, %v1485
        %v1502 = vpack.c.b16 %v1488, %v1487
        %v1503 = vpack.c.b16 %v1490, %v1489
        %v1504 = vpack.c.b16 %v1492, %v1491
        %v1505 = vpack.c.b16 %v1494, %v1493
        %v1506 = vpack.c.b16 %v1496, %v1495
        %v1507 = vpack.c.b16 %v1498, %v1497
        %v1508 = vpack.c.b16 %v1500, %v1499
        %1517 = vmatprep.subr.bf16.mxu0 0
        %1518 = vmatpush1.bf16.msra.mxu0 %v1501
        %1519 = vmatprep.subr.bf16.mxu0 0
        %1520 = vmatpush1.bf16.msra.mxu0 %v1502
        %1521 = vmatprep.subr.bf16.mxu0 0
        %1522 = vmatpush1.bf16.msra.mxu0 %v1503
        %1523 = vmatprep.subr.bf16.mxu0 0
        %1524 = vmatpush1.bf16.msra.mxu0 %v1504
        %1525 = vmatprep.subr.bf16.mxu0 0
        %1526 = vmatpush1.bf16.msra.mxu0 %v1505
        %1527 = vmatprep.subr.bf16.mxu0 0
        %1528 = vmatpush1.bf16.msra.mxu0 %v1506
        %1529 = vmatprep.subr.bf16.mxu0 0
        %1530 = vmatpush1.bf16.msra.mxu0 %v1507
        %1531 = vmatprep.subr.bf16.mxu0 0
        %1532 = vmatpush1.bf16.msra.mxu0 %v1508
        %1533 = vmatprep.subr.bf16.mxu0 0
        %1534 = vmatpush1.bf16.msra.mxu0 0
        %1535 = vmatprep.subr.bf16.mxu0 0
        %1536 = vmatpush1.bf16.msra.mxu0 0
        %1537 = vmatprep.subr.bf16.mxu0 0
        %1538 = vmatpush1.bf16.msra.mxu0 0
        %1539 = vmatprep.subr.bf16.mxu0 0
        %1540 = vmatpush1.bf16.msra.mxu0 0
        %1541 = vmatprep.subr.bf16.mxu0 0
        %1542 = vmatpush1.bf16.msra.mxu0 0
        %1543 = vmatprep.subr.bf16.mxu0 0
        %1544 = vmatpush1.bf16.msra.mxu0 0
        %1545 = vmatprep.subr.bf16.mxu0 0
        %1546 = vmatpush1.bf16.msra.mxu0 0
        %1547 = vmatprep.subr.bf16.mxu0 0
        %1548 = vmatpush1.bf16.msra.mxu0 0
        %1549 = vmatprep.mubr.bf16.mxu0 0
        %1550 = vmatmul.mubr.bf16.gmra.mrb[0].mxu0 %v1437
        %v1551 = vpop.f32.mrb[0].mxu0
        %v1552 = vadd.f32 0.0, %v1551
        %v1553 = vpop.f32.mrb[0].mxu0
        %v1554 = vpop.f32.mrb[0].mxu0
        %v1555 = vadd.f32 0.0, %v1554
        %v1556 = vpop.f32.mrb[0].mxu0
        %1557 = vmatprep.mubr.bf16.mxu0 0
        %1558 = vmatmul.mubr.bf16.gmra.mrb[0].mxu0 %v1438
        %v1559 = vpop.f32.mrb[0].mxu0
        %v1560 = vadd.f32 0.0, %v1559
        %v1561 = vpop.f32.mrb[0].mxu0
        %v1562 = vpop.f32.mrb[0].mxu0
        %v1563 = vadd.f32 0.0, %v1562
        %v1564 = vpop.f32.mrb[0].mxu0
        %1565 = vmatprep.mubr.bf16.mxu0 0
        %1566 = vmatmul.mubr.bf16.gmra.mrb[0].mxu0 %v1439
        %v1567 = vpop.f32.mrb[0].mxu0
        %v1568 = vadd.f32 0.0, %v1567
        %v1569 = vpop.f32.mrb[0].mxu0
        %v1570 = vpop.f32.mrb[0].mxu0
        %v1571 = vadd.f32 0.0, %v1570
        %v1572 = vpop.f32.mrb[0].mxu0
        %1573 = vmatprep.mubr.bf16.mxu0 0
        %1574 = vmatmul.mubr.bf16.gmra.mrb[0].mxu0 %v1440
        %v1575 = vpop.f32.mrb[0].mxu0
        %v1576 = vadd.f32 0.0, %v1575
        %v1577 = vpop.f32.mrb[0].mxu0
        %v1578 = vpop.f32.mrb[0].mxu0
        %v1579 = vadd.f32 0.0, %v1578
        %v1580 = vpop.f32.mrb[0].mxu0
        %1581 = vmatprep.mubr.bf16.mxu0 0
        %1582 = vmatmul.mubr.bf16.gmra.mrb[0].mxu0 %v1441
        %v1583 = vpop.f32.mrb[0].mxu0
        %v1584 = vadd.f32 0.0, %v1583
        %v1585 = vpop.f32.mrb[0].mxu0
        %v1586 = vpop.f32.mrb[0].mxu0
        %v1587 = vadd.f32 0.0, %v1586
        %v1588 = vpop.f32.mrb[0].mxu0
        %1589 = vmatprep.mubr.bf16.mxu0 0
        %1590 = vmatmul.mubr.bf16.gmra.mrb[0].mxu0 %v1442
        %v1591 = vpop.f32.mrb[0].mxu0
        %v1592 = vadd.f32 0.0, %v1591
        %v1593 = vpop.f32.mrb[0].mxu0
        %v1594 = vpop.f32.mrb[0].mxu0
        %v1595 = vadd.f32 0.0, %v1594
        %v1596 = vpop.f32.mrb[0].mxu0
        %1597 = vmatprep.mubr.bf16.mxu0 0
        %1598 = vmatmul.mubr.bf16.gmra.mrb[0].mxu0 %v1443
        %v1599 = vpop.f32.mrb[0].mxu0
        %v1600 = vadd.f32 0.0, %v1599
        %v1601 = vpop.f32.mrb[0].mxu0
        %v1602 = vpop.f32.mrb[0].mxu0
        %v1603 = vadd.f32 0.0, %v1602
        %v1604 = vpop.f32.mrb[0].mxu0
        %1605 = vmatprep.mubr.bf16.mxu0 0
        %1606 = vmatmul.mubr.bf16.gmra.mrb[0].mxu0 %v1444
        %v1607 = vpop.f32.mrb[0].mxu0
        %v1608 = vadd.f32 0.0, %v1607
        %v1609 = vpop.f32.mrb[0].mxu0
        %v1610 = vpop.f32.mrb[0].mxu0
        %v1611 = vadd.f32 0.0, %v1610
        %v1612 = vpop.f32.mrb[0].mxu0
        %1613 = vmatprep.mubr.bf16.mxu0 0
        %1614 = vmatmul.mubr.bf16.gmra.mrb[0].mxu0 %v1445
        %v1615 = vpop.f32.mrb[0].mxu0
        %v1616 = vadd.f32 0.0, %v1615
        %v1617 = vpop.f32.mrb[0].mxu0
        %v1618 = vpop.f32.mrb[0].mxu0
        %v1619 = vadd.f32 0.0, %v1618
        %v1620 = vpop.f32.mrb[0].mxu0
        %1621 = vmatprep.mubr.bf16.mxu0 0
        %1622 = vmatmul.mubr.bf16.gmra.mrb[0].mxu0 %v1446
        %v1623 = vpop.f32.mrb[0].mxu0
        %v1624 = vadd.f32 0.0, %v1623
        %v1625 = vpop.f32.mrb[0].mxu0
        %v1626 = vpop.f32.mrb[0].mxu0
        %v1627 = vadd.f32 0.0, %v1626
        %v1628 = vpop.f32.mrb[0].mxu0
        %1629 = vmatprep.mubr.bf16.mxu0 0
        %1630 = vmatmul.mubr.bf16.gmra.mrb[0].mxu0 %v1447
        %v1631 = vpop.f32.mrb[0].mxu0
        %v1632 = vadd.f32 0.0, %v1631
        %v1633 = vpop.f32.mrb[0].mxu0
        %v1634 = vpop.f32.mrb[0].mxu0
        %v1635 = vadd.f32 0.0, %v1634
        %v1636 = vpop.f32.mrb[0].mxu0
        %1637 = vmatprep.mubr.bf16.mxu0 0
        %1638 = vmatmul.mubr.bf16.gmra.mrb[0].mxu0 %v1448
        %v1639 = vpop.f32.mrb[0].mxu0
        %v1640 = vadd.f32 0.0, %v1639
        %v1641 = vpop.f32.mrb[0].mxu0
        %v1642 = vpop.f32.mrb[0].mxu0
        %v1643 = vadd.f32 0.0, %v1642
        %v1644 = vpop.f32.mrb[0].mxu0
        %1645 = vmatprep.mubr.bf16.mxu0 0
        %1646 = vmatmul.mubr.bf16.gmra.mrb[0].mxu0 %v1449
        %v1647 = vpop.f32.mrb[0].mxu0
        %v1648 = vadd.f32 0.0, %v1647
        %v1649 = vpop.f32.mrb[0].mxu0
        %v1650 = vpop.f32.mrb[0].mxu0
        %v1651 = vadd.f32 0.0, %v1650
        %v1652 = vpop.f32.mrb[0].mxu0
        %1653 = vmatprep.mubr.bf16.mxu0 0
        %1654 = vmatmul.mubr.bf16.gmra.mrb[0].mxu0 %v1450
        %v1655 = vpop.f32.mrb[0].mxu0
        %v1656 = vadd.f32 0.0, %v1655
        %v1657 = vpop.f32.mrb[0].mxu0
        %v1658 = vpop.f32.mrb[0].mxu0
        %v1659 = vadd.f32 0.0, %v1658
        %v1660 = vpop.f32.mrb[0].mxu0
        %1661 = vmatprep.mubr.bf16.mxu0 0
        %1662 = vmatmul.mubr.bf16.gmra.mrb[0].mxu0 %v1451
        %v1663 = vpop.f32.mrb[0].mxu0
        %v1664 = vadd.f32 0.0, %v1663
        %v1665 = vpop.f32.mrb[0].mxu0
        %v1666 = vpop.f32.mrb[0].mxu0
        %v1667 = vadd.f32 0.0, %v1666
        %v1668 = vpop.f32.mrb[0].mxu0
        %1669 = vmatprep.mubr.bf16.mxu0 0
        %1670 = vmatmul.mubr.bf16.gmra.mrb[0].mxu0 %v1452
        %v1671 = vpop.f32.mrb[0].mxu0
        %v1672 = vadd.f32 0.0, %v1671
        %v1673 = vpop.f32.mrb[0].mxu0
        %v1674 = vpop.f32.mrb[0].mxu0
        %v1675 = vadd.f32 0.0, %v1674
        %v1676 = vpop.f32.mrb[0].mxu0
        %1677 = vdwg.mxu0
        %1678 = vst [vmem:[#allocation3] sm:$0xff] %v1552
        %1679 = vst [vmem:[#allocation3 + $0x8] sm:$0xff] %v1555
        %1680 = vst [vmem:[#allocation3 + $0x10] sm:$0xff] %v1560
        %1681 = vst [vmem:[#allocation3 + $0x18] sm:$0xff] %v1563
        %1682 = vst [vmem:[#allocation3 + $0x20] sm:$0xff] %v1568
        %1683 = vst [vmem:[#allocation3 + $0x28] sm:$0xff] %v1571
        %1684 = vst [vmem:[#allocation3 + $0x30] sm:$0xff] %v1576
        %1685 = vst [vmem:[#allocation3 + $0x38] sm:$0xff] %v1579
        %1686 = vst [vmem:[#allocation3 + $0x40] sm:$0xff] %v1584
        %1687 = vst [vmem:[#allocation3 + $0x48] sm:$0xff] %v1587
        %1688 = vst [vmem:[#allocation3 + $0x50] sm:$0xff] %v1592
        %1689 = vst [vmem:[#allocation3 + $0x58] sm:$0xff] %v1595
        %1690 = vst [vmem:[#allocation3 + $0x60] sm:$0xff] %v1600
        %1691 = vst [vmem:[#allocation3 + $0x68] sm:$0xff] %v1603
        %1692 = vst [vmem:[#allocation3 + $0x70] sm:$0xff] %v1608
        %1693 = vst [vmem:[#allocation3 + $0x78] sm:$0xff] %v1611
        %1694 = vst [vmem:[#allocation3 + $0x80] sm:$0xff] %v1616
        %1695 = vst [vmem:[#allocation3 + $0x88] sm:$0xff] %v1619
        %1696 = vst [vmem:[#allocation3 + $0x90] sm:$0xff] %v1624
        %1697 = vst [vmem:[#allocation3 + $0x98] sm:$0xff] %v1627
        %1698 = vst [vmem:[#allocation3 + $0xa0] sm:$0xff] %v1632
        %1699 = vst [vmem:[#allocation3 + $0xa8] sm:$0xff] %v1635
        %1700 = vst [vmem:[#allocation3 + $0xb0] sm:$0xff] %v1640
        %1701 = vst [vmem:[#allocation3 + $0xb8] sm:$0xff] %v1643
        %1702 = vst [vmem:[#allocation3 + $0xc0] sm:$0xff] %v1648
        %1703 = vst [vmem:[#allocation3 + $0xc8] sm:$0xff] %v1651
        %1704 = vst [vmem:[#allocation3 + $0xd0] sm:$0xff] %v1656
        %1705 = vst [vmem:[#allocation3 + $0xd8] sm:$0xff] %v1659
        %1706 = vst [vmem:[#allocation3 + $0xe0] sm:$0xff] %v1664
        %1707 = vst [vmem:[#allocation3 + $0xe8] sm:$0xff] %v1667
        %1708 = vst [vmem:[#allocation3 + $0xf0] sm:$0xff] %v1672
        %1709 = vst [vmem:[#allocation3 + $0xf8] sm:$0xff] %v1675
        %v1710 = vld [vmem:[#allocation2] sm:$0xf]
        %v1711 = vld [vmem:[#allocation2 + $0x4] sm:$0xf]
        %v1712 = vld [vmem:[#allocation2 + $0x8] sm:$0x1]
        %v1713 = vld [vmem:[#allocation2 + $0xc] sm:$0xf]
        %v1714 = vld [vmem:[#allocation2 + $0x10] sm:$0xf]
        %v1715 = vld [vmem:[#allocation2 + $0x14] sm:$0x1]
        %v1716 = vld [vmem:[#allocation2 + $0x18] sm:$0xf]
        %v1717 = vld [vmem:[#allocation2 + $0x1c] sm:$0xf]
        %v1718 = vld [vmem:[#allocation2 + $0x20] sm:$0x1]
        %v1719 = vld [vmem:[#allocation2 + $0x24] sm:$0xf]
        %v1720 = vld [vmem:[#allocation2 + $0x28] sm:$0xf]
        %v1721 = vld [vmem:[#allocation2 + $0x2c] sm:$0x1]
        %v1722 = vld [vmem:[#allocation2 + $0x30] sm:$0xf]
        %v1723 = vld [vmem:[#allocation2 + $0x34] sm:$0xf]
        %v1724 = vld [vmem:[#allocation2 + $0x38] sm:$0x1]
        %v1725 = vld [vmem:[#allocation2 + $0x3c] sm:$0xf]
        %v1726 = vld [vmem:[#allocation2 + $0x40] sm:$0xf]
        %v1727 = vld [vmem:[#allocation2 + $0x44] sm:$0x1]
        %v1728 = vld [vmem:[#allocation2 + $0x48] sm:$0xf]
        %v1729 = vld [vmem:[#allocation2 + $0x4c] sm:$0xf]
        %v1730 = vld [vmem:[#allocation2 + $0x50] sm:$0x1]
        %v1731 = vld [vmem:[#allocation2 + $0x54] sm:$0xf]
        %v1732 = vld [vmem:[#allocation2 + $0x58] sm:$0xf]
        %v1733 = vld [vmem:[#allocation2 + $0x5c] sm:$0x1]
        %v1734 = vld [vmem:[#allocation2 + $0x60] sm:$0xf]
        %v1735 = vld [vmem:[#allocation2 + $0x64] sm:$0xf]
        %v1736 = vld [vmem:[#allocation2 + $0x68] sm:$0x1]
        %v1737 = vld [vmem:[#allocation2 + $0x6c] sm:$0xf]
        %v1738 = vld [vmem:[#allocation2 + $0x70] sm:$0xf]
        %v1739 = vld [vmem:[#allocation2 + $0x74] sm:$0x1]
        %v1740 = vld [vmem:[#allocation2 + $0x78] sm:$0xf]
        %v1741 = vld [vmem:[#allocation2 + $0x7c] sm:$0xf]
        %v1742 = vld [vmem:[#allocation2 + $0x80] sm:$0x1]
        %v1743 = vld [vmem:[#allocation2 + $0x84] sm:$0xf]
        %v1744 = vld [vmem:[#allocation2 + $0x88] sm:$0xf]
        %v1745 = vld [vmem:[#allocation2 + $0x8c] sm:$0x1]
        %v1746 = vld [vmem:[#allocation2 + $0x90] sm:$0xf]
        %v1747 = vld [vmem:[#allocation2 + $0x94] sm:$0xf]
        %v1748 = vld [vmem:[#allocation2 + $0x98] sm:$0x1]
        %v1749 = vld [vmem:[#allocation2 + $0x9c] sm:$0xf]
        %v1750 = vld [vmem:[#allocation2 + $0xa0] sm:$0xf]
        %v1751 = vld [vmem:[#allocation2 + $0xa4] sm:$0x1]
        %v1752 = vld [vmem:[#allocation2 + $0xa8] sm:$0xf]
        %v1753 = vld [vmem:[#allocation2 + $0xac] sm:$0xf]
        %v1754 = vld [vmem:[#allocation2 + $0xb0] sm:$0x1]
        %v1755 = vld [vmem:[#allocation2 + $0xb4] sm:$0xf]
        %v1756 = vld [vmem:[#allocation2 + $0xb8] sm:$0xf]
        %v1757 = vld [vmem:[#allocation2 + $0xbc] sm:$0x1]
        %vm1758 = vsmask.f32 3328
        %vm1759 = vsmask.f32 7440
        %vm1760 = vmor %vm1758, %vm1759
        %v1762 = vshrl.u32 %v1710, 16
        %v1764 = vrot.slane %v1762, 4
        %v1765 = vshll.u32 %v1710, 16
        %v1767 = vrot.slane %v1765, 5
        %v1768 = vor.u32 %v1764, %v1767
        %v1769 = vrot.slane %v1768, 4
        %v1771 = vshll.u32 %v1711, 16
        %v1773 = vrot.slane %v1771, 5
        %v1774 = vsel %vm1760, %v1769, %v1773
        %v1775 = vshrl.u32 %v1711, 16
        %v1777 = vrot.slane %v1775, 4
        %v1778 = vor.u32 %v1777, %v1773
        %v1779 = vrot.slane %v1778, 4
        %v1781 = vshll.u32 %v1712, 16
        %v1783 = vrot.slane %v1781, 5
        %v1784 = vsel %vm1760, %v1779, %v1783
        %v1786 = vshrl.u32 %v1713, 16
        %v1788 = vrot.slane %v1786, 4
        %v1789 = vshll.u32 %v1713, 16
        %v1791 = vrot.slane %v1789, 5
        %v1792 = vor.u32 %v1788, %v1791
        %v1793 = vrot.slane %v1792, 4
        %v1795 = vshll.u32 %v1714, 16
        %v1797 = vrot.slane %v1795, 5
        %v1798 = vsel %vm1760, %v1793, %v1797
        %v1799 = vshrl.u32 %v1714, 16
        %v1801 = vrot.slane %v1799, 4
        %v1802 = vor.u32 %v1801, %v1797
        %v1803 = vrot.slane %v1802, 4
        %v1805 = vshll.u32 %v1715, 16
        %v1807 = vrot.slane %v1805, 5
        %v1808 = vsel %vm1760, %v1803, %v1807
        %v1810 = vshrl.u32 %v1716, 16
        %v1812 = vrot.slane %v1810, 4
        %v1813 = vshll.u32 %v1716, 16
        %v1815 = vrot.slane %v1813, 5
        %v1816 = vor.u32 %v1812, %v1815
        %v1817 = vrot.slane %v1816, 4
        %v1819 = vshll.u32 %v1717, 16
        %v1821 = vrot.slane %v1819, 5
        %v1822 = vsel %vm1760, %v1817, %v1821
        %v1823 = vshrl.u32 %v1717, 16
        %v1825 = vrot.slane %v1823, 4
        %v1826 = vor.u32 %v1825, %v1821
        %v1827 = vrot.slane %v1826, 4
        %v1829 = vshll.u32 %v1718, 16
        %v1831 = vrot.slane %v1829, 5
        %v1832 = vsel %vm1760, %v1827, %v1831
        %v1834 = vshrl.u32 %v1719, 16
        %v1836 = vrot.slane %v1834, 4
        %v1837 = vshll.u32 %v1719, 16
        %v1839 = vrot.slane %v1837, 5
        %v1840 = vor.u32 %v1836, %v1839
        %v1841 = vrot.slane %v1840, 4
        %v1843 = vshll.u32 %v1720, 16
        %v1845 = vrot.slane %v1843, 5
        %v1846 = vsel %vm1760, %v1841, %v1845
        %v1847 = vshrl.u32 %v1720, 16
        %v1849 = vrot.slane %v1847, 4
        %v1850 = vor.u32 %v1849, %v1845
        %v1851 = vrot.slane %v1850, 4
        %v1853 = vshll.u32 %v1721, 16
        %v1855 = vrot.slane %v1853, 5
        %v1856 = vsel %vm1760, %v1851, %v1855
        %v1858 = vshrl.u32 %v1722, 16
        %v1860 = vrot.slane %v1858, 4
        %v1861 = vshll.u32 %v1722, 16
        %v1863 = vrot.slane %v1861, 5
        %v1864 = vor.u32 %v1860, %v1863
        %v1865 = vrot.slane %v1864, 4
        %v1867 = vshll.u32 %v1723, 16
        %v1869 = vrot.slane %v1867, 5
        %v1870 = vsel %vm1760, %v1865, %v1869
        %v1871 = vshrl.u32 %v1723, 16
        %v1873 = vrot.slane %v1871, 4
        %v1874 = vor.u32 %v1873, %v1869
        %v1875 = vrot.slane %v1874, 4
        %v1877 = vshll.u32 %v1724, 16
        %v1879 = vrot.slane %v1877, 5
        %v1880 = vsel %vm1760, %v1875, %v1879
        %v1882 = vshrl.u32 %v1725, 16
        %v1884 = vrot.slane %v1882, 4
        %v1885 = vshll.u32 %v1725, 16
        %v1887 = vrot.slane %v1885, 5
        %v1888 = vor.u32 %v1884, %v1887
        %v1889 = vrot.slane %v1888, 4
        %v1891 = vshll.u32 %v1726, 16
        %v1893 = vrot.slane %v1891, 5
        %v1894 = vsel %vm1760, %v1889, %v1893
        %v1895 = vshrl.u32 %v1726, 16
        %v1897 = vrot.slane %v1895, 4
        %v1898 = vor.u32 %v1897, %v1893
        %v1899 = vrot.slane %v1898, 4
        %v1901 = vshll.u32 %v1727, 16
        %v1903 = vrot.slane %v1901, 5
        %v1904 = vsel %vm1760, %v1899, %v1903
        %v1906 = vshrl.u32 %v1728, 16
        %v1908 = vrot.slane %v1906, 4
        %v1909 = vshll.u32 %v1728, 16
        %v1911 = vrot.slane %v1909, 5
        %v1912 = vor.u32 %v1908, %v1911
        %v1913 = vrot.slane %v1912, 4
        %v1915 = vshll.u32 %v1729, 16
        %v1917 = vrot.slane %v1915, 5
        %v1918 = vsel %vm1760, %v1913, %v1917
        %v1919 = vshrl.u32 %v1729, 16
        %v1921 = vrot.slane %v1919, 4
        %v1922 = vor.u32 %v1921, %v1917
        %v1923 = vrot.slane %v1922, 4
        %v1925 = vshll.u32 %v1730, 16
        %v1927 = vrot.slane %v1925, 5
        %v1928 = vsel %vm1760, %v1923, %v1927
        %v1930 = vshrl.u32 %v1731, 16
        %v1932 = vrot.slane %v1930, 4
        %v1933 = vshll.u32 %v1731, 16
        %v1935 = vrot.slane %v1933, 5
        %v1936 = vor.u32 %v1932, %v1935
        %v1937 = vrot.slane %v1936, 4
        %v1939 = vshll.u32 %v1732, 16
        %v1941 = vrot.slane %v1939, 5
        %v1942 = vsel %vm1760, %v1937, %v1941
        %v1943 = vshrl.u32 %v1732, 16
        %v1945 = vrot.slane %v1943, 4
        %v1946 = vor.u32 %v1945, %v1941
        %v1947 = vrot.slane %v1946, 4
        %v1949 = vshll.u32 %v1733, 16
        %v1951 = vrot.slane %v1949, 5
        %v1952 = vsel %vm1760, %v1947, %v1951
        %v1954 = vshrl.u32 %v1734, 16
        %v1956 = vrot.slane %v1954, 4
        %v1957 = vshll.u32 %v1734, 16
        %v1959 = vrot.slane %v1957, 5
        %v1960 = vor.u32 %v1956, %v1959
        %v1961 = vrot.slane %v1960, 4
        %v1963 = vshll.u32 %v1735, 16
        %v1965 = vrot.slane %v1963, 5
        %v1966 = vsel %vm1760, %v1961, %v1965
        %v1967 = vshrl.u32 %v1735, 16
        %v1969 = vrot.slane %v1967, 4
        %v1970 = vor.u32 %v1969, %v1965
        %v1971 = vrot.slane %v1970, 4
        %v1973 = vshll.u32 %v1736, 16
        %v1975 = vrot.slane %v1973, 5
        %v1976 = vsel %vm1760, %v1971, %v1975
        %v1978 = vshrl.u32 %v1737, 16
        %v1980 = vrot.slane %v1978, 4
        %v1981 = vshll.u32 %v1737, 16
        %v1983 = vrot.slane %v1981, 5
        %v1984 = vor.u32 %v1980, %v1983
        %v1985 = vrot.slane %v1984, 4
        %v1987 = vshll.u32 %v1738, 16
        %v1989 = vrot.slane %v1987, 5
        %v1990 = vsel %vm1760, %v1985, %v1989
        %v1991 = vshrl.u32 %v1738, 16
        %v1993 = vrot.slane %v1991, 4
        %v1994 = vor.u32 %v1993, %v1989
        %v1995 = vrot.slane %v1994, 4
        %v1997 = vshll.u32 %v1739, 16
        %v1999 = vrot.slane %v1997, 5
        %v2000 = vsel %vm1760, %v1995, %v1999
        %v2002 = vshrl.u32 %v1740, 16
        %v2004 = vrot.slane %v2002, 4
        %v2005 = vshll.u32 %v1740, 16
        %v2007 = vrot.slane %v2005, 5
        %v2008 = vor.u32 %v2004, %v2007
        %v2009 = vrot.slane %v2008, 4
        %v2011 = vshll.u32 %v1741, 16
        %v2013 = vrot.slane %v2011, 5
        %v2014 = vsel %vm1760, %v2009, %v2013
        %v2015 = vshrl.u32 %v1741, 16
        %v2017 = vrot.slane %v2015, 4
        %v2018 = vor.u32 %v2017, %v2013
        %v2019 = vrot.slane %v2018, 4
        %v2021 = vshll.u32 %v1742, 16
        %v2023 = vrot.slane %v2021, 5
        %v2024 = vsel %vm1760, %v2019, %v2023
        %v2026 = vshrl.u32 %v1743, 16
        %v2028 = vrot.slane %v2026, 4
        %v2029 = vshll.u32 %v1743, 16
        %v2031 = vrot.slane %v2029, 5
        %v2032 = vor.u32 %v2028, %v2031
        %v2033 = vrot.slane %v2032, 4
        %v2035 = vshll.u32 %v1744, 16
        %v2037 = vrot.slane %v2035, 5
        %v2038 = vsel %vm1760, %v2033, %v2037
        %v2039 = vshrl.u32 %v1744, 16
        %v2041 = vrot.slane %v2039, 4
        %v2042 = vor.u32 %v2041, %v2037
        %v2043 = vrot.slane %v2042, 4
        %v2045 = vshll.u32 %v1745, 16
        %v2047 = vrot.slane %v2045, 5
        %v2048 = vsel %vm1760, %v2043, %v2047
        %v2050 = vshrl.u32 %v1746, 16
        %v2052 = vrot.slane %v2050, 4
        %v2053 = vshll.u32 %v1746, 16
        %v2055 = vrot.slane %v2053, 5
        %v2056 = vor.u32 %v2052, %v2055
        %v2057 = vrot.slane %v2056, 4
        %v2059 = vshll.u32 %v1747, 16
        %v2061 = vrot.slane %v2059, 5
        %v2062 = vsel %vm1760, %v2057, %v2061
        %v2063 = vshrl.u32 %v1747, 16
        %v2065 = vrot.slane %v2063, 4
        %v2066 = vor.u32 %v2065, %v2061
        %v2067 = vrot.slane %v2066, 4
        %v2069 = vshll.u32 %v1748, 16
        %v2071 = vrot.slane %v2069, 5
        %v2072 = vsel %vm1760, %v2067, %v2071
        %v2074 = vshrl.u32 %v1749, 16
        %v2076 = vrot.slane %v2074, 4
        %v2077 = vshll.u32 %v1749, 16
        %v2079 = vrot.slane %v2077, 5
        %v2080 = vor.u32 %v2076, %v2079
        %v2081 = vrot.slane %v2080, 4
        %v2083 = vshll.u32 %v1750, 16
        %v2085 = vrot.slane %v2083, 5
        %v2086 = vsel %vm1760, %v2081, %v2085
        %v2087 = vshrl.u32 %v1750, 16
        %v2089 = vrot.slane %v2087, 4
        %v2090 = vor.u32 %v2089, %v2085
        %v2091 = vrot.slane %v2090, 4
        %v2093 = vshll.u32 %v1751, 16
        %v2095 = vrot.slane %v2093, 5
        %v2096 = vsel %vm1760, %v2091, %v2095
        %v2098 = vshrl.u32 %v1752, 16
        %v2100 = vrot.slane %v2098, 4
        %v2101 = vshll.u32 %v1752, 16
        %v2103 = vrot.slane %v2101, 5
        %v2104 = vor.u32 %v2100, %v2103
        %v2105 = vrot.slane %v2104, 4
        %v2107 = vshll.u32 %v1753, 16
        %v2109 = vrot.slane %v2107, 5
        %v2110 = vsel %vm1760, %v2105, %v2109
        %v2111 = vshrl.u32 %v1753, 16
        %v2113 = vrot.slane %v2111, 4
        %v2114 = vor.u32 %v2113, %v2109
        %v2115 = vrot.slane %v2114, 4
        %v2117 = vshll.u32 %v1754, 16
        %v2119 = vrot.slane %v2117, 5
        %v2120 = vsel %vm1760, %v2115, %v2119
        %v2122 = vshrl.u32 %v1755, 16
        %v2124 = vrot.slane %v2122, 4
        %v2125 = vshll.u32 %v1755, 16
        %v2127 = vrot.slane %v2125, 5
        %v2128 = vor.u32 %v2124, %v2127
        %v2129 = vrot.slane %v2128, 4
        %v2131 = vshll.u32 %v1756, 16
        %v2133 = vrot.slane %v2131, 5
        %v2134 = vsel %vm1760, %v2129, %v2133
        %v2135 = vshrl.u32 %v1756, 16
        %v2137 = vrot.slane %v2135, 4
        %v2138 = vor.u32 %v2137, %v2133
        %v2139 = vrot.slane %v2138, 4
        %v2141 = vshll.u32 %v1757, 16
        %v2143 = vrot.slane %v2141, 5
        %v2144 = vsel %vm1760, %v2139, %v2143
        %s2145 = scalar_lea.vmem [#allocation9], 64
        %v2146 = vld [vmem:[%s2145] sm:$0xf]
        %v2147 = vld [vmem:[%s2145 + $0x4] sm:$0xf]
        %v2148 = vld [vmem:[%s2145 + $0x8] sm:$0xf]
        %v2149 = vld [vmem:[%s2145 + $0xc] sm:$0xf]
        %v2150 = vld [vmem:[%s2145 + $0x10] sm:$0xf]
        %v2151 = vld [vmem:[%s2145 + $0x14] sm:$0xf]
        %v2152 = vld [vmem:[%s2145 + $0x18] sm:$0xf]
        %v2153 = vld [vmem:[%s2145 + $0x1c] sm:$0xf]
        %v2154 = vld [vmem:[%s2145 + $0x20] sm:$0xf]
        %v2155 = vld [vmem:[%s2145 + $0x24] sm:$0xf]
        %v2156 = vld [vmem:[%s2145 + $0x28] sm:$0xf]
        %v2157 = vld [vmem:[%s2145 + $0x2c] sm:$0xf]
        %v2158 = vld [vmem:[%s2145 + $0x30] sm:$0xf]
        %v2159 = vld [vmem:[%s2145 + $0x34] sm:$0xf]
        %v2160 = vld [vmem:[%s2145 + $0x38] sm:$0xf]
        %v2161 = vld [vmem:[%s2145 + $0x3c] sm:$0xf]
        %v2162 = vunpack.c.l.b16 %v1774
        %v2163 = vunpack.c.l.b16 %v1784
        %v2164 = vunpack.c.l.b16 %v1798
        %v2165 = vunpack.c.l.b16 %v1808
        %v2166 = vunpack.c.l.b16 %v1822
        %v2167 = vunpack.c.l.b16 %v1832
        %v2168 = vunpack.c.l.b16 %v1846
        %v2169 = vunpack.c.l.b16 %v1856
        %v2170 = vunpack.c.l.b16 %v1870
        %v2171 = vunpack.c.l.b16 %v1880
        %v2172 = vunpack.c.l.b16 %v1894
        %v2173 = vunpack.c.l.b16 %v1904
        %v2174 = vunpack.c.l.b16 %v1918
        %v2175 = vunpack.c.l.b16 %v1928
        %v2176 = vunpack.c.l.b16 %v1942
        %v2177 = vunpack.c.l.b16 %v1952
        %v2178 = vunpack.c.l.b16 %v1966
        %v2179 = vunpack.c.l.b16 %v1976
        %v2180 = vunpack.c.l.b16 %v1990
        %v2181 = vunpack.c.l.b16 %v2000
        %v2182 = vunpack.c.l.b16 %v2014
        %v2183 = vunpack.c.l.b16 %v2024
        %v2184 = vunpack.c.l.b16 %v2038
        %v2185 = vunpack.c.l.b16 %v2048
        %v2186 = vunpack.c.l.b16 %v2062
        %v2187 = vunpack.c.l.b16 %v2072
        %v2188 = vunpack.c.l.b16 %v2086
        %v2189 = vunpack.c.l.b16 %v2096
        %v2190 = vunpack.c.l.b16 %v2110
        %v2191 = vunpack.c.l.b16 %v2120
        %v2192 = vunpack.c.l.b16 %v2134
        %v2193 = vunpack.c.l.b16 %v2144
        %v2194 = vpack.c.b16 %v2163, %v2162
        %v2195 = vpack.c.b16 %v2165, %v2164
        %v2196 = vpack.c.b16 %v2167, %v2166
        %v2197 = vpack.c.b16 %v2169, %v2168
        %v2198 = vpack.c.b16 %v2171, %v2170
        %v2199 = vpack.c.b16 %v2173, %v2172
        %v2200 = vpack.c.b16 %v2175, %v2174
        %v2201 = vpack.c.b16 %v2177, %v2176
        %v2202 = vpack.c.b16 %v2179, %v2178
        %v2203 = vpack.c.b16 %v2181, %v2180
        %v2204 = vpack.c.b16 %v2183, %v2182
        %v2205 = vpack.c.b16 %v2185, %v2184
        %v2206 = vpack.c.b16 %v2187, %v2186
        %v2207 = vpack.c.b16 %v2189, %v2188
        %v2208 = vpack.c.b16 %v2191, %v2190
        %v2209 = vpack.c.b16 %v2193, %v2192
        %v2242 = vunpack.c.l.b16 %v2146
        %v2243 = vunpack.c.l.b16 %v2147
        %v2244 = vunpack.c.l.b16 %v2148
        %v2245 = vunpack.c.l.b16 %v2149
        %v2246 = vunpack.c.l.b16 %v2150
        %v2247 = vunpack.c.l.b16 %v2151
        %v2248 = vunpack.c.l.b16 %v2152
        %v2249 = vunpack.c.l.b16 %v2153
        %v2250 = vunpack.c.l.b16 %v2154
        %v2251 = vunpack.c.l.b16 %v2155
        %v2252 = vunpack.c.l.b16 %v2156
        %v2253 = vunpack.c.l.b16 %v2157
        %v2254 = vunpack.c.l.b16 %v2158
        %v2255 = vunpack.c.l.b16 %v2159
        %v2256 = vunpack.c.l.b16 %v2160
        %v2257 = vunpack.c.l.b16 %v2161
        %v2258 = vpack.c.b16 %v2243, %v2242
        %v2259 = vpack.c.b16 %v2245, %v2244
        %v2260 = vpack.c.b16 %v2247, %v2246
        %v2261 = vpack.c.b16 %v2249, %v2248
        %v2262 = vpack.c.b16 %v2251, %v2250
        %v2263 = vpack.c.b16 %v2253, %v2252
        %v2264 = vpack.c.b16 %v2255, %v2254
        %v2265 = vpack.c.b16 %v2257, %v2256
        %2274 = vmatprep.subr.bf16.mxu0 0
        %2275 = vmatpush1.bf16.msra.mxu0 %v2258
        %2276 = vmatprep.subr.bf16.mxu0 0
        %2277 = vmatpush1.bf16.msra.mxu0 %v2259
        %2278 = vmatprep.subr.bf16.mxu0 0
        %2279 = vmatpush1.bf16.msra.mxu0 %v2260
        %2280 = vmatprep.subr.bf16.mxu0 0
        %2281 = vmatpush1.bf16.msra.mxu0 %v2261
        %2282 = vmatprep.subr.bf16.mxu0 0
        %2283 = vmatpush1.bf16.msra.mxu0 %v2262
        %2284 = vmatprep.subr.bf16.mxu0 0
        %2285 = vmatpush1.bf16.msra.mxu0 %v2263
        %2286 = vmatprep.subr.bf16.mxu0 0
        %2287 = vmatpush1.bf16.msra.mxu0 %v2264
        %2288 = vmatprep.subr.bf16.mxu0 0
        %2289 = vmatpush1.bf16.msra.mxu0 %v2265
        %2290 = vmatprep.subr.bf16.mxu0 0
        %2291 = vmatpush1.bf16.msra.mxu0 0
        %2292 = vmatprep.subr.bf16.mxu0 0
        %2293 = vmatpush1.bf16.msra.mxu0 0
        %2294 = vmatprep.subr.bf16.mxu0 0
        %2295 = vmatpush1.bf16.msra.mxu0 0
        %2296 = vmatprep.subr.bf16.mxu0 0
        %2297 = vmatpush1.bf16.msra.mxu0 0
        %2298 = vmatprep.subr.bf16.mxu0 0
        %2299 = vmatpush1.bf16.msra.mxu0 0
        %2300 = vmatprep.subr.bf16.mxu0 0
        %2301 = vmatpush1.bf16.msra.mxu0 0
        %2302 = vmatprep.subr.bf16.mxu0 0
        %2303 = vmatpush1.bf16.msra.mxu0 0
        %2304 = vmatprep.subr.bf16.mxu0 0
        %2305 = vmatpush1.bf16.msra.mxu0 0
        %2306 = vmatprep.mubr.bf16.mxu0 0
        %2307 = vmatmul.mubr.bf16.gmra.mrb[0].mxu0 %v2194
        %v2308 = vpop.f32.mrb[0].mxu0
        %v2309 = vadd.f32 0.0, %v2308
        %v2310 = vpop.f32.mrb[0].mxu0
        %v2311 = vpop.f32.mrb[0].mxu0
        %v2312 = vadd.f32 0.0, %v2311
        %v2313 = vpop.f32.mrb[0].mxu0
        %2314 = vmatprep.mubr.bf16.mxu0 0
        %2315 = vmatmul.mubr.bf16.gmra.mrb[0].mxu0 %v2195
        %v2316 = vpop.f32.mrb[0].mxu0
        %v2317 = vadd.f32 0.0, %v2316
        %v2318 = vpop.f32.mrb[0].mxu0
        %v2319 = vpop.f32.mrb[0].mxu0
        %v2320 = vadd.f32 0.0, %v2319
        %v2321 = vpop.f32.mrb[0].mxu0
        %2322 = vmatprep.mubr.bf16.mxu0 0
        %2323 = vmatmul.mubr.bf16.gmra.mrb[0].mxu0 %v2196
        %v2324 = vpop.f32.mrb[0].mxu0
        %v2325 = vadd.f32 0.0, %v2324
        %v2326 = vpop.f32.mrb[0].mxu0
        %v2327 = vpop.f32.mrb[0].mxu0
        %v2328 = vadd.f32 0.0, %v2327
        %v2329 = vpop.f32.mrb[0].mxu0
        %2330 = vmatprep.mubr.bf16.mxu0 0
        %2331 = vmatmul.mubr.bf16.gmra.mrb[0].mxu0 %v2197
        %v2332 = vpop.f32.mrb[0].mxu0
        %v2333 = vadd.f32 0.0, %v2332
        %v2334 = vpop.f32.mrb[0].mxu0
        %v2335 = vpop.f32.mrb[0].mxu0
        %v2336 = vadd.f32 0.0, %v2335
        %v2337 = vpop.f32.mrb[0].mxu0
        %2338 = vmatprep.mubr.bf16.mxu0 0
        %2339 = vmatmul.mubr.bf16.gmra.mrb[0].mxu0 %v2198
        %v2340 = vpop.f32.mrb[0].mxu0
        %v2341 = vadd.f32 0.0, %v2340
        %v2342 = vpop.f32.mrb[0].mxu0
        %v2343 = vpop.f32.mrb[0].mxu0
        %v2344 = vadd.f32 0.0, %v2343
        %v2345 = vpop.f32.mrb[0].mxu0
        %2346 = vmatprep.mubr.bf16.mxu0 0
        %2347 = vmatmul.mubr.bf16.gmra.mrb[0].mxu0 %v2199
        %v2348 = vpop.f32.mrb[0].mxu0
        %v2349 = vadd.f32 0.0, %v2348
        %v2350 = vpop.f32.mrb[0].mxu0
        %v2351 = vpop.f32.mrb[0].mxu0
        %v2352 = vadd.f32 0.0, %v2351
        %v2353 = vpop.f32.mrb[0].mxu0
        %2354 = vmatprep.mubr.bf16.mxu0 0
        %2355 = vmatmul.mubr.bf16.gmra.mrb[0].mxu0 %v2200
        %v2356 = vpop.f32.mrb[0].mxu0
        %v2357 = vadd.f32 0.0, %v2356
        %v2358 = vpop.f32.mrb[0].mxu0
        %v2359 = vpop.f32.mrb[0].mxu0
        %v2360 = vadd.f32 0.0, %v2359
        %v2361 = vpop.f32.mrb[0].mxu0
        %2362 = vmatprep.mubr.bf16.mxu0 0
        %2363 = vmatmul.mubr.bf16.gmra.mrb[0].mxu0 %v2201
        %v2364 = vpop.f32.mrb[0].mxu0
        %v2365 = vadd.f32 0.0, %v2364
        %v2366 = vpop.f32.mrb[0].mxu0
        %v2367 = vpop.f32.mrb[0].mxu0
        %v2368 = vadd.f32 0.0, %v2367
        %v2369 = vpop.f32.mrb[0].mxu0
        %2370 = vmatprep.mubr.bf16.mxu0 0
        %2371 = vmatmul.mubr.bf16.gmra.mrb[0].mxu0 %v2202
        %v2372 = vpop.f32.mrb[0].mxu0
        %v2373 = vadd.f32 0.0, %v2372
        %v2374 = vpop.f32.mrb[0].mxu0
        %v2375 = vpop.f32.mrb[0].mxu0
        %v2376 = vadd.f32 0.0, %v2375
        %v2377 = vpop.f32.mrb[0].mxu0
        %2378 = vmatprep.mubr.bf16.mxu0 0
        %2379 = vmatmul.mubr.bf16.gmra.mrb[0].mxu0 %v2203
        %v2380 = vpop.f32.mrb[0].mxu0
        %v2381 = vadd.f32 0.0, %v2380
        %v2382 = vpop.f32.mrb[0].mxu0
        %v2383 = vpop.f32.mrb[0].mxu0
        %v2384 = vadd.f32 0.0, %v2383
        %v2385 = vpop.f32.mrb[0].mxu0
        %2386 = vmatprep.mubr.bf16.mxu0 0
        %2387 = vmatmul.mubr.bf16.gmra.mrb[0].mxu0 %v2204
        %v2388 = vpop.f32.mrb[0].mxu0
        %v2389 = vadd.f32 0.0, %v2388
        %v2390 = vpop.f32.mrb[0].mxu0
        %v2391 = vpop.f32.mrb[0].mxu0
        %v2392 = vadd.f32 0.0, %v2391
        %v2393 = vpop.f32.mrb[0].mxu0
        %2394 = vmatprep.mubr.bf16.mxu0 0
        %2395 = vmatmul.mubr.bf16.gmra.mrb[0].mxu0 %v2205
        %v2396 = vpop.f32.mrb[0].mxu0
        %v2397 = vadd.f32 0.0, %v2396
        %v2398 = vpop.f32.mrb[0].mxu0
        %v2399 = vpop.f32.mrb[0].mxu0
        %v2400 = vadd.f32 0.0, %v2399
        %v2401 = vpop.f32.mrb[0].mxu0
        %2402 = vmatprep.mubr.bf16.mxu0 0
        %2403 = vmatmul.mubr.bf16.gmra.mrb[0].mxu0 %v2206
        %v2404 = vpop.f32.mrb[0].mxu0
        %v2405 = vadd.f32 0.0, %v2404
        %v2406 = vpop.f32.mrb[0].mxu0
        %v2407 = vpop.f32.mrb[0].mxu0
        %v2408 = vadd.f32 0.0, %v2407
        %v2409 = vpop.f32.mrb[0].mxu0
        %2410 = vmatprep.mubr.bf16.mxu0 0
        %2411 = vmatmul.mubr.bf16.gmra.mrb[0].mxu0 %v2207
        %v2412 = vpop.f32.mrb[0].mxu0
        %v2413 = vadd.f32 0.0, %v2412
        %v2414 = vpop.f32.mrb[0].mxu0
        %v2415 = vpop.f32.mrb[0].mxu0
        %v2416 = vadd.f32 0.0, %v2415
        %v2417 = vpop.f32.mrb[0].mxu0
        %2418 = vmatprep.mubr.bf16.mxu0 0
        %2419 = vmatmul.mubr.bf16.gmra.mrb[0].mxu0 %v2208
        %v2420 = vpop.f32.mrb[0].mxu0
        %v2421 = vadd.f32 0.0, %v2420
        %v2422 = vpop.f32.mrb[0].mxu0
        %v2423 = vpop.f32.mrb[0].mxu0
        %v2424 = vadd.f32 0.0, %v2423
        %v2425 = vpop.f32.mrb[0].mxu0
        %2426 = vmatprep.mubr.bf16.mxu0 0
        %2427 = vmatmul.mubr.bf16.gmra.mrb[0].mxu0 %v2209
        %v2428 = vpop.f32.mrb[0].mxu0
        %v2429 = vadd.f32 0.0, %v2428
        %v2430 = vpop.f32.mrb[0].mxu0
        %v2431 = vpop.f32.mrb[0].mxu0
        %v2432 = vadd.f32 0.0, %v2431
        %v2433 = vpop.f32.mrb[0].mxu0
        %2434 = vdwg.mxu0
        %v2435 = vld [vmem:[#allocation3] sm:$0xff]
        %v2436 = vld [vmem:[#allocation3 + $0x8] sm:$0xff]
        %v2437 = vld [vmem:[#allocation3 + $0x10] sm:$0xff]
        %v2438 = vld [vmem:[#allocation3 + $0x18] sm:$0xff]
        %v2439 = vld [vmem:[#allocation3 + $0x20] sm:$0xff]
        %v2440 = vld [vmem:[#allocation3 + $0x28] sm:$0xff]
        %v2441 = vld [vmem:[#allocation3 + $0x30] sm:$0xff]
        %v2442 = vld [vmem:[#allocation3 + $0x38] sm:$0xff]
        %v2443 = vld [vmem:[#allocation3 + $0x40] sm:$0xff]
        %v2444 = vld [vmem:[#allocation3 + $0x48] sm:$0xff]
        %v2445 = vld [vmem:[#allocation3 + $0x50] sm:$0xff]
        %v2446 = vld [vmem:[#allocation3 + $0x58] sm:$0xff]
        %v2447 = vld [vmem:[#allocation3 + $0x60] sm:$0xff]
        %v2448 = vld [vmem:[#allocation3 + $0x68] sm:$0xff]
        %v2449 = vld [vmem:[#allocation3 + $0x70] sm:$0xff]
        %v2450 = vld [vmem:[#allocation3 + $0x78] sm:$0xff]
        %v2451 = vld [vmem:[#allocation3 + $0x80] sm:$0xff]
        %v2452 = vld [vmem:[#allocation3 + $0x88] sm:$0xff]
        %v2453 = vld [vmem:[#allocation3 + $0x90] sm:$0xff]
        %v2454 = vld [vmem:[#allocation3 + $0x98] sm:$0xff]
        %v2455 = vld [vmem:[#allocation3 + $0xa0] sm:$0xff]
        %v2456 = vld [vmem:[#allocation3 + $0xa8] sm:$0xff]
        %v2457 = vld [vmem:[#allocation3 + $0xb0] sm:$0xff]
        %v2458 = vld [vmem:[#allocation3 + $0xb8] sm:$0xff]
        %v2459 = vld [vmem:[#allocation3 + $0xc0] sm:$0xff]
        %v2460 = vld [vmem:[#allocation3 + $0xc8] sm:$0xff]
        %v2461 = vld [vmem:[#allocation3 + $0xd0] sm:$0xff]
        %v2462 = vld [vmem:[#allocation3 + $0xd8] sm:$0xff]
        %v2463 = vld [vmem:[#allocation3 + $0xe0] sm:$0xff]
        %v2464 = vld [vmem:[#allocation3 + $0xe8] sm:$0xff]
        %v2465 = vld [vmem:[#allocation3 + $0xf0] sm:$0xff]
        %v2466 = vld [vmem:[#allocation3 + $0xf8] sm:$0xff]
        %v2467 = vadd.f32 %v2435, %v2309
        %v2468 = vadd.f32 %v2436, %v2312
        %v2469 = vadd.f32 %v2437, %v2317
        %v2470 = vadd.f32 %v2438, %v2320
        %v2471 = vadd.f32 %v2439, %v2325
        %v2472 = vadd.f32 %v2440, %v2328
        %v2473 = vadd.f32 %v2441, %v2333
        %v2474 = vadd.f32 %v2442, %v2336
        %v2475 = vadd.f32 %v2443, %v2341
        %v2476 = vadd.f32 %v2444, %v2344
        %v2477 = vadd.f32 %v2445, %v2349
        %v2478 = vadd.f32 %v2446, %v2352
        %v2479 = vadd.f32 %v2447, %v2357
        %v2480 = vadd.f32 %v2448, %v2360
        %v2481 = vadd.f32 %v2449, %v2365
        %v2482 = vadd.f32 %v2450, %v2368
        %v2483 = vadd.f32 %v2451, %v2373
        %v2484 = vadd.f32 %v2452, %v2376
        %v2485 = vadd.f32 %v2453, %v2381
        %v2486 = vadd.f32 %v2454, %v2384
        %v2487 = vadd.f32 %v2455, %v2389
        %v2488 = vadd.f32 %v2456, %v2392
        %v2489 = vadd.f32 %v2457, %v2397
        %v2490 = vadd.f32 %v2458, %v2400
        %v2491 = vadd.f32 %v2459, %v2405
        %v2492 = vadd.f32 %v2460, %v2408
        %v2493 = vadd.f32 %v2461, %v2413
        %v2494 = vadd.f32 %v2462, %v2416
        %v2495 = vadd.f32 %v2463, %v2421
        %v2496 = vadd.f32 %v2464, %v2424
        %v2497 = vadd.f32 %v2465, %v2429
        %v2498 = vadd.f32 %v2466, %v2432
        %2499 = vst [vmem:[#allocation3] sm:$0xff] %v2467
        %2500 = vst [vmem:[#allocation3 + $0x8] sm:$0xff] %v2468
        %2501 = vst [vmem:[#allocation3 + $0x10] sm:$0xff] %v2469
        %2502 = vst [vmem:[#allocation3 + $0x18] sm:$0xff] %v2470
        %2503 = vst [vmem:[#allocation3 + $0x20] sm:$0xff] %v2471
        %2504 = vst [vmem:[#allocation3 + $0x28] sm:$0xff] %v2472
        %2505 = vst [vmem:[#allocation3 + $0x30] sm:$0xff] %v2473
        %2506 = vst [vmem:[#allocation3 + $0x38] sm:$0xff] %v2474
        %2507 = vst [vmem:[#allocation3 + $0x40] sm:$0xff] %v2475
        %2508 = vst [vmem:[#allocation3 + $0x48] sm:$0xff] %v2476
        %2509 = vst [vmem:[#allocation3 + $0x50] sm:$0xff] %v2477
        %2510 = vst [vmem:[#allocation3 + $0x58] sm:$0xff] %v2478
        %2511 = vst [vmem:[#allocation3 + $0x60] sm:$0xff] %v2479
        %2512 = vst [vmem:[#allocation3 + $0x68] sm:$0xff] %v2480
        %2513 = vst [vmem:[#allocation3 + $0x70] sm:$0xff] %v2481
        %2514 = vst [vmem:[#allocation3 + $0x78] sm:$0xff] %v2482
        %2515 = vst [vmem:[#allocation3 + $0x80] sm:$0xff] %v2483
        %2516 = vst [vmem:[#allocation3 + $0x88] sm:$0xff] %v2484
        %2517 = vst [vmem:[#allocation3 + $0x90] sm:$0xff] %v2485
        %2518 = vst [vmem:[#allocation3 + $0x98] sm:$0xff] %v2486
        %2519 = vst [vmem:[#allocation3 + $0xa0] sm:$0xff] %v2487
        %2520 = vst [vmem:[#allocation3 + $0xa8] sm:$0xff] %v2488
        %2521 = vst [vmem:[#allocation3 + $0xb0] sm:$0xff] %v2489
        %2522 = vst [vmem:[#allocation3 + $0xb8] sm:$0xff] %v2490
        %2523 = vst [vmem:[#allocation3 + $0xc0] sm:$0xff] %v2491
        %2524 = vst [vmem:[#allocation3 + $0xc8] sm:$0xff] %v2492
        %2525 = vst [vmem:[#allocation3 + $0xd0] sm:$0xff] %v2493
        %2526 = vst [vmem:[#allocation3 + $0xd8] sm:$0xff] %v2494
        %2527 = vst [vmem:[#allocation3 + $0xe0] sm:$0xff] %v2495
        %2528 = vst [vmem:[#allocation3 + $0xe8] sm:$0xff] %v2496
        %2529 = vst [vmem:[#allocation3 + $0xf0] sm:$0xff] %v2497
        %2530 = vst [vmem:[#allocation3 + $0xf8] sm:$0xff] %v2498
        %v2531 = vld [vmem:[#allocation2] sm:$0xe]
        %v2532 = vld [vmem:[#allocation2 + $0x4] sm:$0xf]
        %v2533 = vld [vmem:[#allocation2 + $0x8] sm:$0x1]
        %v2534 = vld [vmem:[#allocation2 + $0xc] sm:$0xe]
        %v2535 = vld [vmem:[#allocation2 + $0x10] sm:$0xf]
        %v2536 = vld [vmem:[#allocation2 + $0x14] sm:$0x1]
        %v2537 = vld [vmem:[#allocation2 + $0x18] sm:$0xe]
        %v2538 = vld [vmem:[#allocation2 + $0x1c] sm:$0xf]
        %v2539 = vld [vmem:[#allocation2 + $0x20] sm:$0x1]
        %v2540 = vld [vmem:[#allocation2 + $0x24] sm:$0xe]
        %v2541 = vld [vmem:[#allocation2 + $0x28] sm:$0xf]
        %v2542 = vld [vmem:[#allocation2 + $0x2c] sm:$0x1]
        %v2543 = vld [vmem:[#allocation2 + $0x30] sm:$0xe]
        %v2544 = vld [vmem:[#allocation2 + $0x34] sm:$0xf]
        %v2545 = vld [vmem:[#allocation2 + $0x38] sm:$0x1]
        %v2546 = vld [vmem:[#allocation2 + $0x3c] sm:$0xe]
        %v2547 = vld [vmem:[#allocation2 + $0x40] sm:$0xf]
        %v2548 = vld [vmem:[#allocation2 + $0x44] sm:$0x1]
        %v2549 = vld [vmem:[#allocation2 + $0x48] sm:$0xe]
        %v2550 = vld [vmem:[#allocation2 + $0x4c] sm:$0xf]
        %v2551 = vld [vmem:[#allocation2 + $0x50] sm:$0x1]
        %v2552 = vld [vmem:[#allocation2 + $0x54] sm:$0xe]
        %v2553 = vld [vmem:[#allocation2 + $0x58] sm:$0xf]
        %v2554 = vld [vmem:[#allocation2 + $0x5c] sm:$0x1]
        %v2555 = vld [vmem:[#allocation2 + $0x60] sm:$0xe]
        %v2556 = vld [vmem:[#allocation2 + $0x64] sm:$0xf]
        %v2557 = vld [vmem:[#allocation2 + $0x68] sm:$0x1]
        %v2558 = vld [vmem:[#allocation2 + $0x6c] sm:$0xe]
        %v2559 = vld [vmem:[#allocation2 + $0x70] sm:$0xf]
        %v2560 = vld [vmem:[#allocation2 + $0x74] sm:$0x1]
        %v2561 = vld [vmem:[#allocation2 + $0x78] sm:$0xe]
        %v2562 = vld [vmem:[#allocation2 + $0x7c] sm:$0xf]
        %v2563 = vld [vmem:[#allocation2 + $0x80] sm:$0x1]
        %v2564 = vld [vmem:[#allocation2 + $0x84] sm:$0xe]
        %v2565 = vld [vmem:[#allocation2 + $0x88] sm:$0xf]
        %v2566 = vld [vmem:[#allocation2 + $0x8c] sm:$0x1]
        %v2567 = vld [vmem:[#allocation2 + $0x90] sm:$0xe]
        %v2568 = vld [vmem:[#allocation2 + $0x94] sm:$0xf]
        %v2569 = vld [vmem:[#allocation2 + $0x98] sm:$0x1]
        %v2570 = vld [vmem:[#allocation2 + $0x9c] sm:$0xe]
        %v2571 = vld [vmem:[#allocation2 + $0xa0] sm:$0xf]
        %v2572 = vld [vmem:[#allocation2 + $0xa4] sm:$0x1]
        %v2573 = vld [vmem:[#allocation2 + $0xa8] sm:$0xe]
        %v2574 = vld [vmem:[#allocation2 + $0xac] sm:$0xf]
        %v2575 = vld [vmem:[#allocation2 + $0xb0] sm:$0x1]
        %v2576 = vld [vmem:[#allocation2 + $0xb4] sm:$0xe]
        %v2577 = vld [vmem:[#allocation2 + $0xb8] sm:$0xf]
        %v2578 = vld [vmem:[#allocation2 + $0xbc] sm:$0x1]
        %vm2627 = vcmask 1042432
        %vm2628 = vcmask 1046532
        %vm2629 = vmor %vm2627, %vm2628
        %v2630 = vrot.slane %v2531, 5
        %v2631 = vrot.slane %v2630, 4
        %v2632 = vrot.slane %v2532, 5
        %v2633 = vsel %vm2629, %v2631, %v2632
        %v2634 = vrot.slane %v2632, 4
        %v2635 = vrot.slane %v2533, 5
        %v2636 = vsel %vm2629, %v2634, %v2635
        %v2637 = vrot.slane %v2534, 5
        %v2638 = vrot.slane %v2637, 4
        %v2639 = vrot.slane %v2535, 5
        %v2640 = vsel %vm2629, %v2638, %v2639
        %v2641 = vrot.slane %v2639, 4
        %v2642 = vrot.slane %v2536, 5
        %v2643 = vsel %vm2629, %v2641, %v2642
        %v2644 = vrot.slane %v2537, 5
        %v2645 = vrot.slane %v2644, 4
        %v2646 = vrot.slane %v2538, 5
        %v2647 = vsel %vm2629, %v2645, %v2646
        %v2648 = vrot.slane %v2646, 4
        %v2649 = vrot.slane %v2539, 5
        %v2650 = vsel %vm2629, %v2648, %v2649
        %v2651 = vrot.slane %v2540, 5
        %v2652 = vrot.slane %v2651, 4
        %v2653 = vrot.slane %v2541, 5
        %v2654 = vsel %vm2629, %v2652, %v2653
        %v2655 = vrot.slane %v2653, 4
        %v2656 = vrot.slane %v2542, 5
        %v2657 = vsel %vm2629, %v2655, %v2656
        %v2658 = vrot.slane %v2543, 5
        %v2659 = vrot.slane %v2658, 4
        %v2660 = vrot.slane %v2544, 5
        %v2661 = vsel %vm2629, %v2659, %v2660
        %v2662 = vrot.slane %v2660, 4
        %v2663 = vrot.slane %v2545, 5
        %v2664 = vsel %vm2629, %v2662, %v2663
        %v2665 = vrot.slane %v2546, 5
        %v2666 = vrot.slane %v2665, 4
        %v2667 = vrot.slane %v2547, 5
        %v2668 = vsel %vm2629, %v2666, %v2667
        %v2669 = vrot.slane %v2667, 4
        %v2670 = vrot.slane %v2548, 5
        %v2671 = vsel %vm2629, %v2669, %v2670
        %v2672 = vrot.slane %v2549, 5
        %v2673 = vrot.slane %v2672, 4
        %v2674 = vrot.slane %v2550, 5
        %v2675 = vsel %vm2629, %v2673, %v2674
        %v2676 = vrot.slane %v2674, 4
        %v2677 = vrot.slane %v2551, 5
        %v2678 = vsel %vm2629, %v2676, %v2677
        %v2679 = vrot.slane %v2552, 5
        %v2680 = vrot.slane %v2679, 4
        %v2681 = vrot.slane %v2553, 5
        %v2682 = vsel %vm2629, %v2680, %v2681
        %v2683 = vrot.slane %v2681, 4
        %v2684 = vrot.slane %v2554, 5
        %v2685 = vsel %vm2629, %v2683, %v2684
        %v2686 = vrot.slane %v2555, 5
        %v2687 = vrot.slane %v2686, 4
        %v2688 = vrot.slane %v2556, 5
        %v2689 = vsel %vm2629, %v2687, %v2688
        %v2690 = vrot.slane %v2688, 4
        %v2691 = vrot.slane %v2557, 5
        %v2692 = vsel %vm2629, %v2690, %v2691
        %v2693 = vrot.slane %v2558, 5
        %v2694 = vrot.slane %v2693, 4
        %v2695 = vrot.slane %v2559, 5
        %v2696 = vsel %vm2629, %v2694, %v2695
        %v2697 = vrot.slane %v2695, 4
        %v2698 = vrot.slane %v2560, 5
        %v2699 = vsel %vm2629, %v2697, %v2698
        %v2700 = vrot.slane %v2561, 5
        %v2701 = vrot.slane %v2700, 4
        %v2702 = vrot.slane %v2562, 5
        %v2703 = vsel %vm2629, %v2701, %v2702
        %v2704 = vrot.slane %v2702, 4
        %v2705 = vrot.slane %v2563, 5
        %v2706 = vsel %vm2629, %v2704, %v2705
        %v2707 = vrot.slane %v2564, 5
        %v2708 = vrot.slane %v2707, 4
        %v2709 = vrot.slane %v2565, 5
        %v2710 = vsel %vm2629, %v2708, %v2709
        %v2711 = vrot.slane %v2709, 4
        %v2712 = vrot.slane %v2566, 5
        %v2713 = vsel %vm2629, %v2711, %v2712
        %v2714 = vrot.slane %v2567, 5
        %v2715 = vrot.slane %v2714, 4
        %v2716 = vrot.slane %v2568, 5
        %v2717 = vsel %vm2629, %v2715, %v2716
        %v2718 = vrot.slane %v2716, 4
        %v2719 = vrot.slane %v2569, 5
        %v2720 = vsel %vm2629, %v2718, %v2719
        %v2721 = vrot.slane %v2570, 5
        %v2722 = vrot.slane %v2721, 4
        %v2723 = vrot.slane %v2571, 5
        %v2724 = vsel %vm2629, %v2722, %v2723
        %v2725 = vrot.slane %v2723, 4
        %v2726 = vrot.slane %v2572, 5
        %v2727 = vsel %vm2629, %v2725, %v2726
        %v2728 = vrot.slane %v2573, 5
        %v2729 = vrot.slane %v2728, 4
        %v2730 = vrot.slane %v2574, 5
        %v2731 = vsel %vm2629, %v2729, %v2730
        %v2732 = vrot.slane %v2730, 4
        %v2733 = vrot.slane %v2575, 5
        %v2734 = vsel %vm2629, %v2732, %v2733
        %v2735 = vrot.slane %v2576, 5
        %v2736 = vrot.slane %v2735, 4
        %v2737 = vrot.slane %v2577, 5
        %v2738 = vsel %vm2629, %v2736, %v2737
        %v2739 = vrot.slane %v2737, 4
        %v2740 = vrot.slane %v2578, 5
        %v2741 = vsel %vm2629, %v2739, %v2740
        %s2742 = scalar_lea.vmem [#allocation9], 128
        %v2743 = vld [vmem:[%s2742] sm:$0xf]
        %v2744 = vld [vmem:[%s2742 + $0x4] sm:$0xf]
        %v2745 = vld [vmem:[%s2742 + $0x8] sm:$0xf]
        %v2746 = vld [vmem:[%s2742 + $0xc] sm:$0xf]
        %v2747 = vld [vmem:[%s2742 + $0x10] sm:$0xf]
        %v2748 = vld [vmem:[%s2742 + $0x14] sm:$0xf]
        %v2749 = vld [vmem:[%s2742 + $0x18] sm:$0xf]
        %v2750 = vld [vmem:[%s2742 + $0x1c] sm:$0xf]
        %v2751 = vld [vmem:[%s2742 + $0x20] sm:$0xf]
        %v2752 = vld [vmem:[%s2742 + $0x24] sm:$0xf]
        %v2753 = vld [vmem:[%s2742 + $0x28] sm:$0xf]
        %v2754 = vld [vmem:[%s2742 + $0x2c] sm:$0xf]
        %v2755 = vld [vmem:[%s2742 + $0x30] sm:$0xf]
        %v2756 = vld [vmem:[%s2742 + $0x34] sm:$0xf]
        %v2757 = vld [vmem:[%s2742 + $0x38] sm:$0xf]
        %v2758 = vld [vmem:[%s2742 + $0x3c] sm:$0xf]
        %v2759 = vunpack.c.l.b16 %v2633
        %v2760 = vunpack.c.l.b16 %v2636
        %v2761 = vunpack.c.l.b16 %v2640
        %v2762 = vunpack.c.l.b16 %v2643
        %v2763 = vunpack.c.l.b16 %v2647
        %v2764 = vunpack.c.l.b16 %v2650
        %v2765 = vunpack.c.l.b16 %v2654
        %v2766 = vunpack.c.l.b16 %v2657
        %v2767 = vunpack.c.l.b16 %v2661
        %v2768 = vunpack.c.l.b16 %v2664
        %v2769 = vunpack.c.l.b16 %v2668
        %v2770 = vunpack.c.l.b16 %v2671
        %v2771 = vunpack.c.l.b16 %v2675
        %v2772 = vunpack.c.l.b16 %v2678
        %v2773 = vunpack.c.l.b16 %v2682
        %v2774 = vunpack.c.l.b16 %v2685
        %v2775 = vunpack.c.l.b16 %v2689
        %v2776 = vunpack.c.l.b16 %v2692
        %v2777 = vunpack.c.l.b16 %v2696
        %v2778 = vunpack.c.l.b16 %v2699
        %v2779 = vunpack.c.l.b16 %v2703
        %v2780 = vunpack.c.l.b16 %v2706
        %v2781 = vunpack.c.l.b16 %v2710
        %v2782 = vunpack.c.l.b16 %v2713
        %v2783 = vunpack.c.l.b16 %v2717
        %v2784 = vunpack.c.l.b16 %v2720
        %v2785 = vunpack.c.l.b16 %v2724
        %v2786 = vunpack.c.l.b16 %v2727
        %v2787 = vunpack.c.l.b16 %v2731
        %v2788 = vunpack.c.l.b16 %v2734
        %v2789 = vunpack.c.l.b16 %v2738
        %v2790 = vunpack.c.l.b16 %v2741
        %v2791 = vpack.c.b16 %v2760, %v2759
        %v2792 = vpack.c.b16 %v2762, %v2761
        %v2793 = vpack.c.b16 %v2764, %v2763
        %v2794 = vpack.c.b16 %v2766, %v2765
        %v2795 = vpack.c.b16 %v2768, %v2767
        %v2796 = vpack.c.b16 %v2770, %v2769
        %v2797 = vpack.c.b16 %v2772, %v2771
        %v2798 = vpack.c.b16 %v2774, %v2773
        %v2799 = vpack.c.b16 %v2776, %v2775
        %v2800 = vpack.c.b16 %v2778, %v2777
        %v2801 = vpack.c.b16 %v2780, %v2779
        %v2802 = vpack.c.b16 %v2782, %v2781
        %v2803 = vpack.c.b16 %v2784, %v2783
        %v2804 = vpack.c.b16 %v2786, %v2785
        %v2805 = vpack.c.b16 %v2788, %v2787
        %v2806 = vpack.c.b16 %v2790, %v2789
        %v2839 = vunpack.c.l.b16 %v2743
        %v2840 = vunpack.c.l.b16 %v2744
        %v2841 = vunpack.c.l.b16 %v2745
        %v2842 = vunpack.c.l.b16 %v2746
        %v2843 = vunpack.c.l.b16 %v2747
        %v2844 = vunpack.c.l.b16 %v2748
        %v2845 = vunpack.c.l.b16 %v2749
        %v2846 = vunpack.c.l.b16 %v2750
        %v2847 = vunpack.c.l.b16 %v2751
        %v2848 = vunpack.c.l.b16 %v2752
        %v2849 = vunpack.c.l.b16 %v2753
        %v2850 = vunpack.c.l.b16 %v2754
        %v2851 = vunpack.c.l.b16 %v2755
        %v2852 = vunpack.c.l.b16 %v2756
        %v2853 = vunpack.c.l.b16 %v2757
        %v2854 = vunpack.c.l.b16 %v2758
        %v2855 = vpack.c.b16 %v2840, %v2839
        %v2856 = vpack.c.b16 %v2842, %v2841
        %v2857 = vpack.c.b16 %v2844, %v2843
        %v2858 = vpack.c.b16 %v2846, %v2845
        %v2859 = vpack.c.b16 %v2848, %v2847
        %v2860 = vpack.c.b16 %v2850, %v2849
        %v2861 = vpack.c.b16 %v2852, %v2851
        %v2862 = vpack.c.b16 %v2854, %v2853
        %2871 = vmatprep.subr.bf16.mxu0 0
        %2872 = vmatpush1.bf16.msra.mxu0 %v2855
        %2873 = vmatprep.subr.bf16.mxu0 0
        %2874 = vmatpush1.bf16.msra.mxu0 %v2856
        %2875 = vmatprep.subr.bf16.mxu0 0
        %2876 = vmatpush1.bf16.msra.mxu0 %v2857
        %2877 = vmatprep.subr.bf16.mxu0 0
        %2878 = vmatpush1.bf16.msra.mxu0 %v2858
        %2879 = vmatprep.subr.bf16.mxu0 0
        %2880 = vmatpush1.bf16.msra.mxu0 %v2859
        %2881 = vmatprep.subr.bf16.mxu0 0
        %2882 = vmatpush1.bf16.msra.mxu0 %v2860
        %2883 = vmatprep.subr.bf16.mxu0 0
        %2884 = vmatpush1.bf16.msra.mxu0 %v2861
        %2885 = vmatprep.subr.bf16.mxu0 0
        %2886 = vmatpush1.bf16.msra.mxu0 %v2862
        %2887 = vmatprep.subr.bf16.mxu0 0
        %2888 = vmatpush1.bf16.msra.mxu0 0
        %2889 = vmatprep.subr.bf16.mxu0 0
        %2890 = vmatpush1.bf16.msra.mxu0 0
        %2891 = vmatprep.subr.bf16.mxu0 0
        %2892 = vmatpush1.bf16.msra.mxu0 0
        %2893 = vmatprep.subr.bf16.mxu0 0
        %2894 = vmatpush1.bf16.msra.mxu0 0
        %2895 = vmatprep.subr.bf16.mxu0 0
        %2896 = vmatpush1.bf16.msra.mxu0 0
        %2897 = vmatprep.subr.bf16.mxu0 0
        %2898 = vmatpush1.bf16.msra.mxu0 0
        %2899 = vmatprep.subr.bf16.mxu0 0
        %2900 = vmatpush1.bf16.msra.mxu0 0
        %2901 = vmatprep.subr.bf16.mxu0 0
        %2902 = vmatpush1.bf16.msra.mxu0 0
        %2903 = vmatprep.mubr.bf16.mxu0 0
        %2904 = vmatmul.mubr.bf16.gmra.mrb[0].mxu0 %v2791
        %v2905 = vpop.f32.mrb[0].mxu0
        %v2906 = vadd.f32 0.0, %v2905
        %v2907 = vpop.f32.mrb[0].mxu0
        %v2908 = vpop.f32.mrb[0].mxu0
        %v2909 = vadd.f32 0.0, %v2908
        %v2910 = vpop.f32.mrb[0].mxu0
        %2911 = vmatprep.mubr.bf16.mxu0 0
        %2912 = vmatmul.mubr.bf16.gmra.mrb[0].mxu0 %v2792
        %v2913 = vpop.f32.mrb[0].mxu0
        %v2914 = vadd.f32 0.0, %v2913
        %v2915 = vpop.f32.mrb[0].mxu0
        %v2916 = vpop.f32.mrb[0].mxu0
        %v2917 = vadd.f32 0.0, %v2916
        %v2918 = vpop.f32.mrb[0].mxu0
        %2919 = vmatprep.mubr.bf16.mxu0 0
        %2920 = vmatmul.mubr.bf16.gmra.mrb[0].mxu0 %v2793
        %v2921 = vpop.f32.mrb[0].mxu0
        %v2922 = vadd.f32 0.0, %v2921
        %v2923 = vpop.f32.mrb[0].mxu0
        %v2924 = vpop.f32.mrb[0].mxu0
        %v2925 = vadd.f32 0.0, %v2924
        %v2926 = vpop.f32.mrb[0].mxu0
        %2927 = vmatprep.mubr.bf16.mxu0 0
        %2928 = vmatmul.mubr.bf16.gmra.mrb[0].mxu0 %v2794
        %v2929 = vpop.f32.mrb[0].mxu0
        %v2930 = vadd.f32 0.0, %v2929
        %v2931 = vpop.f32.mrb[0].mxu0
        %v2932 = vpop.f32.mrb[0].mxu0
        %v2933 = vadd.f32 0.0, %v2932
        %v2934 = vpop.f32.mrb[0].mxu0
        %2935 = vmatprep.mubr.bf16.mxu0 0
        %2936 = vmatmul.mubr.bf16.gmra.mrb[0].mxu0 %v2795
        %v2937 = vpop.f32.mrb[0].mxu0
        %v2938 = vadd.f32 0.0, %v2937
        %v2939 = vpop.f32.mrb[0].mxu0
        %v2940 = vpop.f32.mrb[0].mxu0
        %v2941 = vadd.f32 0.0, %v2940
        %v2942 = vpop.f32.mrb[0].mxu0
        %2943 = vmatprep.mubr.bf16.mxu0 0
        %2944 = vmatmul.mubr.bf16.gmra.mrb[0].mxu0 %v2796
        %v2945 = vpop.f32.mrb[0].mxu0
        %v2946 = vadd.f32 0.0, %v2945
        %v2947 = vpop.f32.mrb[0].mxu0
        %v2948 = vpop.f32.mrb[0].mxu0
        %v2949 = vadd.f32 0.0, %v2948
        %v2950 = vpop.f32.mrb[0].mxu0
        %2951 = vmatprep.mubr.bf16.mxu0 0
        %2952 = vmatmul.mubr.bf16.gmra.mrb[0].mxu0 %v2797
        %v2953 = vpop.f32.mrb[0].mxu0
        %v2954 = vadd.f32 0.0, %v2953
        %v2955 = vpop.f32.mrb[0].mxu0
        %v2956 = vpop.f32.mrb[0].mxu0
        %v2957 = vadd.f32 0.0, %v2956
        %v2958 = vpop.f32.mrb[0].mxu0
        %2959 = vmatprep.mubr.bf16.mxu0 0
        %2960 = vmatmul.mubr.bf16.gmra.mrb[0].mxu0 %v2798
        %v2961 = vpop.f32.mrb[0].mxu0
        %v2962 = vadd.f32 0.0, %v2961
        %v2963 = vpop.f32.mrb[0].mxu0
        %v2964 = vpop.f32.mrb[0].mxu0
        %v2965 = vadd.f32 0.0, %v2964
        %v2966 = vpop.f32.mrb[0].mxu0
        %2967 = vmatprep.mubr.bf16.mxu0 0
        %2968 = vmatmul.mubr.bf16.gmra.mrb[0].mxu0 %v2799
        %v2969 = vpop.f32.mrb[0].mxu0
        %v2970 = vadd.f32 0.0, %v2969
        %v2971 = vpop.f32.mrb[0].mxu0
        %v2972 = vpop.f32.mrb[0].mxu0
        %v2973 = vadd.f32 0.0, %v2972
        %v2974 = vpop.f32.mrb[0].mxu0
        %2975 = vmatprep.mubr.bf16.mxu0 0
        %2976 = vmatmul.mubr.bf16.gmra.mrb[0].mxu0 %v2800
        %v2977 = vpop.f32.mrb[0].mxu0
        %v2978 = vadd.f32 0.0, %v2977
        %v2979 = vpop.f32.mrb[0].mxu0
        %v2980 = vpop.f32.mrb[0].mxu0
        %v2981 = vadd.f32 0.0, %v2980
        %v2982 = vpop.f32.mrb[0].mxu0
        %2983 = vmatprep.mubr.bf16.mxu0 0
        %2984 = vmatmul.mubr.bf16.gmra.mrb[0].mxu0 %v2801
        %v2985 = vpop.f32.mrb[0].mxu0
        %v2986 = vadd.f32 0.0, %v2985
        %v2987 = vpop.f32.mrb[0].mxu0
        %v2988 = vpop.f32.mrb[0].mxu0
        %v2989 = vadd.f32 0.0, %v2988
        %v2990 = vpop.f32.mrb[0].mxu0
        %2991 = vmatprep.mubr.bf16.mxu0 0
        %2992 = vmatmul.mubr.bf16.gmra.mrb[0].mxu0 %v2802
        %v2993 = vpop.f32.mrb[0].mxu0
        %v2994 = vadd.f32 0.0, %v2993
        %v2995 = vpop.f32.mrb[0].mxu0
        %v2996 = vpop.f32.mrb[0].mxu0
        %v2997 = vadd.f32 0.0, %v2996
        %v2998 = vpop.f32.mrb[0].mxu0
        %2999 = vmatprep.mubr.bf16.mxu0 0
        %3000 = vmatmul.mubr.bf16.gmra.mrb[0].mxu0 %v2803
        %v3001 = vpop.f32.mrb[0].mxu0
        %v3002 = vadd.f32 0.0, %v3001
        %v3003 = vpop.f32.mrb[0].mxu0
        %v3004 = vpop.f32.mrb[0].mxu0
        %v3005 = vadd.f32 0.0, %v3004
        %v3006 = vpop.f32.mrb[0].mxu0
        %3007 = vmatprep.mubr.bf16.mxu0 0
        %3008 = vmatmul.mubr.bf16.gmra.mrb[0].mxu0 %v2804
        %v3009 = vpop.f32.mrb[0].mxu0
        %v3010 = vadd.f32 0.0, %v3009
        %v3011 = vpop.f32.mrb[0].mxu0
        %v3012 = vpop.f32.mrb[0].mxu0
        %v3013 = vadd.f32 0.0, %v3012
        %v3014 = vpop.f32.mrb[0].mxu0
        %3015 = vmatprep.mubr.bf16.mxu0 0
        %3016 = vmatmul.mubr.bf16.gmra.mrb[0].mxu0 %v2805
        %v3017 = vpop.f32.mrb[0].mxu0
        %v3018 = vadd.f32 0.0, %v3017
        %v3019 = vpop.f32.mrb[0].mxu0
        %v3020 = vpop.f32.mrb[0].mxu0
        %v3021 = vadd.f32 0.0, %v3020
        %v3022 = vpop.f32.mrb[0].mxu0
        %3023 = vmatprep.mubr.bf16.mxu0 0
        %3024 = vmatmul.mubr.bf16.gmra.mrb[0].mxu0 %v2806
        %v3025 = vpop.f32.mrb[0].mxu0
        %v3026 = vadd.f32 0.0, %v3025
        %v3027 = vpop.f32.mrb[0].mxu0
        %v3028 = vpop.f32.mrb[0].mxu0
        %v3029 = vadd.f32 0.0, %v3028
        %v3030 = vpop.f32.mrb[0].mxu0
        %3031 = vdwg.mxu0
        %v3032 = vld [vmem:[#allocation3] sm:$0xff]
        %v3033 = vld [vmem:[#allocation3 + $0x8] sm:$0xff]
        %v3034 = vld [vmem:[#allocation3 + $0x10] sm:$0xff]
        %v3035 = vld [vmem:[#allocation3 + $0x18] sm:$0xff]
        %v3036 = vld [vmem:[#allocation3 + $0x20] sm:$0xff]
        %v3037 = vld [vmem:[#allocation3 + $0x28] sm:$0xff]
        %v3038 = vld [vmem:[#allocation3 + $0x30] sm:$0xff]
        %v3039 = vld [vmem:[#allocation3 + $0x38] sm:$0xff]
        %v3040 = vld [vmem:[#allocation3 + $0x40] sm:$0xff]
        %v3041 = vld [vmem:[#allocation3 + $0x48] sm:$0xff]
        %v3042 = vld [vmem:[#allocation3 + $0x50] sm:$0xff]
        %v3043 = vld [vmem:[#allocation3 + $0x58] sm:$0xff]
        %v3044 = vld [vmem:[#allocation3 + $0x60] sm:$0xff]
        %v3045 = vld [vmem:[#allocation3 + $0x68] sm:$0xff]
        %v3046 = vld [vmem:[#allocation3 + $0x70] sm:$0xff]
        %v3047 = vld [vmem:[#allocation3 + $0x78] sm:$0xff]
        %v3048 = vld [vmem:[#allocation3 + $0x80] sm:$0xff]
        %v3049 = vld [vmem:[#allocation3 + $0x88] sm:$0xff]
        %v3050 = vld [vmem:[#allocation3 + $0x90] sm:$0xff]
        %v3051 = vld [vmem:[#allocation3 + $0x98] sm:$0xff]
        %v3052 = vld [vmem:[#allocation3 + $0xa0] sm:$0xff]
        %v3053 = vld [vmem:[#allocation3 + $0xa8] sm:$0xff]
        %v3054 = vld [vmem:[#allocation3 + $0xb0] sm:$0xff]
        %v3055 = vld [vmem:[#allocation3 + $0xb8] sm:$0xff]
        %v3056 = vld [vmem:[#allocation3 + $0xc0] sm:$0xff]
        %v3057 = vld [vmem:[#allocation3 + $0xc8] sm:$0xff]
        %v3058 = vld [vmem:[#allocation3 + $0xd0] sm:$0xff]
        %v3059 = vld [vmem:[#allocation3 + $0xd8] sm:$0xff]
        %v3060 = vld [vmem:[#allocation3 + $0xe0] sm:$0xff]
        %v3061 = vld [vmem:[#allocation3 + $0xe8] sm:$0xff]
        %v3062 = vld [vmem:[#allocation3 + $0xf0] sm:$0xff]
        %v3063 = vld [vmem:[#allocation3 + $0xf8] sm:$0xff]
        %v3064 = vadd.f32 %v3032, %v2906
        %v3065 = vadd.f32 %v3033, %v2909
        %v3066 = vadd.f32 %v3034, %v2914
        %v3067 = vadd.f32 %v3035, %v2917
        %v3068 = vadd.f32 %v3036, %v2922
        %v3069 = vadd.f32 %v3037, %v2925
        %v3070 = vadd.f32 %v3038, %v2930
        %v3071 = vadd.f32 %v3039, %v2933
        %v3072 = vadd.f32 %v3040, %v2938
        %v3073 = vadd.f32 %v3041, %v2941
        %v3074 = vadd.f32 %v3042, %v2946
        %v3075 = vadd.f32 %v3043, %v2949
        %v3076 = vadd.f32 %v3044, %v2954
        %v3077 = vadd.f32 %v3045, %v2957
        %v3078 = vadd.f32 %v3046, %v2962
        %v3079 = vadd.f32 %v3047, %v2965
        %v3080 = vadd.f32 %v3048, %v2970
        %v3081 = vadd.f32 %v3049, %v2973
        %v3082 = vadd.f32 %v3050, %v2978
        %v3083 = vadd.f32 %v3051, %v2981
        %v3084 = vadd.f32 %v3052, %v2986
        %v3085 = vadd.f32 %v3053, %v2989
        %v3086 = vadd.f32 %v3054, %v2994
        %v3087 = vadd.f32 %v3055, %v2997
        %v3088 = vadd.f32 %v3056, %v3002
        %v3089 = vadd.f32 %v3057, %v3005
        %v3090 = vadd.f32 %v3058, %v3010
        %v3091 = vadd.f32 %v3059, %v3013
        %v3092 = vadd.f32 %v3060, %v3018
        %v3093 = vadd.f32 %v3061, %v3021
        %v3094 = vadd.f32 %v3062, %v3026
        %v3095 = vadd.f32 %v3063, %v3029
        %3096 = vst [vmem:[#allocation3] sm:$0xff] %v3064
        %3097 = vst [vmem:[#allocation3 + $0x8] sm:$0xff] %v3065
        %3098 = vst [vmem:[#allocation3 + $0x10] sm:$0xff] %v3066
        %3099 = vst [vmem:[#allocation3 + $0x18] sm:$0xff] %v3067
        %3100 = vst [vmem:[#allocation3 + $0x20] sm:$0xff] %v3068
        %3101 = vst [vmem:[#allocation3 + $0x28] sm:$0xff] %v3069
        %3102 = vst [vmem:[#allocation3 + $0x30] sm:$0xff] %v3070
        %3103 = vst [vmem:[#allocation3 + $0x38] sm:$0xff] %v3071
        %3104 = vst [vmem:[#allocation3 + $0x40] sm:$0xff] %v3072
        %3105 = vst [vmem:[#allocation3 + $0x48] sm:$0xff] %v3073
        %3106 = vst [vmem:[#allocation3 + $0x50] sm:$0xff] %v3074
        %3107 = vst [vmem:[#allocation3 + $0x58] sm:$0xff] %v3075
        %3108 = vst [vmem:[#allocation3 + $0x60] sm:$0xff] %v3076
        %3109 = vst [vmem:[#allocation3 + $0x68] sm:$0xff] %v3077
        %3110 = vst [vmem:[#allocation3 + $0x70] sm:$0xff] %v3078
        %3111 = vst [vmem:[#allocation3 + $0x78] sm:$0xff] %v3079
        %3112 = vst [vmem:[#allocation3 + $0x80] sm:$0xff] %v3080
        %3113 = vst [vmem:[#allocation3 + $0x88] sm:$0xff] %v3081
        %3114 = vst [vmem:[#allocation3 + $0x90] sm:$0xff] %v3082
        %3115 = vst [vmem:[#allocation3 + $0x98] sm:$0xff] %v3083
        %3116 = vst [vmem:[#allocation3 + $0xa0] sm:$0xff] %v3084
        %3117 = vst [vmem:[#allocation3 + $0xa8] sm:$0xff] %v3085
        %3118 = vst [vmem:[#allocation3 + $0xb0] sm:$0xff] %v3086
        %3119 = vst [vmem:[#allocation3 + $0xb8] sm:$0xff] %v3087
        %3120 = vst [vmem:[#allocation3 + $0xc0] sm:$0xff] %v3088
        %3121 = vst [vmem:[#allocation3 + $0xc8] sm:$0xff] %v3089
        %3122 = vst [vmem:[#allocation3 + $0xd0] sm:$0xff] %v3090
        %3123 = vst [vmem:[#allocation3 + $0xd8] sm:$0xff] %v3091
        %3124 = vst [vmem:[#allocation3 + $0xe0] sm:$0xff] %v3092
        %3125 = vst [vmem:[#allocation3 + $0xe8] sm:$0xff] %v3093
        %3126 = vst [vmem:[#allocation3 + $0xf0] sm:$0xff] %v3094
        %3127 = vst [vmem:[#allocation3 + $0xf8] sm:$0xff] %v3095
        %v3128 = vld [vmem:[%s1207] sm:$0xf]
        %v3129 = vld [vmem:[%s1207 + $0x4] sm:$0xf]
        %v3130 = vld [vmem:[%s1207 + $0xc] sm:$0xf]
        %v3131 = vld [vmem:[%s1207 + $0x10] sm:$0xf]
        %v3132 = vld [vmem:[%s1207 + $0x18] sm:$0xf]
        %v3133 = vld [vmem:[%s1207 + $0x1c] sm:$0xf]
        %v3134 = vld [vmem:[%s1207 + $0x24] sm:$0xf]
        %v3135 = vld [vmem:[%s1207 + $0x28] sm:$0xf]
        %v3136 = vld [vmem:[%s1207 + $0x30] sm:$0xf]
        %v3137 = vld [vmem:[%s1207 + $0x34] sm:$0xf]
        %v3138 = vld [vmem:[%s1207 + $0x3c] sm:$0xf]
        %v3139 = vld [vmem:[%s1207 + $0x40] sm:$0xf]
        %v3140 = vld [vmem:[%s1207 + $0x48] sm:$0xf]
        %v3141 = vld [vmem:[%s1207 + $0x4c] sm:$0xf]
        %v3142 = vld [vmem:[%s1207 + $0x54] sm:$0xf]
        %v3143 = vld [vmem:[%s1207 + $0x58] sm:$0xf]
        %v3144 = vld [vmem:[%s1207 + $0x60] sm:$0xf]
        %v3145 = vld [vmem:[%s1207 + $0x64] sm:$0xf]
        %v3146 = vld [vmem:[%s1207 + $0x6c] sm:$0xf]
        %v3147 = vld [vmem:[%s1207 + $0x70] sm:$0xf]
        %v3148 = vld [vmem:[%s1207 + $0x78] sm:$0xf]
        %v3149 = vld [vmem:[%s1207 + $0x7c] sm:$0xf]
        %v3150 = vld [vmem:[%s1207 + $0x84] sm:$0xf]
        %v3151 = vld [vmem:[%s1207 + $0x88] sm:$0xf]
        %v3152 = vld [vmem:[%s1207 + $0x90] sm:$0xf]
        %v3153 = vld [vmem:[%s1207 + $0x94] sm:$0xf]
        %v3154 = vld [vmem:[%s1207 + $0x9c] sm:$0xf]
        %v3155 = vld [vmem:[%s1207 + $0xa0] sm:$0xf]
        %v3156 = vld [vmem:[%s1207 + $0xa8] sm:$0xf]
        %v3157 = vld [vmem:[%s1207 + $0xac] sm:$0xf]
        %v3158 = vld [vmem:[%s1207 + $0xb4] sm:$0xf]
        %v3159 = vld [vmem:[%s1207 + $0xb8] sm:$0xf]
        %s3160 = scalar_lea.vmem [#allocation9], 192
        %v3161 = vld [vmem:[%s3160] sm:$0xf]
        %v3162 = vld [vmem:[%s3160 + $0x4] sm:$0xf]
        %v3163 = vld [vmem:[%s3160 + $0x8] sm:$0xf]
        %v3164 = vld [vmem:[%s3160 + $0xc] sm:$0xf]
        %v3165 = vld [vmem:[%s3160 + $0x10] sm:$0xf]
        %v3166 = vld [vmem:[%s3160 + $0x14] sm:$0xf]
        %v3167 = vld [vmem:[%s3160 + $0x18] sm:$0xf]
        %v3168 = vld [vmem:[%s3160 + $0x1c] sm:$0xf]
        %v3169 = vld [vmem:[%s3160 + $0x20] sm:$0xf]
        %v3170 = vld [vmem:[%s3160 + $0x24] sm:$0xf]
        %v3171 = vld [vmem:[%s3160 + $0x28] sm:$0xf]
        %v3172 = vld [vmem:[%s3160 + $0x2c] sm:$0xf]
        %v3173 = vld [vmem:[%s3160 + $0x30] sm:$0xf]
        %v3174 = vld [vmem:[%s3160 + $0x34] sm:$0xf]
        %v3175 = vld [vmem:[%s3160 + $0x38] sm:$0xf]
        %v3176 = vld [vmem:[%s3160 + $0x3c] sm:$0xf]
        %v3209 = vunpack.c.l.b16 %v3128
        %v3210 = vunpack.c.l.b16 %v3129
        %v3211 = vunpack.c.l.b16 %v3130
        %v3212 = vunpack.c.l.b16 %v3131
        %v3213 = vunpack.c.l.b16 %v3132
        %v3214 = vunpack.c.l.b16 %v3133
        %v3215 = vunpack.c.l.b16 %v3134
        %v3216 = vunpack.c.l.b16 %v3135
        %v3217 = vunpack.c.l.b16 %v3136
        %v3218 = vunpack.c.l.b16 %v3137
        %v3219 = vunpack.c.l.b16 %v3138
        %v3220 = vunpack.c.l.b16 %v3139
        %v3221 = vunpack.c.l.b16 %v3140
        %v3222 = vunpack.c.l.b16 %v3141
        %v3223 = vunpack.c.l.b16 %v3142
        %v3224 = vunpack.c.l.b16 %v3143
        %v3225 = vunpack.c.l.b16 %v3144
        %v3226 = vunpack.c.l.b16 %v3145
        %v3227 = vunpack.c.l.b16 %v3146
        %v3228 = vunpack.c.l.b16 %v3147
        %v3229 = vunpack.c.l.b16 %v3148
        %v3230 = vunpack.c.l.b16 %v3149
        %v3231 = vunpack.c.l.b16 %v3150
        %v3232 = vunpack.c.l.b16 %v3151
        %v3233 = vunpack.c.l.b16 %v3152
        %v3234 = vunpack.c.l.b16 %v3153
        %v3235 = vunpack.c.l.b16 %v3154
        %v3236 = vunpack.c.l.b16 %v3155
        %v3237 = vunpack.c.l.b16 %v3156
        %v3238 = vunpack.c.l.b16 %v3157
        %v3239 = vunpack.c.l.b16 %v3158
        %v3240 = vunpack.c.l.b16 %v3159
        %v3241 = vpack.c.b16 %v3210, %v3209
        %v3242 = vpack.c.b16 %v3212, %v3211
        %v3243 = vpack.c.b16 %v3214, %v3213
        %v3244 = vpack.c.b16 %v3216, %v3215
        %v3245 = vpack.c.b16 %v3218, %v3217
        %v3246 = vpack.c.b16 %v3220, %v3219
        %v3247 = vpack.c.b16 %v3222, %v3221
        %v3248 = vpack.c.b16 %v3224, %v3223
        %v3249 = vpack.c.b16 %v3226, %v3225
        %v3250 = vpack.c.b16 %v3228, %v3227
        %v3251 = vpack.c.b16 %v3230, %v3229
        %v3252 = vpack.c.b16 %v3232, %v3231
        %v3253 = vpack.c.b16 %v3234, %v3233
        %v3254 = vpack.c.b16 %v3236, %v3235
        %v3255 = vpack.c.b16 %v3238, %v3237
        %v3256 = vpack.c.b16 %v3240, %v3239
        %v3289 = vunpack.c.l.b16 %v3161
        %v3290 = vunpack.c.l.b16 %v3162
        %v3291 = vunpack.c.l.b16 %v3163
        %v3292 = vunpack.c.l.b16 %v3164
        %v3293 = vunpack.c.l.b16 %v3165
        %v3294 = vunpack.c.l.b16 %v3166
        %v3295 = vunpack.c.l.b16 %v3167
        %v3296 = vunpack.c.l.b16 %v3168
        %v3297 = vunpack.c.l.b16 %v3169
        %v3298 = vunpack.c.l.b16 %v3170
        %v3299 = vunpack.c.l.b16 %v3171
        %v3300 = vunpack.c.l.b16 %v3172
        %v3301 = vunpack.c.l.b16 %v3173
        %v3302 = vunpack.c.l.b16 %v3174
        %v3303 = vunpack.c.l.b16 %v3175
        %v3304 = vunpack.c.l.b16 %v3176
        %v3305 = vpack.c.b16 %v3290, %v3289
        %v3306 = vpack.c.b16 %v3292, %v3291
        %v3307 = vpack.c.b16 %v3294, %v3293
        %v3308 = vpack.c.b16 %v3296, %v3295
        %v3309 = vpack.c.b16 %v3298, %v3297
        %v3310 = vpack.c.b16 %v3300, %v3299
        %v3311 = vpack.c.b16 %v3302, %v3301
        %v3312 = vpack.c.b16 %v3304, %v3303
        %3321 = vmatprep.subr.bf16.mxu0 0
        %3322 = vmatpush1.bf16.msra.mxu0 %v3305
        %3323 = vmatprep.subr.bf16.mxu0 0
        %3324 = vmatpush1.bf16.msra.mxu0 %v3306
        %3325 = vmatprep.subr.bf16.mxu0 0
        %3326 = vmatpush1.bf16.msra.mxu0 %v3307
        %3327 = vmatprep.subr.bf16.mxu0 0
        %3328 = vmatpush1.bf16.msra.mxu0 %v3308
        %3329 = vmatprep.subr.bf16.mxu0 0
        %3330 = vmatpush1.bf16.msra.mxu0 %v3309
        %3331 = vmatprep.subr.bf16.mxu0 0
        %3332 = vmatpush1.bf16.msra.mxu0 %v3310
        %3333 = vmatprep.subr.bf16.mxu0 0
        %3334 = vmatpush1.bf16.msra.mxu0 %v3311
        %3335 = vmatprep.subr.bf16.mxu0 0
        %3336 = vmatpush1.bf16.msra.mxu0 %v3312
        %3337 = vmatprep.subr.bf16.mxu0 0
        %3338 = vmatpush1.bf16.msra.mxu0 0
        %3339 = vmatprep.subr.bf16.mxu0 0
        %3340 = vmatpush1.bf16.msra.mxu0 0
        %3341 = vmatprep.subr.bf16.mxu0 0
        %3342 = vmatpush1.bf16.msra.mxu0 0
        %3343 = vmatprep.subr.bf16.mxu0 0
        %3344 = vmatpush1.bf16.msra.mxu0 0
        %3345 = vmatprep.subr.bf16.mxu0 0
        %3346 = vmatpush1.bf16.msra.mxu0 0
        %3347 = vmatprep.subr.bf16.mxu0 0
        %3348 = vmatpush1.bf16.msra.mxu0 0
        %3349 = vmatprep.subr.bf16.mxu0 0
        %3350 = vmatpush1.bf16.msra.mxu0 0
        %3351 = vmatprep.subr.bf16.mxu0 0
        %3352 = vmatpush1.bf16.msra.mxu0 0
        %3353 = vmatprep.mubr.bf16.mxu0 0
        %3354 = vmatmul.mubr.bf16.gmra.mrb[0].mxu0 %v3241
        %v3355 = vpop.f32.mrb[0].mxu0
        %v3356 = vadd.f32 0.0, %v3355
        %v3357 = vpop.f32.mrb[0].mxu0
        %v3358 = vpop.f32.mrb[0].mxu0
        %v3359 = vadd.f32 0.0, %v3358
        %v3360 = vpop.f32.mrb[0].mxu0
        %3361 = vmatprep.mubr.bf16.mxu0 0
        %3362 = vmatmul.mubr.bf16.gmra.mrb[0].mxu0 %v3242
        %v3363 = vpop.f32.mrb[0].mxu0
        %v3364 = vadd.f32 0.0, %v3363
        %v3365 = vpop.f32.mrb[0].mxu0
        %v3366 = vpop.f32.mrb[0].mxu0
        %v3367 = vadd.f32 0.0, %v3366
        %v3368 = vpop.f32.mrb[0].mxu0
        %3369 = vmatprep.mubr.bf16.mxu0 0
        %3370 = vmatmul.mubr.bf16.gmra.mrb[0].mxu0 %v3243
        %v3371 = vpop.f32.mrb[0].mxu0
        %v3372 = vadd.f32 0.0, %v3371
        %v3373 = vpop.f32.mrb[0].mxu0
        %v3374 = vpop.f32.mrb[0].mxu0
        %v3375 = vadd.f32 0.0, %v3374
        %v3376 = vpop.f32.mrb[0].mxu0
        %3377 = vmatprep.mubr.bf16.mxu0 0
        %3378 = vmatmul.mubr.bf16.gmra.mrb[0].mxu0 %v3244
        %v3379 = vpop.f32.mrb[0].mxu0
        %v3380 = vadd.f32 0.0, %v3379
        %v3381 = vpop.f32.mrb[0].mxu0
        %v3382 = vpop.f32.mrb[0].mxu0
        %v3383 = vadd.f32 0.0, %v3382
        %v3384 = vpop.f32.mrb[0].mxu0
        %3385 = vmatprep.mubr.bf16.mxu0 0
        %3386 = vmatmul.mubr.bf16.gmra.mrb[0].mxu0 %v3245
        %v3387 = vpop.f32.mrb[0].mxu0
        %v3388 = vadd.f32 0.0, %v3387
        %v3389 = vpop.f32.mrb[0].mxu0
        %v3390 = vpop.f32.mrb[0].mxu0
        %v3391 = vadd.f32 0.0, %v3390
        %v3392 = vpop.f32.mrb[0].mxu0
        %3393 = vmatprep.mubr.bf16.mxu0 0
        %3394 = vmatmul.mubr.bf16.gmra.mrb[0].mxu0 %v3246
        %v3395 = vpop.f32.mrb[0].mxu0
        %v3396 = vadd.f32 0.0, %v3395
        %v3397 = vpop.f32.mrb[0].mxu0
        %v3398 = vpop.f32.mrb[0].mxu0
        %v3399 = vadd.f32 0.0, %v3398
        %v3400 = vpop.f32.mrb[0].mxu0
        %3401 = vmatprep.mubr.bf16.mxu0 0
        %3402 = vmatmul.mubr.bf16.gmra.mrb[0].mxu0 %v3247
        %v3403 = vpop.f32.mrb[0].mxu0
        %v3404 = vadd.f32 0.0, %v3403
        %v3405 = vpop.f32.mrb[0].mxu0
        %v3406 = vpop.f32.mrb[0].mxu0
        %v3407 = vadd.f32 0.0, %v3406
        %v3408 = vpop.f32.mrb[0].mxu0
        %3409 = vmatprep.mubr.bf16.mxu0 0
        %3410 = vmatmul.mubr.bf16.gmra.mrb[0].mxu0 %v3248
        %v3411 = vpop.f32.mrb[0].mxu0
        %v3412 = vadd.f32 0.0, %v3411
        %v3413 = vpop.f32.mrb[0].mxu0
        %v3414 = vpop.f32.mrb[0].mxu0
        %v3415 = vadd.f32 0.0, %v3414
        %v3416 = vpop.f32.mrb[0].mxu0
        %3417 = vmatprep.mubr.bf16.mxu0 0
        %3418 = vmatmul.mubr.bf16.gmra.mrb[0].mxu0 %v3249
        %v3419 = vpop.f32.mrb[0].mxu0
        %v3420 = vadd.f32 0.0, %v3419
        %v3421 = vpop.f32.mrb[0].mxu0
        %v3422 = vpop.f32.mrb[0].mxu0
        %v3423 = vadd.f32 0.0, %v3422
        %v3424 = vpop.f32.mrb[0].mxu0
        %3425 = vmatprep.mubr.bf16.mxu0 0
        %3426 = vmatmul.mubr.bf16.gmra.mrb[0].mxu0 %v3250
        %v3427 = vpop.f32.mrb[0].mxu0
        %v3428 = vadd.f32 0.0, %v3427
        %v3429 = vpop.f32.mrb[0].mxu0
        %v3430 = vpop.f32.mrb[0].mxu0
        %v3431 = vadd.f32 0.0, %v3430
        %v3432 = vpop.f32.mrb[0].mxu0
        %3433 = vmatprep.mubr.bf16.mxu0 0
        %3434 = vmatmul.mubr.bf16.gmra.mrb[0].mxu0 %v3251
        %v3435 = vpop.f32.mrb[0].mxu0
        %v3436 = vadd.f32 0.0, %v3435
        %v3437 = vpop.f32.mrb[0].mxu0
        %v3438 = vpop.f32.mrb[0].mxu0
        %v3439 = vadd.f32 0.0, %v3438
        %v3440 = vpop.f32.mrb[0].mxu0
        %3441 = vmatprep.mubr.bf16.mxu0 0
        %3442 = vmatmul.mubr.bf16.gmra.mrb[0].mxu0 %v3252
        %v3443 = vpop.f32.mrb[0].mxu0
        %v3444 = vadd.f32 0.0, %v3443
        %v3445 = vpop.f32.mrb[0].mxu0
        %v3446 = vpop.f32.mrb[0].mxu0
        %v3447 = vadd.f32 0.0, %v3446
        %v3448 = vpop.f32.mrb[0].mxu0
        %3449 = vmatprep.mubr.bf16.mxu0 0
        %3450 = vmatmul.mubr.bf16.gmra.mrb[0].mxu0 %v3253
        %v3451 = vpop.f32.mrb[0].mxu0
        %v3452 = vadd.f32 0.0, %v3451
        %v3453 = vpop.f32.mrb[0].mxu0
        %v3454 = vpop.f32.mrb[0].mxu0
        %v3455 = vadd.f32 0.0, %v3454
        %v3456 = vpop.f32.mrb[0].mxu0
        %3457 = vmatprep.mubr.bf16.mxu0 0
        %3458 = vmatmul.mubr.bf16.gmra.mrb[0].mxu0 %v3254
        %v3459 = vpop.f32.mrb[0].mxu0
        %v3460 = vadd.f32 0.0, %v3459
        %v3461 = vpop.f32.mrb[0].mxu0
        %v3462 = vpop.f32.mrb[0].mxu0
        %v3463 = vadd.f32 0.0, %v3462
        %v3464 = vpop.f32.mrb[0].mxu0
        %3465 = vmatprep.mubr.bf16.mxu0 0
        %3466 = vmatmul.mubr.bf16.gmra.mrb[0].mxu0 %v3255
        %v3467 = vpop.f32.mrb[0].mxu0
        %v3468 = vadd.f32 0.0, %v3467
        %v3469 = vpop.f32.mrb[0].mxu0
        %v3470 = vpop.f32.mrb[0].mxu0
        %v3471 = vadd.f32 0.0, %v3470
        %v3472 = vpop.f32.mrb[0].mxu0
        %3473 = vmatprep.mubr.bf16.mxu0 0
        %3474 = vmatmul.mubr.bf16.gmra.mrb[0].mxu0 %v3256
        %v3475 = vpop.f32.mrb[0].mxu0
        %v3476 = vadd.f32 0.0, %v3475
        %v3477 = vpop.f32.mrb[0].mxu0
        %v3478 = vpop.f32.mrb[0].mxu0
        %v3479 = vadd.f32 0.0, %v3478
        %v3480 = vpop.f32.mrb[0].mxu0
        %3481 = vdwg.mxu0
        %v3482 = vld [vmem:[#allocation3] sm:$0xff]
        %v3483 = vld [vmem:[#allocation3 + $0x8] sm:$0xff]
        %v3484 = vld [vmem:[#allocation3 + $0x10] sm:$0xff]
        %v3485 = vld [vmem:[#allocation3 + $0x18] sm:$0xff]
        %v3486 = vld [vmem:[#allocation3 + $0x20] sm:$0xff]
        %v3487 = vld [vmem:[#allocation3 + $0x28] sm:$0xff]
        %v3488 = vld [vmem:[#allocation3 + $0x30] sm:$0xff]
        %v3489 = vld [vmem:[#allocation3 + $0x38] sm:$0xff]
        %v3490 = vld [vmem:[#allocation3 + $0x40] sm:$0xff]
        %v3491 = vld [vmem:[#allocation3 + $0x48] sm:$0xff]
        %v3492 = vld [vmem:[#allocation3 + $0x50] sm:$0xff]
        %v3493 = vld [vmem:[#allocation3 + $0x58] sm:$0xff]
        %v3494 = vld [vmem:[#allocation3 + $0x60] sm:$0xff]
        %v3495 = vld [vmem:[#allocation3 + $0x68] sm:$0xff]
        %v3496 = vld [vmem:[#allocation3 + $0x70] sm:$0xff]
        %v3497 = vld [vmem:[#allocation3 + $0x78] sm:$0xff]
        %v3498 = vld [vmem:[#allocation3 + $0x80] sm:$0xff]
        %v3499 = vld [vmem:[#allocation3 + $0x88] sm:$0xff]
        %v3500 = vld [vmem:[#allocation3 + $0x90] sm:$0xff]
        %v3501 = vld [vmem:[#allocation3 + $0x98] sm:$0xff]
        %v3502 = vld [vmem:[#allocation3 + $0xa0] sm:$0xff]
        %v3503 = vld [vmem:[#allocation3 + $0xa8] sm:$0xff]
        %v3504 = vld [vmem:[#allocation3 + $0xb0] sm:$0xff]
        %v3505 = vld [vmem:[#allocation3 + $0xb8] sm:$0xff]
        %v3506 = vld [vmem:[#allocation3 + $0xc0] sm:$0xff]
        %v3507 = vld [vmem:[#allocation3 + $0xc8] sm:$0xff]
        %v3508 = vld [vmem:[#allocation3 + $0xd0] sm:$0xff]
        %v3509 = vld [vmem:[#allocation3 + $0xd8] sm:$0xff]
        %v3510 = vld [vmem:[#allocation3 + $0xe0] sm:$0xff]
        %v3511 = vld [vmem:[#allocation3 + $0xe8] sm:$0xff]
        %v3512 = vld [vmem:[#allocation3 + $0xf0] sm:$0xff]
        %v3513 = vld [vmem:[#allocation3 + $0xf8] sm:$0xff]
        %v3514 = vadd.f32 %v3482, %v3356
        %v3515 = vadd.f32 %v3483, %v3359
        %v3516 = vadd.f32 %v3484, %v3364
        %v3517 = vadd.f32 %v3485, %v3367
        %v3518 = vadd.f32 %v3486, %v3372
        %v3519 = vadd.f32 %v3487, %v3375
        %v3520 = vadd.f32 %v3488, %v3380
        %v3521 = vadd.f32 %v3489, %v3383
        %v3522 = vadd.f32 %v3490, %v3388
        %v3523 = vadd.f32 %v3491, %v3391
        %v3524 = vadd.f32 %v3492, %v3396
        %v3525 = vadd.f32 %v3493, %v3399
        %v3526 = vadd.f32 %v3494, %v3404
        %v3527 = vadd.f32 %v3495, %v3407
        %v3528 = vadd.f32 %v3496, %v3412
        %v3529 = vadd.f32 %v3497, %v3415
        %v3530 = vadd.f32 %v3498, %v3420
        %v3531 = vadd.f32 %v3499, %v3423
        %v3532 = vadd.f32 %v3500, %v3428
        %v3533 = vadd.f32 %v3501, %v3431
        %v3534 = vadd.f32 %v3502, %v3436
        %v3535 = vadd.f32 %v3503, %v3439
        %v3536 = vadd.f32 %v3504, %v3444
        %v3537 = vadd.f32 %v3505, %v3447
        %v3538 = vadd.f32 %v3506, %v3452
        %v3539 = vadd.f32 %v3507, %v3455
        %v3540 = vadd.f32 %v3508, %v3460
        %v3541 = vadd.f32 %v3509, %v3463
        %v3542 = vadd.f32 %v3510, %v3468
        %v3543 = vadd.f32 %v3511, %v3471
        %v3544 = vadd.f32 %v3512, %v3476
        %v3545 = vadd.f32 %v3513, %v3479
        %3546 = vst [vmem:[#allocation3] sm:$0xff] %v3514
        %3547 = vst [vmem:[#allocation3 + $0x8] sm:$0xff] %v3515
        %3548 = vst [vmem:[#allocation3 + $0x10] sm:$0xff] %v3516
        %3549 = vst [vmem:[#allocation3 + $0x18] sm:$0xff] %v3517
        %3550 = vst [vmem:[#allocation3 + $0x20] sm:$0xff] %v3518
        %3551 = vst [vmem:[#allocation3 + $0x28] sm:$0xff] %v3519
        %3552 = vst [vmem:[#allocation3 + $0x30] sm:$0xff] %v3520
        %3553 = vst [vmem:[#allocation3 + $0x38] sm:$0xff] %v3521
        %3554 = vst [vmem:[#allocation3 + $0x40] sm:$0xff] %v3522
        %3555 = vst [vmem:[#allocation3 + $0x48] sm:$0xff] %v3523
        %3556 = vst [vmem:[#allocation3 + $0x50] sm:$0xff] %v3524
        %3557 = vst [vmem:[#allocation3 + $0x58] sm:$0xff] %v3525
        %3558 = vst [vmem:[#allocation3 + $0x60] sm:$0xff] %v3526
        %3559 = vst [vmem:[#allocation3 + $0x68] sm:$0xff] %v3527
        %3560 = vst [vmem:[#allocation3 + $0x70] sm:$0xff] %v3528
        %3561 = vst [vmem:[#allocation3 + $0x78] sm:$0xff] %v3529
        %3562 = vst [vmem:[#allocation3 + $0x80] sm:$0xff] %v3530
        %3563 = vst [vmem:[#allocation3 + $0x88] sm:$0xff] %v3531
        %3564 = vst [vmem:[#allocation3 + $0x90] sm:$0xff] %v3532
        %3565 = vst [vmem:[#allocation3 + $0x98] sm:$0xff] %v3533
        %3566 = vst [vmem:[#allocation3 + $0xa0] sm:$0xff] %v3534
        %3567 = vst [vmem:[#allocation3 + $0xa8] sm:$0xff] %v3535
        %3568 = vst [vmem:[#allocation3 + $0xb0] sm:$0xff] %v3536
        %3569 = vst [vmem:[#allocation3 + $0xb8] sm:$0xff] %v3537
        %3570 = vst [vmem:[#allocation3 + $0xc0] sm:$0xff] %v3538
        %3571 = vst [vmem:[#allocation3 + $0xc8] sm:$0xff] %v3539
        %3572 = vst [vmem:[#allocation3 + $0xd0] sm:$0xff] %v3540
        %3573 = vst [vmem:[#allocation3 + $0xd8] sm:$0xff] %v3541
        %3574 = vst [vmem:[#allocation3 + $0xe0] sm:$0xff] %v3542
        %3575 = vst [vmem:[#allocation3 + $0xe8] sm:$0xff] %v3543
        %3576 = vst [vmem:[#allocation3 + $0xf0] sm:$0xff] %v3544
        %3577 = vst [vmem:[#allocation3 + $0xf8] sm:$0xff] %v3545
        %v3578 = vld [vmem:[%s1207] sm:$0xf]
        %v3579 = vld [vmem:[%s1207 + $0x4] sm:$0xf]
        %v3580 = vld [vmem:[%s1207 + $0x8] sm:$0x1]
        %v3581 = vld [vmem:[%s1207 + $0xc] sm:$0xf]
        %v3582 = vld [vmem:[%s1207 + $0x10] sm:$0xf]
        %v3583 = vld [vmem:[%s1207 + $0x14] sm:$0x1]
        %v3584 = vld [vmem:[%s1207 + $0x18] sm:$0xf]
        %v3585 = vld [vmem:[%s1207 + $0x1c] sm:$0xf]
        %v3586 = vld [vmem:[%s1207 + $0x20] sm:$0x1]
        %v3587 = vld [vmem:[%s1207 + $0x24] sm:$0xf]
        %v3588 = vld [vmem:[%s1207 + $0x28] sm:$0xf]
        %v3589 = vld [vmem:[%s1207 + $0x2c] sm:$0x1]
        %v3590 = vld [vmem:[%s1207 + $0x30] sm:$0xf]
        %v3591 = vld [vmem:[%s1207 + $0x34] sm:$0xf]
        %v3592 = vld [vmem:[%s1207 + $0x38] sm:$0x1]
        %v3593 = vld [vmem:[%s1207 + $0x3c] sm:$0xf]
        %v3594 = vld [vmem:[%s1207 + $0x40] sm:$0xf]
        %v3595 = vld [vmem:[%s1207 + $0x44] sm:$0x1]
        %v3596 = vld [vmem:[%s1207 + $0x48] sm:$0xf]
        %v3597 = vld [vmem:[%s1207 + $0x4c] sm:$0xf]
        %v3598 = vld [vmem:[%s1207 + $0x50] sm:$0x1]
        %v3599 = vld [vmem:[%s1207 + $0x54] sm:$0xf]
        %v3600 = vld [vmem:[%s1207 + $0x58] sm:$0xf]
        %v3601 = vld [vmem:[%s1207 + $0x5c] sm:$0x1]
        %v3602 = vld [vmem:[%s1207 + $0x60] sm:$0xf]
        %v3603 = vld [vmem:[%s1207 + $0x64] sm:$0xf]
        %v3604 = vld [vmem:[%s1207 + $0x68] sm:$0x1]
        %v3605 = vld [vmem:[%s1207 + $0x6c] sm:$0xf]
        %v3606 = vld [vmem:[%s1207 + $0x70] sm:$0xf]
        %v3607 = vld [vmem:[%s1207 + $0x74] sm:$0x1]
        %v3608 = vld [vmem:[%s1207 + $0x78] sm:$0xf]
        %v3609 = vld [vmem:[%s1207 + $0x7c] sm:$0xf]
        %v3610 = vld [vmem:[%s1207 + $0x80] sm:$0x1]
        %v3611 = vld [vmem:[%s1207 + $0x84] sm:$0xf]
        %v3612 = vld [vmem:[%s1207 + $0x88] sm:$0xf]
        %v3613 = vld [vmem:[%s1207 + $0x8c] sm:$0x1]
        %v3614 = vld [vmem:[%s1207 + $0x90] sm:$0xf]
        %v3615 = vld [vmem:[%s1207 + $0x94] sm:$0xf]
        %v3616 = vld [vmem:[%s1207 + $0x98] sm:$0x1]
        %v3617 = vld [vmem:[%s1207 + $0x9c] sm:$0xf]
        %v3618 = vld [vmem:[%s1207 + $0xa0] sm:$0xf]
        %v3619 = vld [vmem:[%s1207 + $0xa4] sm:$0x1]
        %v3620 = vld [vmem:[%s1207 + $0xa8] sm:$0xf]
        %v3621 = vld [vmem:[%s1207 + $0xac] sm:$0xf]
        %v3622 = vld [vmem:[%s1207 + $0xb0] sm:$0x1]
        %v3623 = vld [vmem:[%s1207 + $0xb4] sm:$0xf]
        %v3624 = vld [vmem:[%s1207 + $0xb8] sm:$0xf]
        %v3625 = vld [vmem:[%s1207 + $0xbc] sm:$0x1]
        %v3627 = vshrl.u32 %v3578, 16
        %v3629 = vrot.slane %v3627, 4
        %v3630 = vshll.u32 %v3578, 16
        %v3632 = vrot.slane %v3630, 5
        %v3633 = vor.u32 %v3629, %v3632
        %v3634 = vrot.slane %v3633, 4
        %v3636 = vshll.u32 %v3579, 16
        %v3638 = vrot.slane %v3636, 5
        %v3639 = vsel %vm1760, %v3634, %v3638
        %v3640 = vshrl.u32 %v3579, 16
        %v3642 = vrot.slane %v3640, 4
        %v3643 = vor.u32 %v3642, %v3638
        %v3644 = vrot.slane %v3643, 4
        %v3646 = vshll.u32 %v3580, 16
        %v3648 = vrot.slane %v3646, 5
        %v3649 = vsel %vm1760, %v3644, %v3648
        %v3651 = vshrl.u32 %v3581, 16
        %v3653 = vrot.slane %v3651, 4
        %v3654 = vshll.u32 %v3581, 16
        %v3656 = vrot.slane %v3654, 5
        %v3657 = vor.u32 %v3653, %v3656
        %v3658 = vrot.slane %v3657, 4
        %v3660 = vshll.u32 %v3582, 16
        %v3662 = vrot.slane %v3660, 5
        %v3663 = vsel %vm1760, %v3658, %v3662
        %v3664 = vshrl.u32 %v3582, 16
        %v3666 = vrot.slane %v3664, 4
        %v3667 = vor.u32 %v3666, %v3662
        %v3668 = vrot.slane %v3667, 4
        %v3670 = vshll.u32 %v3583, 16
        %v3672 = vrot.slane %v3670, 5
        %v3673 = vsel %vm1760, %v3668, %v3672
        %v3675 = vshrl.u32 %v3584, 16
        %v3677 = vrot.slane %v3675, 4
        %v3678 = vshll.u32 %v3584, 16
        %v3680 = vrot.slane %v3678, 5
        %v3681 = vor.u32 %v3677, %v3680
        %v3682 = vrot.slane %v3681, 4
        %v3684 = vshll.u32 %v3585, 16
        %v3686 = vrot.slane %v3684, 5
        %v3687 = vsel %vm1760, %v3682, %v3686
        %v3688 = vshrl.u32 %v3585, 16
        %v3690 = vrot.slane %v3688, 4
        %v3691 = vor.u32 %v3690, %v3686
        %v3692 = vrot.slane %v3691, 4
        %v3694 = vshll.u32 %v3586, 16
        %v3696 = vrot.slane %v3694, 5
        %v3697 = vsel %vm1760, %v3692, %v3696
        %v3699 = vshrl.u32 %v3587, 16
        %v3701 = vrot.slane %v3699, 4
        %v3702 = vshll.u32 %v3587, 16
        %v3704 = vrot.slane %v3702, 5
        %v3705 = vor.u32 %v3701, %v3704
        %v3706 = vrot.slane %v3705, 4
        %v3708 = vshll.u32 %v3588, 16
        %v3710 = vrot.slane %v3708, 5
        %v3711 = vsel %vm1760, %v3706, %v3710
        %v3712 = vshrl.u32 %v3588, 16
        %v3714 = vrot.slane %v3712, 4
        %v3715 = vor.u32 %v3714, %v3710
        %v3716 = vrot.slane %v3715, 4
        %v3718 = vshll.u32 %v3589, 16
        %v3720 = vrot.slane %v3718, 5
        %v3721 = vsel %vm1760, %v3716, %v3720
        %v3723 = vshrl.u32 %v3590, 16
        %v3725 = vrot.slane %v3723, 4
        %v3726 = vshll.u32 %v3590, 16
        %v3728 = vrot.slane %v3726, 5
        %v3729 = vor.u32 %v3725, %v3728
        %v3730 = vrot.slane %v3729, 4
        %v3732 = vshll.u32 %v3591, 16
        %v3734 = vrot.slane %v3732, 5
        %v3735 = vsel %vm1760, %v3730, %v3734
        %v3736 = vshrl.u32 %v3591, 16
        %v3738 = vrot.slane %v3736, 4
        %v3739 = vor.u32 %v3738, %v3734
        %v3740 = vrot.slane %v3739, 4
        %v3742 = vshll.u32 %v3592, 16
        %v3744 = vrot.slane %v3742, 5
        %v3745 = vsel %vm1760, %v3740, %v3744
        %v3747 = vshrl.u32 %v3593, 16
        %v3749 = vrot.slane %v3747, 4
        %v3750 = vshll.u32 %v3593, 16
        %v3752 = vrot.slane %v3750, 5
        %v3753 = vor.u32 %v3749, %v3752
        %v3754 = vrot.slane %v3753, 4
        %v3756 = vshll.u32 %v3594, 16
        %v3758 = vrot.slane %v3756, 5
        %v3759 = vsel %vm1760, %v3754, %v3758
        %v3760 = vshrl.u32 %v3594, 16
        %v3762 = vrot.slane %v3760, 4
        %v3763 = vor.u32 %v3762, %v3758
        %v3764 = vrot.slane %v3763, 4
        %v3766 = vshll.u32 %v3595, 16
        %v3768 = vrot.slane %v3766, 5
        %v3769 = vsel %vm1760, %v3764, %v3768
        %v3771 = vshrl.u32 %v3596, 16
        %v3773 = vrot.slane %v3771, 4
        %v3774 = vshll.u32 %v3596, 16
        %v3776 = vrot.slane %v3774, 5
        %v3777 = vor.u32 %v3773, %v3776
        %v3778 = vrot.slane %v3777, 4
        %v3780 = vshll.u32 %v3597, 16
        %v3782 = vrot.slane %v3780, 5
        %v3783 = vsel %vm1760, %v3778, %v3782
        %v3784 = vshrl.u32 %v3597, 16
        %v3786 = vrot.slane %v3784, 4
        %v3787 = vor.u32 %v3786, %v3782
        %v3788 = vrot.slane %v3787, 4
        %v3790 = vshll.u32 %v3598, 16
        %v3792 = vrot.slane %v3790, 5
        %v3793 = vsel %vm1760, %v3788, %v3792
        %v3795 = vshrl.u32 %v3599, 16
        %v3797 = vrot.slane %v3795, 4
        %v3798 = vshll.u32 %v3599, 16
        %v3800 = vrot.slane %v3798, 5
        %v3801 = vor.u32 %v3797, %v3800
        %v3802 = vrot.slane %v3801, 4
        %v3804 = vshll.u32 %v3600, 16
        %v3806 = vrot.slane %v3804, 5
        %v3807 = vsel %vm1760, %v3802, %v3806
        %v3808 = vshrl.u32 %v3600, 16
        %v3810 = vrot.slane %v3808, 4
        %v3811 = vor.u32 %v3810, %v3806
        %v3812 = vrot.slane %v3811, 4
        %v3814 = vshll.u32 %v3601, 16
        %v3816 = vrot.slane %v3814, 5
        %v3817 = vsel %vm1760, %v3812, %v3816
        %v3819 = vshrl.u32 %v3602, 16
        %v3821 = vrot.slane %v3819, 4
        %v3822 = vshll.u32 %v3602, 16
        %v3824 = vrot.slane %v3822, 5
        %v3825 = vor.u32 %v3821, %v3824
        %v3826 = vrot.slane %v3825, 4
        %v3828 = vshll.u32 %v3603, 16
        %v3830 = vrot.slane %v3828, 5
        %v3831 = vsel %vm1760, %v3826, %v3830
        %v3832 = vshrl.u32 %v3603, 16
        %v3834 = vrot.slane %v3832, 4
        %v3835 = vor.u32 %v3834, %v3830
        %v3836 = vrot.slane %v3835, 4
        %v3838 = vshll.u32 %v3604, 16
        %v3840 = vrot.slane %v3838, 5
        %v3841 = vsel %vm1760, %v3836, %v3840
        %v3843 = vshrl.u32 %v3605, 16
        %v3845 = vrot.slane %v3843, 4
        %v3846 = vshll.u32 %v3605, 16
        %v3848 = vrot.slane %v3846, 5
        %v3849 = vor.u32 %v3845, %v3848
        %v3850 = vrot.slane %v3849, 4
        %v3852 = vshll.u32 %v3606, 16
        %v3854 = vrot.slane %v3852, 5
        %v3855 = vsel %vm1760, %v3850, %v3854
        %v3856 = vshrl.u32 %v3606, 16
        %v3858 = vrot.slane %v3856, 4
        %v3859 = vor.u32 %v3858, %v3854
        %v3860 = vrot.slane %v3859, 4
        %v3862 = vshll.u32 %v3607, 16
        %v3864 = vrot.slane %v3862, 5
        %v3865 = vsel %vm1760, %v3860, %v3864
        %v3867 = vshrl.u32 %v3608, 16
        %v3869 = vrot.slane %v3867, 4
        %v3870 = vshll.u32 %v3608, 16
        %v3872 = vrot.slane %v3870, 5
        %v3873 = vor.u32 %v3869, %v3872
        %v3874 = vrot.slane %v3873, 4
        %v3876 = vshll.u32 %v3609, 16
        %v3878 = vrot.slane %v3876, 5
        %v3879 = vsel %vm1760, %v3874, %v3878
        %v3880 = vshrl.u32 %v3609, 16
        %v3882 = vrot.slane %v3880, 4
        %v3883 = vor.u32 %v3882, %v3878
        %v3884 = vrot.slane %v3883, 4
        %v3886 = vshll.u32 %v3610, 16
        %v3888 = vrot.slane %v3886, 5
        %v3889 = vsel %vm1760, %v3884, %v3888
        %v3891 = vshrl.u32 %v3611, 16
        %v3893 = vrot.slane %v3891, 4
        %v3894 = vshll.u32 %v3611, 16
        %v3896 = vrot.slane %v3894, 5
        %v3897 = vor.u32 %v3893, %v3896
        %v3898 = vrot.slane %v3897, 4
        %v3900 = vshll.u32 %v3612, 16
        %v3902 = vrot.slane %v3900, 5
        %v3903 = vsel %vm1760, %v3898, %v3902
        %v3904 = vshrl.u32 %v3612, 16
        %v3906 = vrot.slane %v3904, 4
        %v3907 = vor.u32 %v3906, %v3902
        %v3908 = vrot.slane %v3907, 4
        %v3910 = vshll.u32 %v3613, 16
        %v3912 = vrot.slane %v3910, 5
        %v3913 = vsel %vm1760, %v3908, %v3912
        %v3915 = vshrl.u32 %v3614, 16
        %v3917 = vrot.slane %v3915, 4
        %v3918 = vshll.u32 %v3614, 16
        %v3920 = vrot.slane %v3918, 5
        %v3921 = vor.u32 %v3917, %v3920
        %v3922 = vrot.slane %v3921, 4
        %v3924 = vshll.u32 %v3615, 16
        %v3926 = vrot.slane %v3924, 5
        %v3927 = vsel %vm1760, %v3922, %v3926
        %v3928 = vshrl.u32 %v3615, 16
        %v3930 = vrot.slane %v3928, 4
        %v3931 = vor.u32 %v3930, %v3926
        %v3932 = vrot.slane %v3931, 4
        %v3934 = vshll.u32 %v3616, 16
        %v3936 = vrot.slane %v3934, 5
        %v3937 = vsel %vm1760, %v3932, %v3936
        %v3939 = vshrl.u32 %v3617, 16
        %v3941 = vrot.slane %v3939, 4
        %v3942 = vshll.u32 %v3617, 16
        %v3944 = vrot.slane %v3942, 5
        %v3945 = vor.u32 %v3941, %v3944
        %v3946 = vrot.slane %v3945, 4
        %v3948 = vshll.u32 %v3618, 16
        %v3950 = vrot.slane %v3948, 5
        %v3951 = vsel %vm1760, %v3946, %v3950
        %v3952 = vshrl.u32 %v3618, 16
        %v3954 = vrot.slane %v3952, 4
        %v3955 = vor.u32 %v3954, %v3950
        %v3956 = vrot.slane %v3955, 4
        %v3958 = vshll.u32 %v3619, 16
        %v3960 = vrot.slane %v3958, 5
        %v3961 = vsel %vm1760, %v3956, %v3960
        %v3963 = vshrl.u32 %v3620, 16
        %v3965 = vrot.slane %v3963, 4
        %v3966 = vshll.u32 %v3620, 16
        %v3968 = vrot.slane %v3966, 5
        %v3969 = vor.u32 %v3965, %v3968
        %v3970 = vrot.slane %v3969, 4
        %v3972 = vshll.u32 %v3621, 16
        %v3974 = vrot.slane %v3972, 5
        %v3975 = vsel %vm1760, %v3970, %v3974
        %v3976 = vshrl.u32 %v3621, 16
        %v3978 = vrot.slane %v3976, 4
        %v3979 = vor.u32 %v3978, %v3974
        %v3980 = vrot.slane %v3979, 4
        %v3982 = vshll.u32 %v3622, 16
        %v3984 = vrot.slane %v3982, 5
        %v3985 = vsel %vm1760, %v3980, %v3984
        %v3987 = vshrl.u32 %v3623, 16
        %v3989 = vrot.slane %v3987, 4
        %v3990 = vshll.u32 %v3623, 16
        %v3992 = vrot.slane %v3990, 5
        %v3993 = vor.u32 %v3989, %v3992
        %v3994 = vrot.slane %v3993, 4
        %v3996 = vshll.u32 %v3624, 16
        %v3998 = vrot.slane %v3996, 5
        %v3999 = vsel %vm1760, %v3994, %v3998
        %v4000 = vshrl.u32 %v3624, 16
        %v4002 = vrot.slane %v4000, 4
        %v4003 = vor.u32 %v4002, %v3998
        %v4004 = vrot.slane %v4003, 4
        %v4006 = vshll.u32 %v3625, 16
        %v4008 = vrot.slane %v4006, 5
        %v4009 = vsel %vm1760, %v4004, %v4008
        %s4010 = scalar_lea.vmem [#allocation9], 256
        %v4011 = vld [vmem:[%s4010] sm:$0xf]
        %v4012 = vld [vmem:[%s4010 + $0x4] sm:$0xf]
        %v4013 = vld [vmem:[%s4010 + $0x8] sm:$0xf]
        %v4014 = vld [vmem:[%s4010 + $0xc] sm:$0xf]
        %v4015 = vld [vmem:[%s4010 + $0x10] sm:$0xf]
        %v4016 = vld [vmem:[%s4010 + $0x14] sm:$0xf]
        %v4017 = vld [vmem:[%s4010 + $0x18] sm:$0xf]
        %v4018 = vld [vmem:[%s4010 + $0x1c] sm:$0xf]
        %v4019 = vld [vmem:[%s4010 + $0x20] sm:$0xf]
        %v4020 = vld [vmem:[%s4010 + $0x24] sm:$0xf]
        %v4021 = vld [vmem:[%s4010 + $0x28] sm:$0xf]
        %v4022 = vld [vmem:[%s4010 + $0x2c] sm:$0xf]
        %v4023 = vld [vmem:[%s4010 + $0x30] sm:$0xf]
        %v4024 = vld [vmem:[%s4010 + $0x34] sm:$0xf]
        %v4025 = vld [vmem:[%s4010 + $0x38] sm:$0xf]
        %v4026 = vld [vmem:[%s4010 + $0x3c] sm:$0xf]
        %v4027 = vunpack.c.l.b16 %v3639
        %v4028 = vunpack.c.l.b16 %v3649
        %v4029 = vunpack.c.l.b16 %v3663
        %v4030 = vunpack.c.l.b16 %v3673
        %v4031 = vunpack.c.l.b16 %v3687
        %v4032 = vunpack.c.l.b16 %v3697
        %v4033 = vunpack.c.l.b16 %v3711
        %v4034 = vunpack.c.l.b16 %v3721
        %v4035 = vunpack.c.l.b16 %v3735
        %v4036 = vunpack.c.l.b16 %v3745
        %v4037 = vunpack.c.l.b16 %v3759
        %v4038 = vunpack.c.l.b16 %v3769
        %v4039 = vunpack.c.l.b16 %v3783
        %v4040 = vunpack.c.l.b16 %v3793
        %v4041 = vunpack.c.l.b16 %v3807
        %v4042 = vunpack.c.l.b16 %v3817
        %v4043 = vunpack.c.l.b16 %v3831
        %v4044 = vunpack.c.l.b16 %v3841
        %v4045 = vunpack.c.l.b16 %v3855
        %v4046 = vunpack.c.l.b16 %v3865
        %v4047 = vunpack.c.l.b16 %v3879
        %v4048 = vunpack.c.l.b16 %v3889
        %v4049 = vunpack.c.l.b16 %v3903
        %v4050 = vunpack.c.l.b16 %v3913
        %v4051 = vunpack.c.l.b16 %v3927
        %v4052 = vunpack.c.l.b16 %v3937
        %v4053 = vunpack.c.l.b16 %v3951
        %v4054 = vunpack.c.l.b16 %v3961
        %v4055 = vunpack.c.l.b16 %v3975
        %v4056 = vunpack.c.l.b16 %v3985
        %v4057 = vunpack.c.l.b16 %v3999
        %v4058 = vunpack.c.l.b16 %v4009
        %v4059 = vpack.c.b16 %v4028, %v4027
        %v4060 = vpack.c.b16 %v4030, %v4029
        %v4061 = vpack.c.b16 %v4032, %v4031
        %v4062 = vpack.c.b16 %v4034, %v4033
        %v4063 = vpack.c.b16 %v4036, %v4035
        %v4064 = vpack.c.b16 %v4038, %v4037
        %v4065 = vpack.c.b16 %v4040, %v4039
        %v4066 = vpack.c.b16 %v4042, %v4041
        %v4067 = vpack.c.b16 %v4044, %v4043
        %v4068 = vpack.c.b16 %v4046, %v4045
        %v4069 = vpack.c.b16 %v4048, %v4047
        %v4070 = vpack.c.b16 %v4050, %v4049
        %v4071 = vpack.c.b16 %v4052, %v4051
        %v4072 = vpack.c.b16 %v4054, %v4053
        %v4073 = vpack.c.b16 %v4056, %v4055
        %v4074 = vpack.c.b16 %v4058, %v4057
        %v4107 = vunpack.c.l.b16 %v4011
        %v4108 = vunpack.c.l.b16 %v4012
        %v4109 = vunpack.c.l.b16 %v4013
        %v4110 = vunpack.c.l.b16 %v4014
        %v4111 = vunpack.c.l.b16 %v4015
        %v4112 = vunpack.c.l.b16 %v4016
        %v4113 = vunpack.c.l.b16 %v4017
        %v4114 = vunpack.c.l.b16 %v4018
        %v4115 = vunpack.c.l.b16 %v4019
        %v4116 = vunpack.c.l.b16 %v4020
        %v4117 = vunpack.c.l.b16 %v4021
        %v4118 = vunpack.c.l.b16 %v4022
        %v4119 = vunpack.c.l.b16 %v4023
        %v4120 = vunpack.c.l.b16 %v4024
        %v4121 = vunpack.c.l.b16 %v4025
        %v4122 = vunpack.c.l.b16 %v4026
        %v4123 = vpack.c.b16 %v4108, %v4107
        %v4124 = vpack.c.b16 %v4110, %v4109
        %v4125 = vpack.c.b16 %v4112, %v4111
        %v4126 = vpack.c.b16 %v4114, %v4113
        %v4127 = vpack.c.b16 %v4116, %v4115
        %v4128 = vpack.c.b16 %v4118, %v4117
        %v4129 = vpack.c.b16 %v4120, %v4119
        %v4130 = vpack.c.b16 %v4122, %v4121
        %4139 = vmatprep.subr.bf16.mxu0 0
        %4140 = vmatpush1.bf16.msra.mxu0 %v4123
        %4141 = vmatprep.subr.bf16.mxu0 0
        %4142 = vmatpush1.bf16.msra.mxu0 %v4124
        %4143 = vmatprep.subr.bf16.mxu0 0
        %4144 = vmatpush1.bf16.msra.mxu0 %v4125
        %4145 = vmatprep.subr.bf16.mxu0 0
        %4146 = vmatpush1.bf16.msra.mxu0 %v4126
        %4147 = vmatprep.subr.bf16.mxu0 0
        %4148 = vmatpush1.bf16.msra.mxu0 %v4127
        %4149 = vmatprep.subr.bf16.mxu0 0
        %4150 = vmatpush1.bf16.msra.mxu0 %v4128
        %4151 = vmatprep.subr.bf16.mxu0 0
        %4152 = vmatpush1.bf16.msra.mxu0 %v4129
        %4153 = vmatprep.subr.bf16.mxu0 0
        %4154 = vmatpush1.bf16.msra.mxu0 %v4130
        %4155 = vmatprep.subr.bf16.mxu0 0
        %4156 = vmatpush1.bf16.msra.mxu0 0
        %4157 = vmatprep.subr.bf16.mxu0 0
        %4158 = vmatpush1.bf16.msra.mxu0 0
        %4159 = vmatprep.subr.bf16.mxu0 0
        %4160 = vmatpush1.bf16.msra.mxu0 0
        %4161 = vmatprep.subr.bf16.mxu0 0
        %4162 = vmatpush1.bf16.msra.mxu0 0
        %4163 = vmatprep.subr.bf16.mxu0 0
        %4164 = vmatpush1.bf16.msra.mxu0 0
        %4165 = vmatprep.subr.bf16.mxu0 0
        %4166 = vmatpush1.bf16.msra.mxu0 0
        %4167 = vmatprep.subr.bf16.mxu0 0
        %4168 = vmatpush1.bf16.msra.mxu0 0
        %4169 = vmatprep.subr.bf16.mxu0 0
        %4170 = vmatpush1.bf16.msra.mxu0 0
        %4171 = vmatprep.mubr.bf16.mxu0 0
        %4172 = vmatmul.mubr.bf16.gmra.mrb[0].mxu0 %v4059
        %v4173 = vpop.f32.mrb[0].mxu0
        %v4174 = vadd.f32 0.0, %v4173
        %v4175 = vpop.f32.mrb[0].mxu0
        %v4176 = vpop.f32.mrb[0].mxu0
        %v4177 = vadd.f32 0.0, %v4176
        %v4178 = vpop.f32.mrb[0].mxu0
        %4179 = vmatprep.mubr.bf16.mxu0 0
        %4180 = vmatmul.mubr.bf16.gmra.mrb[0].mxu0 %v4060
        %v4181 = vpop.f32.mrb[0].mxu0
        %v4182 = vadd.f32 0.0, %v4181
        %v4183 = vpop.f32.mrb[0].mxu0
        %v4184 = vpop.f32.mrb[0].mxu0
        %v4185 = vadd.f32 0.0, %v4184
        %v4186 = vpop.f32.mrb[0].mxu0
        %4187 = vmatprep.mubr.bf16.mxu0 0
        %4188 = vmatmul.mubr.bf16.gmra.mrb[0].mxu0 %v4061
        %v4189 = vpop.f32.mrb[0].mxu0
        %v4190 = vadd.f32 0.0, %v4189
        %v4191 = vpop.f32.mrb[0].mxu0
        %v4192 = vpop.f32.mrb[0].mxu0
        %v4193 = vadd.f32 0.0, %v4192
        %v4194 = vpop.f32.mrb[0].mxu0
        %4195 = vmatprep.mubr.bf16.mxu0 0
        %4196 = vmatmul.mubr.bf16.gmra.mrb[0].mxu0 %v4062
        %v4197 = vpop.f32.mrb[0].mxu0
        %v4198 = vadd.f32 0.0, %v4197
        %v4199 = vpop.f32.mrb[0].mxu0
        %v4200 = vpop.f32.mrb[0].mxu0
        %v4201 = vadd.f32 0.0, %v4200
        %v4202 = vpop.f32.mrb[0].mxu0
        %4203 = vmatprep.mubr.bf16.mxu0 0
        %4204 = vmatmul.mubr.bf16.gmra.mrb[0].mxu0 %v4063
        %v4205 = vpop.f32.mrb[0].mxu0
        %v4206 = vadd.f32 0.0, %v4205
        %v4207 = vpop.f32.mrb[0].mxu0
        %v4208 = vpop.f32.mrb[0].mxu0
        %v4209 = vadd.f32 0.0, %v4208
        %v4210 = vpop.f32.mrb[0].mxu0
        %4211 = vmatprep.mubr.bf16.mxu0 0
        %4212 = vmatmul.mubr.bf16.gmra.mrb[0].mxu0 %v4064
        %v4213 = vpop.f32.mrb[0].mxu0
        %v4214 = vadd.f32 0.0, %v4213
        %v4215 = vpop.f32.mrb[0].mxu0
        %v4216 = vpop.f32.mrb[0].mxu0
        %v4217 = vadd.f32 0.0, %v4216
        %v4218 = vpop.f32.mrb[0].mxu0
        %4219 = vmatprep.mubr.bf16.mxu0 0
        %4220 = vmatmul.mubr.bf16.gmra.mrb[0].mxu0 %v4065
        %v4221 = vpop.f32.mrb[0].mxu0
        %v4222 = vadd.f32 0.0, %v4221
        %v4223 = vpop.f32.mrb[0].mxu0
        %v4224 = vpop.f32.mrb[0].mxu0
        %v4225 = vadd.f32 0.0, %v4224
        %v4226 = vpop.f32.mrb[0].mxu0
        %4227 = vmatprep.mubr.bf16.mxu0 0
        %4228 = vmatmul.mubr.bf16.gmra.mrb[0].mxu0 %v4066
        %v4229 = vpop.f32.mrb[0].mxu0
        %v4230 = vadd.f32 0.0, %v4229
        %v4231 = vpop.f32.mrb[0].mxu0
        %v4232 = vpop.f32.mrb[0].mxu0
        %v4233 = vadd.f32 0.0, %v4232
        %v4234 = vpop.f32.mrb[0].mxu0
        %4235 = vmatprep.mubr.bf16.mxu0 0
        %4236 = vmatmul.mubr.bf16.gmra.mrb[0].mxu0 %v4067
        %v4237 = vpop.f32.mrb[0].mxu0
        %v4238 = vadd.f32 0.0, %v4237
        %v4239 = vpop.f32.mrb[0].mxu0
        %v4240 = vpop.f32.mrb[0].mxu0
        %v4241 = vadd.f32 0.0, %v4240
        %v4242 = vpop.f32.mrb[0].mxu0
        %4243 = vmatprep.mubr.bf16.mxu0 0
        %4244 = vmatmul.mubr.bf16.gmra.mrb[0].mxu0 %v4068
        %v4245 = vpop.f32.mrb[0].mxu0
        %v4246 = vadd.f32 0.0, %v4245
        %v4247 = vpop.f32.mrb[0].mxu0
        %v4248 = vpop.f32.mrb[0].mxu0
        %v4249 = vadd.f32 0.0, %v4248
        %v4250 = vpop.f32.mrb[0].mxu0
        %4251 = vmatprep.mubr.bf16.mxu0 0
        %4252 = vmatmul.mubr.bf16.gmra.mrb[0].mxu0 %v4069
        %v4253 = vpop.f32.mrb[0].mxu0
        %v4254 = vadd.f32 0.0, %v4253
        %v4255 = vpop.f32.mrb[0].mxu0
        %v4256 = vpop.f32.mrb[0].mxu0
        %v4257 = vadd.f32 0.0, %v4256
        %v4258 = vpop.f32.mrb[0].mxu0
        %4259 = vmatprep.mubr.bf16.mxu0 0
        %4260 = vmatmul.mubr.bf16.gmra.mrb[0].mxu0 %v4070
        %v4261 = vpop.f32.mrb[0].mxu0
        %v4262 = vadd.f32 0.0, %v4261
        %v4263 = vpop.f32.mrb[0].mxu0
        %v4264 = vpop.f32.mrb[0].mxu0
        %v4265 = vadd.f32 0.0, %v4264
        %v4266 = vpop.f32.mrb[0].mxu0
        %4267 = vmatprep.mubr.bf16.mxu0 0
        %4268 = vmatmul.mubr.bf16.gmra.mrb[0].mxu0 %v4071
        %v4269 = vpop.f32.mrb[0].mxu0
        %v4270 = vadd.f32 0.0, %v4269
        %v4271 = vpop.f32.mrb[0].mxu0
        %v4272 = vpop.f32.mrb[0].mxu0
        %v4273 = vadd.f32 0.0, %v4272
        %v4274 = vpop.f32.mrb[0].mxu0
        %4275 = vmatprep.mubr.bf16.mxu0 0
        %4276 = vmatmul.mubr.bf16.gmra.mrb[0].mxu0 %v4072
        %v4277 = vpop.f32.mrb[0].mxu0
        %v4278 = vadd.f32 0.0, %v4277
        %v4279 = vpop.f32.mrb[0].mxu0
        %v4280 = vpop.f32.mrb[0].mxu0
        %v4281 = vadd.f32 0.0, %v4280
        %v4282 = vpop.f32.mrb[0].mxu0
        %4283 = vmatprep.mubr.bf16.mxu0 0
        %4284 = vmatmul.mubr.bf16.gmra.mrb[0].mxu0 %v4073
        %v4285 = vpop.f32.mrb[0].mxu0
        %v4286 = vadd.f32 0.0, %v4285
        %v4287 = vpop.f32.mrb[0].mxu0
        %v4288 = vpop.f32.mrb[0].mxu0
        %v4289 = vadd.f32 0.0, %v4288
        %v4290 = vpop.f32.mrb[0].mxu0
        %4291 = vmatprep.mubr.bf16.mxu0 0
        %4292 = vmatmul.mubr.bf16.gmra.mrb[0].mxu0 %v4074
        %v4293 = vpop.f32.mrb[0].mxu0
        %v4294 = vadd.f32 0.0, %v4293
        %v4295 = vpop.f32.mrb[0].mxu0
        %v4296 = vpop.f32.mrb[0].mxu0
        %v4297 = vadd.f32 0.0, %v4296
        %v4298 = vpop.f32.mrb[0].mxu0
        %4299 = vdwg.mxu0
        %v4300 = vld [vmem:[#allocation3] sm:$0xff]
        %v4301 = vld [vmem:[#allocation3 + $0x8] sm:$0xff]
        %v4302 = vld [vmem:[#allocation3 + $0x10] sm:$0xff]
        %v4303 = vld [vmem:[#allocation3 + $0x18] sm:$0xff]
        %v4304 = vld [vmem:[#allocation3 + $0x20] sm:$0xff]
        %v4305 = vld [vmem:[#allocation3 + $0x28] sm:$0xff]
        %v4306 = vld [vmem:[#allocation3 + $0x30] sm:$0xff]
        %v4307 = vld [vmem:[#allocation3 + $0x38] sm:$0xff]
        %v4308 = vld [vmem:[#allocation3 + $0x40] sm:$0xff]
        %v4309 = vld [vmem:[#allocation3 + $0x48] sm:$0xff]
        %v4310 = vld [vmem:[#allocation3 + $0x50] sm:$0xff]
        %v4311 = vld [vmem:[#allocation3 + $0x58] sm:$0xff]
        %v4312 = vld [vmem:[#allocation3 + $0x60] sm:$0xff]
        %v4313 = vld [vmem:[#allocation3 + $0x68] sm:$0xff]
        %v4314 = vld [vmem:[#allocation3 + $0x70] sm:$0xff]
        %v4315 = vld [vmem:[#allocation3 + $0x78] sm:$0xff]
        %v4316 = vld [vmem:[#allocation3 + $0x80] sm:$0xff]
        %v4317 = vld [vmem:[#allocation3 + $0x88] sm:$0xff]
        %v4318 = vld [vmem:[#allocation3 + $0x90] sm:$0xff]
        %v4319 = vld [vmem:[#allocation3 + $0x98] sm:$0xff]
        %v4320 = vld [vmem:[#allocation3 + $0xa0] sm:$0xff]
        %v4321 = vld [vmem:[#allocation3 + $0xa8] sm:$0xff]
        %v4322 = vld [vmem:[#allocation3 + $0xb0] sm:$0xff]
        %v4323 = vld [vmem:[#allocation3 + $0xb8] sm:$0xff]
        %v4324 = vld [vmem:[#allocation3 + $0xc0] sm:$0xff]
        %v4325 = vld [vmem:[#allocation3 + $0xc8] sm:$0xff]
        %v4326 = vld [vmem:[#allocation3 + $0xd0] sm:$0xff]
        %v4327 = vld [vmem:[#allocation3 + $0xd8] sm:$0xff]
        %v4328 = vld [vmem:[#allocation3 + $0xe0] sm:$0xff]
        %v4329 = vld [vmem:[#allocation3 + $0xe8] sm:$0xff]
        %v4330 = vld [vmem:[#allocation3 + $0xf0] sm:$0xff]
        %v4331 = vld [vmem:[#allocation3 + $0xf8] sm:$0xff]
        %v4332 = vadd.f32 %v4300, %v4174
        %v4333 = vadd.f32 %v4301, %v4177
        %v4334 = vadd.f32 %v4302, %v4182
        %v4335 = vadd.f32 %v4303, %v4185
        %v4336 = vadd.f32 %v4304, %v4190
        %v4337 = vadd.f32 %v4305, %v4193
        %v4338 = vadd.f32 %v4306, %v4198
        %v4339 = vadd.f32 %v4307, %v4201
        %v4340 = vadd.f32 %v4308, %v4206
        %v4341 = vadd.f32 %v4309, %v4209
        %v4342 = vadd.f32 %v4310, %v4214
        %v4343 = vadd.f32 %v4311, %v4217
        %v4344 = vadd.f32 %v4312, %v4222
        %v4345 = vadd.f32 %v4313, %v4225
        %v4346 = vadd.f32 %v4314, %v4230
        %v4347 = vadd.f32 %v4315, %v4233
        %v4348 = vadd.f32 %v4316, %v4238
        %v4349 = vadd.f32 %v4317, %v4241
        %v4350 = vadd.f32 %v4318, %v4246
        %v4351 = vadd.f32 %v4319, %v4249
        %v4352 = vadd.f32 %v4320, %v4254
        %v4353 = vadd.f32 %v4321, %v4257
        %v4354 = vadd.f32 %v4322, %v4262
        %v4355 = vadd.f32 %v4323, %v4265
        %v4356 = vadd.f32 %v4324, %v4270
        %v4357 = vadd.f32 %v4325, %v4273
        %v4358 = vadd.f32 %v4326, %v4278
        %v4359 = vadd.f32 %v4327, %v4281
        %v4360 = vadd.f32 %v4328, %v4286
        %v4361 = vadd.f32 %v4329, %v4289
        %v4362 = vadd.f32 %v4330, %v4294
        %v4363 = vadd.f32 %v4331, %v4297
        %4364 = vst [vmem:[#allocation3] sm:$0xff] %v4332
        %4365 = vst [vmem:[#allocation3 + $0x8] sm:$0xff] %v4333
        %4366 = vst [vmem:[#allocation3 + $0x10] sm:$0xff] %v4334
        %4367 = vst [vmem:[#allocation3 + $0x18] sm:$0xff] %v4335
        %4368 = vst [vmem:[#allocation3 + $0x20] sm:$0xff] %v4336
        %4369 = vst [vmem:[#allocation3 + $0x28] sm:$0xff] %v4337
        %4370 = vst [vmem:[#allocation3 + $0x30] sm:$0xff] %v4338
        %4371 = vst [vmem:[#allocation3 + $0x38] sm:$0xff] %v4339
        %4372 = vst [vmem:[#allocation3 + $0x40] sm:$0xff] %v4340
        %4373 = vst [vmem:[#allocation3 + $0x48] sm:$0xff] %v4341
        %4374 = vst [vmem:[#allocation3 + $0x50] sm:$0xff] %v4342
        %4375 = vst [vmem:[#allocation3 + $0x58] sm:$0xff] %v4343
        %4376 = vst [vmem:[#allocation3 + $0x60] sm:$0xff] %v4344
        %4377 = vst [vmem:[#allocation3 + $0x68] sm:$0xff] %v4345
        %4378 = vst [vmem:[#allocation3 + $0x70] sm:$0xff] %v4346
        %4379 = vst [vmem:[#allocation3 + $0x78] sm:$0xff] %v4347
        %4380 = vst [vmem:[#allocation3 + $0x80] sm:$0xff] %v4348
        %4381 = vst [vmem:[#allocation3 + $0x88] sm:$0xff] %v4349
        %4382 = vst [vmem:[#allocation3 + $0x90] sm:$0xff] %v4350
        %4383 = vst [vmem:[#allocation3 + $0x98] sm:$0xff] %v4351
        %4384 = vst [vmem:[#allocation3 + $0xa0] sm:$0xff] %v4352
        %4385 = vst [vmem:[#allocation3 + $0xa8] sm:$0xff] %v4353
        %4386 = vst [vmem:[#allocation3 + $0xb0] sm:$0xff] %v4354
        %4387 = vst [vmem:[#allocation3 + $0xb8] sm:$0xff] %v4355
        %4388 = vst [vmem:[#allocation3 + $0xc0] sm:$0xff] %v4356
        %4389 = vst [vmem:[#allocation3 + $0xc8] sm:$0xff] %v4357
        %4390 = vst [vmem:[#allocation3 + $0xd0] sm:$0xff] %v4358
        %4391 = vst [vmem:[#allocation3 + $0xd8] sm:$0xff] %v4359
        %4392 = vst [vmem:[#allocation3 + $0xe0] sm:$0xff] %v4360
        %4393 = vst [vmem:[#allocation3 + $0xe8] sm:$0xff] %v4361
        %4394 = vst [vmem:[#allocation3 + $0xf0] sm:$0xff] %v4362
        %4395 = vst [vmem:[#allocation3 + $0xf8] sm:$0xff] %v4363
        %v4396 = vld [vmem:[%s1207] sm:$0xe]
        %v4397 = vld [vmem:[%s1207 + $0x4] sm:$0xf]
        %v4398 = vld [vmem:[%s1207 + $0x8] sm:$0x1]
        %v4399 = vld [vmem:[%s1207 + $0xc] sm:$0xe]
        %v4400 = vld [vmem:[%s1207 + $0x10] sm:$0xf]
        %v4401 = vld [vmem:[%s1207 + $0x14] sm:$0x1]
        %v4402 = vld [vmem:[%s1207 + $0x18] sm:$0xe]
        %v4403 = vld [vmem:[%s1207 + $0x1c] sm:$0xf]
        %v4404 = vld [vmem:[%s1207 + $0x20] sm:$0x1]
        %v4405 = vld [vmem:[%s1207 + $0x24] sm:$0xe]
        %v4406 = vld [vmem:[%s1207 + $0x28] sm:$0xf]
        %v4407 = vld [vmem:[%s1207 + $0x2c] sm:$0x1]
        %v4408 = vld [vmem:[%s1207 + $0x30] sm:$0xe]
        %v4409 = vld [vmem:[%s1207 + $0x34] sm:$0xf]
        %v4410 = vld [vmem:[%s1207 + $0x38] sm:$0x1]
        %v4411 = vld [vmem:[%s1207 + $0x3c] sm:$0xe]
        %v4412 = vld [vmem:[%s1207 + $0x40] sm:$0xf]
        %v4413 = vld [vmem:[%s1207 + $0x44] sm:$0x1]
        %v4414 = vld [vmem:[%s1207 + $0x48] sm:$0xe]
        %v4415 = vld [vmem:[%s1207 + $0x4c] sm:$0xf]
        %v4416 = vld [vmem:[%s1207 + $0x50] sm:$0x1]
        %v4417 = vld [vmem:[%s1207 + $0x54] sm:$0xe]
        %v4418 = vld [vmem:[%s1207 + $0x58] sm:$0xf]
        %v4419 = vld [vmem:[%s1207 + $0x5c] sm:$0x1]
        %v4420 = vld [vmem:[%s1207 + $0x60] sm:$0xe]
        %v4421 = vld [vmem:[%s1207 + $0x64] sm:$0xf]
        %v4422 = vld [vmem:[%s1207 + $0x68] sm:$0x1]
        %v4423 = vld [vmem:[%s1207 + $0x6c] sm:$0xe]
        %v4424 = vld [vmem:[%s1207 + $0x70] sm:$0xf]
        %v4425 = vld [vmem:[%s1207 + $0x74] sm:$0x1]
        %v4426 = vld [vmem:[%s1207 + $0x78] sm:$0xe]
        %v4427 = vld [vmem:[%s1207 + $0x7c] sm:$0xf]
        %v4428 = vld [vmem:[%s1207 + $0x80] sm:$0x1]
        %v4429 = vld [vmem:[%s1207 + $0x84] sm:$0xe]
        %v4430 = vld [vmem:[%s1207 + $0x88] sm:$0xf]
        %v4431 = vld [vmem:[%s1207 + $0x8c] sm:$0x1]
        %v4432 = vld [vmem:[%s1207 + $0x90] sm:$0xe]
        %v4433 = vld [vmem:[%s1207 + $0x94] sm:$0xf]
        %v4434 = vld [vmem:[%s1207 + $0x98] sm:$0x1]
        %v4435 = vld [vmem:[%s1207 + $0x9c] sm:$0xe]
        %v4436 = vld [vmem:[%s1207 + $0xa0] sm:$0xf]
        %v4437 = vld [vmem:[%s1207 + $0xa4] sm:$0x1]
        %v4438 = vld [vmem:[%s1207 + $0xa8] sm:$0xe]
        %v4439 = vld [vmem:[%s1207 + $0xac] sm:$0xf]
        %v4440 = vld [vmem:[%s1207 + $0xb0] sm:$0x1]
        %v4441 = vld [vmem:[%s1207 + $0xb4] sm:$0xe]
        %v4442 = vld [vmem:[%s1207 + $0xb8] sm:$0xf]
        %v4443 = vld [vmem:[%s1207 + $0xbc] sm:$0x1]
        %v4492 = vrot.slane %v4396, 5
        %v4493 = vrot.slane %v4492, 4
        %v4494 = vrot.slane %v4397, 5
        %v4495 = vsel %vm2629, %v4493, %v4494
        %v4496 = vrot.slane %v4494, 4
        %v4497 = vrot.slane %v4398, 5
        %v4498 = vsel %vm2629, %v4496, %v4497
        %v4499 = vrot.slane %v4399, 5
        %v4500 = vrot.slane %v4499, 4
        %v4501 = vrot.slane %v4400, 5
        %v4502 = vsel %vm2629, %v4500, %v4501
        %v4503 = vrot.slane %v4501, 4
        %v4504 = vrot.slane %v4401, 5
        %v4505 = vsel %vm2629, %v4503, %v4504
        %v4506 = vrot.slane %v4402, 5
        %v4507 = vrot.slane %v4506, 4
        %v4508 = vrot.slane %v4403, 5
        %v4509 = vsel %vm2629, %v4507, %v4508
        %v4510 = vrot.slane %v4508, 4
        %v4511 = vrot.slane %v4404, 5
        %v4512 = vsel %vm2629, %v4510, %v4511
        %v4513 = vrot.slane %v4405, 5
        %v4514 = vrot.slane %v4513, 4
        %v4515 = vrot.slane %v4406, 5
        %v4516 = vsel %vm2629, %v4514, %v4515
        %v4517 = vrot.slane %v4515, 4
        %v4518 = vrot.slane %v4407, 5
        %v4519 = vsel %vm2629, %v4517, %v4518
        %v4520 = vrot.slane %v4408, 5
        %v4521 = vrot.slane %v4520, 4
        %v4522 = vrot.slane %v4409, 5
        %v4523 = vsel %vm2629, %v4521, %v4522
        %v4524 = vrot.slane %v4522, 4
        %v4525 = vrot.slane %v4410, 5
        %v4526 = vsel %vm2629, %v4524, %v4525
        %v4527 = vrot.slane %v4411, 5
        %v4528 = vrot.slane %v4527, 4
        %v4529 = vrot.slane %v4412, 5
        %v4530 = vsel %vm2629, %v4528, %v4529
        %v4531 = vrot.slane %v4529, 4
        %v4532 = vrot.slane %v4413, 5
        %v4533 = vsel %vm2629, %v4531, %v4532
        %v4534 = vrot.slane %v4414, 5
        %v4535 = vrot.slane %v4534, 4
        %v4536 = vrot.slane %v4415, 5
        %v4537 = vsel %vm2629, %v4535, %v4536
        %v4538 = vrot.slane %v4536, 4
        %v4539 = vrot.slane %v4416, 5
        %v4540 = vsel %vm2629, %v4538, %v4539
        %v4541 = vrot.slane %v4417, 5
        %v4542 = vrot.slane %v4541, 4
        %v4543 = vrot.slane %v4418, 5
        %v4544 = vsel %vm2629, %v4542, %v4543
        %v4545 = vrot.slane %v4543, 4
        %v4546 = vrot.slane %v4419, 5
        %v4547 = vsel %vm2629, %v4545, %v4546
        %v4548 = vrot.slane %v4420, 5
        %v4549 = vrot.slane %v4548, 4
        %v4550 = vrot.slane %v4421, 5
        %v4551 = vsel %vm2629, %v4549, %v4550
        %v4552 = vrot.slane %v4550, 4
        %v4553 = vrot.slane %v4422, 5
        %v4554 = vsel %vm2629, %v4552, %v4553
        %v4555 = vrot.slane %v4423, 5
        %v4556 = vrot.slane %v4555, 4
        %v4557 = vrot.slane %v4424, 5
        %v4558 = vsel %vm2629, %v4556, %v4557
        %v4559 = vrot.slane %v4557, 4
        %v4560 = vrot.slane %v4425, 5
        %v4561 = vsel %vm2629, %v4559, %v4560
        %v4562 = vrot.slane %v4426, 5
        %v4563 = vrot.slane %v4562, 4
        %v4564 = vrot.slane %v4427, 5
        %v4565 = vsel %vm2629, %v4563, %v4564
        %v4566 = vrot.slane %v4564, 4
        %v4567 = vrot.slane %v4428, 5
        %v4568 = vsel %vm2629, %v4566, %v4567
        %v4569 = vrot.slane %v4429, 5
        %v4570 = vrot.slane %v4569, 4
        %v4571 = vrot.slane %v4430, 5
        %v4572 = vsel %vm2629, %v4570, %v4571
        %v4573 = vrot.slane %v4571, 4
        %v4574 = vrot.slane %v4431, 5
        %v4575 = vsel %vm2629, %v4573, %v4574
        %v4576 = vrot.slane %v4432, 5
        %v4577 = vrot.slane %v4576, 4
        %v4578 = vrot.slane %v4433, 5
        %v4579 = vsel %vm2629, %v4577, %v4578
        %v4580 = vrot.slane %v4578, 4
        %v4581 = vrot.slane %v4434, 5
        %v4582 = vsel %vm2629, %v4580, %v4581
        %v4583 = vrot.slane %v4435, 5
        %v4584 = vrot.slane %v4583, 4
        %v4585 = vrot.slane %v4436, 5
        %v4586 = vsel %vm2629, %v4584, %v4585
        %v4587 = vrot.slane %v4585, 4
        %v4588 = vrot.slane %v4437, 5
        %v4589 = vsel %vm2629, %v4587, %v4588
        %v4590 = vrot.slane %v4438, 5
        %v4591 = vrot.slane %v4590, 4
        %v4592 = vrot.slane %v4439, 5
        %v4593 = vsel %vm2629, %v4591, %v4592
        %v4594 = vrot.slane %v4592, 4
        %v4595 = vrot.slane %v4440, 5
        %v4596 = vsel %vm2629, %v4594, %v4595
        %v4597 = vrot.slane %v4441, 5
        %v4598 = vrot.slane %v4597, 4
        %v4599 = vrot.slane %v4442, 5
        %v4600 = vsel %vm2629, %v4598, %v4599
        %v4601 = vrot.slane %v4599, 4
        %v4602 = vrot.slane %v4443, 5
        %v4603 = vsel %vm2629, %v4601, %v4602
        %s4604 = scalar_lea.vmem [#allocation9], 320
        %v4605 = vld [vmem:[%s4604] sm:$0xf]
        %v4606 = vld [vmem:[%s4604 + $0x4] sm:$0xf]
        %v4607 = vld [vmem:[%s4604 + $0x8] sm:$0xf]
        %v4608 = vld [vmem:[%s4604 + $0xc] sm:$0xf]
        %v4609 = vld [vmem:[%s4604 + $0x10] sm:$0xf]
        %v4610 = vld [vmem:[%s4604 + $0x14] sm:$0xf]
        %v4611 = vld [vmem:[%s4604 + $0x18] sm:$0xf]
        %v4612 = vld [vmem:[%s4604 + $0x1c] sm:$0xf]
        %v4613 = vld [vmem:[%s4604 + $0x20] sm:$0xf]
        %v4614 = vld [vmem:[%s4604 + $0x24] sm:$0xf]
        %v4615 = vld [vmem:[%s4604 + $0x28] sm:$0xf]
        %v4616 = vld [vmem:[%s4604 + $0x2c] sm:$0xf]
        %v4617 = vld [vmem:[%s4604 + $0x30] sm:$0xf]
        %v4618 = vld [vmem:[%s4604 + $0x34] sm:$0xf]
        %v4619 = vld [vmem:[%s4604 + $0x38] sm:$0xf]
        %v4620 = vld [vmem:[%s4604 + $0x3c] sm:$0xf]
        %v4621 = vunpack.c.l.b16 %v4495
        %v4622 = vunpack.c.l.b16 %v4498
        %v4623 = vunpack.c.l.b16 %v4502
        %v4624 = vunpack.c.l.b16 %v4505
        %v4625 = vunpack.c.l.b16 %v4509
        %v4626 = vunpack.c.l.b16 %v4512
        %v4627 = vunpack.c.l.b16 %v4516
        %v4628 = vunpack.c.l.b16 %v4519
        %v4629 = vunpack.c.l.b16 %v4523
        %v4630 = vunpack.c.l.b16 %v4526
        %v4631 = vunpack.c.l.b16 %v4530
        %v4632 = vunpack.c.l.b16 %v4533
        %v4633 = vunpack.c.l.b16 %v4537
        %v4634 = vunpack.c.l.b16 %v4540
        %v4635 = vunpack.c.l.b16 %v4544
        %v4636 = vunpack.c.l.b16 %v4547
        %v4637 = vunpack.c.l.b16 %v4551
        %v4638 = vunpack.c.l.b16 %v4554
        %v4639 = vunpack.c.l.b16 %v4558
        %v4640 = vunpack.c.l.b16 %v4561
        %v4641 = vunpack.c.l.b16 %v4565
        %v4642 = vunpack.c.l.b16 %v4568
        %v4643 = vunpack.c.l.b16 %v4572
        %v4644 = vunpack.c.l.b16 %v4575
        %v4645 = vunpack.c.l.b16 %v4579
        %v4646 = vunpack.c.l.b16 %v4582
        %v4647 = vunpack.c.l.b16 %v4586
        %v4648 = vunpack.c.l.b16 %v4589
        %v4649 = vunpack.c.l.b16 %v4593
        %v4650 = vunpack.c.l.b16 %v4596
        %v4651 = vunpack.c.l.b16 %v4600
        %v4652 = vunpack.c.l.b16 %v4603
        %v4653 = vpack.c.b16 %v4622, %v4621
        %v4654 = vpack.c.b16 %v4624, %v4623
        %v4655 = vpack.c.b16 %v4626, %v4625
        %v4656 = vpack.c.b16 %v4628, %v4627
        %v4657 = vpack.c.b16 %v4630, %v4629
        %v4658 = vpack.c.b16 %v4632, %v4631
        %v4659 = vpack.c.b16 %v4634, %v4633
        %v4660 = vpack.c.b16 %v4636, %v4635
        %v4661 = vpack.c.b16 %v4638, %v4637
        %v4662 = vpack.c.b16 %v4640, %v4639
        %v4663 = vpack.c.b16 %v4642, %v4641
        %v4664 = vpack.c.b16 %v4644, %v4643
        %v4665 = vpack.c.b16 %v4646, %v4645
        %v4666 = vpack.c.b16 %v4648, %v4647
        %v4667 = vpack.c.b16 %v4650, %v4649
        %v4668 = vpack.c.b16 %v4652, %v4651
        %v4701 = vunpack.c.l.b16 %v4605
        %v4702 = vunpack.c.l.b16 %v4606
        %v4703 = vunpack.c.l.b16 %v4607
        %v4704 = vunpack.c.l.b16 %v4608
        %v4705 = vunpack.c.l.b16 %v4609
        %v4706 = vunpack.c.l.b16 %v4610
        %v4707 = vunpack.c.l.b16 %v4611
        %v4708 = vunpack.c.l.b16 %v4612
        %v4709 = vunpack.c.l.b16 %v4613
        %v4710 = vunpack.c.l.b16 %v4614
        %v4711 = vunpack.c.l.b16 %v4615
        %v4712 = vunpack.c.l.b16 %v4616
        %v4713 = vunpack.c.l.b16 %v4617
        %v4714 = vunpack.c.l.b16 %v4618
        %v4715 = vunpack.c.l.b16 %v4619
        %v4716 = vunpack.c.l.b16 %v4620
        %v4717 = vpack.c.b16 %v4702, %v4701
        %v4718 = vpack.c.b16 %v4704, %v4703
        %v4719 = vpack.c.b16 %v4706, %v4705
        %v4720 = vpack.c.b16 %v4708, %v4707
        %v4721 = vpack.c.b16 %v4710, %v4709
        %v4722 = vpack.c.b16 %v4712, %v4711
        %v4723 = vpack.c.b16 %v4714, %v4713
        %v4724 = vpack.c.b16 %v4716, %v4715
        %4733 = vmatprep.subr.bf16.mxu0 0
        %4734 = vmatpush1.bf16.msra.mxu0 %v4717
        %4735 = vmatprep.subr.bf16.mxu0 0
        %4736 = vmatpush1.bf16.msra.mxu0 %v4718
        %4737 = vmatprep.subr.bf16.mxu0 0
        %4738 = vmatpush1.bf16.msra.mxu0 %v4719
        %4739 = vmatprep.subr.bf16.mxu0 0
        %4740 = vmatpush1.bf16.msra.mxu0 %v4720
        %4741 = vmatprep.subr.bf16.mxu0 0
        %4742 = vmatpush1.bf16.msra.mxu0 %v4721
        %4743 = vmatprep.subr.bf16.mxu0 0
        %4744 = vmatpush1.bf16.msra.mxu0 %v4722
        %4745 = vmatprep.subr.bf16.mxu0 0
        %4746 = vmatpush1.bf16.msra.mxu0 %v4723
        %4747 = vmatprep.subr.bf16.mxu0 0
        %4748 = vmatpush1.bf16.msra.mxu0 %v4724
        %4749 = vmatprep.subr.bf16.mxu0 0
        %4750 = vmatpush1.bf16.msra.mxu0 0
        %4751 = vmatprep.subr.bf16.mxu0 0
        %4752 = vmatpush1.bf16.msra.mxu0 0
        %4753 = vmatprep.subr.bf16.mxu0 0
        %4754 = vmatpush1.bf16.msra.mxu0 0
        %4755 = vmatprep.subr.bf16.mxu0 0
        %4756 = vmatpush1.bf16.msra.mxu0 0
        %4757 = vmatprep.subr.bf16.mxu0 0
        %4758 = vmatpush1.bf16.msra.mxu0 0
        %4759 = vmatprep.subr.bf16.mxu0 0
        %4760 = vmatpush1.bf16.msra.mxu0 0
        %4761 = vmatprep.subr.bf16.mxu0 0
        %4762 = vmatpush1.bf16.msra.mxu0 0
        %4763 = vmatprep.subr.bf16.mxu0 0
        %4764 = vmatpush1.bf16.msra.mxu0 0
        %4765 = vmatprep.mubr.bf16.mxu0 0
        %4766 = vmatmul.mubr.bf16.gmra.mrb[0].mxu0 %v4653
        %v4767 = vpop.f32.mrb[0].mxu0
        %v4768 = vadd.f32 0.0, %v4767
        %v4769 = vpop.f32.mrb[0].mxu0
        %v4770 = vpop.f32.mrb[0].mxu0
        %v4771 = vadd.f32 0.0, %v4770
        %v4772 = vpop.f32.mrb[0].mxu0
        %4773 = vmatprep.mubr.bf16.mxu0 0
        %4774 = vmatmul.mubr.bf16.gmra.mrb[0].mxu0 %v4654
        %v4775 = vpop.f32.mrb[0].mxu0
        %v4776 = vadd.f32 0.0, %v4775
        %v4777 = vpop.f32.mrb[0].mxu0
        %v4778 = vpop.f32.mrb[0].mxu0
        %v4779 = vadd.f32 0.0, %v4778
        %v4780 = vpop.f32.mrb[0].mxu0
        %4781 = vmatprep.mubr.bf16.mxu0 0
        %4782 = vmatmul.mubr.bf16.gmra.mrb[0].mxu0 %v4655
        %v4783 = vpop.f32.mrb[0].mxu0
        %v4784 = vadd.f32 0.0, %v4783
        %v4785 = vpop.f32.mrb[0].mxu0
        %v4786 = vpop.f32.mrb[0].mxu0
        %v4787 = vadd.f32 0.0, %v4786
        %v4788 = vpop.f32.mrb[0].mxu0
        %4789 = vmatprep.mubr.bf16.mxu0 0
        %4790 = vmatmul.mubr.bf16.gmra.mrb[0].mxu0 %v4656
        %v4791 = vpop.f32.mrb[0].mxu0
        %v4792 = vadd.f32 0.0, %v4791
        %v4793 = vpop.f32.mrb[0].mxu0
        %v4794 = vpop.f32.mrb[0].mxu0
        %v4795 = vadd.f32 0.0, %v4794
        %v4796 = vpop.f32.mrb[0].mxu0
        %4797 = vmatprep.mubr.bf16.mxu0 0
        %4798 = vmatmul.mubr.bf16.gmra.mrb[0].mxu0 %v4657
        %v4799 = vpop.f32.mrb[0].mxu0
        %v4800 = vadd.f32 0.0, %v4799
        %v4801 = vpop.f32.mrb[0].mxu0
        %v4802 = vpop.f32.mrb[0].mxu0
        %v4803 = vadd.f32 0.0, %v4802
        %v4804 = vpop.f32.mrb[0].mxu0
        %4805 = vmatprep.mubr.bf16.mxu0 0
        %4806 = vmatmul.mubr.bf16.gmra.mrb[0].mxu0 %v4658
        %v4807 = vpop.f32.mrb[0].mxu0
        %v4808 = vadd.f32 0.0, %v4807
        %v4809 = vpop.f32.mrb[0].mxu0
        %v4810 = vpop.f32.mrb[0].mxu0
        %v4811 = vadd.f32 0.0, %v4810
        %v4812 = vpop.f32.mrb[0].mxu0
        %4813 = vmatprep.mubr.bf16.mxu0 0
        %4814 = vmatmul.mubr.bf16.gmra.mrb[0].mxu0 %v4659
        %v4815 = vpop.f32.mrb[0].mxu0
        %v4816 = vadd.f32 0.0, %v4815
        %v4817 = vpop.f32.mrb[0].mxu0
        %v4818 = vpop.f32.mrb[0].mxu0
        %v4819 = vadd.f32 0.0, %v4818
        %v4820 = vpop.f32.mrb[0].mxu0
        %4821 = vmatprep.mubr.bf16.mxu0 0
        %4822 = vmatmul.mubr.bf16.gmra.mrb[0].mxu0 %v4660
        %v4823 = vpop.f32.mrb[0].mxu0
        %v4824 = vadd.f32 0.0, %v4823
        %v4825 = vpop.f32.mrb[0].mxu0
        %v4826 = vpop.f32.mrb[0].mxu0
        %v4827 = vadd.f32 0.0, %v4826
        %v4828 = vpop.f32.mrb[0].mxu0
        %4829 = vmatprep.mubr.bf16.mxu0 0
        %4830 = vmatmul.mubr.bf16.gmra.mrb[0].mxu0 %v4661
        %v4831 = vpop.f32.mrb[0].mxu0
        %v4832 = vadd.f32 0.0, %v4831
        %v4833 = vpop.f32.mrb[0].mxu0
        %v4834 = vpop.f32.mrb[0].mxu0
        %v4835 = vadd.f32 0.0, %v4834
        %v4836 = vpop.f32.mrb[0].mxu0
        %4837 = vmatprep.mubr.bf16.mxu0 0
        %4838 = vmatmul.mubr.bf16.gmra.mrb[0].mxu0 %v4662
        %v4839 = vpop.f32.mrb[0].mxu0
        %v4840 = vadd.f32 0.0, %v4839
        %v4841 = vpop.f32.mrb[0].mxu0
        %v4842 = vpop.f32.mrb[0].mxu0
        %v4843 = vadd.f32 0.0, %v4842
        %v4844 = vpop.f32.mrb[0].mxu0
        %4845 = vmatprep.mubr.bf16.mxu0 0
        %4846 = vmatmul.mubr.bf16.gmra.mrb[0].mxu0 %v4663
        %v4847 = vpop.f32.mrb[0].mxu0
        %v4848 = vadd.f32 0.0, %v4847
        %v4849 = vpop.f32.mrb[0].mxu0
        %v4850 = vpop.f32.mrb[0].mxu0
        %v4851 = vadd.f32 0.0, %v4850
        %v4852 = vpop.f32.mrb[0].mxu0
        %4853 = vmatprep.mubr.bf16.mxu0 0
        %4854 = vmatmul.mubr.bf16.gmra.mrb[0].mxu0 %v4664
        %v4855 = vpop.f32.mrb[0].mxu0
        %v4856 = vadd.f32 0.0, %v4855
        %v4857 = vpop.f32.mrb[0].mxu0
        %v4858 = vpop.f32.mrb[0].mxu0
        %v4859 = vadd.f32 0.0, %v4858
        %v4860 = vpop.f32.mrb[0].mxu0
        %4861 = vmatprep.mubr.bf16.mxu0 0
        %4862 = vmatmul.mubr.bf16.gmra.mrb[0].mxu0 %v4665
        %v4863 = vpop.f32.mrb[0].mxu0
        %v4864 = vadd.f32 0.0, %v4863
        %v4865 = vpop.f32.mrb[0].mxu0
        %v4866 = vpop.f32.mrb[0].mxu0
        %v4867 = vadd.f32 0.0, %v4866
        %v4868 = vpop.f32.mrb[0].mxu0
        %4869 = vmatprep.mubr.bf16.mxu0 0
        %4870 = vmatmul.mubr.bf16.gmra.mrb[0].mxu0 %v4666
        %v4871 = vpop.f32.mrb[0].mxu0
        %v4872 = vadd.f32 0.0, %v4871
        %v4873 = vpop.f32.mrb[0].mxu0
        %v4874 = vpop.f32.mrb[0].mxu0
        %v4875 = vadd.f32 0.0, %v4874
        %v4876 = vpop.f32.mrb[0].mxu0
        %4877 = vmatprep.mubr.bf16.mxu0 0
        %4878 = vmatmul.mubr.bf16.gmra.mrb[0].mxu0 %v4667
        %v4879 = vpop.f32.mrb[0].mxu0
        %v4880 = vadd.f32 0.0, %v4879
        %v4881 = vpop.f32.mrb[0].mxu0
        %v4882 = vpop.f32.mrb[0].mxu0
        %v4883 = vadd.f32 0.0, %v4882
        %v4884 = vpop.f32.mrb[0].mxu0
        %4885 = vmatprep.mubr.bf16.mxu0 0
        %4886 = vmatmul.mubr.bf16.gmra.mrb[0].mxu0 %v4668
        %v4887 = vpop.f32.mrb[0].mxu0
        %v4888 = vadd.f32 0.0, %v4887
        %v4889 = vpop.f32.mrb[0].mxu0
        %v4890 = vpop.f32.mrb[0].mxu0
        %v4891 = vadd.f32 0.0, %v4890
        %v4892 = vpop.f32.mrb[0].mxu0
        %4893 = vdwg.mxu0
        %v4894 = vld [vmem:[#allocation3] sm:$0xff]
        %v4895 = vld [vmem:[#allocation3 + $0x8] sm:$0xff]
        %v4896 = vld [vmem:[#allocation3 + $0x10] sm:$0xff]
        %v4897 = vld [vmem:[#allocation3 + $0x18] sm:$0xff]
        %v4898 = vld [vmem:[#allocation3 + $0x20] sm:$0xff]
        %v4899 = vld [vmem:[#allocation3 + $0x28] sm:$0xff]
        %v4900 = vld [vmem:[#allocation3 + $0x30] sm:$0xff]
        %v4901 = vld [vmem:[#allocation3 + $0x38] sm:$0xff]
        %v4902 = vld [vmem:[#allocation3 + $0x40] sm:$0xff]
        %v4903 = vld [vmem:[#allocation3 + $0x48] sm:$0xff]
        %v4904 = vld [vmem:[#allocation3 + $0x50] sm:$0xff]
        %v4905 = vld [vmem:[#allocation3 + $0x58] sm:$0xff]
        %v4906 = vld [vmem:[#allocation3 + $0x60] sm:$0xff]
        %v4907 = vld [vmem:[#allocation3 + $0x68] sm:$0xff]
        %v4908 = vld [vmem:[#allocation3 + $0x70] sm:$0xff]
        %v4909 = vld [vmem:[#allocation3 + $0x78] sm:$0xff]
        %v4910 = vld [vmem:[#allocation3 + $0x80] sm:$0xff]
        %v4911 = vld [vmem:[#allocation3 + $0x88] sm:$0xff]
        %v4912 = vld [vmem:[#allocation3 + $0x90] sm:$0xff]
        %v4913 = vld [vmem:[#allocation3 + $0x98] sm:$0xff]
        %v4914 = vld [vmem:[#allocation3 + $0xa0] sm:$0xff]
        %v4915 = vld [vmem:[#allocation3 + $0xa8] sm:$0xff]
        %v4916 = vld [vmem:[#allocation3 + $0xb0] sm:$0xff]
        %v4917 = vld [vmem:[#allocation3 + $0xb8] sm:$0xff]
        %v4918 = vld [vmem:[#allocation3 + $0xc0] sm:$0xff]
        %v4919 = vld [vmem:[#allocation3 + $0xc8] sm:$0xff]
        %v4920 = vld [vmem:[#allocation3 + $0xd0] sm:$0xff]
        %v4921 = vld [vmem:[#allocation3 + $0xd8] sm:$0xff]
        %v4922 = vld [vmem:[#allocation3 + $0xe0] sm:$0xff]
        %v4923 = vld [vmem:[#allocation3 + $0xe8] sm:$0xff]
        %v4924 = vld [vmem:[#allocation3 + $0xf0] sm:$0xff]
        %v4925 = vld [vmem:[#allocation3 + $0xf8] sm:$0xff]
        %v4926 = vadd.f32 %v4894, %v4768
        %v4927 = vadd.f32 %v4895, %v4771
        %v4928 = vadd.f32 %v4896, %v4776
        %v4929 = vadd.f32 %v4897, %v4779
        %v4930 = vadd.f32 %v4898, %v4784
        %v4931 = vadd.f32 %v4899, %v4787
        %v4932 = vadd.f32 %v4900, %v4792
        %v4933 = vadd.f32 %v4901, %v4795
        %v4934 = vadd.f32 %v4902, %v4800
        %v4935 = vadd.f32 %v4903, %v4803
        %v4936 = vadd.f32 %v4904, %v4808
        %v4937 = vadd.f32 %v4905, %v4811
        %v4938 = vadd.f32 %v4906, %v4816
        %v4939 = vadd.f32 %v4907, %v4819
        %v4940 = vadd.f32 %v4908, %v4824
        %v4941 = vadd.f32 %v4909, %v4827
        %v4942 = vadd.f32 %v4910, %v4832
        %v4943 = vadd.f32 %v4911, %v4835
        %v4944 = vadd.f32 %v4912, %v4840
        %v4945 = vadd.f32 %v4913, %v4843
        %v4946 = vadd.f32 %v4914, %v4848
        %v4947 = vadd.f32 %v4915, %v4851
        %v4948 = vadd.f32 %v4916, %v4856
        %v4949 = vadd.f32 %v4917, %v4859
        %v4950 = vadd.f32 %v4918, %v4864
        %v4951 = vadd.f32 %v4919, %v4867
        %v4952 = vadd.f32 %v4920, %v4872
        %v4953 = vadd.f32 %v4921, %v4875
        %v4954 = vadd.f32 %v4922, %v4880
        %v4955 = vadd.f32 %v4923, %v4883
        %v4956 = vadd.f32 %v4924, %v4888
        %v4957 = vadd.f32 %v4925, %v4891
        %4958 = vst [vmem:[#allocation3] sm:$0xff] %v4926
        %4959 = vst [vmem:[#allocation3 + $0x8] sm:$0xff] %v4927
        %4960 = vst [vmem:[#allocation3 + $0x10] sm:$0xff] %v4928
        %4961 = vst [vmem:[#allocation3 + $0x18] sm:$0xff] %v4929
        %4962 = vst [vmem:[#allocation3 + $0x20] sm:$0xff] %v4930
        %4963 = vst [vmem:[#allocation3 + $0x28] sm:$0xff] %v4931
        %4964 = vst [vmem:[#allocation3 + $0x30] sm:$0xff] %v4932
        %4965 = vst [vmem:[#allocation3 + $0x38] sm:$0xff] %v4933
        %4966 = vst [vmem:[#allocation3 + $0x40] sm:$0xff] %v4934
        %4967 = vst [vmem:[#allocation3 + $0x48] sm:$0xff] %v4935
        %4968 = vst [vmem:[#allocation3 + $0x50] sm:$0xff] %v4936
        %4969 = vst [vmem:[#allocation3 + $0x58] sm:$0xff] %v4937
        %4970 = vst [vmem:[#allocation3 + $0x60] sm:$0xff] %v4938
        %4971 = vst [vmem:[#allocation3 + $0x68] sm:$0xff] %v4939
        %4972 = vst [vmem:[#allocation3 + $0x70] sm:$0xff] %v4940
        %4973 = vst [vmem:[#allocation3 + $0x78] sm:$0xff] %v4941
        %4974 = vst [vmem:[#allocation3 + $0x80] sm:$0xff] %v4942
        %4975 = vst [vmem:[#allocation3 + $0x88] sm:$0xff] %v4943
        %4976 = vst [vmem:[#allocation3 + $0x90] sm:$0xff] %v4944
        %4977 = vst [vmem:[#allocation3 + $0x98] sm:$0xff] %v4945
        %4978 = vst [vmem:[#allocation3 + $0xa0] sm:$0xff] %v4946
        %4979 = vst [vmem:[#allocation3 + $0xa8] sm:$0xff] %v4947
        %4980 = vst [vmem:[#allocation3 + $0xb0] sm:$0xff] %v4948
        %4981 = vst [vmem:[#allocation3 + $0xb8] sm:$0xff] %v4949
        %4982 = vst [vmem:[#allocation3 + $0xc0] sm:$0xff] %v4950
        %4983 = vst [vmem:[#allocation3 + $0xc8] sm:$0xff] %v4951
        %4984 = vst [vmem:[#allocation3 + $0xd0] sm:$0xff] %v4952
        %4985 = vst [vmem:[#allocation3 + $0xd8] sm:$0xff] %v4953
        %4986 = vst [vmem:[#allocation3 + $0xe0] sm:$0xff] %v4954
        %4987 = vst [vmem:[#allocation3 + $0xe8] sm:$0xff] %v4955
        %4988 = vst [vmem:[#allocation3 + $0xf0] sm:$0xff] %v4956
        %4989 = vst [vmem:[#allocation3 + $0xf8] sm:$0xff] %v4957
        %s4990 = scalar_lea.vmem [#allocation2], 24
        %v4991 = vld [vmem:[%s4990] sm:$0xf]
        %v4992 = vld [vmem:[%s4990 + $0x4] sm:$0xf]
        %v4993 = vld [vmem:[%s4990 + $0xc] sm:$0xf]
        %v4994 = vld [vmem:[%s4990 + $0x10] sm:$0xf]
        %v4995 = vld [vmem:[%s4990 + $0x18] sm:$0xf]
        %v4996 = vld [vmem:[%s4990 + $0x1c] sm:$0xf]
        %v4997 = vld [vmem:[%s4990 + $0x24] sm:$0xf]
        %v4998 = vld [vmem:[%s4990 + $0x28] sm:$0xf]
        %v4999 = vld [vmem:[%s4990 + $0x30] sm:$0xf]
        %v5000 = vld [vmem:[%s4990 + $0x34] sm:$0xf]
        %v5001 = vld [vmem:[%s4990 + $0x3c] sm:$0xf]
        %v5002 = vld [vmem:[%s4990 + $0x40] sm:$0xf]
        %v5003 = vld [vmem:[%s4990 + $0x48] sm:$0xf]
        %v5004 = vld [vmem:[%s4990 + $0x4c] sm:$0xf]
        %v5005 = vld [vmem:[%s4990 + $0x54] sm:$0xf]
        %v5006 = vld [vmem:[%s4990 + $0x58] sm:$0xf]
        %v5007 = vld [vmem:[%s4990 + $0x60] sm:$0xf]
        %v5008 = vld [vmem:[%s4990 + $0x64] sm:$0xf]
        %v5009 = vld [vmem:[%s4990 + $0x6c] sm:$0xf]
        %v5010 = vld [vmem:[%s4990 + $0x70] sm:$0xf]
        %v5011 = vld [vmem:[%s4990 + $0x78] sm:$0xf]
        %v5012 = vld [vmem:[%s4990 + $0x7c] sm:$0xf]
        %v5013 = vld [vmem:[%s4990 + $0x84] sm:$0xf]
        %v5014 = vld [vmem:[%s4990 + $0x88] sm:$0xf]
        %v5015 = vld [vmem:[%s4990 + $0x90] sm:$0xf]
        %v5016 = vld [vmem:[%s4990 + $0x94] sm:$0xf]
        %v5017 = vld [vmem:[%s4990 + $0x9c] sm:$0xf]
        %v5018 = vld [vmem:[%s4990 + $0xa0] sm:$0xf]
        %v5019 = vld [vmem:[%s4990 + $0xa8] sm:$0xf]
        %v5020 = vld [vmem:[%s4990 + $0xac] sm:$0xf]
        %v5021 = vld [vmem:[%s4990 + $0xb4] sm:$0xf]
        %v5022 = vld [vmem:[%s4990 + $0xb8] sm:$0xf]
        %s5023 = scalar_lea.vmem [#allocation9], 384
        %v5024 = vld [vmem:[%s5023] sm:$0xf]
        %v5025 = vld [vmem:[%s5023 + $0x4] sm:$0xf]
        %v5026 = vld [vmem:[%s5023 + $0x8] sm:$0xf]
        %v5027 = vld [vmem:[%s5023 + $0xc] sm:$0xf]
        %v5028 = vld [vmem:[%s5023 + $0x10] sm:$0xf]
        %v5029 = vld [vmem:[%s5023 + $0x14] sm:$0xf]
        %v5030 = vld [vmem:[%s5023 + $0x18] sm:$0xf]
        %v5031 = vld [vmem:[%s5023 + $0x1c] sm:$0xf]
        %v5032 = vld [vmem:[%s5023 + $0x20] sm:$0xf]
        %v5033 = vld [vmem:[%s5023 + $0x24] sm:$0xf]
        %v5034 = vld [vmem:[%s5023 + $0x28] sm:$0xf]
        %v5035 = vld [vmem:[%s5023 + $0x2c] sm:$0xf]
        %v5036 = vld [vmem:[%s5023 + $0x30] sm:$0xf]
        %v5037 = vld [vmem:[%s5023 + $0x34] sm:$0xf]
        %v5038 = vld [vmem:[%s5023 + $0x38] sm:$0xf]
        %v5039 = vld [vmem:[%s5023 + $0x3c] sm:$0xf]
        %v5072 = vunpack.c.l.b16 %v4991
        %v5073 = vunpack.c.l.b16 %v4992
        %v5074 = vunpack.c.l.b16 %v4993
        %v5075 = vunpack.c.l.b16 %v4994
        %v5076 = vunpack.c.l.b16 %v4995
        %v5077 = vunpack.c.l.b16 %v4996
        %v5078 = vunpack.c.l.b16 %v4997
        %v5079 = vunpack.c.l.b16 %v4998
        %v5080 = vunpack.c.l.b16 %v4999
        %v5081 = vunpack.c.l.b16 %v5000
        %v5082 = vunpack.c.l.b16 %v5001
        %v5083 = vunpack.c.l.b16 %v5002
        %v5084 = vunpack.c.l.b16 %v5003
        %v5085 = vunpack.c.l.b16 %v5004
        %v5086 = vunpack.c.l.b16 %v5005
        %v5087 = vunpack.c.l.b16 %v5006
        %v5088 = vunpack.c.l.b16 %v5007
        %v5089 = vunpack.c.l.b16 %v5008
        %v5090 = vunpack.c.l.b16 %v5009
        %v5091 = vunpack.c.l.b16 %v5010
        %v5092 = vunpack.c.l.b16 %v5011
        %v5093 = vunpack.c.l.b16 %v5012
        %v5094 = vunpack.c.l.b16 %v5013
        %v5095 = vunpack.c.l.b16 %v5014
        %v5096 = vunpack.c.l.b16 %v5015
        %v5097 = vunpack.c.l.b16 %v5016
        %v5098 = vunpack.c.l.b16 %v5017
        %v5099 = vunpack.c.l.b16 %v5018
        %v5100 = vunpack.c.l.b16 %v5019
        %v5101 = vunpack.c.l.b16 %v5020
        %v5102 = vunpack.c.l.b16 %v5021
        %v5103 = vunpack.c.l.b16 %v5022
        %v5104 = vpack.c.b16 %v5073, %v5072
        %v5105 = vpack.c.b16 %v5075, %v5074
        %v5106 = vpack.c.b16 %v5077, %v5076
        %v5107 = vpack.c.b16 %v5079, %v5078
        %v5108 = vpack.c.b16 %v5081, %v5080
        %v5109 = vpack.c.b16 %v5083, %v5082
        %v5110 = vpack.c.b16 %v5085, %v5084
        %v5111 = vpack.c.b16 %v5087, %v5086
        %v5112 = vpack.c.b16 %v5089, %v5088
        %v5113 = vpack.c.b16 %v5091, %v5090
        %v5114 = vpack.c.b16 %v5093, %v5092
        %v5115 = vpack.c.b16 %v5095, %v5094
        %v5116 = vpack.c.b16 %v5097, %v5096
        %v5117 = vpack.c.b16 %v5099, %v5098
        %v5118 = vpack.c.b16 %v5101, %v5100
        %v5119 = vpack.c.b16 %v5103, %v5102
        %v5152 = vunpack.c.l.b16 %v5024
        %v5153 = vunpack.c.l.b16 %v5025
        %v5154 = vunpack.c.l.b16 %v5026
        %v5155 = vunpack.c.l.b16 %v5027
        %v5156 = vunpack.c.l.b16 %v5028
        %v5157 = vunpack.c.l.b16 %v5029
        %v5158 = vunpack.c.l.b16 %v5030
        %v5159 = vunpack.c.l.b16 %v5031
        %v5160 = vunpack.c.l.b16 %v5032
        %v5161 = vunpack.c.l.b16 %v5033
        %v5162 = vunpack.c.l.b16 %v5034
        %v5163 = vunpack.c.l.b16 %v5035
        %v5164 = vunpack.c.l.b16 %v5036
        %v5165 = vunpack.c.l.b16 %v5037
        %v5166 = vunpack.c.l.b16 %v5038
        %v5167 = vunpack.c.l.b16 %v5039
        %v5168 = vpack.c.b16 %v5153, %v5152
        %v5169 = vpack.c.b16 %v5155, %v5154
        %v5170 = vpack.c.b16 %v5157, %v5156
        %v5171 = vpack.c.b16 %v5159, %v5158
        %v5172 = vpack.c.b16 %v5161, %v5160
        %v5173 = vpack.c.b16 %v5163, %v5162
        %v5174 = vpack.c.b16 %v5165, %v5164
        %v5175 = vpack.c.b16 %v5167, %v5166
        %5184 = vmatprep.subr.bf16.mxu0 0
        %5185 = vmatpush1.bf16.msra.mxu0 %v5168
        %5186 = vmatprep.subr.bf16.mxu0 0
        %5187 = vmatpush1.bf16.msra.mxu0 %v5169
        %5188 = vmatprep.subr.bf16.mxu0 0
        %5189 = vmatpush1.bf16.msra.mxu0 %v5170
        %5190 = vmatprep.subr.bf16.mxu0 0
        %5191 = vmatpush1.bf16.msra.mxu0 %v5171
        %5192 = vmatprep.subr.bf16.mxu0 0
        %5193 = vmatpush1.bf16.msra.mxu0 %v5172
        %5194 = vmatprep.subr.bf16.mxu0 0
        %5195 = vmatpush1.bf16.msra.mxu0 %v5173
        %5196 = vmatprep.subr.bf16.mxu0 0
        %5197 = vmatpush1.bf16.msra.mxu0 %v5174
        %5198 = vmatprep.subr.bf16.mxu0 0
        %5199 = vmatpush1.bf16.msra.mxu0 %v5175
        %5200 = vmatprep.subr.bf16.mxu0 0
        %5201 = vmatpush1.bf16.msra.mxu0 0
        %5202 = vmatprep.subr.bf16.mxu0 0
        %5203 = vmatpush1.bf16.msra.mxu0 0
        %5204 = vmatprep.subr.bf16.mxu0 0
        %5205 = vmatpush1.bf16.msra.mxu0 0
        %5206 = vmatprep.subr.bf16.mxu0 0
        %5207 = vmatpush1.bf16.msra.mxu0 0
        %5208 = vmatprep.subr.bf16.mxu0 0
        %5209 = vmatpush1.bf16.msra.mxu0 0
        %5210 = vmatprep.subr.bf16.mxu0 0
        %5211 = vmatpush1.bf16.msra.mxu0 0
        %5212 = vmatprep.subr.bf16.mxu0 0
        %5213 = vmatpush1.bf16.msra.mxu0 0
        %5214 = vmatprep.subr.bf16.mxu0 0
        %5215 = vmatpush1.bf16.msra.mxu0 0
        %5216 = vmatprep.mubr.bf16.mxu0 0
        %5217 = vmatmul.mubr.bf16.gmra.mrb[0].mxu0 %v5104
        %v5218 = vpop.f32.mrb[0].mxu0
        %v5219 = vadd.f32 0.0, %v5218
        %v5220 = vpop.f32.mrb[0].mxu0
        %v5221 = vpop.f32.mrb[0].mxu0
        %v5222 = vadd.f32 0.0, %v5221
        %v5223 = vpop.f32.mrb[0].mxu0
        %5224 = vmatprep.mubr.bf16.mxu0 0
        %5225 = vmatmul.mubr.bf16.gmra.mrb[0].mxu0 %v5105
        %v5226 = vpop.f32.mrb[0].mxu0
        %v5227 = vadd.f32 0.0, %v5226
        %v5228 = vpop.f32.mrb[0].mxu0
        %v5229 = vpop.f32.mrb[0].mxu0
        %v5230 = vadd.f32 0.0, %v5229
        %v5231 = vpop.f32.mrb[0].mxu0
        %5232 = vmatprep.mubr.bf16.mxu0 0
        %5233 = vmatmul.mubr.bf16.gmra.mrb[0].mxu0 %v5106
        %v5234 = vpop.f32.mrb[0].mxu0
        %v5235 = vadd.f32 0.0, %v5234
        %v5236 = vpop.f32.mrb[0].mxu0
        %v5237 = vpop.f32.mrb[0].mxu0
        %v5238 = vadd.f32 0.0, %v5237
        %v5239 = vpop.f32.mrb[0].mxu0
        %5240 = vmatprep.mubr.bf16.mxu0 0
        %5241 = vmatmul.mubr.bf16.gmra.mrb[0].mxu0 %v5107
        %v5242 = vpop.f32.mrb[0].mxu0
        %v5243 = vadd.f32 0.0, %v5242
        %v5244 = vpop.f32.mrb[0].mxu0
        %v5245 = vpop.f32.mrb[0].mxu0
        %v5246 = vadd.f32 0.0, %v5245
        %v5247 = vpop.f32.mrb[0].mxu0
        %5248 = vmatprep.mubr.bf16.mxu0 0
        %5249 = vmatmul.mubr.bf16.gmra.mrb[0].mxu0 %v5108
        %v5250 = vpop.f32.mrb[0].mxu0
        %v5251 = vadd.f32 0.0, %v5250
        %v5252 = vpop.f32.mrb[0].mxu0
        %v5253 = vpop.f32.mrb[0].mxu0
        %v5254 = vadd.f32 0.0, %v5253
        %v5255 = vpop.f32.mrb[0].mxu0
        %5256 = vmatprep.mubr.bf16.mxu0 0
        %5257 = vmatmul.mubr.bf16.gmra.mrb[0].mxu0 %v5109
        %v5258 = vpop.f32.mrb[0].mxu0
        %v5259 = vadd.f32 0.0, %v5258
        %v5260 = vpop.f32.mrb[0].mxu0
        %v5261 = vpop.f32.mrb[0].mxu0
        %v5262 = vadd.f32 0.0, %v5261
        %v5263 = vpop.f32.mrb[0].mxu0
        %5264 = vmatprep.mubr.bf16.mxu0 0
        %5265 = vmatmul.mubr.bf16.gmra.mrb[0].mxu0 %v5110
        %v5266 = vpop.f32.mrb[0].mxu0
        %v5267 = vadd.f32 0.0, %v5266
        %v5268 = vpop.f32.mrb[0].mxu0
        %v5269 = vpop.f32.mrb[0].mxu0
        %v5270 = vadd.f32 0.0, %v5269
        %v5271 = vpop.f32.mrb[0].mxu0
        %5272 = vmatprep.mubr.bf16.mxu0 0
        %5273 = vmatmul.mubr.bf16.gmra.mrb[0].mxu0 %v5111
        %v5274 = vpop.f32.mrb[0].mxu0
        %v5275 = vadd.f32 0.0, %v5274
        %v5276 = vpop.f32.mrb[0].mxu0
        %v5277 = vpop.f32.mrb[0].mxu0
        %v5278 = vadd.f32 0.0, %v5277
        %v5279 = vpop.f32.mrb[0].mxu0
        %5280 = vmatprep.mubr.bf16.mxu0 0
        %5281 = vmatmul.mubr.bf16.gmra.mrb[0].mxu0 %v5112
        %v5282 = vpop.f32.mrb[0].mxu0
        %v5283 = vadd.f32 0.0, %v5282
        %v5284 = vpop.f32.mrb[0].mxu0
        %v5285 = vpop.f32.mrb[0].mxu0
        %v5286 = vadd.f32 0.0, %v5285
        %v5287 = vpop.f32.mrb[0].mxu0
        %5288 = vmatprep.mubr.bf16.mxu0 0
        %5289 = vmatmul.mubr.bf16.gmra.mrb[0].mxu0 %v5113
        %v5290 = vpop.f32.mrb[0].mxu0
        %v5291 = vadd.f32 0.0, %v5290
        %v5292 = vpop.f32.mrb[0].mxu0
        %v5293 = vpop.f32.mrb[0].mxu0
        %v5294 = vadd.f32 0.0, %v5293
        %v5295 = vpop.f32.mrb[0].mxu0
        %5296 = vmatprep.mubr.bf16.mxu0 0
        %5297 = vmatmul.mubr.bf16.gmra.mrb[0].mxu0 %v5114
        %v5298 = vpop.f32.mrb[0].mxu0
        %v5299 = vadd.f32 0.0, %v5298
        %v5300 = vpop.f32.mrb[0].mxu0
        %v5301 = vpop.f32.mrb[0].mxu0
        %v5302 = vadd.f32 0.0, %v5301
        %v5303 = vpop.f32.mrb[0].mxu0
        %5304 = vmatprep.mubr.bf16.mxu0 0
        %5305 = vmatmul.mubr.bf16.gmra.mrb[0].mxu0 %v5115
        %v5306 = vpop.f32.mrb[0].mxu0
        %v5307 = vadd.f32 0.0, %v5306
        %v5308 = vpop.f32.mrb[0].mxu0
        %v5309 = vpop.f32.mrb[0].mxu0
        %v5310 = vadd.f32 0.0, %v5309
        %v5311 = vpop.f32.mrb[0].mxu0
        %5312 = vmatprep.mubr.bf16.mxu0 0
        %5313 = vmatmul.mubr.bf16.gmra.mrb[0].mxu0 %v5116
        %v5314 = vpop.f32.mrb[0].mxu0
        %v5315 = vadd.f32 0.0, %v5314
        %v5316 = vpop.f32.mrb[0].mxu0
        %v5317 = vpop.f32.mrb[0].mxu0
        %v5318 = vadd.f32 0.0, %v5317
        %v5319 = vpop.f32.mrb[0].mxu0
        %5320 = vmatprep.mubr.bf16.mxu0 0
        %5321 = vmatmul.mubr.bf16.gmra.mrb[0].mxu0 %v5117
        %v5322 = vpop.f32.mrb[0].mxu0
        %v5323 = vadd.f32 0.0, %v5322
        %v5324 = vpop.f32.mrb[0].mxu0
        %v5325 = vpop.f32.mrb[0].mxu0
        %v5326 = vadd.f32 0.0, %v5325
        %v5327 = vpop.f32.mrb[0].mxu0
        %5328 = vmatprep.mubr.bf16.mxu0 0
        %5329 = vmatmul.mubr.bf16.gmra.mrb[0].mxu0 %v5118
        %v5330 = vpop.f32.mrb[0].mxu0
        %v5331 = vadd.f32 0.0, %v5330
        %v5332 = vpop.f32.mrb[0].mxu0
        %v5333 = vpop.f32.mrb[0].mxu0
        %v5334 = vadd.f32 0.0, %v5333
        %v5335 = vpop.f32.mrb[0].mxu0
        %5336 = vmatprep.mubr.bf16.mxu0 0
        %5337 = vmatmul.mubr.bf16.gmra.mrb[0].mxu0 %v5119
        %v5338 = vpop.f32.mrb[0].mxu0
        %v5339 = vadd.f32 0.0, %v5338
        %v5340 = vpop.f32.mrb[0].mxu0
        %v5341 = vpop.f32.mrb[0].mxu0
        %v5342 = vadd.f32 0.0, %v5341
        %v5343 = vpop.f32.mrb[0].mxu0
        %5344 = vdwg.mxu0
        %v5345 = vld [vmem:[#allocation3] sm:$0xff]
        %v5346 = vld [vmem:[#allocation3 + $0x8] sm:$0xff]
        %v5347 = vld [vmem:[#allocation3 + $0x10] sm:$0xff]
        %v5348 = vld [vmem:[#allocation3 + $0x18] sm:$0xff]
        %v5349 = vld [vmem:[#allocation3 + $0x20] sm:$0xff]
        %v5350 = vld [vmem:[#allocation3 + $0x28] sm:$0xff]
        %v5351 = vld [vmem:[#allocation3 + $0x30] sm:$0xff]
        %v5352 = vld [vmem:[#allocation3 + $0x38] sm:$0xff]
        %v5353 = vld [vmem:[#allocation3 + $0x40] sm:$0xff]
        %v5354 = vld [vmem:[#allocation3 + $0x48] sm:$0xff]
        %v5355 = vld [vmem:[#allocation3 + $0x50] sm:$0xff]
        %v5356 = vld [vmem:[#allocation3 + $0x58] sm:$0xff]
        %v5357 = vld [vmem:[#allocation3 + $0x60] sm:$0xff]
        %v5358 = vld [vmem:[#allocation3 + $0x68] sm:$0xff]
        %v5359 = vld [vmem:[#allocation3 + $0x70] sm:$0xff]
        %v5360 = vld [vmem:[#allocation3 + $0x78] sm:$0xff]
        %v5361 = vld [vmem:[#allocation3 + $0x80] sm:$0xff]
        %v5362 = vld [vmem:[#allocation3 + $0x88] sm:$0xff]
        %v5363 = vld [vmem:[#allocation3 + $0x90] sm:$0xff]
        %v5364 = vld [vmem:[#allocation3 + $0x98] sm:$0xff]
        %v5365 = vld [vmem:[#allocation3 + $0xa0] sm:$0xff]
        %v5366 = vld [vmem:[#allocation3 + $0xa8] sm:$0xff]
        %v5367 = vld [vmem:[#allocation3 + $0xb0] sm:$0xff]
        %v5368 = vld [vmem:[#allocation3 + $0xb8] sm:$0xff]
        %v5369 = vld [vmem:[#allocation3 + $0xc0] sm:$0xff]
        %v5370 = vld [vmem:[#allocation3 + $0xc8] sm:$0xff]
        %v5371 = vld [vmem:[#allocation3 + $0xd0] sm:$0xff]
        %v5372 = vld [vmem:[#allocation3 + $0xd8] sm:$0xff]
        %v5373 = vld [vmem:[#allocation3 + $0xe0] sm:$0xff]
        %v5374 = vld [vmem:[#allocation3 + $0xe8] sm:$0xff]
        %v5375 = vld [vmem:[#allocation3 + $0xf0] sm:$0xff]
        %v5376 = vld [vmem:[#allocation3 + $0xf8] sm:$0xff]
        %v5377 = vadd.f32 %v5345, %v5219
        %v5378 = vadd.f32 %v5346, %v5222
        %v5379 = vadd.f32 %v5347, %v5227
        %v5380 = vadd.f32 %v5348, %v5230
        %v5381 = vadd.f32 %v5349, %v5235
        %v5382 = vadd.f32 %v5350, %v5238
        %v5383 = vadd.f32 %v5351, %v5243
        %v5384 = vadd.f32 %v5352, %v5246
        %v5385 = vadd.f32 %v5353, %v5251
        %v5386 = vadd.f32 %v5354, %v5254
        %v5387 = vadd.f32 %v5355, %v5259
        %v5388 = vadd.f32 %v5356, %v5262
        %v5389 = vadd.f32 %v5357, %v5267
        %v5390 = vadd.f32 %v5358, %v5270
        %v5391 = vadd.f32 %v5359, %v5275
        %v5392 = vadd.f32 %v5360, %v5278
        %v5393 = vadd.f32 %v5361, %v5283
        %v5394 = vadd.f32 %v5362, %v5286
        %v5395 = vadd.f32 %v5363, %v5291
        %v5396 = vadd.f32 %v5364, %v5294
        %v5397 = vadd.f32 %v5365, %v5299
        %v5398 = vadd.f32 %v5366, %v5302
        %v5399 = vadd.f32 %v5367, %v5307
        %v5400 = vadd.f32 %v5368, %v5310
        %v5401 = vadd.f32 %v5369, %v5315
        %v5402 = vadd.f32 %v5370, %v5318
        %v5403 = vadd.f32 %v5371, %v5323
        %v5404 = vadd.f32 %v5372, %v5326
        %v5405 = vadd.f32 %v5373, %v5331
        %v5406 = vadd.f32 %v5374, %v5334
        %v5407 = vadd.f32 %v5375, %v5339
        %v5408 = vadd.f32 %v5376, %v5342
        %5409 = vst [vmem:[#allocation3] sm:$0xff] %v5377
        %5410 = vst [vmem:[#allocation3 + $0x8] sm:$0xff] %v5378
        %5411 = vst [vmem:[#allocation3 + $0x10] sm:$0xff] %v5379
        %5412 = vst [vmem:[#allocation3 + $0x18] sm:$0xff] %v5380
        %5413 = vst [vmem:[#allocation3 + $0x20] sm:$0xff] %v5381
        %5414 = vst [vmem:[#allocation3 + $0x28] sm:$0xff] %v5382
        %5415 = vst [vmem:[#allocation3 + $0x30] sm:$0xff] %v5383
        %5416 = vst [vmem:[#allocation3 + $0x38] sm:$0xff] %v5384
        %5417 = vst [vmem:[#allocation3 + $0x40] sm:$0xff] %v5385
        %5418 = vst [vmem:[#allocation3 + $0x48] sm:$0xff] %v5386
        %5419 = vst [vmem:[#allocation3 + $0x50] sm:$0xff] %v5387
        %5420 = vst [vmem:[#allocation3 + $0x58] sm:$0xff] %v5388
        %5421 = vst [vmem:[#allocation3 + $0x60] sm:$0xff] %v5389
        %5422 = vst [vmem:[#allocation3 + $0x68] sm:$0xff] %v5390
        %5423 = vst [vmem:[#allocation3 + $0x70] sm:$0xff] %v5391
        %5424 = vst [vmem:[#allocation3 + $0x78] sm:$0xff] %v5392
        %5425 = vst [vmem:[#allocation3 + $0x80] sm:$0xff] %v5393
        %5426 = vst [vmem:[#allocation3 + $0x88] sm:$0xff] %v5394
        %5427 = vst [vmem:[#allocation3 + $0x90] sm:$0xff] %v5395
        %5428 = vst [vmem:[#allocation3 + $0x98] sm:$0xff] %v5396
        %5429 = vst [vmem:[#allocation3 + $0xa0] sm:$0xff] %v5397
        %5430 = vst [vmem:[#allocation3 + $0xa8] sm:$0xff] %v5398
        %5431 = vst [vmem:[#allocation3 + $0xb0] sm:$0xff] %v5399
        %5432 = vst [vmem:[#allocation3 + $0xb8] sm:$0xff] %v5400
        %5433 = vst [vmem:[#allocation3 + $0xc0] sm:$0xff] %v5401
        %5434 = vst [vmem:[#allocation3 + $0xc8] sm:$0xff] %v5402
        %5435 = vst [vmem:[#allocation3 + $0xd0] sm:$0xff] %v5403
        %5436 = vst [vmem:[#allocation3 + $0xd8] sm:$0xff] %v5404
        %5437 = vst [vmem:[#allocation3 + $0xe0] sm:$0xff] %v5405
        %5438 = vst [vmem:[#allocation3 + $0xe8] sm:$0xff] %v5406
        %5439 = vst [vmem:[#allocation3 + $0xf0] sm:$0xff] %v5407
        %5440 = vst [vmem:[#allocation3 + $0xf8] sm:$0xff] %v5408
        %v5441 = vld [vmem:[%s4990] sm:$0xf]
        %v5442 = vld [vmem:[%s4990 + $0x4] sm:$0xf]
        %v5443 = vld [vmem:[%s4990 + $0x8] sm:$0x1]
        %v5444 = vld [vmem:[%s4990 + $0xc] sm:$0xf]
        %v5445 = vld [vmem:[%s4990 + $0x10] sm:$0xf]
        %v5446 = vld [vmem:[%s4990 + $0x14] sm:$0x1]
        %v5447 = vld [vmem:[%s4990 + $0x18] sm:$0xf]
        %v5448 = vld [vmem:[%s4990 + $0x1c] sm:$0xf]
        %v5449 = vld [vmem:[%s4990 + $0x20] sm:$0x1]
        %v5450 = vld [vmem:[%s4990 + $0x24] sm:$0xf]
        %v5451 = vld [vmem:[%s4990 + $0x28] sm:$0xf]
        %v5452 = vld [vmem:[%s4990 + $0x2c] sm:$0x1]
        %v5453 = vld [vmem:[%s4990 + $0x30] sm:$0xf]
        %v5454 = vld [vmem:[%s4990 + $0x34] sm:$0xf]
        %v5455 = vld [vmem:[%s4990 + $0x38] sm:$0x1]
        %v5456 = vld [vmem:[%s4990 + $0x3c] sm:$0xf]
        %v5457 = vld [vmem:[%s4990 + $0x40] sm:$0xf]
        %v5458 = vld [vmem:[%s4990 + $0x44] sm:$0x1]
        %v5459 = vld [vmem:[%s4990 + $0x48] sm:$0xf]
        %v5460 = vld [vmem:[%s4990 + $0x4c] sm:$0xf]
        %v5461 = vld [vmem:[%s4990 + $0x50] sm:$0x1]
        %v5462 = vld [vmem:[%s4990 + $0x54] sm:$0xf]
        %v5463 = vld [vmem:[%s4990 + $0x58] sm:$0xf]
        %v5464 = vld [vmem:[%s4990 + $0x5c] sm:$0x1]
        %v5465 = vld [vmem:[%s4990 + $0x60] sm:$0xf]
        %v5466 = vld [vmem:[%s4990 + $0x64] sm:$0xf]
        %v5467 = vld [vmem:[%s4990 + $0x68] sm:$0x1]
        %v5468 = vld [vmem:[%s4990 + $0x6c] sm:$0xf]
        %v5469 = vld [vmem:[%s4990 + $0x70] sm:$0xf]
        %v5470 = vld [vmem:[%s4990 + $0x74] sm:$0x1]
        %v5471 = vld [vmem:[%s4990 + $0x78] sm:$0xf]
        %v5472 = vld [vmem:[%s4990 + $0x7c] sm:$0xf]
        %v5473 = vld [vmem:[%s4990 + $0x80] sm:$0x1]
        %v5474 = vld [vmem:[%s4990 + $0x84] sm:$0xf]
        %v5475 = vld [vmem:[%s4990 + $0x88] sm:$0xf]
        %v5476 = vld [vmem:[%s4990 + $0x8c] sm:$0x1]
        %v5477 = vld [vmem:[%s4990 + $0x90] sm:$0xf]
        %v5478 = vld [vmem:[%s4990 + $0x94] sm:$0xf]
        %v5479 = vld [vmem:[%s4990 + $0x98] sm:$0x1]
        %v5480 = vld [vmem:[%s4990 + $0x9c] sm:$0xf]
        %v5481 = vld [vmem:[%s4990 + $0xa0] sm:$0xf]
        %v5482 = vld [vmem:[%s4990 + $0xa4] sm:$0x1]
        %v5483 = vld [vmem:[%s4990 + $0xa8] sm:$0xf]
        %v5484 = vld [vmem:[%s4990 + $0xac] sm:$0xf]
        %v5485 = vld [vmem:[%s4990 + $0xb0] sm:$0x1]
        %v5486 = vld [vmem:[%s4990 + $0xb4] sm:$0xf]
        %v5487 = vld [vmem:[%s4990 + $0xb8] sm:$0xf]
        %v5488 = vld [vmem:[%s4990 + $0xbc] sm:$0x1]
        %v5490 = vshrl.u32 %v5441, 16
        %v5492 = vrot.slane %v5490, 4
        %v5493 = vshll.u32 %v5441, 16
        %v5495 = vrot.slane %v5493, 5
        %v5496 = vor.u32 %v5492, %v5495
        %v5497 = vrot.slane %v5496, 4
        %v5499 = vshll.u32 %v5442, 16
        %v5501 = vrot.slane %v5499, 5
        %v5502 = vsel %vm1760, %v5497, %v5501
        %v5503 = vshrl.u32 %v5442, 16
        %v5505 = vrot.slane %v5503, 4
        %v5506 = vor.u32 %v5505, %v5501
        %v5507 = vrot.slane %v5506, 4
        %v5509 = vshll.u32 %v5443, 16
        %v5511 = vrot.slane %v5509, 5
        %v5512 = vsel %vm1760, %v5507, %v5511
        %v5514 = vshrl.u32 %v5444, 16
        %v5516 = vrot.slane %v5514, 4
        %v5517 = vshll.u32 %v5444, 16
        %v5519 = vrot.slane %v5517, 5
        %v5520 = vor.u32 %v5516, %v5519
        %v5521 = vrot.slane %v5520, 4
        %v5523 = vshll.u32 %v5445, 16
        %v5525 = vrot.slane %v5523, 5
        %v5526 = vsel %vm1760, %v5521, %v5525
        %v5527 = vshrl.u32 %v5445, 16
        %v5529 = vrot.slane %v5527, 4
        %v5530 = vor.u32 %v5529, %v5525
        %v5531 = vrot.slane %v5530, 4
        %v5533 = vshll.u32 %v5446, 16
        %v5535 = vrot.slane %v5533, 5
        %v5536 = vsel %vm1760, %v5531, %v5535
        %v5538 = vshrl.u32 %v5447, 16
        %v5540 = vrot.slane %v5538, 4
        %v5541 = vshll.u32 %v5447, 16
        %v5543 = vrot.slane %v5541, 5
        %v5544 = vor.u32 %v5540, %v5543
        %v5545 = vrot.slane %v5544, 4
        %v5547 = vshll.u32 %v5448, 16
        %v5549 = vrot.slane %v5547, 5
        %v5550 = vsel %vm1760, %v5545, %v5549
        %v5551 = vshrl.u32 %v5448, 16
        %v5553 = vrot.slane %v5551, 4
        %v5554 = vor.u32 %v5553, %v5549
        %v5555 = vrot.slane %v5554, 4
        %v5557 = vshll.u32 %v5449, 16
        %v5559 = vrot.slane %v5557, 5
        %v5560 = vsel %vm1760, %v5555, %v5559
        %v5562 = vshrl.u32 %v5450, 16
        %v5564 = vrot.slane %v5562, 4
        %v5565 = vshll.u32 %v5450, 16
        %v5567 = vrot.slane %v5565, 5
        %v5568 = vor.u32 %v5564, %v5567
        %v5569 = vrot.slane %v5568, 4
        %v5571 = vshll.u32 %v5451, 16
        %v5573 = vrot.slane %v5571, 5
        %v5574 = vsel %vm1760, %v5569, %v5573
        %v5575 = vshrl.u32 %v5451, 16
        %v5577 = vrot.slane %v5575, 4
        %v5578 = vor.u32 %v5577, %v5573
        %v5579 = vrot.slane %v5578, 4
        %v5581 = vshll.u32 %v5452, 16
        %v5583 = vrot.slane %v5581, 5
        %v5584 = vsel %vm1760, %v5579, %v5583
        %v5586 = vshrl.u32 %v5453, 16
        %v5588 = vrot.slane %v5586, 4
        %v5589 = vshll.u32 %v5453, 16
        %v5591 = vrot.slane %v5589, 5
        %v5592 = vor.u32 %v5588, %v5591
        %v5593 = vrot.slane %v5592, 4
        %v5595 = vshll.u32 %v5454, 16
        %v5597 = vrot.slane %v5595, 5
        %v5598 = vsel %vm1760, %v5593, %v5597
        %v5599 = vshrl.u32 %v5454, 16
        %v5601 = vrot.slane %v5599, 4
        %v5602 = vor.u32 %v5601, %v5597
        %v5603 = vrot.slane %v5602, 4
        %v5605 = vshll.u32 %v5455, 16
        %v5607 = vrot.slane %v5605, 5
        %v5608 = vsel %vm1760, %v5603, %v5607
        %v5610 = vshrl.u32 %v5456, 16
        %v5612 = vrot.slane %v5610, 4
        %v5613 = vshll.u32 %v5456, 16
        %v5615 = vrot.slane %v5613, 5
        %v5616 = vor.u32 %v5612, %v5615
        %v5617 = vrot.slane %v5616, 4
        %v5619 = vshll.u32 %v5457, 16
        %v5621 = vrot.slane %v5619, 5
        %v5622 = vsel %vm1760, %v5617, %v5621
        %v5623 = vshrl.u32 %v5457, 16
        %v5625 = vrot.slane %v5623, 4
        %v5626 = vor.u32 %v5625, %v5621
        %v5627 = vrot.slane %v5626, 4
        %v5629 = vshll.u32 %v5458, 16
        %v5631 = vrot.slane %v5629, 5
        %v5632 = vsel %vm1760, %v5627, %v5631
        %v5634 = vshrl.u32 %v5459, 16
        %v5636 = vrot.slane %v5634, 4
        %v5637 = vshll.u32 %v5459, 16
        %v5639 = vrot.slane %v5637, 5
        %v5640 = vor.u32 %v5636, %v5639
        %v5641 = vrot.slane %v5640, 4
        %v5643 = vshll.u32 %v5460, 16
        %v5645 = vrot.slane %v5643, 5
        %v5646 = vsel %vm1760, %v5641, %v5645
        %v5647 = vshrl.u32 %v5460, 16
        %v5649 = vrot.slane %v5647, 4
        %v5650 = vor.u32 %v5649, %v5645
        %v5651 = vrot.slane %v5650, 4
        %v5653 = vshll.u32 %v5461, 16
        %v5655 = vrot.slane %v5653, 5
        %v5656 = vsel %vm1760, %v5651, %v5655
        %v5658 = vshrl.u32 %v5462, 16
        %v5660 = vrot.slane %v5658, 4
        %v5661 = vshll.u32 %v5462, 16
        %v5663 = vrot.slane %v5661, 5
        %v5664 = vor.u32 %v5660, %v5663
        %v5665 = vrot.slane %v5664, 4
        %v5667 = vshll.u32 %v5463, 16
        %v5669 = vrot.slane %v5667, 5
        %v5670 = vsel %vm1760, %v5665, %v5669
        %v5671 = vshrl.u32 %v5463, 16
        %v5673 = vrot.slane %v5671, 4
        %v5674 = vor.u32 %v5673, %v5669
        %v5675 = vrot.slane %v5674, 4
        %v5677 = vshll.u32 %v5464, 16
        %v5679 = vrot.slane %v5677, 5
        %v5680 = vsel %vm1760, %v5675, %v5679
        %v5682 = vshrl.u32 %v5465, 16
        %v5684 = vrot.slane %v5682, 4
        %v5685 = vshll.u32 %v5465, 16
        %v5687 = vrot.slane %v5685, 5
        %v5688 = vor.u32 %v5684, %v5687
        %v5689 = vrot.slane %v5688, 4
        %v5691 = vshll.u32 %v5466, 16
        %v5693 = vrot.slane %v5691, 5
        %v5694 = vsel %vm1760, %v5689, %v5693
        %v5695 = vshrl.u32 %v5466, 16
        %v5697 = vrot.slane %v5695, 4
        %v5698 = vor.u32 %v5697, %v5693
        %v5699 = vrot.slane %v5698, 4
        %v5701 = vshll.u32 %v5467, 16
        %v5703 = vrot.slane %v5701, 5
        %v5704 = vsel %vm1760, %v5699, %v5703
        %v5706 = vshrl.u32 %v5468, 16
        %v5708 = vrot.slane %v5706, 4
        %v5709 = vshll.u32 %v5468, 16
        %v5711 = vrot.slane %v5709, 5
        %v5712 = vor.u32 %v5708, %v5711
        %v5713 = vrot.slane %v5712, 4
        %v5715 = vshll.u32 %v5469, 16
        %v5717 = vrot.slane %v5715, 5
        %v5718 = vsel %vm1760, %v5713, %v5717
        %v5719 = vshrl.u32 %v5469, 16
        %v5721 = vrot.slane %v5719, 4
        %v5722 = vor.u32 %v5721, %v5717
        %v5723 = vrot.slane %v5722, 4
        %v5725 = vshll.u32 %v5470, 16
        %v5727 = vrot.slane %v5725, 5
        %v5728 = vsel %vm1760, %v5723, %v5727
        %v5730 = vshrl.u32 %v5471, 16
        %v5732 = vrot.slane %v5730, 4
        %v5733 = vshll.u32 %v5471, 16
        %v5735 = vrot.slane %v5733, 5
        %v5736 = vor.u32 %v5732, %v5735
        %v5737 = vrot.slane %v5736, 4
        %v5739 = vshll.u32 %v5472, 16
        %v5741 = vrot.slane %v5739, 5
        %v5742 = vsel %vm1760, %v5737, %v5741
        %v5743 = vshrl.u32 %v5472, 16
        %v5745 = vrot.slane %v5743, 4
        %v5746 = vor.u32 %v5745, %v5741
        %v5747 = vrot.slane %v5746, 4
        %v5749 = vshll.u32 %v5473, 16
        %v5751 = vrot.slane %v5749, 5
        %v5752 = vsel %vm1760, %v5747, %v5751
        %v5754 = vshrl.u32 %v5474, 16
        %v5756 = vrot.slane %v5754, 4
        %v5757 = vshll.u32 %v5474, 16
        %v5759 = vrot.slane %v5757, 5
        %v5760 = vor.u32 %v5756, %v5759
        %v5761 = vrot.slane %v5760, 4
        %v5763 = vshll.u32 %v5475, 16
        %v5765 = vrot.slane %v5763, 5
        %v5766 = vsel %vm1760, %v5761, %v5765
        %v5767 = vshrl.u32 %v5475, 16
        %v5769 = vrot.slane %v5767, 4
        %v5770 = vor.u32 %v5769, %v5765
        %v5771 = vrot.slane %v5770, 4
        %v5773 = vshll.u32 %v5476, 16
        %v5775 = vrot.slane %v5773, 5
        %v5776 = vsel %vm1760, %v5771, %v5775
        %v5778 = vshrl.u32 %v5477, 16
        %v5780 = vrot.slane %v5778, 4
        %v5781 = vshll.u32 %v5477, 16
        %v5783 = vrot.slane %v5781, 5
        %v5784 = vor.u32 %v5780, %v5783
        %v5785 = vrot.slane %v5784, 4
        %v5787 = vshll.u32 %v5478, 16
        %v5789 = vrot.slane %v5787, 5
        %v5790 = vsel %vm1760, %v5785, %v5789
        %v5791 = vshrl.u32 %v5478, 16
        %v5793 = vrot.slane %v5791, 4
        %v5794 = vor.u32 %v5793, %v5789
        %v5795 = vrot.slane %v5794, 4
        %v5797 = vshll.u32 %v5479, 16
        %v5799 = vrot.slane %v5797, 5
        %v5800 = vsel %vm1760, %v5795, %v5799
        %v5802 = vshrl.u32 %v5480, 16
        %v5804 = vrot.slane %v5802, 4
        %v5805 = vshll.u32 %v5480, 16
        %v5807 = vrot.slane %v5805, 5
        %v5808 = vor.u32 %v5804, %v5807
        %v5809 = vrot.slane %v5808, 4
        %v5811 = vshll.u32 %v5481, 16
        %v5813 = vrot.slane %v5811, 5
        %v5814 = vsel %vm1760, %v5809, %v5813
        %v5815 = vshrl.u32 %v5481, 16
        %v5817 = vrot.slane %v5815, 4
        %v5818 = vor.u32 %v5817, %v5813
        %v5819 = vrot.slane %v5818, 4
        %v5821 = vshll.u32 %v5482, 16
        %v5823 = vrot.slane %v5821, 5
        %v5824 = vsel %vm1760, %v5819, %v5823
        %v5826 = vshrl.u32 %v5483, 16
        %v5828 = vrot.slane %v5826, 4
        %v5829 = vshll.u32 %v5483, 16
        %v5831 = vrot.slane %v5829, 5
        %v5832 = vor.u32 %v5828, %v5831
        %v5833 = vrot.slane %v5832, 4
        %v5835 = vshll.u32 %v5484, 16
        %v5837 = vrot.slane %v5835, 5
        %v5838 = vsel %vm1760, %v5833, %v5837
        %v5839 = vshrl.u32 %v5484, 16
        %v5841 = vrot.slane %v5839, 4
        %v5842 = vor.u32 %v5841, %v5837
        %v5843 = vrot.slane %v5842, 4
        %v5845 = vshll.u32 %v5485, 16
        %v5847 = vrot.slane %v5845, 5
        %v5848 = vsel %vm1760, %v5843, %v5847
        %v5850 = vshrl.u32 %v5486, 16
        %v5852 = vrot.slane %v5850, 4
        %v5853 = vshll.u32 %v5486, 16
        %v5855 = vrot.slane %v5853, 5
        %v5856 = vor.u32 %v5852, %v5855
        %v5857 = vrot.slane %v5856, 4
        %v5859 = vshll.u32 %v5487, 16
        %v5861 = vrot.slane %v5859, 5
        %v5862 = vsel %vm1760, %v5857, %v5861
        %v5863 = vshrl.u32 %v5487, 16
        %v5865 = vrot.slane %v5863, 4
        %v5866 = vor.u32 %v5865, %v5861
        %v5867 = vrot.slane %v5866, 4
        %v5869 = vshll.u32 %v5488, 16
        %v5871 = vrot.slane %v5869, 5
        %v5872 = vsel %vm1760, %v5867, %v5871
        %s5873 = scalar_lea.vmem [#allocation9], 448
        %v5874 = vld [vmem:[%s5873] sm:$0xf]
        %v5875 = vld [vmem:[%s5873 + $0x4] sm:$0xf]
        %v5876 = vld [vmem:[%s5873 + $0x8] sm:$0xf]
        %v5877 = vld [vmem:[%s5873 + $0xc] sm:$0xf]
        %v5878 = vld [vmem:[%s5873 + $0x10] sm:$0xf]
        %v5879 = vld [vmem:[%s5873 + $0x14] sm:$0xf]
        %v5880 = vld [vmem:[%s5873 + $0x18] sm:$0xf]
        %v5881 = vld [vmem:[%s5873 + $0x1c] sm:$0xf]
        %v5882 = vld [vmem:[%s5873 + $0x20] sm:$0xf]
        %v5883 = vld [vmem:[%s5873 + $0x24] sm:$0xf]
        %v5884 = vld [vmem:[%s5873 + $0x28] sm:$0xf]
        %v5885 = vld [vmem:[%s5873 + $0x2c] sm:$0xf]
        %v5886 = vld [vmem:[%s5873 + $0x30] sm:$0xf]
        %v5887 = vld [vmem:[%s5873 + $0x34] sm:$0xf]
        %v5888 = vld [vmem:[%s5873 + $0x38] sm:$0xf]
        %v5889 = vld [vmem:[%s5873 + $0x3c] sm:$0xf]
        %v5890 = vunpack.c.l.b16 %v5502
        %v5891 = vunpack.c.l.b16 %v5512
        %v5892 = vunpack.c.l.b16 %v5526
        %v5893 = vunpack.c.l.b16 %v5536
        %v5894 = vunpack.c.l.b16 %v5550
        %v5895 = vunpack.c.l.b16 %v5560
        %v5896 = vunpack.c.l.b16 %v5574
        %v5897 = vunpack.c.l.b16 %v5584
        %v5898 = vunpack.c.l.b16 %v5598
        %v5899 = vunpack.c.l.b16 %v5608
        %v5900 = vunpack.c.l.b16 %v5622
        %v5901 = vunpack.c.l.b16 %v5632
        %v5902 = vunpack.c.l.b16 %v5646
        %v5903 = vunpack.c.l.b16 %v5656
        %v5904 = vunpack.c.l.b16 %v5670
        %v5905 = vunpack.c.l.b16 %v5680
        %v5906 = vunpack.c.l.b16 %v5694
        %v5907 = vunpack.c.l.b16 %v5704
        %v5908 = vunpack.c.l.b16 %v5718
        %v5909 = vunpack.c.l.b16 %v5728
        %v5910 = vunpack.c.l.b16 %v5742
        %v5911 = vunpack.c.l.b16 %v5752
        %v5912 = vunpack.c.l.b16 %v5766
        %v5913 = vunpack.c.l.b16 %v5776
        %v5914 = vunpack.c.l.b16 %v5790
        %v5915 = vunpack.c.l.b16 %v5800
        %v5916 = vunpack.c.l.b16 %v5814
        %v5917 = vunpack.c.l.b16 %v5824
        %v5918 = vunpack.c.l.b16 %v5838
        %v5919 = vunpack.c.l.b16 %v5848
        %v5920 = vunpack.c.l.b16 %v5862
        %v5921 = vunpack.c.l.b16 %v5872
        %v5922 = vpack.c.b16 %v5891, %v5890
        %v5923 = vpack.c.b16 %v5893, %v5892
        %v5924 = vpack.c.b16 %v5895, %v5894
        %v5925 = vpack.c.b16 %v5897, %v5896
        %v5926 = vpack.c.b16 %v5899, %v5898
        %v5927 = vpack.c.b16 %v5901, %v5900
        %v5928 = vpack.c.b16 %v5903, %v5902
        %v5929 = vpack.c.b16 %v5905, %v5904
        %v5930 = vpack.c.b16 %v5907, %v5906
        %v5931 = vpack.c.b16 %v5909, %v5908
        %v5932 = vpack.c.b16 %v5911, %v5910
        %v5933 = vpack.c.b16 %v5913, %v5912
        %v5934 = vpack.c.b16 %v5915, %v5914
        %v5935 = vpack.c.b16 %v5917, %v5916
        %v5936 = vpack.c.b16 %v5919, %v5918
        %v5937 = vpack.c.b16 %v5921, %v5920
        %v5970 = vunpack.c.l.b16 %v5874
        %v5971 = vunpack.c.l.b16 %v5875
        %v5972 = vunpack.c.l.b16 %v5876
        %v5973 = vunpack.c.l.b16 %v5877
        %v5974 = vunpack.c.l.b16 %v5878
        %v5975 = vunpack.c.l.b16 %v5879
        %v5976 = vunpack.c.l.b16 %v5880
        %v5977 = vunpack.c.l.b16 %v5881
        %v5978 = vunpack.c.l.b16 %v5882
        %v5979 = vunpack.c.l.b16 %v5883
        %v5980 = vunpack.c.l.b16 %v5884
        %v5981 = vunpack.c.l.b16 %v5885
        %v5982 = vunpack.c.l.b16 %v5886
        %v5983 = vunpack.c.l.b16 %v5887
        %v5984 = vunpack.c.l.b16 %v5888
        %v5985 = vunpack.c.l.b16 %v5889
        %v5986 = vpack.c.b16 %v5971, %v5970
        %v5987 = vpack.c.b16 %v5973, %v5972
        %v5988 = vpack.c.b16 %v5975, %v5974
        %v5989 = vpack.c.b16 %v5977, %v5976
        %v5990 = vpack.c.b16 %v5979, %v5978
        %v5991 = vpack.c.b16 %v5981, %v5980
        %v5992 = vpack.c.b16 %v5983, %v5982
        %v5993 = vpack.c.b16 %v5985, %v5984
        %6002 = vmatprep.subr.bf16.mxu0 0
        %6003 = vmatpush1.bf16.msra.mxu0 %v5986
        %6004 = vmatprep.subr.bf16.mxu0 0
        %6005 = vmatpush1.bf16.msra.mxu0 %v5987
        %6006 = vmatprep.subr.bf16.mxu0 0
        %6007 = vmatpush1.bf16.msra.mxu0 %v5988
        %6008 = vmatprep.subr.bf16.mxu0 0
        %6009 = vmatpush1.bf16.msra.mxu0 %v5989
        %6010 = vmatprep.subr.bf16.mxu0 0
        %6011 = vmatpush1.bf16.msra.mxu0 %v5990
        %6012 = vmatprep.subr.bf16.mxu0 0
        %6013 = vmatpush1.bf16.msra.mxu0 %v5991
        %6014 = vmatprep.subr.bf16.mxu0 0
        %6015 = vmatpush1.bf16.msra.mxu0 %v5992
        %6016 = vmatprep.subr.bf16.mxu0 0
        %6017 = vmatpush1.bf16.msra.mxu0 %v5993
        %6018 = vmatprep.subr.bf16.mxu0 0
        %6019 = vmatpush1.bf16.msra.mxu0 0
        %6020 = vmatprep.subr.bf16.mxu0 0
        %6021 = vmatpush1.bf16.msra.mxu0 0
        %6022 = vmatprep.subr.bf16.mxu0 0
        %6023 = vmatpush1.bf16.msra.mxu0 0
        %6024 = vmatprep.subr.bf16.mxu0 0
        %6025 = vmatpush1.bf16.msra.mxu0 0
        %6026 = vmatprep.subr.bf16.mxu0 0
        %6027 = vmatpush1.bf16.msra.mxu0 0
        %6028 = vmatprep.subr.bf16.mxu0 0
        %6029 = vmatpush1.bf16.msra.mxu0 0
        %6030 = vmatprep.subr.bf16.mxu0 0
        %6031 = vmatpush1.bf16.msra.mxu0 0
        %6032 = vmatprep.subr.bf16.mxu0 0
        %6033 = vmatpush1.bf16.msra.mxu0 0
        %6034 = vmatprep.mubr.bf16.mxu0 0
        %6035 = vmatmul.mubr.bf16.gmra.mrb[0].mxu0 %v5922
        %v6036 = vpop.f32.mrb[0].mxu0
        %v6037 = vadd.f32 0.0, %v6036
        %v6038 = vpop.f32.mrb[0].mxu0
        %v6039 = vpop.f32.mrb[0].mxu0
        %v6040 = vadd.f32 0.0, %v6039
        %v6041 = vpop.f32.mrb[0].mxu0
        %6042 = vmatprep.mubr.bf16.mxu0 0
        %6043 = vmatmul.mubr.bf16.gmra.mrb[0].mxu0 %v5923
        %v6044 = vpop.f32.mrb[0].mxu0
        %v6045 = vadd.f32 0.0, %v6044
        %v6046 = vpop.f32.mrb[0].mxu0
        %v6047 = vpop.f32.mrb[0].mxu0
        %v6048 = vadd.f32 0.0, %v6047
        %v6049 = vpop.f32.mrb[0].mxu0
        %6050 = vmatprep.mubr.bf16.mxu0 0
        %6051 = vmatmul.mubr.bf16.gmra.mrb[0].mxu0 %v5924
        %v6052 = vpop.f32.mrb[0].mxu0
        %v6053 = vadd.f32 0.0, %v6052
        %v6054 = vpop.f32.mrb[0].mxu0
        %v6055 = vpop.f32.mrb[0].mxu0
        %v6056 = vadd.f32 0.0, %v6055
        %v6057 = vpop.f32.mrb[0].mxu0
        %6058 = vmatprep.mubr.bf16.mxu0 0
        %6059 = vmatmul.mubr.bf16.gmra.mrb[0].mxu0 %v5925
        %v6060 = vpop.f32.mrb[0].mxu0
        %v6061 = vadd.f32 0.0, %v6060
        %v6062 = vpop.f32.mrb[0].mxu0
        %v6063 = vpop.f32.mrb[0].mxu0
        %v6064 = vadd.f32 0.0, %v6063
        %v6065 = vpop.f32.mrb[0].mxu0
        %6066 = vmatprep.mubr.bf16.mxu0 0
        %6067 = vmatmul.mubr.bf16.gmra.mrb[0].mxu0 %v5926
        %v6068 = vpop.f32.mrb[0].mxu0
        %v6069 = vadd.f32 0.0, %v6068
        %v6070 = vpop.f32.mrb[0].mxu0
        %v6071 = vpop.f32.mrb[0].mxu0
        %v6072 = vadd.f32 0.0, %v6071
        %v6073 = vpop.f32.mrb[0].mxu0
        %6074 = vmatprep.mubr.bf16.mxu0 0
        %6075 = vmatmul.mubr.bf16.gmra.mrb[0].mxu0 %v5927
        %v6076 = vpop.f32.mrb[0].mxu0
        %v6077 = vadd.f32 0.0, %v6076
        %v6078 = vpop.f32.mrb[0].mxu0
        %v6079 = vpop.f32.mrb[0].mxu0
        %v6080 = vadd.f32 0.0, %v6079
        %v6081 = vpop.f32.mrb[0].mxu0
        %6082 = vmatprep.mubr.bf16.mxu0 0
        %6083 = vmatmul.mubr.bf16.gmra.mrb[0].mxu0 %v5928
        %v6084 = vpop.f32.mrb[0].mxu0
        %v6085 = vadd.f32 0.0, %v6084
        %v6086 = vpop.f32.mrb[0].mxu0
        %v6087 = vpop.f32.mrb[0].mxu0
        %v6088 = vadd.f32 0.0, %v6087
        %v6089 = vpop.f32.mrb[0].mxu0
        %6090 = vmatprep.mubr.bf16.mxu0 0
        %6091 = vmatmul.mubr.bf16.gmra.mrb[0].mxu0 %v5929
        %v6092 = vpop.f32.mrb[0].mxu0
        %v6093 = vadd.f32 0.0, %v6092
        %v6094 = vpop.f32.mrb[0].mxu0
        %v6095 = vpop.f32.mrb[0].mxu0
        %v6096 = vadd.f32 0.0, %v6095
        %v6097 = vpop.f32.mrb[0].mxu0
        %6098 = vmatprep.mubr.bf16.mxu0 0
        %6099 = vmatmul.mubr.bf16.gmra.mrb[0].mxu0 %v5930
        %v6100 = vpop.f32.mrb[0].mxu0
        %v6101 = vadd.f32 0.0, %v6100
        %v6102 = vpop.f32.mrb[0].mxu0
        %v6103 = vpop.f32.mrb[0].mxu0
        %v6104 = vadd.f32 0.0, %v6103
        %v6105 = vpop.f32.mrb[0].mxu0
        %6106 = vmatprep.mubr.bf16.mxu0 0
        %6107 = vmatmul.mubr.bf16.gmra.mrb[0].mxu0 %v5931
        %v6108 = vpop.f32.mrb[0].mxu0
        %v6109 = vadd.f32 0.0, %v6108
        %v6110 = vpop.f32.mrb[0].mxu0
        %v6111 = vpop.f32.mrb[0].mxu0
        %v6112 = vadd.f32 0.0, %v6111
        %v6113 = vpop.f32.mrb[0].mxu0
        %6114 = vmatprep.mubr.bf16.mxu0 0
        %6115 = vmatmul.mubr.bf16.gmra.mrb[0].mxu0 %v5932
        %v6116 = vpop.f32.mrb[0].mxu0
        %v6117 = vadd.f32 0.0, %v6116
        %v6118 = vpop.f32.mrb[0].mxu0
        %v6119 = vpop.f32.mrb[0].mxu0
        %v6120 = vadd.f32 0.0, %v6119
        %v6121 = vpop.f32.mrb[0].mxu0
        %6122 = vmatprep.mubr.bf16.mxu0 0
        %6123 = vmatmul.mubr.bf16.gmra.mrb[0].mxu0 %v5933
        %v6124 = vpop.f32.mrb[0].mxu0
        %v6125 = vadd.f32 0.0, %v6124
        %v6126 = vpop.f32.mrb[0].mxu0
        %v6127 = vpop.f32.mrb[0].mxu0
        %v6128 = vadd.f32 0.0, %v6127
        %v6129 = vpop.f32.mrb[0].mxu0
        %6130 = vmatprep.mubr.bf16.mxu0 0
        %6131 = vmatmul.mubr.bf16.gmra.mrb[0].mxu0 %v5934
        %v6132 = vpop.f32.mrb[0].mxu0
        %v6133 = vadd.f32 0.0, %v6132
        %v6134 = vpop.f32.mrb[0].mxu0
        %v6135 = vpop.f32.mrb[0].mxu0
        %v6136 = vadd.f32 0.0, %v6135
        %v6137 = vpop.f32.mrb[0].mxu0
        %6138 = vmatprep.mubr.bf16.mxu0 0
        %6139 = vmatmul.mubr.bf16.gmra.mrb[0].mxu0 %v5935
        %v6140 = vpop.f32.mrb[0].mxu0
        %v6141 = vadd.f32 0.0, %v6140
        %v6142 = vpop.f32.mrb[0].mxu0
        %v6143 = vpop.f32.mrb[0].mxu0
        %v6144 = vadd.f32 0.0, %v6143
        %v6145 = vpop.f32.mrb[0].mxu0
        %6146 = vmatprep.mubr.bf16.mxu0 0
        %6147 = vmatmul.mubr.bf16.gmra.mrb[0].mxu0 %v5936
        %v6148 = vpop.f32.mrb[0].mxu0
        %v6149 = vadd.f32 0.0, %v6148
        %v6150 = vpop.f32.mrb[0].mxu0
        %v6151 = vpop.f32.mrb[0].mxu0
        %v6152 = vadd.f32 0.0, %v6151
        %v6153 = vpop.f32.mrb[0].mxu0
        %6154 = vmatprep.mubr.bf16.mxu0 0
        %6155 = vmatmul.mubr.bf16.gmra.mrb[0].mxu0 %v5937
        %v6156 = vpop.f32.mrb[0].mxu0
        %v6157 = vadd.f32 0.0, %v6156
        %v6158 = vpop.f32.mrb[0].mxu0
        %v6159 = vpop.f32.mrb[0].mxu0
        %v6160 = vadd.f32 0.0, %v6159
        %v6161 = vpop.f32.mrb[0].mxu0
        %6162 = vdwg.mxu0
        %v6163 = vld [vmem:[#allocation3] sm:$0xff]
        %v6164 = vld [vmem:[#allocation3 + $0x8] sm:$0xff]
        %v6165 = vld [vmem:[#allocation3 + $0x10] sm:$0xff]
        %v6166 = vld [vmem:[#allocation3 + $0x18] sm:$0xff]
        %v6167 = vld [vmem:[#allocation3 + $0x20] sm:$0xff]
        %v6168 = vld [vmem:[#allocation3 + $0x28] sm:$0xff]
        %v6169 = vld [vmem:[#allocation3 + $0x30] sm:$0xff]
        %v6170 = vld [vmem:[#allocation3 + $0x38] sm:$0xff]
        %v6171 = vld [vmem:[#allocation3 + $0x40] sm:$0xff]
        %v6172 = vld [vmem:[#allocation3 + $0x48] sm:$0xff]
        %v6173 = vld [vmem:[#allocation3 + $0x50] sm:$0xff]
        %v6174 = vld [vmem:[#allocation3 + $0x58] sm:$0xff]
        %v6175 = vld [vmem:[#allocation3 + $0x60] sm:$0xff]
        %v6176 = vld [vmem:[#allocation3 + $0x68] sm:$0xff]
        %v6177 = vld [vmem:[#allocation3 + $0x70] sm:$0xff]
        %v6178 = vld [vmem:[#allocation3 + $0x78] sm:$0xff]
        %v6179 = vld [vmem:[#allocation3 + $0x80] sm:$0xff]
        %v6180 = vld [vmem:[#allocation3 + $0x88] sm:$0xff]
        %v6181 = vld [vmem:[#allocation3 + $0x90] sm:$0xff]
        %v6182 = vld [vmem:[#allocation3 + $0x98] sm:$0xff]
        %v6183 = vld [vmem:[#allocation3 + $0xa0] sm:$0xff]
        %v6184 = vld [vmem:[#allocation3 + $0xa8] sm:$0xff]
        %v6185 = vld [vmem:[#allocation3 + $0xb0] sm:$0xff]
        %v6186 = vld [vmem:[#allocation3 + $0xb8] sm:$0xff]
        %v6187 = vld [vmem:[#allocation3 + $0xc0] sm:$0xff]
        %v6188 = vld [vmem:[#allocation3 + $0xc8] sm:$0xff]
        %v6189 = vld [vmem:[#allocation3 + $0xd0] sm:$0xff]
        %v6190 = vld [vmem:[#allocation3 + $0xd8] sm:$0xff]
        %v6191 = vld [vmem:[#allocation3 + $0xe0] sm:$0xff]
        %v6192 = vld [vmem:[#allocation3 + $0xe8] sm:$0xff]
        %v6193 = vld [vmem:[#allocation3 + $0xf0] sm:$0xff]
        %v6194 = vld [vmem:[#allocation3 + $0xf8] sm:$0xff]
        %v6195 = vadd.f32 %v6163, %v6037
        %v6196 = vadd.f32 %v6164, %v6040
        %v6197 = vadd.f32 %v6165, %v6045
        %v6198 = vadd.f32 %v6166, %v6048
        %v6199 = vadd.f32 %v6167, %v6053
        %v6200 = vadd.f32 %v6168, %v6056
        %v6201 = vadd.f32 %v6169, %v6061
        %v6202 = vadd.f32 %v6170, %v6064
        %v6203 = vadd.f32 %v6171, %v6069
        %v6204 = vadd.f32 %v6172, %v6072
        %v6205 = vadd.f32 %v6173, %v6077
        %v6206 = vadd.f32 %v6174, %v6080
        %v6207 = vadd.f32 %v6175, %v6085
        %v6208 = vadd.f32 %v6176, %v6088
        %v6209 = vadd.f32 %v6177, %v6093
        %v6210 = vadd.f32 %v6178, %v6096
        %v6211 = vadd.f32 %v6179, %v6101
        %v6212 = vadd.f32 %v6180, %v6104
        %v6213 = vadd.f32 %v6181, %v6109
        %v6214 = vadd.f32 %v6182, %v6112
        %v6215 = vadd.f32 %v6183, %v6117
        %v6216 = vadd.f32 %v6184, %v6120
        %v6217 = vadd.f32 %v6185, %v6125
        %v6218 = vadd.f32 %v6186, %v6128
        %v6219 = vadd.f32 %v6187, %v6133
        %v6220 = vadd.f32 %v6188, %v6136
        %v6221 = vadd.f32 %v6189, %v6141
        %v6222 = vadd.f32 %v6190, %v6144
        %v6223 = vadd.f32 %v6191, %v6149
        %v6224 = vadd.f32 %v6192, %v6152
        %v6225 = vadd.f32 %v6193, %v6157
        %v6226 = vadd.f32 %v6194, %v6160
        %6227 = vst [vmem:[#allocation3] sm:$0xff] %v6195
        %6228 = vst [vmem:[#allocation3 + $0x8] sm:$0xff] %v6196
        %6229 = vst [vmem:[#allocation3 + $0x10] sm:$0xff] %v6197
        %6230 = vst [vmem:[#allocation3 + $0x18] sm:$0xff] %v6198
        %6231 = vst [vmem:[#allocation3 + $0x20] sm:$0xff] %v6199
        %6232 = vst [vmem:[#allocation3 + $0x28] sm:$0xff] %v6200
        %6233 = vst [vmem:[#allocation3 + $0x30] sm:$0xff] %v6201
        %6234 = vst [vmem:[#allocation3 + $0x38] sm:$0xff] %v6202
        %6235 = vst [vmem:[#allocation3 + $0x40] sm:$0xff] %v6203
        %6236 = vst [vmem:[#allocation3 + $0x48] sm:$0xff] %v6204
        %6237 = vst [vmem:[#allocation3 + $0x50] sm:$0xff] %v6205
        %6238 = vst [vmem:[#allocation3 + $0x58] sm:$0xff] %v6206
        %6239 = vst [vmem:[#allocation3 + $0x60] sm:$0xff] %v6207
        %6240 = vst [vmem:[#allocation3 + $0x68] sm:$0xff] %v6208
        %6241 = vst [vmem:[#allocation3 + $0x70] sm:$0xff] %v6209
        %6242 = vst [vmem:[#allocation3 + $0x78] sm:$0xff] %v6210
        %6243 = vst [vmem:[#allocation3 + $0x80] sm:$0xff] %v6211
        %6244 = vst [vmem:[#allocation3 + $0x88] sm:$0xff] %v6212
        %6245 = vst [vmem:[#allocation3 + $0x90] sm:$0xff] %v6213
        %6246 = vst [vmem:[#allocation3 + $0x98] sm:$0xff] %v6214
        %6247 = vst [vmem:[#allocation3 + $0xa0] sm:$0xff] %v6215
        %6248 = vst [vmem:[#allocation3 + $0xa8] sm:$0xff] %v6216
        %6249 = vst [vmem:[#allocation3 + $0xb0] sm:$0xff] %v6217
        %6250 = vst [vmem:[#allocation3 + $0xb8] sm:$0xff] %v6218
        %6251 = vst [vmem:[#allocation3 + $0xc0] sm:$0xff] %v6219
        %6252 = vst [vmem:[#allocation3 + $0xc8] sm:$0xff] %v6220
        %6253 = vst [vmem:[#allocation3 + $0xd0] sm:$0xff] %v6221
        %6254 = vst [vmem:[#allocation3 + $0xd8] sm:$0xff] %v6222
        %6255 = vst [vmem:[#allocation3 + $0xe0] sm:$0xff] %v6223
        %6256 = vst [vmem:[#allocation3 + $0xe8] sm:$0xff] %v6224
        %6257 = vst [vmem:[#allocation3 + $0xf0] sm:$0xff] %v6225
        %6258 = vst [vmem:[#allocation3 + $0xf8] sm:$0xff] %v6226
        %v6259 = vld [vmem:[%s4990] sm:$0xe]
        %v6260 = vld [vmem:[%s4990 + $0x4] sm:$0xf]
        %v6261 = vld [vmem:[%s4990 + $0x8] sm:$0x1]
        %v6262 = vld [vmem:[%s4990 + $0xc] sm:$0xe]
        %v6263 = vld [vmem:[%s4990 + $0x10] sm:$0xf]
        %v6264 = vld [vmem:[%s4990 + $0x14] sm:$0x1]
        %v6265 = vld [vmem:[%s4990 + $0x18] sm:$0xe]
        %v6266 = vld [vmem:[%s4990 + $0x1c] sm:$0xf]
        %v6267 = vld [vmem:[%s4990 + $0x20] sm:$0x1]
        %v6268 = vld [vmem:[%s4990 + $0x24] sm:$0xe]
        %v6269 = vld [vmem:[%s4990 + $0x28] sm:$0xf]
        %v6270 = vld [vmem:[%s4990 + $0x2c] sm:$0x1]
        %v6271 = vld [vmem:[%s4990 + $0x30] sm:$0xe]
        %v6272 = vld [vmem:[%s4990 + $0x34] sm:$0xf]
        %v6273 = vld [vmem:[%s4990 + $0x38] sm:$0x1]
        %v6274 = vld [vmem:[%s4990 + $0x3c] sm:$0xe]
        %v6275 = vld [vmem:[%s4990 + $0x40] sm:$0xf]
        %v6276 = vld [vmem:[%s4990 + $0x44] sm:$0x1]
        %v6277 = vld [vmem:[%s4990 + $0x48] sm:$0xe]
        %v6278 = vld [vmem:[%s4990 + $0x4c] sm:$0xf]
        %v6279 = vld [vmem:[%s4990 + $0x50] sm:$0x1]
        %v6280 = vld [vmem:[%s4990 + $0x54] sm:$0xe]
        %v6281 = vld [vmem:[%s4990 + $0x58] sm:$0xf]
        %v6282 = vld [vmem:[%s4990 + $0x5c] sm:$0x1]
        %v6283 = vld [vmem:[%s4990 + $0x60] sm:$0xe]
        %v6284 = vld [vmem:[%s4990 + $0x64] sm:$0xf]
        %v6285 = vld [vmem:[%s4990 + $0x68] sm:$0x1]
        %v6286 = vld [vmem:[%s4990 + $0x6c] sm:$0xe]
        %v6287 = vld [vmem:[%s4990 + $0x70] sm:$0xf]
        %v6288 = vld [vmem:[%s4990 + $0x74] sm:$0x1]
        %v6289 = vld [vmem:[%s4990 + $0x78] sm:$0xe]
        %v6290 = vld [vmem:[%s4990 + $0x7c] sm:$0xf]
        %v6291 = vld [vmem:[%s4990 + $0x80] sm:$0x1]
        %v6292 = vld [vmem:[%s4990 + $0x84] sm:$0xe]
        %v6293 = vld [vmem:[%s4990 + $0x88] sm:$0xf]
        %v6294 = vld [vmem:[%s4990 + $0x8c] sm:$0x1]
        %v6295 = vld [vmem:[%s4990 + $0x90] sm:$0xe]
        %v6296 = vld [vmem:[%s4990 + $0x94] sm:$0xf]
        %v6297 = vld [vmem:[%s4990 + $0x98] sm:$0x1]
        %v6298 = vld [vmem:[%s4990 + $0x9c] sm:$0xe]
        %v6299 = vld [vmem:[%s4990 + $0xa0] sm:$0xf]
        %v6300 = vld [vmem:[%s4990 + $0xa4] sm:$0x1]
        %v6301 = vld [vmem:[%s4990 + $0xa8] sm:$0xe]
        %v6302 = vld [vmem:[%s4990 + $0xac] sm:$0xf]
        %v6303 = vld [vmem:[%s4990 + $0xb0] sm:$0x1]
        %v6304 = vld [vmem:[%s4990 + $0xb4] sm:$0xe]
        %v6305 = vld [vmem:[%s4990 + $0xb8] sm:$0xf]
        %v6306 = vld [vmem:[%s4990 + $0xbc] sm:$0x1]
        %v6355 = vrot.slane %v6259, 5
        %v6356 = vrot.slane %v6355, 4
        %v6357 = vrot.slane %v6260, 5
        %v6358 = vsel %vm2629, %v6356, %v6357
        %v6359 = vrot.slane %v6357, 4
        %v6360 = vrot.slane %v6261, 5
        %v6361 = vsel %vm2629, %v6359, %v6360
        %v6362 = vrot.slane %v6262, 5
        %v6363 = vrot.slane %v6362, 4
        %v6364 = vrot.slane %v6263, 5
        %v6365 = vsel %vm2629, %v6363, %v6364
        %v6366 = vrot.slane %v6364, 4
        %v6367 = vrot.slane %v6264, 5
        %v6368 = vsel %vm2629, %v6366, %v6367
        %v6369 = vrot.slane %v6265, 5
        %v6370 = vrot.slane %v6369, 4
        %v6371 = vrot.slane %v6266, 5
        %v6372 = vsel %vm2629, %v6370, %v6371
        %v6373 = vrot.slane %v6371, 4
        %v6374 = vrot.slane %v6267, 5
        %v6375 = vsel %vm2629, %v6373, %v6374
        %v6376 = vrot.slane %v6268, 5
        %v6377 = vrot.slane %v6376, 4
        %v6378 = vrot.slane %v6269, 5
        %v6379 = vsel %vm2629, %v6377, %v6378
        %v6380 = vrot.slane %v6378, 4
        %v6381 = vrot.slane %v6270, 5
        %v6382 = vsel %vm2629, %v6380, %v6381
        %v6383 = vrot.slane %v6271, 5
        %v6384 = vrot.slane %v6383, 4
        %v6385 = vrot.slane %v6272, 5
        %v6386 = vsel %vm2629, %v6384, %v6385
        %v6387 = vrot.slane %v6385, 4
        %v6388 = vrot.slane %v6273, 5
        %v6389 = vsel %vm2629, %v6387, %v6388
        %v6390 = vrot.slane %v6274, 5
        %v6391 = vrot.slane %v6390, 4
        %v6392 = vrot.slane %v6275, 5
        %v6393 = vsel %vm2629, %v6391, %v6392
        %v6394 = vrot.slane %v6392, 4
        %v6395 = vrot.slane %v6276, 5
        %v6396 = vsel %vm2629, %v6394, %v6395
        %v6397 = vrot.slane %v6277, 5
        %v6398 = vrot.slane %v6397, 4
        %v6399 = vrot.slane %v6278, 5
        %v6400 = vsel %vm2629, %v6398, %v6399
        %v6401 = vrot.slane %v6399, 4
        %v6402 = vrot.slane %v6279, 5
        %v6403 = vsel %vm2629, %v6401, %v6402
        %v6404 = vrot.slane %v6280, 5
        %v6405 = vrot.slane %v6404, 4
        %v6406 = vrot.slane %v6281, 5
        %v6407 = vsel %vm2629, %v6405, %v6406
        %v6408 = vrot.slane %v6406, 4
        %v6409 = vrot.slane %v6282, 5
        %v6410 = vsel %vm2629, %v6408, %v6409
        %v6411 = vrot.slane %v6283, 5
        %v6412 = vrot.slane %v6411, 4
        %v6413 = vrot.slane %v6284, 5
        %v6414 = vsel %vm2629, %v6412, %v6413
        %v6415 = vrot.slane %v6413, 4
        %v6416 = vrot.slane %v6285, 5
        %v6417 = vsel %vm2629, %v6415, %v6416
        %v6418 = vrot.slane %v6286, 5
        %v6419 = vrot.slane %v6418, 4
        %v6420 = vrot.slane %v6287, 5
        %v6421 = vsel %vm2629, %v6419, %v6420
        %v6422 = vrot.slane %v6420, 4
        %v6423 = vrot.slane %v6288, 5
        %v6424 = vsel %vm2629, %v6422, %v6423
        %v6425 = vrot.slane %v6289, 5
        %v6426 = vrot.slane %v6425, 4
        %v6427 = vrot.slane %v6290, 5
        %v6428 = vsel %vm2629, %v6426, %v6427
        %v6429 = vrot.slane %v6427, 4
        %v6430 = vrot.slane %v6291, 5
        %v6431 = vsel %vm2629, %v6429, %v6430
        %v6432 = vrot.slane %v6292, 5
        %v6433 = vrot.slane %v6432, 4
        %v6434 = vrot.slane %v6293, 5
        %v6435 = vsel %vm2629, %v6433, %v6434
        %v6436 = vrot.slane %v6434, 4
        %v6437 = vrot.slane %v6294, 5
        %v6438 = vsel %vm2629, %v6436, %v6437
        %v6439 = vrot.slane %v6295, 5
        %v6440 = vrot.slane %v6439, 4
        %v6441 = vrot.slane %v6296, 5
        %v6442 = vsel %vm2629, %v6440, %v6441
        %v6443 = vrot.slane %v6441, 4
        %v6444 = vrot.slane %v6297, 5
        %v6445 = vsel %vm2629, %v6443, %v6444
        %v6446 = vrot.slane %v6298, 5
        %v6447 = vrot.slane %v6446, 4
        %v6448 = vrot.slane %v6299, 5
        %v6449 = vsel %vm2629, %v6447, %v6448
        %v6450 = vrot.slane %v6448, 4
        %v6451 = vrot.slane %v6300, 5
        %v6452 = vsel %vm2629, %v6450, %v6451
        %v6453 = vrot.slane %v6301, 5
        %v6454 = vrot.slane %v6453, 4
        %v6455 = vrot.slane %v6302, 5
        %v6456 = vsel %vm2629, %v6454, %v6455
        %v6457 = vrot.slane %v6455, 4
        %v6458 = vrot.slane %v6303, 5
        %v6459 = vsel %vm2629, %v6457, %v6458
        %v6460 = vrot.slane %v6304, 5
        %v6461 = vrot.slane %v6460, 4
        %v6462 = vrot.slane %v6305, 5
        %v6463 = vsel %vm2629, %v6461, %v6462
        %v6464 = vrot.slane %v6462, 4
        %v6465 = vrot.slane %v6306, 5
        %v6466 = vsel %vm2629, %v6464, %v6465
        %s6467 = scalar_lea.vmem [#allocation9], 512
        %v6468 = vld [vmem:[%s6467] sm:$0xf]
        %v6469 = vld [vmem:[%s6467 + $0x4] sm:$0xf]
        %v6470 = vld [vmem:[%s6467 + $0x8] sm:$0xf]
        %v6471 = vld [vmem:[%s6467 + $0xc] sm:$0xf]
        %v6472 = vld [vmem:[%s6467 + $0x10] sm:$0xf]
        %v6473 = vld [vmem:[%s6467 + $0x14] sm:$0xf]
        %v6474 = vld [vmem:[%s6467 + $0x18] sm:$0xf]
        %v6475 = vld [vmem:[%s6467 + $0x1c] sm:$0xf]
        %v6476 = vld [vmem:[%s6467 + $0x20] sm:$0xf]
        %v6477 = vld [vmem:[%s6467 + $0x24] sm:$0xf]
        %v6478 = vld [vmem:[%s6467 + $0x28] sm:$0xf]
        %v6479 = vld [vmem:[%s6467 + $0x2c] sm:$0xf]
        %v6480 = vld [vmem:[%s6467 + $0x30] sm:$0xf]
        %v6481 = vld [vmem:[%s6467 + $0x34] sm:$0xf]
        %v6482 = vld [vmem:[%s6467 + $0x38] sm:$0xf]
        %v6483 = vld [vmem:[%s6467 + $0x3c] sm:$0xf]
        %v6484 = vunpack.c.l.b16 %v6358
        %v6485 = vunpack.c.l.b16 %v6361
        %v6486 = vunpack.c.l.b16 %v6365
        %v6487 = vunpack.c.l.b16 %v6368
        %v6488 = vunpack.c.l.b16 %v6372
        %v6489 = vunpack.c.l.b16 %v6375
        %v6490 = vunpack.c.l.b16 %v6379
        %v6491 = vunpack.c.l.b16 %v6382
        %v6492 = vunpack.c.l.b16 %v6386
        %v6493 = vunpack.c.l.b16 %v6389
        %v6494 = vunpack.c.l.b16 %v6393
        %v6495 = vunpack.c.l.b16 %v6396
        %v6496 = vunpack.c.l.b16 %v6400
        %v6497 = vunpack.c.l.b16 %v6403
        %v6498 = vunpack.c.l.b16 %v6407
        %v6499 = vunpack.c.l.b16 %v6410
        %v6500 = vunpack.c.l.b16 %v6414
        %v6501 = vunpack.c.l.b16 %v6417
        %v6502 = vunpack.c.l.b16 %v6421
        %v6503 = vunpack.c.l.b16 %v6424
        %v6504 = vunpack.c.l.b16 %v6428
        %v6505 = vunpack.c.l.b16 %v6431
        %v6506 = vunpack.c.l.b16 %v6435
        %v6507 = vunpack.c.l.b16 %v6438
        %v6508 = vunpack.c.l.b16 %v6442
        %v6509 = vunpack.c.l.b16 %v6445
        %v6510 = vunpack.c.l.b16 %v6449
        %v6511 = vunpack.c.l.b16 %v6452
        %v6512 = vunpack.c.l.b16 %v6456
        %v6513 = vunpack.c.l.b16 %v6459
        %v6514 = vunpack.c.l.b16 %v6463
        %v6515 = vunpack.c.l.b16 %v6466
        %v6516 = vpack.c.b16 %v6485, %v6484
        %v6517 = vpack.c.b16 %v6487, %v6486
        %v6518 = vpack.c.b16 %v6489, %v6488
        %v6519 = vpack.c.b16 %v6491, %v6490
        %v6520 = vpack.c.b16 %v6493, %v6492
        %v6521 = vpack.c.b16 %v6495, %v6494
        %v6522 = vpack.c.b16 %v6497, %v6496
        %v6523 = vpack.c.b16 %v6499, %v6498
        %v6524 = vpack.c.b16 %v6501, %v6500
        %v6525 = vpack.c.b16 %v6503, %v6502
        %v6526 = vpack.c.b16 %v6505, %v6504
        %v6527 = vpack.c.b16 %v6507, %v6506
        %v6528 = vpack.c.b16 %v6509, %v6508
        %v6529 = vpack.c.b16 %v6511, %v6510
        %v6530 = vpack.c.b16 %v6513, %v6512
        %v6531 = vpack.c.b16 %v6515, %v6514
        %v6564 = vunpack.c.l.b16 %v6468
        %v6565 = vunpack.c.l.b16 %v6469
        %v6566 = vunpack.c.l.b16 %v6470
        %v6567 = vunpack.c.l.b16 %v6471
        %v6568 = vunpack.c.l.b16 %v6472
        %v6569 = vunpack.c.l.b16 %v6473
        %v6570 = vunpack.c.l.b16 %v6474
        %v6571 = vunpack.c.l.b16 %v6475
        %v6572 = vunpack.c.l.b16 %v6476
        %v6573 = vunpack.c.l.b16 %v6477
        %v6574 = vunpack.c.l.b16 %v6478
        %v6575 = vunpack.c.l.b16 %v6479
        %v6576 = vunpack.c.l.b16 %v6480
        %v6577 = vunpack.c.l.b16 %v6481
        %v6578 = vunpack.c.l.b16 %v6482
        %v6579 = vunpack.c.l.b16 %v6483
        %v6580 = vpack.c.b16 %v6565, %v6564
        %v6581 = vpack.c.b16 %v6567, %v6566
        %v6582 = vpack.c.b16 %v6569, %v6568
        %v6583 = vpack.c.b16 %v6571, %v6570
        %v6584 = vpack.c.b16 %v6573, %v6572
        %v6585 = vpack.c.b16 %v6575, %v6574
        %v6586 = vpack.c.b16 %v6577, %v6576
        %v6587 = vpack.c.b16 %v6579, %v6578
        %6596 = vmatprep.subr.bf16.mxu0 0
        %6597 = vmatpush1.bf16.msra.mxu0 %v6580
        %6598 = vmatprep.subr.bf16.mxu0 0
        %6599 = vmatpush1.bf16.msra.mxu0 %v6581
        %6600 = vmatprep.subr.bf16.mxu0 0
        %6601 = vmatpush1.bf16.msra.mxu0 %v6582
        %6602 = vmatprep.subr.bf16.mxu0 0
        %6603 = vmatpush1.bf16.msra.mxu0 %v6583
        %6604 = vmatprep.subr.bf16.mxu0 0
        %6605 = vmatpush1.bf16.msra.mxu0 %v6584
        %6606 = vmatprep.subr.bf16.mxu0 0
        %6607 = vmatpush1.bf16.msra.mxu0 %v6585
        %6608 = vmatprep.subr.bf16.mxu0 0
        %6609 = vmatpush1.bf16.msra.mxu0 %v6586
        %6610 = vmatprep.subr.bf16.mxu0 0
        %6611 = vmatpush1.bf16.msra.mxu0 %v6587
        %6612 = vmatprep.subr.bf16.mxu0 0
        %6613 = vmatpush1.bf16.msra.mxu0 0
        %6614 = vmatprep.subr.bf16.mxu0 0
        %6615 = vmatpush1.bf16.msra.mxu0 0
        %6616 = vmatprep.subr.bf16.mxu0 0
        %6617 = vmatpush1.bf16.msra.mxu0 0
        %6618 = vmatprep.subr.bf16.mxu0 0
        %6619 = vmatpush1.bf16.msra.mxu0 0
        %6620 = vmatprep.subr.bf16.mxu0 0
        %6621 = vmatpush1.bf16.msra.mxu0 0
        %6622 = vmatprep.subr.bf16.mxu0 0
        %6623 = vmatpush1.bf16.msra.mxu0 0
        %6624 = vmatprep.subr.bf16.mxu0 0
        %6625 = vmatpush1.bf16.msra.mxu0 0
        %6626 = vmatprep.subr.bf16.mxu0 0
        %6627 = vmatpush1.bf16.msra.mxu0 0
        %6628 = vmatprep.mubr.bf16.mxu0 0
        %6629 = vmatmul.mubr.bf16.gmra.mrb[0].mxu0 %v6516
        %v6630 = vpop.f32.mrb[0].mxu0
        %v6631 = vadd.f32 0.0, %v6630
        %v6632 = vpop.f32.mrb[0].mxu0
        %v6633 = vpop.f32.mrb[0].mxu0
        %v6634 = vadd.f32 0.0, %v6633
        %v6635 = vpop.f32.mrb[0].mxu0
        %6636 = vmatprep.mubr.bf16.mxu0 0
        %6637 = vmatmul.mubr.bf16.gmra.mrb[0].mxu0 %v6517
        %v6638 = vpop.f32.mrb[0].mxu0
        %v6639 = vadd.f32 0.0, %v6638
        %v6640 = vpop.f32.mrb[0].mxu0
        %v6641 = vpop.f32.mrb[0].mxu0
        %v6642 = vadd.f32 0.0, %v6641
        %v6643 = vpop.f32.mrb[0].mxu0
        %6644 = vmatprep.mubr.bf16.mxu0 0
        %6645 = vmatmul.mubr.bf16.gmra.mrb[0].mxu0 %v6518
        %v6646 = vpop.f32.mrb[0].mxu0
        %v6647 = vadd.f32 0.0, %v6646
        %v6648 = vpop.f32.mrb[0].mxu0
        %v6649 = vpop.f32.mrb[0].mxu0
        %v6650 = vadd.f32 0.0, %v6649
        %v6651 = vpop.f32.mrb[0].mxu0
        %6652 = vmatprep.mubr.bf16.mxu0 0
        %6653 = vmatmul.mubr.bf16.gmra.mrb[0].mxu0 %v6519
        %v6654 = vpop.f32.mrb[0].mxu0
        %v6655 = vadd.f32 0.0, %v6654
        %v6656 = vpop.f32.mrb[0].mxu0
        %v6657 = vpop.f32.mrb[0].mxu0
        %v6658 = vadd.f32 0.0, %v6657
        %v6659 = vpop.f32.mrb[0].mxu0
        %6660 = vmatprep.mubr.bf16.mxu0 0
        %6661 = vmatmul.mubr.bf16.gmra.mrb[0].mxu0 %v6520
        %v6662 = vpop.f32.mrb[0].mxu0
        %v6663 = vadd.f32 0.0, %v6662
        %v6664 = vpop.f32.mrb[0].mxu0
        %v6665 = vpop.f32.mrb[0].mxu0
        %v6666 = vadd.f32 0.0, %v6665
        %v6667 = vpop.f32.mrb[0].mxu0
        %6668 = vmatprep.mubr.bf16.mxu0 0
        %6669 = vmatmul.mubr.bf16.gmra.mrb[0].mxu0 %v6521
        %v6670 = vpop.f32.mrb[0].mxu0
        %v6671 = vadd.f32 0.0, %v6670
        %v6672 = vpop.f32.mrb[0].mxu0
        %v6673 = vpop.f32.mrb[0].mxu0
        %v6674 = vadd.f32 0.0, %v6673
        %v6675 = vpop.f32.mrb[0].mxu0
        %6676 = vmatprep.mubr.bf16.mxu0 0
        %6677 = vmatmul.mubr.bf16.gmra.mrb[0].mxu0 %v6522
        %v6678 = vpop.f32.mrb[0].mxu0
        %v6679 = vadd.f32 0.0, %v6678
        %v6680 = vpop.f32.mrb[0].mxu0
        %v6681 = vpop.f32.mrb[0].mxu0
        %v6682 = vadd.f32 0.0, %v6681
        %v6683 = vpop.f32.mrb[0].mxu0
        %6684 = vmatprep.mubr.bf16.mxu0 0
        %6685 = vmatmul.mubr.bf16.gmra.mrb[0].mxu0 %v6523
        %v6686 = vpop.f32.mrb[0].mxu0
        %v6687 = vadd.f32 0.0, %v6686
        %v6688 = vpop.f32.mrb[0].mxu0
        %v6689 = vpop.f32.mrb[0].mxu0
        %v6690 = vadd.f32 0.0, %v6689
        %v6691 = vpop.f32.mrb[0].mxu0
        %6692 = vmatprep.mubr.bf16.mxu0 0
        %6693 = vmatmul.mubr.bf16.gmra.mrb[0].mxu0 %v6524
        %v6694 = vpop.f32.mrb[0].mxu0
        %v6695 = vadd.f32 0.0, %v6694
        %v6696 = vpop.f32.mrb[0].mxu0
        %v6697 = vpop.f32.mrb[0].mxu0
        %v6698 = vadd.f32 0.0, %v6697
        %v6699 = vpop.f32.mrb[0].mxu0
        %6700 = vmatprep.mubr.bf16.mxu0 0
        %6701 = vmatmul.mubr.bf16.gmra.mrb[0].mxu0 %v6525
        %v6702 = vpop.f32.mrb[0].mxu0
        %v6703 = vadd.f32 0.0, %v6702
        %v6704 = vpop.f32.mrb[0].mxu0
        %v6705 = vpop.f32.mrb[0].mxu0
        %v6706 = vadd.f32 0.0, %v6705
        %v6707 = vpop.f32.mrb[0].mxu0
        %6708 = vmatprep.mubr.bf16.mxu0 0
        %6709 = vmatmul.mubr.bf16.gmra.mrb[0].mxu0 %v6526
        %v6710 = vpop.f32.mrb[0].mxu0
        %v6711 = vadd.f32 0.0, %v6710
        %v6712 = vpop.f32.mrb[0].mxu0
        %v6713 = vpop.f32.mrb[0].mxu0
        %v6714 = vadd.f32 0.0, %v6713
        %v6715 = vpop.f32.mrb[0].mxu0
        %6716 = vmatprep.mubr.bf16.mxu0 0
        %6717 = vmatmul.mubr.bf16.gmra.mrb[0].mxu0 %v6527
        %v6718 = vpop.f32.mrb[0].mxu0
        %v6719 = vadd.f32 0.0, %v6718
        %v6720 = vpop.f32.mrb[0].mxu0
        %v6721 = vpop.f32.mrb[0].mxu0
        %v6722 = vadd.f32 0.0, %v6721
        %v6723 = vpop.f32.mrb[0].mxu0
        %6724 = vmatprep.mubr.bf16.mxu0 0
        %6725 = vmatmul.mubr.bf16.gmra.mrb[0].mxu0 %v6528
        %v6726 = vpop.f32.mrb[0].mxu0
        %v6727 = vadd.f32 0.0, %v6726
        %v6728 = vpop.f32.mrb[0].mxu0
        %v6729 = vpop.f32.mrb[0].mxu0
        %v6730 = vadd.f32 0.0, %v6729
        %v6731 = vpop.f32.mrb[0].mxu0
        %6732 = vmatprep.mubr.bf16.mxu0 0
        %6733 = vmatmul.mubr.bf16.gmra.mrb[0].mxu0 %v6529
        %v6734 = vpop.f32.mrb[0].mxu0
        %v6735 = vadd.f32 0.0, %v6734
        %v6736 = vpop.f32.mrb[0].mxu0
        %v6737 = vpop.f32.mrb[0].mxu0
        %v6738 = vadd.f32 0.0, %v6737
        %v6739 = vpop.f32.mrb[0].mxu0
        %6740 = vmatprep.mubr.bf16.mxu0 0
        %6741 = vmatmul.mubr.bf16.gmra.mrb[0].mxu0 %v6530
        %v6742 = vpop.f32.mrb[0].mxu0
        %v6743 = vadd.f32 0.0, %v6742
        %v6744 = vpop.f32.mrb[0].mxu0
        %v6745 = vpop.f32.mrb[0].mxu0
        %v6746 = vadd.f32 0.0, %v6745
        %v6747 = vpop.f32.mrb[0].mxu0
        %6748 = vmatprep.mubr.bf16.mxu0 0
        %6749 = vmatmul.mubr.bf16.gmra.mrb[0].mxu0 %v6531
        %v6750 = vpop.f32.mrb[0].mxu0
        %v6751 = vadd.f32 0.0, %v6750
        %v6752 = vpop.f32.mrb[0].mxu0
        %v6753 = vpop.f32.mrb[0].mxu0
        %v6754 = vadd.f32 0.0, %v6753
        %v6755 = vpop.f32.mrb[0].mxu0
        %6756 = vdwg.mxu0
        %v6757 = vld [vmem:[#allocation3] sm:$0xff]
        %v6758 = vld [vmem:[#allocation3 + $0x8] sm:$0xff]
        %v6759 = vld [vmem:[#allocation3 + $0x10] sm:$0xff]
        %v6760 = vld [vmem:[#allocation3 + $0x18] sm:$0xff]
        %v6761 = vld [vmem:[#allocation3 + $0x20] sm:$0xff]
        %v6762 = vld [vmem:[#allocation3 + $0x28] sm:$0xff]
        %v6763 = vld [vmem:[#allocation3 + $0x30] sm:$0xff]
        %v6764 = vld [vmem:[#allocation3 + $0x38] sm:$0xff]
        %v6765 = vld [vmem:[#allocation3 + $0x40] sm:$0xff]
        %v6766 = vld [vmem:[#allocation3 + $0x48] sm:$0xff]
        %v6767 = vld [vmem:[#allocation3 + $0x50] sm:$0xff]
        %v6768 = vld [vmem:[#allocation3 + $0x58] sm:$0xff]
        %v6769 = vld [vmem:[#allocation3 + $0x60] sm:$0xff]
        %v6770 = vld [vmem:[#allocation3 + $0x68] sm:$0xff]
        %v6771 = vld [vmem:[#allocation3 + $0x70] sm:$0xff]
        %v6772 = vld [vmem:[#allocation3 + $0x78] sm:$0xff]
        %v6773 = vld [vmem:[#allocation3 + $0x80] sm:$0xff]
        %v6774 = vld [vmem:[#allocation3 + $0x88] sm:$0xff]
        %v6775 = vld [vmem:[#allocation3 + $0x90] sm:$0xff]
        %v6776 = vld [vmem:[#allocation3 + $0x98] sm:$0xff]
        %v6777 = vld [vmem:[#allocation3 + $0xa0] sm:$0xff]
        %v6778 = vld [vmem:[#allocation3 + $0xa8] sm:$0xff]
        %v6779 = vld [vmem:[#allocation3 + $0xb0] sm:$0xff]
        %v6780 = vld [vmem:[#allocation3 + $0xb8] sm:$0xff]
        %v6781 = vld [vmem:[#allocation3 + $0xc0] sm:$0xff]
        %v6782 = vld [vmem:[#allocation3 + $0xc8] sm:$0xff]
        %v6783 = vld [vmem:[#allocation3 + $0xd0] sm:$0xff]
        %v6784 = vld [vmem:[#allocation3 + $0xd8] sm:$0xff]
        %v6785 = vld [vmem:[#allocation3 + $0xe0] sm:$0xff]
        %v6786 = vld [vmem:[#allocation3 + $0xe8] sm:$0xff]
        %v6787 = vld [vmem:[#allocation3 + $0xf0] sm:$0xff]
        %v6788 = vld [vmem:[#allocation3 + $0xf8] sm:$0xff]
        %v6789 = vadd.f32 %v6757, %v6631
        %v6790 = vadd.f32 %v6758, %v6634
        %v6791 = vadd.f32 %v6759, %v6639
        %v6792 = vadd.f32 %v6760, %v6642
        %v6793 = vadd.f32 %v6761, %v6647
        %v6794 = vadd.f32 %v6762, %v6650
        %v6795 = vadd.f32 %v6763, %v6655
        %v6796 = vadd.f32 %v6764, %v6658
        %v6797 = vadd.f32 %v6765, %v6663
        %v6798 = vadd.f32 %v6766, %v6666
        %v6799 = vadd.f32 %v6767, %v6671
        %v6800 = vadd.f32 %v6768, %v6674
        %v6801 = vadd.f32 %v6769, %v6679
        %v6802 = vadd.f32 %v6770, %v6682
        %v6803 = vadd.f32 %v6771, %v6687
        %v6804 = vadd.f32 %v6772, %v6690
        %v6805 = vadd.f32 %v6773, %v6695
        %v6806 = vadd.f32 %v6774, %v6698
        %v6807 = vadd.f32 %v6775, %v6703
        %v6808 = vadd.f32 %v6776, %v6706
        %v6809 = vadd.f32 %v6777, %v6711
        %v6810 = vadd.f32 %v6778, %v6714
        %v6811 = vadd.f32 %v6779, %v6719
        %v6812 = vadd.f32 %v6780, %v6722
        %v6813 = vadd.f32 %v6781, %v6727
        %v6814 = vadd.f32 %v6782, %v6730
        %v6815 = vadd.f32 %v6783, %v6735
        %v6816 = vadd.f32 %v6784, %v6738
        %v6817 = vadd.f32 %v6785, %v6743
        %v6818 = vadd.f32 %v6786, %v6746
        %v6819 = vadd.f32 %v6787, %v6751
        %v6820 = vadd.f32 %v6788, %v6754
        %6821 = vst [vmem:[#allocation3] sm:$0xff] %v6789
        %6822 = vst [vmem:[#allocation3 + $0x8] sm:$0xff] %v6790
        %6823 = vst [vmem:[#allocation3 + $0x10] sm:$0xff] %v6791
        %6824 = vst [vmem:[#allocation3 + $0x18] sm:$0xff] %v6792
        %6825 = vst [vmem:[#allocation3 + $0x20] sm:$0xff] %v6793
        %6826 = vst [vmem:[#allocation3 + $0x28] sm:$0xff] %v6794
        %6827 = vst [vmem:[#allocation3 + $0x30] sm:$0xff] %v6795
        %6828 = vst [vmem:[#allocation3 + $0x38] sm:$0xff] %v6796
        %6829 = vst [vmem:[#allocation3 + $0x40] sm:$0xff] %v6797
        %6830 = vst [vmem:[#allocation3 + $0x48] sm:$0xff] %v6798
        %6831 = vst [vmem:[#allocation3 + $0x50] sm:$0xff] %v6799
        %6832 = vst [vmem:[#allocation3 + $0x58] sm:$0xff] %v6800
        %6833 = vst [vmem:[#allocation3 + $0x60] sm:$0xff] %v6801
        %6834 = vst [vmem:[#allocation3 + $0x68] sm:$0xff] %v6802
        %6835 = vst [vmem:[#allocation3 + $0x70] sm:$0xff] %v6803
        %6836 = vst [vmem:[#allocation3 + $0x78] sm:$0xff] %v6804
        %6837 = vst [vmem:[#allocation3 + $0x80] sm:$0xff] %v6805
        %6838 = vst [vmem:[#allocation3 + $0x88] sm:$0xff] %v6806
        %6839 = vst [vmem:[#allocation3 + $0x90] sm:$0xff] %v6807
        %6840 = vst [vmem:[#allocation3 + $0x98] sm:$0xff] %v6808
        %6841 = vst [vmem:[#allocation3 + $0xa0] sm:$0xff] %v6809
        %6842 = vst [vmem:[#allocation3 + $0xa8] sm:$0xff] %v6810
        %6843 = vst [vmem:[#allocation3 + $0xb0] sm:$0xff] %v6811
        %6844 = vst [vmem:[#allocation3 + $0xb8] sm:$0xff] %v6812
        %6845 = vst [vmem:[#allocation3 + $0xc0] sm:$0xff] %v6813
        %6846 = vst [vmem:[#allocation3 + $0xc8] sm:$0xff] %v6814
        %6847 = vst [vmem:[#allocation3 + $0xd0] sm:$0xff] %v6815
        %6848 = vst [vmem:[#allocation3 + $0xd8] sm:$0xff] %v6816
        %6849 = vst [vmem:[#allocation3 + $0xe0] sm:$0xff] %v6817
        %6850 = vst [vmem:[#allocation3 + $0xe8] sm:$0xff] %v6818
        %6851 = vst [vmem:[#allocation3 + $0xf0] sm:$0xff] %v6819
        %6852 = vst [vmem:[#allocation3 + $0xf8] sm:$0xff] %v6820
        %v6853 = vld [vmem:[#allocation3] sm:$0xff]
        %v6854 = vld [vmem:[#allocation3 + $0x8] sm:$0xff]
        %v6855 = vld [vmem:[#allocation3 + $0x10] sm:$0xff]
        %v6856 = vld [vmem:[#allocation3 + $0x18] sm:$0xff]
        %v6857 = vld [vmem:[#allocation3 + $0x20] sm:$0xff]
        %v6858 = vld [vmem:[#allocation3 + $0x28] sm:$0xff]
        %v6859 = vld [vmem:[#allocation3 + $0x30] sm:$0xff]
        %v6860 = vld [vmem:[#allocation3 + $0x38] sm:$0xff]
        %v6861 = vld [vmem:[#allocation3 + $0x40] sm:$0xff]
        %v6862 = vld [vmem:[#allocation3 + $0x48] sm:$0xff]
        %v6863 = vld [vmem:[#allocation3 + $0x50] sm:$0xff]
        %v6864 = vld [vmem:[#allocation3 + $0x58] sm:$0xff]
        %v6865 = vld [vmem:[#allocation3 + $0x60] sm:$0xff]
        %v6866 = vld [vmem:[#allocation3 + $0x68] sm:$0xff]
        %v6867 = vld [vmem:[#allocation3 + $0x70] sm:$0xff]
        %v6868 = vld [vmem:[#allocation3 + $0x78] sm:$0xff]
        %v6869 = vld [vmem:[#allocation3 + $0x80] sm:$0xff]
        %v6870 = vld [vmem:[#allocation3 + $0x88] sm:$0xff]
        %v6871 = vld [vmem:[#allocation3 + $0x90] sm:$0xff]
        %v6872 = vld [vmem:[#allocation3 + $0x98] sm:$0xff]
        %v6873 = vld [vmem:[#allocation3 + $0xa0] sm:$0xff]
        %v6874 = vld [vmem:[#allocation3 + $0xa8] sm:$0xff]
        %v6875 = vld [vmem:[#allocation3 + $0xb0] sm:$0xff]
        %v6876 = vld [vmem:[#allocation3 + $0xb8] sm:$0xff]
        %v6877 = vld [vmem:[#allocation3 + $0xc0] sm:$0xff]
        %v6878 = vld [vmem:[#allocation3 + $0xc8] sm:$0xff]
        %v6879 = vld [vmem:[#allocation3 + $0xd0] sm:$0xff]
        %v6880 = vld [vmem:[#allocation3 + $0xd8] sm:$0xff]
        %v6881 = vld [vmem:[#allocation3 + $0xe0] sm:$0xff]
        %v6882 = vld [vmem:[#allocation3 + $0xe8] sm:$0xff]
        %v6883 = vld [vmem:[#allocation3 + $0xf0] sm:$0xff]
        %v6884 = vld [vmem:[#allocation3 + $0xf8] sm:$0xff]
        %v6885 = vld [vmem:[%s4] sm:$0x1]
        %v6887 = vlaneseq
        %v6888 = vshrl.u32 %v6887, 7
        %v6889 = vsub.s32 0, %v6888
        %v6890 = vrot.slane %v6885, %v6889
        %v6892 = vadd.f32 %v6853, %v6890
        %v6893 = vadd.f32 %v6854, %v6890
        %v6894 = vadd.f32 %v6855, %v6890
        %v6895 = vadd.f32 %v6856, %v6890
        %v6896 = vadd.f32 %v6857, %v6890
        %v6897 = vadd.f32 %v6858, %v6890
        %v6898 = vadd.f32 %v6859, %v6890
        %v6899 = vadd.f32 %v6860, %v6890
        %v6900 = vadd.f32 %v6861, %v6890
        %v6901 = vadd.f32 %v6862, %v6890
        %v6902 = vadd.f32 %v6863, %v6890
        %v6903 = vadd.f32 %v6864, %v6890
        %v6904 = vadd.f32 %v6865, %v6890
        %v6905 = vadd.f32 %v6866, %v6890
        %v6906 = vadd.f32 %v6867, %v6890
        %v6907 = vadd.f32 %v6868, %v6890
        %v6908 = vadd.f32 %v6869, %v6890
        %v6909 = vadd.f32 %v6870, %v6890
        %v6910 = vadd.f32 %v6871, %v6890
        %v6911 = vadd.f32 %v6872, %v6890
        %v6912 = vadd.f32 %v6873, %v6890
        %v6913 = vadd.f32 %v6874, %v6890
        %v6914 = vadd.f32 %v6875, %v6890
        %v6915 = vadd.f32 %v6876, %v6890
        %v6916 = vadd.f32 %v6877, %v6890
        %v6917 = vadd.f32 %v6878, %v6890
        %v6918 = vadd.f32 %v6879, %v6890
        %v6919 = vadd.f32 %v6880, %v6890
        %v6920 = vadd.f32 %v6881, %v6890
        %v6921 = vadd.f32 %v6882, %v6890
        %v6922 = vadd.f32 %v6883, %v6890
        %v6923 = vadd.f32 %v6884, %v6890
        %v6924 = vmax.f32 %v6892, 0.0
        %v6925 = vmax.f32 %v6893, 0.0
        %v6926 = vmax.f32 %v6894, 0.0
        %v6927 = vmax.f32 %v6895, 0.0
        %v6928 = vmax.f32 %v6896, 0.0
        %v6929 = vmax.f32 %v6897, 0.0
        %v6930 = vmax.f32 %v6898, 0.0
        %v6931 = vmax.f32 %v6899, 0.0
        %v6932 = vmax.f32 %v6900, 0.0
        %v6933 = vmax.f32 %v6901, 0.0
        %v6934 = vmax.f32 %v6902, 0.0
        %v6935 = vmax.f32 %v6903, 0.0
        %v6936 = vmax.f32 %v6904, 0.0
        %v6937 = vmax.f32 %v6905, 0.0
        %v6938 = vmax.f32 %v6906, 0.0
        %v6939 = vmax.f32 %v6907, 0.0
        %v6940 = vmax.f32 %v6908, 0.0
        %v6941 = vmax.f32 %v6909, 0.0
        %v6942 = vmax.f32 %v6910, 0.0
        %v6943 = vmax.f32 %v6911, 0.0
        %v6944 = vmax.f32 %v6912, 0.0
        %v6945 = vmax.f32 %v6913, 0.0
        %v6946 = vmax.f32 %v6914, 0.0
        %v6947 = vmax.f32 %v6915, 0.0
        %v6948 = vmax.f32 %v6916, 0.0
        %v6949 = vmax.f32 %v6917, 0.0
        %v6950 = vmax.f32 %v6918, 0.0
        %v6951 = vmax.f32 %v6919, 0.0
        %v6952 = vmax.f32 %v6920, 0.0
        %v6953 = vmax.f32 %v6921, 0.0
        %v6954 = vmax.f32 %v6922, 0.0
        %v6955 = vmax.f32 %v6923, 0.0
        %v6956 = vpack.c.bf16 %v6925, %v6924
        %v6957 = vpack.c.bf16 %v6927, %v6926
        %v6958 = vpack.c.bf16 %v6929, %v6928
        %v6959 = vpack.c.bf16 %v6931, %v6930
        %v6960 = vpack.c.bf16 %v6933, %v6932
        %v6961 = vpack.c.bf16 %v6935, %v6934
        %v6962 = vpack.c.bf16 %v6937, %v6936
        %v6963 = vpack.c.bf16 %v6939, %v6938
        %v6964 = vpack.c.bf16 %v6941, %v6940
        %v6965 = vpack.c.bf16 %v6943, %v6942
        %v6966 = vpack.c.bf16 %v6945, %v6944
        %v6967 = vpack.c.bf16 %v6947, %v6946
        %v6968 = vpack.c.bf16 %v6949, %v6948
        %v6969 = vpack.c.bf16 %v6951, %v6950
        %v6970 = vpack.c.bf16 %v6953, %v6952
        %v6971 = vpack.c.bf16 %v6955, %v6954
        %v6972 = vld [vmem:[#allocation10] sm:$0xf]
        %v6973 = vld [vmem:[#allocation10 + $0x4] sm:$0xf]
        %v6974 = vld [vmem:[#allocation10 + $0x8] sm:$0xf]
        %v6975 = vld [vmem:[#allocation10 + $0xc] sm:$0xf]
        %v6976 = vld [vmem:[#allocation10 + $0x10] sm:$0xf]
        %v6977 = vld [vmem:[#allocation10 + $0x14] sm:$0xf]
        %v6978 = vld [vmem:[#allocation10 + $0x18] sm:$0xf]
        %v6979 = vld [vmem:[#allocation10 + $0x1c] sm:$0xf]
        %v6980 = vld [vmem:[#allocation10 + $0x20] sm:$0xf]
        %v6981 = vld [vmem:[#allocation10 + $0x24] sm:$0xf]
        %v6982 = vld [vmem:[#allocation10 + $0x28] sm:$0xf]
        %v6983 = vld [vmem:[#allocation10 + $0x2c] sm:$0xf]
        %v6984 = vld [vmem:[#allocation10 + $0x30] sm:$0xf]
        %v6985 = vld [vmem:[#allocation10 + $0x34] sm:$0xf]
        %v6986 = vld [vmem:[#allocation10 + $0x38] sm:$0xf]
        %v6987 = vld [vmem:[#allocation10 + $0x3c] sm:$0xf]
        %v6988 = vld [vmem:[%s6] sm:$0x1]
        %v6990 = vlaneseq
        %v6991 = vshrl.u32 %v6990, 7
        %v6992 = vsub.s32 0, %v6991
        %v6993 = vrot.slane %v6988, %v6992
        %v7011 = vunpack.c.l.b16 %v6972
        %v7012 = vunpack.c.l.b16 %v6973
        %v7013 = vunpack.c.l.b16 %v6974
        %v7014 = vunpack.c.l.b16 %v6975
        %v7015 = vunpack.c.l.b16 %v6976
        %v7016 = vunpack.c.l.b16 %v6977
        %v7017 = vunpack.c.l.b16 %v6978
        %v7018 = vunpack.c.l.b16 %v6979
        %v7019 = vunpack.c.l.b16 %v6980
        %v7020 = vunpack.c.l.b16 %v6981
        %v7021 = vunpack.c.l.b16 %v6982
        %v7022 = vunpack.c.l.b16 %v6983
        %v7023 = vunpack.c.l.b16 %v6984
        %v7024 = vunpack.c.l.b16 %v6985
        %v7025 = vunpack.c.l.b16 %v6986
        %v7026 = vunpack.c.l.b16 %v6987
        %v7027 = vpack.c.b16 %v7012, %v7011
        %v7028 = vpack.c.b16 %v7014, %v7013
        %v7029 = vpack.c.b16 %v7016, %v7015
        %v7030 = vpack.c.b16 %v7018, %v7017
        %v7031 = vpack.c.b16 %v7020, %v7019
        %v7032 = vpack.c.b16 %v7022, %v7021
        %v7033 = vpack.c.b16 %v7024, %v7023
        %v7034 = vpack.c.b16 %v7026, %v7025
        %7043 = vmatprep.subr.bf16.mxu0 0
        %7044 = vmatpush1.bf16.msra.mxu0 %v7027
        %7045 = vmatprep.subr.bf16.mxu0 0
        %7046 = vmatpush1.bf16.msra.mxu0 %v7028
        %7047 = vmatprep.subr.bf16.mxu0 0
        %7048 = vmatpush1.bf16.msra.mxu0 %v7029
        %7049 = vmatprep.subr.bf16.mxu0 0
        %7050 = vmatpush1.bf16.msra.mxu0 %v7030
        %7051 = vmatprep.subr.bf16.mxu0 0
        %7052 = vmatpush1.bf16.msra.mxu0 %v7031
        %7053 = vmatprep.subr.bf16.mxu0 0
        %7054 = vmatpush1.bf16.msra.mxu0 %v7032
        %7055 = vmatprep.subr.bf16.mxu0 0
        %7056 = vmatpush1.bf16.msra.mxu0 %v7033
        %7057 = vmatprep.subr.bf16.mxu0 0
        %7058 = vmatpush1.bf16.msra.mxu0 %v7034
        %7059 = vmatprep.subr.bf16.mxu0 0
        %7060 = vmatpush1.bf16.msra.mxu0 0
        %7061 = vmatprep.subr.bf16.mxu0 0
        %7062 = vmatpush1.bf16.msra.mxu0 0
        %7063 = vmatprep.subr.bf16.mxu0 0
        %7064 = vmatpush1.bf16.msra.mxu0 0
        %7065 = vmatprep.subr.bf16.mxu0 0
        %7066 = vmatpush1.bf16.msra.mxu0 0
        %7067 = vmatprep.subr.bf16.mxu0 0
        %7068 = vmatpush1.bf16.msra.mxu0 0
        %7069 = vmatprep.subr.bf16.mxu0 0
        %7070 = vmatpush1.bf16.msra.mxu0 0
        %7071 = vmatprep.subr.bf16.mxu0 0
        %7072 = vmatpush1.bf16.msra.mxu0 0
        %7073 = vmatprep.subr.bf16.mxu0 0
        %7074 = vmatpush1.bf16.msra.mxu0 0
        %7075 = vmatprep.mubr.bf16.mxu0 0
        %7076 = vmatmul.mubr.bf16.gmra.mrb[0].mxu0 %v6956
        %v7077 = vpop.f32.mrb[0].mxu0
        %v7078 = vadd.f32 %v6993, %v7077
        %v7079 = vpop.f32.mrb[0].mxu0
        %v7080 = vpop.f32.mrb[0].mxu0
        %v7081 = vadd.f32 %v6993, %v7080
        %v7082 = vpop.f32.mrb[0].mxu0
        %7083 = vmatprep.mubr.bf16.mxu0 0
        %7084 = vmatmul.mubr.bf16.gmra.mrb[0].mxu0 %v6957
        %v7085 = vpop.f32.mrb[0].mxu0
        %v7086 = vadd.f32 %v6993, %v7085
        %v7087 = vpop.f32.mrb[0].mxu0
        %v7088 = vpop.f32.mrb[0].mxu0
        %v7089 = vadd.f32 %v6993, %v7088
        %v7090 = vpop.f32.mrb[0].mxu0
        %7091 = vmatprep.mubr.bf16.mxu0 0
        %7092 = vmatmul.mubr.bf16.gmra.mrb[0].mxu0 %v6958
        %v7093 = vpop.f32.mrb[0].mxu0
        %v7094 = vadd.f32 %v6993, %v7093
        %v7095 = vpop.f32.mrb[0].mxu0
        %v7096 = vpop.f32.mrb[0].mxu0
        %v7097 = vadd.f32 %v6993, %v7096
        %v7098 = vpop.f32.mrb[0].mxu0
        %7099 = vmatprep.mubr.bf16.mxu0 0
        %7100 = vmatmul.mubr.bf16.gmra.mrb[0].mxu0 %v6959
        %v7101 = vpop.f32.mrb[0].mxu0
        %v7102 = vadd.f32 %v6993, %v7101
        %v7103 = vpop.f32.mrb[0].mxu0
        %v7104 = vpop.f32.mrb[0].mxu0
        %v7105 = vadd.f32 %v6993, %v7104
        %v7106 = vpop.f32.mrb[0].mxu0
        %7107 = vmatprep.mubr.bf16.mxu0 0
        %7108 = vmatmul.mubr.bf16.gmra.mrb[0].mxu0 %v6960
        %v7109 = vpop.f32.mrb[0].mxu0
        %v7110 = vadd.f32 %v6993, %v7109
        %v7111 = vpop.f32.mrb[0].mxu0
        %v7112 = vpop.f32.mrb[0].mxu0
        %v7113 = vadd.f32 %v6993, %v7112
        %v7114 = vpop.f32.mrb[0].mxu0
        %7115 = vmatprep.mubr.bf16.mxu0 0
        %7116 = vmatmul.mubr.bf16.gmra.mrb[0].mxu0 %v6961
        %v7117 = vpop.f32.mrb[0].mxu0
        %v7118 = vadd.f32 %v6993, %v7117
        %v7119 = vpop.f32.mrb[0].mxu0
        %v7120 = vpop.f32.mrb[0].mxu0
        %v7121 = vadd.f32 %v6993, %v7120
        %v7122 = vpop.f32.mrb[0].mxu0
        %7123 = vmatprep.mubr.bf16.mxu0 0
        %7124 = vmatmul.mubr.bf16.gmra.mrb[0].mxu0 %v6962
        %v7125 = vpop.f32.mrb[0].mxu0
        %v7126 = vadd.f32 %v6993, %v7125
        %v7127 = vpop.f32.mrb[0].mxu0
        %v7128 = vpop.f32.mrb[0].mxu0
        %v7129 = vadd.f32 %v6993, %v7128
        %v7130 = vpop.f32.mrb[0].mxu0
        %7131 = vmatprep.mubr.bf16.mxu0 0
        %7132 = vmatmul.mubr.bf16.gmra.mrb[0].mxu0 %v6963
        %v7133 = vpop.f32.mrb[0].mxu0
        %v7134 = vadd.f32 %v6993, %v7133
        %v7135 = vpop.f32.mrb[0].mxu0
        %v7136 = vpop.f32.mrb[0].mxu0
        %v7137 = vadd.f32 %v6993, %v7136
        %v7138 = vpop.f32.mrb[0].mxu0
        %7139 = vmatprep.mubr.bf16.mxu0 0
        %7140 = vmatmul.mubr.bf16.gmra.mrb[0].mxu0 %v6964
        %v7141 = vpop.f32.mrb[0].mxu0
        %v7142 = vadd.f32 %v6993, %v7141
        %v7143 = vpop.f32.mrb[0].mxu0
        %v7144 = vpop.f32.mrb[0].mxu0
        %v7145 = vadd.f32 %v6993, %v7144
        %v7146 = vpop.f32.mrb[0].mxu0
        %7147 = vmatprep.mubr.bf16.mxu0 0
        %7148 = vmatmul.mubr.bf16.gmra.mrb[0].mxu0 %v6965
        %v7149 = vpop.f32.mrb[0].mxu0
        %v7150 = vadd.f32 %v6993, %v7149
        %v7151 = vpop.f32.mrb[0].mxu0
        %v7152 = vpop.f32.mrb[0].mxu0
        %v7153 = vadd.f32 %v6993, %v7152
        %v7154 = vpop.f32.mrb[0].mxu0
        %7155 = vmatprep.mubr.bf16.mxu0 0
        %7156 = vmatmul.mubr.bf16.gmra.mrb[0].mxu0 %v6966
        %v7157 = vpop.f32.mrb[0].mxu0
        %v7158 = vadd.f32 %v6993, %v7157
        %v7159 = vpop.f32.mrb[0].mxu0
        %v7160 = vpop.f32.mrb[0].mxu0
        %v7161 = vadd.f32 %v6993, %v7160
        %v7162 = vpop.f32.mrb[0].mxu0
        %7163 = vmatprep.mubr.bf16.mxu0 0
        %7164 = vmatmul.mubr.bf16.gmra.mrb[0].mxu0 %v6967
        %v7165 = vpop.f32.mrb[0].mxu0
        %v7166 = vadd.f32 %v6993, %v7165
        %v7167 = vpop.f32.mrb[0].mxu0
        %v7168 = vpop.f32.mrb[0].mxu0
        %v7169 = vadd.f32 %v6993, %v7168
        %v7170 = vpop.f32.mrb[0].mxu0
        %7171 = vmatprep.mubr.bf16.mxu0 0
        %7172 = vmatmul.mubr.bf16.gmra.mrb[0].mxu0 %v6968
        %v7173 = vpop.f32.mrb[0].mxu0
        %v7174 = vadd.f32 %v6993, %v7173
        %v7175 = vpop.f32.mrb[0].mxu0
        %v7176 = vpop.f32.mrb[0].mxu0
        %v7177 = vadd.f32 %v6993, %v7176
        %v7178 = vpop.f32.mrb[0].mxu0
        %7179 = vmatprep.mubr.bf16.mxu0 0
        %7180 = vmatmul.mubr.bf16.gmra.mrb[0].mxu0 %v6969
        %v7181 = vpop.f32.mrb[0].mxu0
        %v7182 = vadd.f32 %v6993, %v7181
        %v7183 = vpop.f32.mrb[0].mxu0
        %v7184 = vpop.f32.mrb[0].mxu0
        %v7185 = vadd.f32 %v6993, %v7184
        %v7186 = vpop.f32.mrb[0].mxu0
        %7187 = vmatprep.mubr.bf16.mxu0 0
        %7188 = vmatmul.mubr.bf16.gmra.mrb[0].mxu0 %v6970
        %v7189 = vpop.f32.mrb[0].mxu0
        %v7190 = vadd.f32 %v6993, %v7189
        %v7191 = vpop.f32.mrb[0].mxu0
        %v7192 = vpop.f32.mrb[0].mxu0
        %v7193 = vadd.f32 %v6993, %v7192
        %v7194 = vpop.f32.mrb[0].mxu0
        %7195 = vmatprep.mubr.bf16.mxu0 0
        %7196 = vmatmul.mubr.bf16.gmra.mrb[0].mxu0 %v6971
        %v7197 = vpop.f32.mrb[0].mxu0
        %v7198 = vadd.f32 %v6993, %v7197
        %v7199 = vpop.f32.mrb[0].mxu0
        %v7200 = vpop.f32.mrb[0].mxu0
        %v7201 = vadd.f32 %v6993, %v7200
        %v7202 = vpop.f32.mrb[0].mxu0
        %7203 = vdwg.mxu0
        %v7204 = vunpack.c.l.bf16 %v342
        %v7205 = vunpack.c.l.bf16 %v343
        %v7206 = vunpack.c.l.bf16 %v344
        %v7207 = vunpack.c.l.bf16 %v345
        %v7208 = vunpack.c.l.bf16 %v346
        %v7209 = vunpack.c.l.bf16 %v347
        %v7210 = vunpack.c.l.bf16 %v348
        %v7211 = vunpack.c.l.bf16 %v349
        %v7212 = vunpack.c.l.bf16 %v350
        %v7213 = vunpack.c.l.bf16 %v351
        %v7214 = vunpack.c.l.bf16 %v352
        %v7215 = vunpack.c.l.bf16 %v353
        %v7216 = vunpack.c.l.bf16 %v354
        %v7217 = vunpack.c.l.bf16 %v355
        %v7218 = vunpack.c.l.bf16 %v356
        %v7219 = vunpack.c.l.bf16 %v357
        %v7220 = vunpack.c.l.bf16 %v358
        %v7221 = vunpack.c.l.bf16 %v359
        %v7222 = vunpack.c.l.bf16 %v360
        %v7223 = vunpack.c.l.bf16 %v361
        %v7224 = vunpack.c.l.bf16 %v362
        %v7225 = vunpack.c.l.bf16 %v363
        %v7226 = vunpack.c.l.bf16 %v364
        %v7227 = vunpack.c.l.bf16 %v365
        %v7228 = vunpack.c.l.bf16 %v366
        %v7229 = vunpack.c.l.bf16 %v367
        %v7230 = vunpack.c.l.bf16 %v368
        %v7231 = vunpack.c.l.bf16 %v369
        %v7232 = vunpack.c.l.bf16 %v370
        %v7233 = vunpack.c.l.bf16 %v371
        %v7234 = vunpack.c.l.bf16 %v372
        %v7235 = vunpack.c.l.bf16 %v373
        %v7236 = vadd.f32 %v7078, %v7204
        %v7237 = vadd.f32 %v7081, %v7205
        %v7238 = vadd.f32 %v7086, %v7206
        %v7239 = vadd.f32 %v7089, %v7207
        %v7240 = vadd.f32 %v7094, %v7208
        %v7241 = vadd.f32 %v7097, %v7209
        %v7242 = vadd.f32 %v7102, %v7210
        %v7243 = vadd.f32 %v7105, %v7211
        %v7244 = vadd.f32 %v7110, %v7212
        %v7245 = vadd.f32 %v7113, %v7213
        %v7246 = vadd.f32 %v7118, %v7214
        %v7247 = vadd.f32 %v7121, %v7215
        %v7248 = vadd.f32 %v7126, %v7216
        %v7249 = vadd.f32 %v7129, %v7217
        %v7250 = vadd.f32 %v7134, %v7218
        %v7251 = vadd.f32 %v7137, %v7219
        %v7252 = vadd.f32 %v7142, %v7220
        %v7253 = vadd.f32 %v7145, %v7221
        %v7254 = vadd.f32 %v7150, %v7222
        %v7255 = vadd.f32 %v7153, %v7223
        %v7256 = vadd.f32 %v7158, %v7224
        %v7257 = vadd.f32 %v7161, %v7225
        %v7258 = vadd.f32 %v7166, %v7226
        %v7259 = vadd.f32 %v7169, %v7227
        %v7260 = vadd.f32 %v7174, %v7228
        %v7261 = vadd.f32 %v7177, %v7229
        %v7262 = vadd.f32 %v7182, %v7230
        %v7263 = vadd.f32 %v7185, %v7231
        %v7264 = vadd.f32 %v7190, %v7232
        %v7265 = vadd.f32 %v7193, %v7233
        %v7266 = vadd.f32 %v7198, %v7234
        %v7267 = vadd.f32 %v7201, %v7235
        %v7268 = vmax.f32 %v7236, 0.0
        %v7269 = vmax.f32 %v7237, 0.0
        %v7270 = vmax.f32 %v7238, 0.0
        %v7271 = vmax.f32 %v7239, 0.0
        %v7272 = vmax.f32 %v7240, 0.0
        %v7273 = vmax.f32 %v7241, 0.0
        %v7274 = vmax.f32 %v7242, 0.0
        %v7275 = vmax.f32 %v7243, 0.0
        %v7276 = vmax.f32 %v7244, 0.0
        %v7277 = vmax.f32 %v7245, 0.0
        %v7278 = vmax.f32 %v7246, 0.0
        %v7279 = vmax.f32 %v7247, 0.0
        %v7280 = vmax.f32 %v7248, 0.0
        %v7281 = vmax.f32 %v7249, 0.0
        %v7282 = vmax.f32 %v7250, 0.0
        %v7283 = vmax.f32 %v7251, 0.0
        %v7284 = vmax.f32 %v7252, 0.0
        %v7285 = vmax.f32 %v7253, 0.0
        %v7286 = vmax.f32 %v7254, 0.0
        %v7287 = vmax.f32 %v7255, 0.0
        %v7288 = vmax.f32 %v7256, 0.0
        %v7289 = vmax.f32 %v7257, 0.0
        %v7290 = vmax.f32 %v7258, 0.0
        %v7291 = vmax.f32 %v7259, 0.0
        %v7292 = vmax.f32 %v7260, 0.0
        %v7293 = vmax.f32 %v7261, 0.0
        %v7294 = vmax.f32 %v7262, 0.0
        %v7295 = vmax.f32 %v7263, 0.0
        %v7296 = vmax.f32 %v7264, 0.0
        %v7297 = vmax.f32 %v7265, 0.0
        %v7298 = vmax.f32 %v7266, 0.0
        %v7299 = vmax.f32 %v7267, 0.0
        %7300 = vst [vmem:[%s340] sm:$0xff] %v7268
        %7301 = vst [vmem:[%s340 + $0x8] sm:$0xff] %v7269
        %7302 = vst [vmem:[%s340 + $0x10] sm:$0xff] %v7270
        %7303 = vst [vmem:[%s340 + $0x18] sm:$0xff] %v7271
        %7304 = vst [vmem:[%s340 + $0x20] sm:$0xff] %v7272
        %7305 = vst [vmem:[%s340 + $0x28] sm:$0xff] %v7273
        %7306 = vst [vmem:[%s340 + $0x30] sm:$0xff] %v7274
        %7307 = vst [vmem:[%s340 + $0x38] sm:$0xff] %v7275
        %7308 = vst [vmem:[%s340 + $0x40] sm:$0xff] %v7276
        %7309 = vst [vmem:[%s340 + $0x48] sm:$0xff] %v7277
        %7310 = vst [vmem:[%s340 + $0x50] sm:$0xff] %v7278
        %7311 = vst [vmem:[%s340 + $0x58] sm:$0xff] %v7279
        %7312 = vst [vmem:[%s340 + $0x60] sm:$0xff] %v7280
        %7313 = vst [vmem:[%s340 + $0x68] sm:$0xff] %v7281
        %7314 = vst [vmem:[%s340 + $0x70] sm:$0xff] %v7282
        %7315 = vst [vmem:[%s340 + $0x78] sm:$0xff] %v7283
        %7316 = vst [vmem:[%s340 + $0x80] sm:$0xff] %v7284
        %7317 = vst [vmem:[%s340 + $0x88] sm:$0xff] %v7285
        %7318 = vst [vmem:[%s340 + $0x90] sm:$0xff] %v7286
        %7319 = vst [vmem:[%s340 + $0x98] sm:$0xff] %v7287
        %7320 = vst [vmem:[%s340 + $0xa0] sm:$0xff] %v7288
        %7321 = vst [vmem:[%s340 + $0xa8] sm:$0xff] %v7289
        %7322 = vst [vmem:[%s340 + $0xb0] sm:$0xff] %v7290
        %7323 = vst [vmem:[%s340 + $0xb8] sm:$0xff] %v7291
        %7324 = vst [vmem:[%s340 + $0xc0] sm:$0xff] %v7292
        %7325 = vst [vmem:[%s340 + $0xc8] sm:$0xff] %v7293
        %7326 = vst [vmem:[%s340 + $0xd0] sm:$0xff] %v7294
        %7327 = vst [vmem:[%s340 + $0xd8] sm:$0xff] %v7295
        %7328 = vst [vmem:[%s340 + $0xe0] sm:$0xff] %v7296
        %7329 = vst [vmem:[%s340 + $0xe8] sm:$0xff] %v7297
        %7330 = vst [vmem:[%s340 + $0xf0] sm:$0xff] %v7298
        %7331 = vst [vmem:[%s340 + $0xf8] sm:$0xff] %v7299
        %s7332 = sand.u32 %s186, 1
        %s7333 = scalar_lea.sflag [#allocation6], %s7332
        %s7334 = sand.u32 %s186, 1
        %s7335 = smul.addr %s7334, 256
        %s7336 = scalar_lea.vmem [#allocation12], %s7335
        // Predicated region
        $region65: #{tpu_custom_call.1} parent=47 // pred_check
          %p7337 = pneg %p196
        $region66: #{tpu_custom_call.1} parent=47 // pred_check_branch
          %7339 = sbr.rel (%p7337) target = $region68
        $region67: #{tpu_custom_call.1} parent=47 // pred_region
          %s7341 = ssub.s32 4096, 4096
          %7342 = vsyncadd %s7333, %s7341
          %s7343 = smul.addr %s26, 32
          %s7344 = smul.addr %s7343, 128
          %s7345 = scalar_lea.hbm %s7, %s7344
          %s7346 = sshll.u32 %s7336, 4
          %s7347 = int_to_ptr.vmem [resolvable:$true] %s7346
          %7352 = dma.vmem_to_hbm [thread:$0]  %s7347, 4096, %s7345, %s7333, 128, 128, 8
        $region68: #{tpu_custom_call.1} parent=47 // pred_fallthru
          _
      $region48: #{tpu_custom_call.1} parent=5 // pred_fallthru
        _
      %p7353 = scmp.le.s32.totalorder 2, %s21
      // Predicated region
      $region69: #{tpu_custom_call.1} parent=5 // pred_check
        %p7354 = pneg %p7353
      $region70: #{tpu_custom_call.1} parent=5 // pred_check_branch
        %7356 = sbr.rel (%p7354) target = $region72
      $region71: #{tpu_custom_call.1} parent=5 // pred_region
        %s7357 = ssub.s32 %s21, 2
        // Predicated region
        $region73: #{tpu_custom_call.1} parent=71 // pred_check
          %p7358 = pneg %p202
        $region74: #{tpu_custom_call.1} parent=71 // pred_check_branch
          %7360 = sbr.rel (%p7358) target = $region76
        $region75: #{tpu_custom_call.1} parent=71 // pred_region
          %s7361 = sand.u32 %s187, 1
          %s7362 = scalar_lea.sflag [#allocation6], %s7361
          %s7363 = sand.u32 %s187, 1
          %s7364 = smul.addr %s7363, 256
          %s7365 = scalar_lea.vmem [#allocation12], %s7364
          %7366 = dma.done %s7362, 4096
        $region76: #{tpu_custom_call.1} parent=71 // pred_fallthru
          _
      $region72: #{tpu_custom_call.1} parent=5 // pred_fallthru
        _
    $region6: #{tpu_custom_call.1} parent=1 // loop_footer
      %s25 = sadd.s32 1, %s21
    $region7: #{tpu_custom_call.1} parent=1 // loop_footer_branch
      %20 = sbr.rel target = $region3
    $region8: #{tpu_custom_call.1} parent=1 // loop_exit
      _
    %7367 = vsyncpa [#allocation5], 1
    %s7368 = scalar_lea.sflag [#allocation5], 1
    %7369 = vsyncpa %s7368, 1
    %7370 = vsyncpa [#allocation8], 1
    %7371 = vsyncpa [#allocation11], 1
    %7372 = vsyncpa [#allocation6], 1
    %s7373 = scalar_lea.sflag [#allocation6], 1
    %7374 = vsyncpa %s7373, 1

</llo_original>
